<compile_context>
chip_gen: v7x
topology: tpu7x:2x2x1
jax: 0.10.0
libtpu: 0.0.40
codegen_flags: <defaults>
</compile_context>

<pallas_src>
import functools

import numpy as np
import jax
import jax.numpy as jnp
from jax import lax
from jax.experimental import pallas as pl
from jax.experimental.pallas import tpu as pltpu

KS = (5, 9, 13)        # SPP max-pool kernel sizes (reference semantics)
N_STAGES = len(KS)     # cascaded 5x5 pools: 5, 5∘5 = 9, 5∘5∘5 = 13
PP = 2                 # padding per cascaded 5x5 stage (5 // 2)
BN_EPS = 1e-5


def _spp_kernel(x_ref, w1_ref, b1_ref, w2_ref, b2_ref, o_ref, scr_ref,
                *, H, W, C1, C_, C2):
    Hp, Wp = H + 2 * PP, W + 2 * PP

    # ---- -inf borders of the bf16 pooling scratch (border-only init) -------
    # Scratch memory is uninitialized, and under megacore sharding of the
    # "parallel" batch axis each core starts at an arbitrary program_id, so a
    # once-per-core guard (pid == 0 or an SMEM flag) is not reliable.  The
    # border splat is tiny (O((H + W) * PP * C_) bf16), so do it every step.
    scr_ref[:PP, :, :] = jnp.full((PP, Wp, C_), -jnp.inf, jnp.bfloat16)
    scr_ref[PP + H:, :, :] = jnp.full((PP, Wp, C_), -jnp.inf, jnp.bfloat16)
    scr_ref[PP:PP + H, :PP, :] = jnp.full((H, PP, C_), -jnp.inf, jnp.bfloat16)
    scr_ref[PP:PP + H, PP + W:, :] = jnp.full((H, PP, C_), -jnp.inf, jnp.bfloat16)

    # ---- cv1: 1x1 conv (+ folded BN) + SiLU; bf16 MXU, f32 accumulate ------
    x = x_ref[0].reshape(H * W, C1)                       # bf16 (cast in wrapper)
    y = jnp.dot(x, w1_ref[...], preferred_element_type=jnp.float32) + b1_ref[...]
    y = y * jax.nn.sigmoid(y)                             # SiLU, f32
    y_bf = y.astype(jnp.bfloat16)

    # ---- streamed cv2: identity-branch partial first, then one partial per
    # pooled branch (accumulated in f32).  The MXU work overlaps the pooling.
    z = jnp.dot(y_bf, w2_ref[0], preferred_element_type=jnp.float32) + b2_ref[...]

    cur = y_bf.reshape(H, W, C_)                          # bf16 map for the cascade

    # ---- cascaded 5x5 max pools (separable: W then H), SPPF-equivalent -----
    for s in range(N_STAGES):
        # current map into the scratch interior; -inf borders stay intact
        scr_ref[PP:PP + H, PP:PP + W, :] = cur
        # 1D max pool along W (sublane axis): 5 shifted windows
        # TODO(synk): optionally move these shifts onto pltpu.roll (XLU slot)
        # once C_ is lane-dense; shifted loads are fine at these sizes.
        pw = scr_ref[PP:PP + H, 0:W, :]
        for i in range(1, 2 * PP + 1):
            pw = jnp.maximum(pw, scr_ref[PP:PP + H, i:i + W, :])
        # write back at column 0 so every H-pass read is sublane-aligned
        scr_ref[PP:PP + H, 0:W, :] = pw
        ph = scr_ref[0:H, 0:W, :]
        for i in range(1, 2 * PP + 1):
            ph = jnp.maximum(ph, scr_ref[i:i + H, 0:W, :])
        # restore the left -inf border columns clobbered by the aligned writeback
        scr_ref[PP:PP + H, :PP, :] = jnp.full((H, PP, C_), -jnp.inf, jnp.bfloat16)
        # cv2 partial matmul for this branch; the branch is dropped immediately
        z += jnp.dot(ph.reshape(H * W, C_), w2_ref[s + 1],
                     preferred_element_type=jnp.float32)
        cur = ph                                          # next stage pools this map

    # ---- cv2 epilogue: SiLU + store (f32 output, matching the module) ------
    z = z * jax.nn.sigmoid(z)
    o_ref[0] = z.reshape(H, W, C2).astype(o_ref.dtype)


def _vmem_estimate(H, W, C1, C_, C2):
    """Conservative per-step VMEM bytes estimate for vmem_limit_bytes."""
    hw = H * W
    est = 0
    est += 2 * hw * C1 * 2                                   # x tile (bf16, 2 bufs)
    est += 2 * hw * C2 * 4                                   # out tile (f32, 2 bufs)
    est += 2 * (C1 * C_ * 2 + C_ * 4)                        # w1 / b1
    est += 2 * ((N_STAGES + 1) * C_ * C2 * 2 + C2 * 4)       # w2 / b2
    est += (H + 2 * PP) * (W + 2 * PP) * C_ * 2              # pooling scratch (bf16)
    est += hw * (C_ * 4 + C_ * 2 + C2 * 4 + 3 * C_ * 2)      # live temporaries
    vmem = int(est * 1.6)
    # 48 MiB cap keeps headroom on v7x (64 MiB physical); floor at the v6e
    # scoped default so larger feature maps aren't artificially squeezed.
    return max(32 * 1024 * 1024, min(48 * 1024 * 1024, vmem))


def spp_pallas(x_nhwc, w1, b1, w2, b2):
    """x_nhwc: (N, H, W, C1); w1: (C1, C_); w2: (4*C_, C2); b*: (1, C*)."""
    N, H, W, C1 = x_nhwc.shape
    C_ = w1.shape[1]
    C2 = w2.shape[1]
    assert w2.shape[0] == (N_STAGES + 1) * C_
    # TODO(synk): real SPP feature maps (W = 13 / 19 / 20) need W padded to a
    # sublane multiple (-inf pad in the pooled region, trim on output) or the
    # layout-preserving reshapes relaxed; the demo uses W = 16.
    assert W % 8 == 0, "W must be a multiple of 8 for layout-preserving reshapes"

    kernel = functools.partial(_spp_kernel, H=H, W=W, C1=C1, C_=C_, C2=C2)

    # bf16 activations + weights through the boundary (halves x / weight DMA);
    # in a full network the upstream layer should emit bf16 directly so this
    # cast fuses away.  f32 accumulation is kept inside the kernel.
    x_bf = x_nhwc.astype(jnp.bfloat16)
    w1_bf = w1.astype(jnp.bfloat16)
    w2_bf = w2.astype(jnp.bfloat16).reshape(N_STAGES + 1, C_, C2)

    # TODO(synk): for v7x (2 TCs) with N == 1, add a halo'd H row-block grid
    # axis (6-row halo, cv1 recomputed on the overlap) so both cores are busy;
    # the batch axis already shards across cores for N >= 2.
    # TODO(synk): weight/bias BlockSpecs could use pipeline_mode=pl.Buffered(1)
    # (single-buffered constants) to reclaim VMEM on v7x at YOLO sizes.
    return pl.pallas_call(
        kernel,
        out_shape=jax.ShapeDtypeStruct((N, H, W, C2), jnp.float32),
        grid_spec=pltpu.PrefetchScalarGridSpec(
            num_scalar_prefetch=0,
            grid=(N,),
            in_specs=[
                pl.BlockSpec((1, H, W, C1), lambda n: (n, 0, 0, 0)),
                pl.BlockSpec((C1, C_), lambda n: (0, 0)),
                pl.BlockSpec((1, C_), lambda n: (0, 0)),
                pl.BlockSpec((N_STAGES + 1, C_, C2), lambda n: (0, 0, 0)),
                pl.BlockSpec((1, C2), lambda n: (0, 0)),
            ],
            out_specs=pl.BlockSpec((1, H, W, C2), lambda n: (n, 0, 0, 0)),
            scratch_shapes=[
                # single merged bf16 pooling scratch, padded in both H and W
                pltpu.VMEM((H + 2 * PP, W + 2 * PP, C_), jnp.bfloat16),
            ],
        ),
        compiler_params=pltpu.CompilerParams(
            dimension_semantics=("parallel",),
            vmem_limit_bytes=_vmem_estimate(H, W, C1, C_, C2),
        ),
    )(x_bf, w1_bf, b1, w2_bf, b2)


# ---------------------------------------------------------------------------
# Parameter construction (deterministic, synthetic) and BN folding (eval mode)
# ---------------------------------------------------------------------------
def _fold_conv_bn(key, c_in, c_out):
    kw, kg, kb, km, kv = jax.random.split(key, 5)
    w = jax.random.normal(kw, (c_in, c_out), jnp.float32) * 0.1   # 1x1 conv weight
    gamma = 1.0 + 0.1 * jax.random.normal(kg, (c_out,), jnp.float32)
    beta = 0.1 * jax.random.normal(kb, (c_out,), jnp.float32)
    mean = 0.1 * jax.random.normal(km, (c_out,), jnp.float32)
    var = jnp.abs(jax.random.normal(kv, (c_out,), jnp.float32)) + 0.5
    scale = gamma / jnp.sqrt(var + BN_EPS)
    w_eff = w * scale[None, :]
    b_eff = (beta - mean * scale)[None, :]
    return w_eff, b_eff


def _spp_reference(x_nhwc, w1, b1, w2, b2):
    """Pure-JAX reference for the PyTorch SPP forward (BN folded), using the
    same bf16-input / f32-accumulate matmul quantization as the kernel."""
    xb = x_nhwc.astype(jnp.bfloat16)
    y = jnp.einsum("nhwc,cd->nhwd", xb, w1.astype(jnp.bfloat16),
                   preferred_element_type=jnp.float32) + b1[None, None]
    y = y * jax.nn.sigmoid(y)
    branches = [y]
    for k in KS:
        p = k // 2
        branches.append(lax.reduce_window(
            y, -jnp.inf, lax.max,
            window_dimensions=(1, k, k, 1), window_strides=(1, 1, 1, 1),
            padding=((0, 0), (p, p), (p, p), (0, 0))))
    cat = jnp.concatenate(branches, axis=-1).astype(jnp.bfloat16)
    z = jnp.einsum("nhwc,cd->nhwd", cat, w2.astype(jnp.bfloat16),
                   preferred_element_type=jnp.float32) + b2[None, None]
    return z * jax.nn.sigmoid(z)


if __name__ == "__main__":
    # Small shapes consistent with the module: batch=2, c1=4, c2=8, 16x16.
    N, C1, H, W = 2, 4, 16, 16
    C2 = 8
    C_ = C1 // 2

    key = jax.random.PRNGKey(0)
    kx, k1, k2 = jax.random.split(key, 3)
    x_nchw = jax.random.normal(kx, (N, C1, H, W), jnp.float32)    # PyTorch NCHW input

    w1, b1 = _fold_conv_bn(k1, C1, C_)          # cv1:  c1 -> c_
    w2, b2 = _fold_conv_bn(k2, 4 * C_, C2)      # cv2:  4*c_ -> c2

    # Glue: NCHW -> NHWC for the kernel.  In a real network keep NHWC
    # end-to-end so these HBM-pass transposes disappear.
    x_nhwc = jnp.transpose(x_nchw, (0, 2, 3, 1))
    out_nhwc = spp_pallas(x_nhwc, w1, b1, w2, b2)
    out_nchw = jnp.transpose(out_nhwc, (0, 3, 1, 2))        # back to NCHW
    out_nchw = jax.block_until_ready(out_nchw)

    ref = jnp.transpose(_spp_reference(x_nhwc, w1, b1, w2, b2), (0, 3, 1, 2))
    np.testing.assert_allclose(np.asarray(out_nchw), np.asarray(ref),
                               rtol=1e-3, atol=1e-3)
    print("KERNEL_OK")
</pallas_src>

<mosaic_0001>
module attributes {stable_mosaic.version = 11 : i64} {
  func.func @_spp_kernel(%arg0: i32, %arg1: memref<1x16x16x4xbf16, #tpu.memory_space<vmem>>, %arg2: memref<4x2xbf16, #tpu.memory_space<vmem>>, %arg3: memref<1x2xf32, #tpu.memory_space<vmem>>, %arg4: memref<4x2x8xbf16, #tpu.memory_space<vmem>>, %arg5: memref<1x8xf32, #tpu.memory_space<vmem>>, %arg6: memref<1x16x16x8xf32, #tpu.memory_space<vmem>>, %arg7: memref<20x20x2xbf16, #tpu.memory_space<vmem>>) attributes {dimension_semantics = [#tpu.dimension_semantics<parallel>], iteration_bounds = array<i64: 2>, scalar_prefetch = 0 : i64, scratch_operands = 1 : i64, tpu.core_type = #tpu.core_type<tc>, window_params = [{transform_indices = @transform_0, window_bounds = array<i64: 1, 16, 16, 4>}, {pipeline_mode = #tpu.pipeline_mode<synchronous>, transform_indices = @transform_1, window_bounds = array<i64: 4, 2>}, {pipeline_mode = #tpu.pipeline_mode<synchronous>, transform_indices = @transform_2, window_bounds = array<i64: 1, 2>}, {pipeline_mode = #tpu.pipeline_mode<synchronous>, transform_indices = @transform_3, window_bounds = array<i64: 4, 2, 8>}, {pipeline_mode = #tpu.pipeline_mode<synchronous>, transform_indices = @transform_4, window_bounds = array<i64: 1, 8>}, {transform_indices = @transform_5, window_bounds = array<i64: 1, 16, 16, 8>}]} {
    %cst = arith.constant 0xFF80 : bf16
    %0 = vector.broadcast %cst : bf16 to vector<2x20x2xbf16>
    %c0 = arith.constant 0 : index
    %c0_0 = arith.constant 0 : index
    %c0_1 = arith.constant 0 : index
    %1 = vector.load %arg7[%c0, %c0_0, %c0_1] : memref<20x20x2xbf16, #tpu.memory_space<vmem>>, vector<2x20x2xbf16>
    tpu.vector_store %arg7[%c0, %c0_0, %c0_1], %0 {strides = array<i32>} : memref<20x20x2xbf16, #tpu.memory_space<vmem>>, vector<2x20x2xbf16>,
    %cst_2 = arith.constant 0xFF80 : bf16
    %2 = vector.broadcast %cst_2 : bf16 to vector<2x20x2xbf16>
    %c18 = arith.constant 18 : index
    %c0_3 = arith.constant 0 : index
    %c0_4 = arith.constant 0 : index
    %3 = vector.load %arg7[%c18, %c0_3, %c0_4] : memref<20x20x2xbf16, #tpu.memory_space<vmem>>, vector<2x20x2xbf16>
    tpu.vector_store %arg7[%c18, %c0_3, %c0_4], %2 {strides = array<i32>} : memref<20x20x2xbf16, #tpu.memory_space<vmem>>, vector<2x20x2xbf16>,
    %cst_5 = arith.constant 0xFF80 : bf16
    %4 = vector.broadcast %cst_5 : bf16 to vector<16x2x2xbf16>
    %c2 = arith.constant 2 : index
    %c0_6 = arith.constant 0 : index
    %c0_7 = arith.constant 0 : index
    %5 = vector.load %arg7[%c2, %c0_6, %c0_7] : memref<20x20x2xbf16, #tpu.memory_space<vmem>>, vector<16x2x2xbf16>
    tpu.vector_store %arg7[%c2, %c0_6, %c0_7], %4 {strides = array<i32>} : memref<20x20x2xbf16, #tpu.memory_space<vmem>>, vector<16x2x2xbf16>,
    %cst_8 = arith.constant 0xFF80 : bf16
    %6 = vector.broadcast %cst_8 : bf16 to vector<16x2x2xbf16>
    %c2_9 = arith.constant 2 : index
    %c18_10 = arith.constant 18 : index
    %c0_11 = arith.constant 0 : index
    %7 = vector.load %arg7[%c2_9, %c18_10, %c0_11] : memref<20x20x2xbf16, #tpu.memory_space<vmem>>, vector<16x2x2xbf16>
    tpu.vector_store %arg7[%c2_9, %c18_10, %c0_11], %6 {strides = array<i32>} : memref<20x20x2xbf16, #tpu.memory_space<vmem>>, vector<16x2x2xbf16>,
    %c0_12 = arith.constant 0 : index
    %c0_13 = arith.constant 0 : index
    %c0_14 = arith.constant 0 : index
    %c0_15 = arith.constant 0 : index
    %8 = vector.load %arg1[%c0_12, %c0_13, %c0_14, %c0_15] : memref<1x16x16x4xbf16, #tpu.memory_space<vmem>>, vector<1x16x16x4xbf16>
    %9 = vector.shape_cast %8 : vector<1x16x16x4xbf16> to vector<16x16x4xbf16>
    %10 = vector.shape_cast %9 : vector<16x16x4xbf16> to vector<256x4xbf16>
    %c0_16 = arith.constant 0 : index
    %c0_17 = arith.constant 0 : index
    %11 = vector.load %arg2[%c0_16, %c0_17] : memref<4x2xbf16, #tpu.memory_space<vmem>>, vector<4x2xbf16>
    %cst_18 = arith.constant dense<0.000000e+00> : vector<256x2xf32>
    %12 = tpu.matmul %10, %11, %cst_18 {dimension_numbers = #tpu.dot_dimension_numbers<[1], [0], [0], [1], [0, 0, 1, 1], [], []>} : vector<256x4xbf16>, vector<4x2xbf16>, vector<256x2xf32> -> vector<256x2xf32>
    %c0_19 = arith.constant 0 : index
    %c0_20 = arith.constant 0 : index
    %13 = vector.load %arg3[%c0_19, %c0_20] : memref<1x2xf32, #tpu.memory_space<vmem>>, vector<1x2xf32>
    %14 = vector.broadcast %13 : vector<1x2xf32> to vector<256x2xf32>
    %15 = arith.addf %12, %14 : vector<256x2xf32>
    %16 = arith.negf %15 : vector<256x2xf32>
    %17 = math.exp %16 : vector<256x2xf32>
    %cst_21 = arith.constant 1.000000e+00 : f32
    %18 = vector.broadcast %cst_21 : f32 to vector<256x2xf32>
    %19 = arith.addf %18, %17 : vector<256x2xf32>
    %20 = arith.divf %18, %19 : vector<256x2xf32>
    %21 = arith.mulf %15, %20 : vector<256x2xf32>
    %22 = arith.truncf %21 : vector<256x2xf32> to vector<256x2xbf16>
    %c0_22 = arith.constant 0 : index
    %c0_23 = arith.constant 0 : index
    %c0_24 = arith.constant 0 : index
    %23 = vector.load %arg4[%c0_22, %c0_23, %c0_24] : memref<4x2x8xbf16, #tpu.memory_space<vmem>>, vector<1x2x8xbf16>
    %24 = vector.shape_cast %23 : vector<1x2x8xbf16> to vector<2x8xbf16>
    %cst_25 = arith.constant dense<0.000000e+00> : vector<256x8xf32>
    %25 = tpu.matmul %22, %24, %cst_25 {dimension_numbers = #tpu.dot_dimension_numbers<[1], [0], [0], [1], [0, 0, 1, 1], [], []>} : vector<256x2xbf16>, vector<2x8xbf16>, vector<256x8xf32> -> vector<256x8xf32>
    %c0_26 = arith.constant 0 : index
    %c0_27 = arith.constant 0 : index
    %26 = vector.load %arg5[%c0_26, %c0_27] : memref<1x8xf32, #tpu.memory_space<vmem>>, vector<1x8xf32>
    %27 = vector.broadcast %26 : vector<1x8xf32> to vector<256x8xf32>
    %28 = arith.addf %25, %27 : vector<256x8xf32>
    %29 = vector.shape_cast %22 : vector<256x2xbf16> to vector<16x16x2xbf16>
    %c2_28 = arith.constant 2 : index
    %c2_29 = arith.constant 2 : index
    %c0_30 = arith.constant 0 : index
    %30 = vector.load %arg7[%c2_28, %c2_29, %c0_30] : memref<20x20x2xbf16, #tpu.memory_space<vmem>>, vector<16x16x2xbf16>
    tpu.vector_store %arg7[%c2_28, %c2_29, %c0_30], %29 {strides = array<i32>} : memref<20x20x2xbf16, #tpu.memory_space<vmem>>, vector<16x16x2xbf16>,
    %c2_31 = arith.constant 2 : index
    %c0_32 = arith.constant 0 : index
    %c0_33 = arith.constant 0 : index
    %31 = vector.load %arg7[%c2_31, %c0_32, %c0_33] : memref<20x20x2xbf16, #tpu.memory_space<vmem>>, vector<16x16x2xbf16>
    %c2_34 = arith.constant 2 : index
    %c1 = arith.constant 1 : index
    %c0_35 = arith.constant 0 : index
    %32 = vector.load %arg7[%c2_34, %c1, %c0_35] : memref<20x20x2xbf16, #tpu.memory_space<vmem>>, vector<16x16x2xbf16>
    %33 = arith.maximumf %31, %32 : vector<16x16x2xbf16>
    %c2_36 = arith.constant 2 : index
    %c2_37 = arith.constant 2 : index
    %c0_38 = arith.constant 0 : index
    %34 = vector.load %arg7[%c2_36, %c2_37, %c0_38] : memref<20x20x2xbf16, #tpu.memory_space<vmem>>, vector<16x16x2xbf16>
    %35 = arith.maximumf %33, %34 : vector<16x16x2xbf16>
    %c2_39 = arith.constant 2 : index
    %c3 = arith.constant 3 : index
    %c0_40 = arith.constant 0 : index
    %36 = vector.load %arg7[%c2_39, %c3, %c0_40] : memref<20x20x2xbf16, #tpu.memory_space<vmem>>, vector<16x16x2xbf16>
    %37 = arith.maximumf %35, %36 : vector<16x16x2xbf16>
    %c2_41 = arith.constant 2 : index
    %c4 = arith.constant 4 : index
    %c0_42 = arith.constant 0 : index
    %38 = vector.load %arg7[%c2_41, %c4, %c0_42] : memref<20x20x2xbf16, #tpu.memory_space<vmem>>, vector<16x16x2xbf16>
    %39 = arith.maximumf %37, %38 : vector<16x16x2xbf16>
    %c2_43 = arith.constant 2 : index
    %c0_44 = arith.constant 0 : index
    %c0_45 = arith.constant 0 : index
    %40 = vector.load %arg7[%c2_43, %c0_44, %c0_45] : memref<20x20x2xbf16, #tpu.memory_space<vmem>>, vector<16x16x2xbf16>
    tpu.vector_store %arg7[%c2_43, %c0_44, %c0_45], %39 {strides = array<i32>} : memref<20x20x2xbf16, #tpu.memory_space<vmem>>, vector<16x16x2xbf16>,
    %c0_46 = arith.constant 0 : index
    %c0_47 = arith.constant 0 : index
    %c0_48 = arith.constant 0 : index
    %41 = vector.load %arg7[%c0_46, %c0_47, %c0_48] : memref<20x20x2xbf16, #tpu.memory_space<vmem>>, vector<16x16x2xbf16>
    %c1_49 = arith.constant 1 : index
    %c0_50 = arith.constant 0 : index
    %c0_51 = arith.constant 0 : index
    %42 = vector.load %arg7[%c1_49, %c0_50, %c0_51] : memref<20x20x2xbf16, #tpu.memory_space<vmem>>, vector<16x16x2xbf16>
    %43 = arith.maximumf %41, %42 : vector<16x16x2xbf16>
    %c2_52 = arith.constant 2 : index
    %c0_53 = arith.constant 0 : index
    %c0_54 = arith.constant 0 : index
    %44 = vector.load %arg7[%c2_52, %c0_53, %c0_54] : memref<20x20x2xbf16, #tpu.memory_space<vmem>>, vector<16x16x2xbf16>
    %45 = arith.maximumf %43, %44 : vector<16x16x2xbf16>
    %c3_55 = arith.constant 3 : index
    %c0_56 = arith.constant 0 : index
    %c0_57 = arith.constant 0 : index
    %46 = vector.load %arg7[%c3_55, %c0_56, %c0_57] : memref<20x20x2xbf16, #tpu.memory_space<vmem>>, vector<16x16x2xbf16>
    %47 = arith.maximumf %45, %46 : vector<16x16x2xbf16>
    %c4_58 = arith.constant 4 : index
    %c0_59 = arith.constant 0 : index
    %c0_60 = arith.constant 0 : index
    %48 = vector.load %arg7[%c4_58, %c0_59, %c0_60] : memref<20x20x2xbf16, #tpu.memory_space<vmem>>, vector<16x16x2xbf16>
    %49 = arith.maximumf %47, %48 : vector<16x16x2xbf16>
    %cst_61 = arith.constant 0xFF80 : bf16
    %50 = vector.broadcast %cst_61 : bf16 to vector<16x2x2xbf16>
    %c2_62 = arith.constant 2 : index
    %c0_63 = arith.constant 0 : index
    %c0_64 = arith.constant 0 : index
    %51 = vector.load %arg7[%c2_62, %c0_63, %c0_64] : memref<20x20x2xbf16, #tpu.memory_space<vmem>>, vector<16x2x2xbf16>
    tpu.vector_store %arg7[%c2_62, %c0_63, %c0_64], %50 {strides = array<i32>} : memref<20x20x2xbf16, #tpu.memory_space<vmem>>, vector<16x2x2xbf16>,
    %52 = vector.shape_cast %49 : vector<16x16x2xbf16> to vector<256x2xbf16>
    %c1_65 = arith.constant 1 : index
    %c0_66 = arith.constant 0 : index
    %c0_67 = arith.constant 0 : index
    %53 = vector.load %arg4[%c1_65, %c0_66, %c0_67] : memref<4x2x8xbf16, #tpu.memory_space<vmem>>, vector<1x2x8xbf16>
    %54 = vector.shape_cast %53 : vector<1x2x8xbf16> to vector<2x8xbf16>
    %cst_68 = arith.constant dense<0.000000e+00> : vector<256x8xf32>
    %55 = tpu.matmul %52, %54, %cst_68 {dimension_numbers = #tpu.dot_dimension_numbers<[1], [0], [0], [1], [0, 0, 1, 1], [], []>} : vector<256x2xbf16>, vector<2x8xbf16>, vector<256x8xf32> -> vector<256x8xf32>
    %56 = arith.addf %28, %55 : vector<256x8xf32>
    %c2_69 = arith.constant 2 : index
    %c2_70 = arith.constant 2 : index
    %c0_71 = arith.constant 0 : index
    %57 = vector.load %arg7[%c2_69, %c2_70, %c0_71] : memref<20x20x2xbf16, #tpu.memory_space<vmem>>, vector<16x16x2xbf16>
    tpu.vector_store %arg7[%c2_69, %c2_70, %c0_71], %49 {strides = array<i32>} : memref<20x20x2xbf16, #tpu.memory_space<vmem>>, vector<16x16x2xbf16>,
    %c2_72 = arith.constant 2 : index
    %c0_73 = arith.constant 0 : index
    %c0_74 = arith.constant 0 : index
    %58 = vector.load %arg7[%c2_72, %c0_73, %c0_74] : memref<20x20x2xbf16, #tpu.memory_space<vmem>>, vector<16x16x2xbf16>
    %c2_75 = arith.constant 2 : index
    %c1_76 = arith.constant 1 : index
    %c0_77 = arith.constant 0 : index
    %59 = vector.load %arg7[%c2_75, %c1_76, %c0_77] : memref<20x20x2xbf16, #tpu.memory_space<vmem>>, vector<16x16x2xbf16>
    %60 = arith.maximumf %58, %59 : vector<16x16x2xbf16>
    %c2_78 = arith.constant 2 : index
    %c2_79 = arith.constant 2 : index
    %c0_80 = arith.constant 0 : index
    %61 = vector.load %arg7[%c2_78, %c2_79, %c0_80] : memref<20x20x2xbf16, #tpu.memory_space<vmem>>, vector<16x16x2xbf16>
    %62 = arith.maximumf %60, %61 : vector<16x16x2xbf16>
    %c2_81 = arith.constant 2 : index
    %c3_82 = arith.constant 3 : index
    %c0_83 = arith.constant 0 : index
    %63 = vector.load %arg7[%c2_81, %c3_82, %c0_83] : memref<20x20x2xbf16, #tpu.memory_space<vmem>>, vector<16x16x2xbf16>
    %64 = arith.maximumf %62, %63 : vector<16x16x2xbf16>
    %c2_84 = arith.constant 2 : index
    %c4_85 = arith.constant 4 : index
    %c0_86 = arith.constant 0 : index
    %65 = vector.load %arg7[%c2_84, %c4_85, %c0_86] : memref<20x20x2xbf16, #tpu.memory_space<vmem>>, vector<16x16x2xbf16>
    %66 = arith.maximumf %64, %65 : vector<16x16x2xbf16>
    %c2_87 = arith.constant 2 : index
    %c0_88 = arith.constant 0 : index
    %c0_89 = arith.constant 0 : index
    %67 = vector.load %arg7[%c2_87, %c0_88, %c0_89] : memref<20x20x2xbf16, #tpu.memory_space<vmem>>, vector<16x16x2xbf16>
    tpu.vector_store %arg7[%c2_87, %c0_88, %c0_89], %66 {strides = array<i32>} : memref<20x20x2xbf16, #tpu.memory_space<vmem>>, vector<16x16x2xbf16>,
    %c0_90 = arith.constant 0 : index
    %c0_91 = arith.constant 0 : index
    %c0_92 = arith.constant 0 : index
    %68 = vector.load %arg7[%c0_90, %c0_91, %c0_92] : memref<20x20x2xbf16, #tpu.memory_space<vmem>>, vector<16x16x2xbf16>
    %c1_93 = arith.constant 1 : index
    %c0_94 = arith.constant 0 : index
    %c0_95 = arith.constant 0 : index
    %69 = vector.load %arg7[%c1_93, %c0_94, %c0_95] : memref<20x20x2xbf16, #tpu.memory_space<vmem>>, vector<16x16x2xbf16>
    %70 = arith.maximumf %68, %69 : vector<16x16x2xbf16>
    %c2_96 = arith.constant 2 : index
    %c0_97 = arith.constant 0 : index
    %c0_98 = arith.constant 0 : index
    %71 = vector.load %arg7[%c2_96, %c0_97, %c0_98] : memref<20x20x2xbf16, #tpu.memory_space<vmem>>, vector<16x16x2xbf16>
    %72 = arith.maximumf %70, %71 : vector<16x16x2xbf16>
    %c3_99 = arith.constant 3 : index
    %c0_100 = arith.constant 0 : index
    %c0_101 = arith.constant 0 : index
    %73 = vector.load %arg7[%c3_99, %c0_100, %c0_101] : memref<20x20x2xbf16, #tpu.memory_space<vmem>>, vector<16x16x2xbf16>
    %74 = arith.maximumf %72, %73 : vector<16x16x2xbf16>
    %c4_102 = arith.constant 4 : index
    %c0_103 = arith.constant 0 : index
    %c0_104 = arith.constant 0 : index
    %75 = vector.load %arg7[%c4_102, %c0_103, %c0_104] : memref<20x20x2xbf16, #tpu.memory_space<vmem>>, vector<16x16x2xbf16>
    %76 = arith.maximumf %74, %75 : vector<16x16x2xbf16>
    %cst_105 = arith.constant 0xFF80 : bf16
    %77 = vector.broadcast %cst_105 : bf16 to vector<16x2x2xbf16>
    %c2_106 = arith.constant 2 : index
    %c0_107 = arith.constant 0 : index
    %c0_108 = arith.constant 0 : index
    %78 = vector.load %arg7[%c2_106, %c0_107, %c0_108] : memref<20x20x2xbf16, #tpu.memory_space<vmem>>, vector<16x2x2xbf16>
    tpu.vector_store %arg7[%c2_106, %c0_107, %c0_108], %77 {strides = array<i32>} : memref<20x20x2xbf16, #tpu.memory_space<vmem>>, vector<16x2x2xbf16>,
    %79 = vector.shape_cast %76 : vector<16x16x2xbf16> to vector<256x2xbf16>
    %c2_109 = arith.constant 2 : index
    %c0_110 = arith.constant 0 : index
    %c0_111 = arith.constant 0 : index
    %80 = vector.load %arg4[%c2_109, %c0_110, %c0_111] : memref<4x2x8xbf16, #tpu.memory_space<vmem>>, vector<1x2x8xbf16>
    %81 = vector.shape_cast %80 : vector<1x2x8xbf16> to vector<2x8xbf16>
    %cst_112 = arith.constant dense<0.000000e+00> : vector<256x8xf32>
    %82 = tpu.matmul %79, %81, %cst_112 {dimension_numbers = #tpu.dot_dimension_numbers<[1], [0], [0], [1], [0, 0, 1, 1], [], []>} : vector<256x2xbf16>, vector<2x8xbf16>, vector<256x8xf32> -> vector<256x8xf32>
    %83 = arith.addf %56, %82 : vector<256x8xf32>
    %c2_113 = arith.constant 2 : index
    %c2_114 = arith.constant 2 : index
    %c0_115 = arith.constant 0 : index
    %84 = vector.load %arg7[%c2_113, %c2_114, %c0_115] : memref<20x20x2xbf16, #tpu.memory_space<vmem>>, vector<16x16x2xbf16>
    tpu.vector_store %arg7[%c2_113, %c2_114, %c0_115], %76 {strides = array<i32>} : memref<20x20x2xbf16, #tpu.memory_space<vmem>>, vector<16x16x2xbf16>,
    %c2_116 = arith.constant 2 : index
    %c0_117 = arith.constant 0 : index
    %c0_118 = arith.constant 0 : index
    %85 = vector.load %arg7[%c2_116, %c0_117, %c0_118] : memref<20x20x2xbf16, #tpu.memory_space<vmem>>, vector<16x16x2xbf16>
    %c2_119 = arith.constant 2 : index
    %c1_120 = arith.constant 1 : index
    %c0_121 = arith.constant 0 : index
    %86 = vector.load %arg7[%c2_119, %c1_120, %c0_121] : memref<20x20x2xbf16, #tpu.memory_space<vmem>>, vector<16x16x2xbf16>
    %87 = arith.maximumf %85, %86 : vector<16x16x2xbf16>
    %c2_122 = arith.constant 2 : index
    %c2_123 = arith.constant 2 : index
    %c0_124 = arith.constant 0 : index
    %88 = vector.load %arg7[%c2_122, %c2_123, %c0_124] : memref<20x20x2xbf16, #tpu.memory_space<vmem>>, vector<16x16x2xbf16>
    %89 = arith.maximumf %87, %88 : vector<16x16x2xbf16>
    %c2_125 = arith.constant 2 : index
    %c3_126 = arith.constant 3 : index
    %c0_127 = arith.constant 0 : index
    %90 = vector.load %arg7[%c2_125, %c3_126, %c0_127] : memref<20x20x2xbf16, #tpu.memory_space<vmem>>, vector<16x16x2xbf16>
    %91 = arith.maximumf %89, %90 : vector<16x16x2xbf16>
    %c2_128 = arith.constant 2 : index
    %c4_129 = arith.constant 4 : index
    %c0_130 = arith.constant 0 : index
    %92 = vector.load %arg7[%c2_128, %c4_129, %c0_130] : memref<20x20x2xbf16, #tpu.memory_space<vmem>>, vector<16x16x2xbf16>
    %93 = arith.maximumf %91, %92 : vector<16x16x2xbf16>
    %c2_131 = arith.constant 2 : index
    %c0_132 = arith.constant 0 : index
    %c0_133 = arith.constant 0 : index
    %94 = vector.load %arg7[%c2_131, %c0_132, %c0_133] : memref<20x20x2xbf16, #tpu.memory_space<vmem>>, vector<16x16x2xbf16>
    tpu.vector_store %arg7[%c2_131, %c0_132, %c0_133], %93 {strides = array<i32>} : memref<20x20x2xbf16, #tpu.memory_space<vmem>>, vector<16x16x2xbf16>,
    %c0_134 = arith.constant 0 : index
    %c0_135 = arith.constant 0 : index
    %c0_136 = arith.constant 0 : index
    %95 = vector.load %arg7[%c0_134, %c0_135, %c0_136] : memref<20x20x2xbf16, #tpu.memory_space<vmem>>, vector<16x16x2xbf16>
    %c1_137 = arith.constant 1 : index
    %c0_138 = arith.constant 0 : index
    %c0_139 = arith.constant 0 : index
    %96 = vector.load %arg7[%c1_137, %c0_138, %c0_139] : memref<20x20x2xbf16, #tpu.memory_space<vmem>>, vector<16x16x2xbf16>
    %97 = arith.maximumf %95, %96 : vector<16x16x2xbf16>
    %c2_140 = arith.constant 2 : index
    %c0_141 = arith.constant 0 : index
    %c0_142 = arith.constant 0 : index
    %98 = vector.load %arg7[%c2_140, %c0_141, %c0_142] : memref<20x20x2xbf16, #tpu.memory_space<vmem>>, vector<16x16x2xbf16>
    %99 = arith.maximumf %97, %98 : vector<16x16x2xbf16>
    %c3_143 = arith.constant 3 : index
    %c0_144 = arith.constant 0 : index
    %c0_145 = arith.constant 0 : index
    %100 = vector.load %arg7[%c3_143, %c0_144, %c0_145] : memref<20x20x2xbf16, #tpu.memory_space<vmem>>, vector<16x16x2xbf16>
    %101 = arith.maximumf %99, %100 : vector<16x16x2xbf16>
    %c4_146 = arith.constant 4 : index
    %c0_147 = arith.constant 0 : index
    %c0_148 = arith.constant 0 : index
    %102 = vector.load %arg7[%c4_146, %c0_147, %c0_148] : memref<20x20x2xbf16, #tpu.memory_space<vmem>>, vector<16x16x2xbf16>
    %103 = arith.maximumf %101, %102 : vector<16x16x2xbf16>
    %cst_149 = arith.constant 0xFF80 : bf16
    %104 = vector.broadcast %cst_149 : bf16 to vector<16x2x2xbf16>
    %c2_150 = arith.constant 2 : index
    %c0_151 = arith.constant 0 : index
    %c0_152 = arith.constant 0 : index
    %105 = vector.load %arg7[%c2_150, %c0_151, %c0_152] : memref<20x20x2xbf16, #tpu.memory_space<vmem>>, vector<16x2x2xbf16>
    tpu.vector_store %arg7[%c2_150, %c0_151, %c0_152], %104 {strides = array<i32>} : memref<20x20x2xbf16, #tpu.memory_space<vmem>>, vector<16x2x2xbf16>,
    %106 = vector.shape_cast %103 : vector<16x16x2xbf16> to vector<256x2xbf16>
    %c3_153 = arith.constant 3 : index
    %c0_154 = arith.constant 0 : index
    %c0_155 = arith.constant 0 : index
    %107 = vector.load %arg4[%c3_153, %c0_154, %c0_155] : memref<4x2x8xbf16, #tpu.memory_space<vmem>>, vector<1x2x8xbf16>
    %108 = vector.shape_cast %107 : vector<1x2x8xbf16> to vector<2x8xbf16>
    %cst_156 = arith.constant dense<0.000000e+00> : vector<256x8xf32>
    %109 = tpu.matmul %106, %108, %cst_156 {dimension_numbers = #tpu.dot_dimension_numbers<[1], [0], [0], [1], [0, 0, 1, 1], [], []>} : vector<256x2xbf16>, vector<2x8xbf16>, vector<256x8xf32> -> vector<256x8xf32>
    %110 = arith.addf %83, %109 : vector<256x8xf32>
    %111 = arith.negf %110 : vector<256x8xf32>
    %112 = math.exp %111 : vector<256x8xf32>
    %cst_157 = arith.constant 1.000000e+00 : f32
    %113 = vector.broadcast %cst_157 : f32 to vector<256x8xf32>
    %114 = arith.addf %113, %112 : vector<256x8xf32>
    %115 = arith.divf %113, %114 : vector<256x8xf32>
    %116 = arith.mulf %110, %115 : vector<256x8xf32>
    %117 = vector.shape_cast %116 : vector<256x8xf32> to vector<16x16x8xf32>
    %c0_158 = arith.constant 0 : index
    %c0_159 = arith.constant 0 : index
    %c0_160 = arith.constant 0 : index
    %c0_161 = arith.constant 0 : index
    %118 = vector.load %arg6[%c0_158, %c0_159, %c0_160, %c0_161] : memref<1x16x16x8xf32, #tpu.memory_space<vmem>>, vector<1x16x16x8xf32>
    %119 = vector.shape_cast %118 : vector<1x16x16x8xf32> to vector<16x16x8xf32>
    %120 = vector.shape_cast %117 : vector<16x16x8xf32> to vector<1x16x16x8xf32>
    tpu.vector_store %arg6[%c0_158, %c0_159, %c0_160, %c0_161], %120 {strides = array<i32>} : memref<1x16x16x8xf32, #tpu.memory_space<vmem>>, vector<1x16x16x8xf32>,
    return
  }
  func.func @transform_0(%arg0: i32) -> (i32, i32, i32, i32) {
    %c0_i32 = arith.constant 0 : i32
    %c0_i32_0 = arith.constant 0 : i32
    %c0_i32_1 = arith.constant 0 : i32
    %c0_i32_2 = arith.constant 0 : i32
    return %arg0, %c0_i32, %c0_i32_0, %c0_i32_1 : i32, i32, i32, i32
  }
  func.func @transform_1(%arg0: i32) -> (i32, i32) {
    %c0_i32 = arith.constant 0 : i32
    %c0_i32_0 = arith.constant 0 : i32
    %c0_i32_1 = arith.constant 0 : i32
    return %c0_i32, %c0_i32_0 : i32, i32
  }
  func.func @transform_2(%arg0: i32) -> (i32, i32) {
    %c0_i32 = arith.constant 0 : i32
    %c0_i32_0 = arith.constant 0 : i32
    %c0_i32_1 = arith.constant 0 : i32
    return %c0_i32, %c0_i32_0 : i32, i32
  }
  func.func @transform_3(%arg0: i32) -> (i32, i32, i32) {
    %c0_i32 = arith.constant 0 : i32
    %c0_i32_0 = arith.constant 0 : i32
    %c0_i32_1 = arith.constant 0 : i32
    %c0_i32_2 = arith.constant 0 : i32
    return %c0_i32, %c0_i32_0, %c0_i32_1 : i32, i32, i32
  }
  func.func @transform_4(%arg0: i32) -> (i32, i32) {
    %c0_i32 = arith.constant 0 : i32
    %c0_i32_0 = arith.constant 0 : i32
    %c0_i32_1 = arith.constant 0 : i32
    return %c0_i32, %c0_i32_0 : i32, i32
  }
  func.func @transform_5(%arg0: i32) -> (i32, i32, i32, i32) {
    %c0_i32 = arith.constant 0 : i32
    %c0_i32_0 = arith.constant 0 : i32
    %c0_i32_1 = arith.constant 0 : i32
    %c0_i32_2 = arith.constant 0 : i32
    return %arg0, %c0_i32, %c0_i32_0, %c0_i32_1 : i32, i32, i32, i32
  }
}

</mosaic_0001>

<llo_original>
// kernel: tpu_custom_call.1
$region0: #{tpu_custom_call.1}
  #allocation0 [shape = 'u32[]', space=smem, size = 0x4, offset = 0x4, fixed_abs, tag = 'smem constant byte address 0x4 - core index']
  #allocation1 [shape = 'u32[144,128]{1,0:T(1,128)}', space=vmem, size = 0x12000, scoped, tag = 'internal scratch']
  #allocation2 [shape = 'bf16[20,20,2]{2,1,0:T(8,128)(2,1)}', space=vmem, size = 0x1e000, scoped, tag = 'scratch operand']
  %s0 = inlined_call_operand.vmem [shape: bf16[2,16,16,4], index: 0, kind: input, shape index: {}]
  %s1 = inlined_call_operand.vmem [shape: bf16[4,2], index: 1, kind: input, shape index: {}]
  %s2 = inlined_call_operand.vmem [shape: f32[1,2], index: 2, kind: input, shape index: {}]
  %s3 = inlined_call_operand.vmem [shape: bf16[4,2,8], index: 3, kind: input, shape index: {}]
  %s4 = inlined_call_operand.vmem [shape: f32[1,8], index: 4, kind: input, shape index: {}]
  %s5 = inlined_call_operand.vmem [shape: f32[2,16,16,8], index: 5, kind: output, shape index: {}]
  %s6 = sld [smem:[#allocation0]]
  $region53: #{tpu_custom_call.1} parent=0
    _
  %s8 = ssub.s32 1, %s6
  %s9 = scalar_select 0, %s8, %s6
  loop: start=0, step=1, limit=4
  $region2: #{tpu_custom_call.1} parent=0 // loop_pre_header
    _
  $region3: #{tpu_custom_call.1} parent=0 // loop_header
    %s11 = sphi 0, %s15
    %p12 = scmp.ge.s32.totalorder %s11, 4
    %s21 = sphi 0, %s23
    %s24 = sphi 0, %s21
    %s25 = sphi 0, %s24
    %s41 = sphi 0, %s25
    %s45 = sphi 0, %s45
    %s47 = sphi 0, %s45
    %s48 = sphi 0, %s47
    %s62 = sphi 0, %s48
    %s66 = sphi 0, %s66
    %s68 = sphi 0, %s66
    %s69 = sphi 0, %s68
    %s83 = sphi 0, %s69
    %s87 = sphi 0, %s87
    %s89 = sphi 0, %s87
    %s90 = sphi 0, %s89
    %s104 = sphi 0, %s90
    %s108 = sphi 0, %s108
    %s110 = sphi 0, %s108
    %s111 = sphi 0, %s110
    %s125 = sphi 0, %s111
    %s131 = sphi 0, %s133
    %s134 = sphi 0, %s131
    %s135 = sphi 0, %s134
    %s151 = sphi 0, %s135
  $region4: #{tpu_custom_call.1} parent=0 // loop_header_branch
    %14 = sbr.rel (%p12) target = $region8
  $region5: #{tpu_custom_call.1} parent=0 // loop_body
    %s16 = ssub.s32 %s11, 1
    %s17 = ssub.s32 %s11, 2
    %s18 = sadd.s32 %s11, 1
    %s19 = ssub.s32 %s11, %s18
    %p20 = scmp.eq.s32.totalorder %s19, 0
    %s22 = sadd.s32 %s21, 1
    %s23 = scalar_select %p20, %s21, %s22
    %p26 = pneg %p20
    %p27 = scmp.eq.s32.totalorder %s11, 1
    %p28 = por %p26, %p27
    %p29 = scmp.ne.s32.totalorder %s21, %s24
    %p30 = scmp.eq.s32.totalorder %s11, 0
    %p31 = por %p29, %p30
    %p32 = scmp.ne.s32.totalorder %s21, %s24
    %p33 = scmp.eq.s32.totalorder %s16, 1
    %p34 = por %p32, %p33
    %p35 = scmp.ne.s32.totalorder %s24, %s25
    %p36 = scmp.eq.s32.totalorder %s16, 0
    %p37 = por %p35, %p36
    %p38 = scmp.ne.s32.totalorder %s24, %s25
    %p39 = scmp.eq.s32.totalorder %s17, 1
    %p40 = por %p38, %p39
    %p42 = scmp.ne.s32.totalorder %s25, %s41
    %p43 = scmp.eq.s32.totalorder %s17, 0
    %p44 = por %p42, %p43
    %s46 = sadd.s32 %s45, 1
    %p49 = scmp.eq.s32.totalorder %s11, 1
    %p50 = scmp.ne.s32.totalorder %s45, %s47
    %p51 = scmp.eq.s32.totalorder %s11, 0
    %p52 = por %p50, %p51
    %p53 = scmp.ne.s32.totalorder %s45, %s47
    %p54 = scmp.eq.s32.totalorder %s16, 1
    %p55 = por %p53, %p54
    %p56 = scmp.ne.s32.totalorder %s47, %s48
    %p57 = scmp.eq.s32.totalorder %s16, 0
    %p58 = por %p56, %p57
    %p59 = scmp.ne.s32.totalorder %s47, %s48
    %p60 = scmp.eq.s32.totalorder %s17, 1
    %p61 = por %p59, %p60
    %p63 = scmp.ne.s32.totalorder %s48, %s62
    %p64 = scmp.eq.s32.totalorder %s17, 0
    %p65 = por %p63, %p64
    %s67 = sadd.s32 %s66, 1
    %p70 = scmp.eq.s32.totalorder %s11, 1
    %p71 = scmp.ne.s32.totalorder %s66, %s68
    %p72 = scmp.eq.s32.totalorder %s11, 0
    %p73 = por %p71, %p72
    %p74 = scmp.ne.s32.totalorder %s66, %s68
    %p75 = scmp.eq.s32.totalorder %s16, 1
    %p76 = por %p74, %p75
    %p77 = scmp.ne.s32.totalorder %s68, %s69
    %p78 = scmp.eq.s32.totalorder %s16, 0
    %p79 = por %p77, %p78
    %p80 = scmp.ne.s32.totalorder %s68, %s69
    %p81 = scmp.eq.s32.totalorder %s17, 1
    %p82 = por %p80, %p81
    %p84 = scmp.ne.s32.totalorder %s69, %s83
    %p85 = scmp.eq.s32.totalorder %s17, 0
    %p86 = por %p84, %p85
    %s88 = sadd.s32 %s87, 1
    %p91 = scmp.eq.s32.totalorder %s11, 1
    %p92 = scmp.ne.s32.totalorder %s87, %s89
    %p93 = scmp.eq.s32.totalorder %s11, 0
    %p94 = por %p92, %p93
    %p95 = scmp.ne.s32.totalorder %s87, %s89
    %p96 = scmp.eq.s32.totalorder %s16, 1
    %p97 = por %p95, %p96
    %p98 = scmp.ne.s32.totalorder %s89, %s90
    %p99 = scmp.eq.s32.totalorder %s16, 0
    %p100 = por %p98, %p99
    %p101 = scmp.ne.s32.totalorder %s89, %s90
    %p102 = scmp.eq.s32.totalorder %s17, 1
    %p103 = por %p101, %p102
    %p105 = scmp.ne.s32.totalorder %s90, %s104
    %p106 = scmp.eq.s32.totalorder %s17, 0
    %p107 = por %p105, %p106
    %s109 = sadd.s32 %s108, 1
    %p112 = scmp.eq.s32.totalorder %s11, 1
    %p113 = scmp.ne.s32.totalorder %s108, %s110
    %p114 = scmp.eq.s32.totalorder %s11, 0
    %p115 = por %p113, %p114
    %p116 = scmp.ne.s32.totalorder %s108, %s110
    %p117 = scmp.eq.s32.totalorder %s16, 1
    %p118 = por %p116, %p117
    %p119 = scmp.ne.s32.totalorder %s110, %s111
    %p120 = scmp.eq.s32.totalorder %s16, 0
    %p121 = por %p119, %p120
    %p122 = scmp.ne.s32.totalorder %s110, %s111
    %p123 = scmp.eq.s32.totalorder %s17, 1
    %p124 = por %p122, %p123
    %p126 = scmp.ne.s32.totalorder %s111, %s125
    %p127 = scmp.eq.s32.totalorder %s17, 0
    %p128 = por %p126, %p127
    %s129 = ssub.s32 %s11, %s18
    %p130 = scmp.eq.s32.totalorder %s129, 0
    %s132 = sadd.s32 %s131, 1
    %s133 = scalar_select %p130, %s131, %s132
    %p136 = pneg %p130
    %p137 = scmp.eq.s32.totalorder %s11, 1
    %p138 = por %p136, %p137
    %p139 = scmp.ne.s32.totalorder %s131, %s134
    %p140 = scmp.eq.s32.totalorder %s11, 0
    %p141 = por %p139, %p140
    %p142 = scmp.ne.s32.totalorder %s131, %s134
    %p143 = scmp.eq.s32.totalorder %s16, 1
    %p144 = por %p142, %p143
    %p145 = scmp.ne.s32.totalorder %s134, %s135
    %p146 = scmp.eq.s32.totalorder %s16, 0
    %p147 = por %p145, %p146
    %p148 = scmp.ne.s32.totalorder %s134, %s135
    %p149 = scmp.eq.s32.totalorder %s17, 1
    %p150 = por %p148, %p149
    %p152 = scmp.ne.s32.totalorder %s135, %s151
    %p153 = scmp.eq.s32.totalorder %s17, 0
    %p154 = por %p152, %p153
    %p155 = scmp.le.s32.totalorder 1, %s11
    %p156 = scmp.lt.s32.totalorder %s11, 3
    %p157 = pnand %p155, %p156
    %p158 = pneg %p157
    // Predicated region
    $region9: #{tpu_custom_call.1} parent=5 // pred_check
      _
    $region10: #{tpu_custom_call.1} parent=5 // pred_check_branch
      %160 = sbr.rel (%p157) target = $region12
    $region11: #{tpu_custom_call.1} parent=5 // pred_region
      %s161 = ssub.s32 %s11, 1
      // Predicated region
      $region13: #{tpu_custom_call.1} parent=11 // pred_check
        %p162 = pneg %p58
      $region14: #{tpu_custom_call.1} parent=11 // pred_check_branch
        %164 = sbr.rel (%p162) target = $region16
      $region15: #{tpu_custom_call.1} parent=11 // pred_region
        _
      $region16: #{tpu_custom_call.1} parent=11 // pred_fallthru
        _
      // Predicated region
      $region17: #{tpu_custom_call.1} parent=11 // pred_check
        %p165 = pneg %p79
      $region18: #{tpu_custom_call.1} parent=11 // pred_check_branch
        %167 = sbr.rel (%p165) target = $region20
      $region19: #{tpu_custom_call.1} parent=11 // pred_region
        _
      $region20: #{tpu_custom_call.1} parent=11 // pred_fallthru
        _
      // Predicated region
      $region21: #{tpu_custom_call.1} parent=11 // pred_check
        %p168 = pneg %p100
      $region22: #{tpu_custom_call.1} parent=11 // pred_check_branch
        %170 = sbr.rel (%p168) target = $region24
      $region23: #{tpu_custom_call.1} parent=11 // pred_region
        _
      $region24: #{tpu_custom_call.1} parent=11 // pred_fallthru
        _
      // Predicated region
      $region25: #{tpu_custom_call.1} parent=11 // pred_check
        %p171 = pneg %p121
      $region26: #{tpu_custom_call.1} parent=11 // pred_check_branch
        %173 = sbr.rel (%p171) target = $region28
      $region27: #{tpu_custom_call.1} parent=11 // pred_region
        _
      $region28: #{tpu_custom_call.1} parent=11 // pred_fallthru
        _
    $region12: #{tpu_custom_call.1} parent=5 // pred_fallthru
      _
    %p174 = scmp.lt.s32.totalorder %s11, 2
    // Predicated region
    $region29: #{tpu_custom_call.1} parent=5 // pred_check
      %p175 = pneg %p174
    $region30: #{tpu_custom_call.1} parent=5 // pred_check_branch
      %177 = sbr.rel (%p175) target = $region32
    $region31: #{tpu_custom_call.1} parent=5 // pred_region
      // Predicated region
      $region33: #{tpu_custom_call.1} parent=31 // pred_check
        %p178 = pneg %p31
      $region34: #{tpu_custom_call.1} parent=31 // pred_check_branch
        %180 = sbr.rel (%p178) target = $region36
      $region35: #{tpu_custom_call.1} parent=31 // pred_region
        %p181 = scmp.lt.s32.totalorder %s11, 1
        %s182 = scalar_select %p181, %s11, 1
        %s183 = smul.addr %s182, 32
        %s184 = smul.addr %s183, 4
        %s185 = scalar_lea.vmem %s0, %s184
      $region36: #{tpu_custom_call.1} parent=31 // pred_fallthru
        _
    $region32: #{tpu_custom_call.1} parent=5 // pred_fallthru
      _
    %p186 = scmp.le.s32.totalorder 1, %s11
    %p187 = scmp.lt.s32.totalorder %s11, 3
    %p188 = pnand %p186, %p187
    %p189 = pneg %p188
    // Predicated region
    $region37: #{tpu_custom_call.1} parent=5 // pred_check
      _
    $region38: #{tpu_custom_call.1} parent=5 // pred_check_branch
      %191 = sbr.rel (%p188) target = $region40
    $region39: #{tpu_custom_call.1} parent=5 // pred_region
      %s192 = ssub.s32 %s11, 1
      %p193 = scmp.lt.s32.totalorder %s16, 1
      %s194 = scalar_select %p193, %s16, 1
      %s195 = smul.addr %s194, 32
      %s196 = smul.addr %s195, 4
      %s197 = scalar_lea.vmem %s0, %s196
      %p198 = pneg %p37
      %p199 = pneg %p34
      %p200 = pneg %p58
      %p201 = pneg %p55
      %p202 = pneg %p79
      %p203 = pneg %p76
      %p204 = pneg %p100
      %p205 = pneg %p97
      %p206 = pneg %p121
      %p207 = pneg %p118
      %p208 = pneg %p147
      %p209 = pneg %p144
      %p210 = scmp.lt.s32.totalorder %s16, 1
      %s211 = scalar_select %p210, %s16, 1
      %s212 = smul.addr %s211, 32
      %s213 = smul.addr %s212, 8
      %s214 = scalar_lea.vmem %s5, %s213
      %p215 = scmp.lt.s32.totalorder %s16, 1
      %s216 = scalar_select %p215, %s16, 1
      %s217 = smul.addr %s216, 32
      %s218 = smul.addr %s217, 4
      %s219 = scalar_lea.vmem %s0, %s218
      %p220 = scmp.lt.s32.totalorder %s16, 1
      %s221 = scalar_select %p220, %s16, 1
      %s222 = smul.addr %s221, 32
      %s223 = smul.addr %s222, 8
      %s224 = scalar_lea.vmem %s5, %s223
      %vm227 = vcmask 11264
      %228 = vst.msk [vmem:[#allocation2] sm:$0xf] %vm227, 4286644096
      %229 = vst.msk [vmem:[#allocation2 + $0x4] sm:$0xf] %vm227, 4286644096
      %vm230 = vcmask 9216
      %231 = vst.msk [vmem:[#allocation2 + $0x8] sm:$0x3] %vm230, 4286644096
      %232 = vst.msk [vmem:[#allocation2 + $0xc] sm:$0xf] %vm227, 4286644096
      %233 = vst.msk [vmem:[#allocation2 + $0x10] sm:$0xf] %vm227, 4286644096
      %234 = vst.msk [vmem:[#allocation2 + $0x14] sm:$0x3] %vm230, 4286644096
      %s235 = scalar_lea.vmem [#allocation2], 216
      %236 = vst.msk [vmem:[%s235] sm:$0xf] %vm227, 4286644096
      %237 = vst.msk [vmem:[%s235 + $0x4] sm:$0xf] %vm227, 4286644096
      %238 = vst.msk [vmem:[%s235 + $0x8] sm:$0x3] %vm230, 4286644096
      %239 = vst.msk [vmem:[%s235 + $0xc] sm:$0xf] %vm227, 4286644096
      %240 = vst.msk [vmem:[%s235 + $0x10] sm:$0xf] %vm227, 4286644096
      %241 = vst.msk [vmem:[%s235 + $0x14] sm:$0x3] %vm230, 4286644096
      %s242 = scalar_lea.vmem [#allocation2], 24
      %vm243 = vcmask 8192
      %244 = vst.msk [vmem:[%s242] sm:$0x1] %vm243, 4286644096
      %245 = vst.msk [vmem:[%s242 + $0xc] sm:$0x1] %vm243, 4286644096
      %246 = vst.msk [vmem:[%s242 + $0x18] sm:$0x1] %vm243, 4286644096
      %247 = vst.msk [vmem:[%s242 + $0x24] sm:$0x1] %vm243, 4286644096
      %248 = vst.msk [vmem:[%s242 + $0x30] sm:$0x1] %vm243, 4286644096
      %249 = vst.msk [vmem:[%s242 + $0x3c] sm:$0x1] %vm243, 4286644096
      %250 = vst.msk [vmem:[%s242 + $0x48] sm:$0x1] %vm243, 4286644096
      %251 = vst.msk [vmem:[%s242 + $0x54] sm:$0x1] %vm243, 4286644096
      %252 = vst.msk [vmem:[%s242 + $0x60] sm:$0x1] %vm243, 4286644096
      %253 = vst.msk [vmem:[%s242 + $0x6c] sm:$0x1] %vm243, 4286644096
      %254 = vst.msk [vmem:[%s242 + $0x78] sm:$0x1] %vm243, 4286644096
      %255 = vst.msk [vmem:[%s242 + $0x84] sm:$0x1] %vm243, 4286644096
      %256 = vst.msk [vmem:[%s242 + $0x90] sm:$0x1] %vm243, 4286644096
      %257 = vst.msk [vmem:[%s242 + $0x9c] sm:$0x1] %vm243, 4286644096
      %258 = vst.msk [vmem:[%s242 + $0xa8] sm:$0x1] %vm243, 4286644096
      %259 = vst.msk [vmem:[%s242 + $0xb4] sm:$0x1] %vm243, 4286644096
      %vm260 = vcmask 9217
      %261 = vst.msk [vmem:[%s242 + $0x8] sm:$0x2] %vm260, 4286644096
      %262 = vst.msk [vmem:[%s242 + $0x14] sm:$0x2] %vm260, 4286644096
      %263 = vst.msk [vmem:[%s242 + $0x20] sm:$0x2] %vm260, 4286644096
      %264 = vst.msk [vmem:[%s242 + $0x2c] sm:$0x2] %vm260, 4286644096
      %265 = vst.msk [vmem:[%s242 + $0x38] sm:$0x2] %vm260, 4286644096
      %266 = vst.msk [vmem:[%s242 + $0x44] sm:$0x2] %vm260, 4286644096
      %267 = vst.msk [vmem:[%s242 + $0x50] sm:$0x2] %vm260, 4286644096
      %268 = vst.msk [vmem:[%s242 + $0x5c] sm:$0x2] %vm260, 4286644096
      %269 = vst.msk [vmem:[%s242 + $0x68] sm:$0x2] %vm260, 4286644096
      %270 = vst.msk [vmem:[%s242 + $0x74] sm:$0x2] %vm260, 4286644096
      %271 = vst.msk [vmem:[%s242 + $0x80] sm:$0x2] %vm260, 4286644096
      %272 = vst.msk [vmem:[%s242 + $0x8c] sm:$0x2] %vm260, 4286644096
      %273 = vst.msk [vmem:[%s242 + $0x98] sm:$0x2] %vm260, 4286644096
      %274 = vst.msk [vmem:[%s242 + $0xa4] sm:$0x2] %vm260, 4286644096
      %275 = vst.msk [vmem:[%s242 + $0xb0] sm:$0x2] %vm260, 4286644096
      %276 = vst.msk [vmem:[%s242 + $0xbc] sm:$0x2] %vm260, 4286644096
      %v277 = vld [vmem:[%s219] sm:$0xf]
      %v278 = vld [vmem:[%s219 + $0x4] sm:$0xf]
      %v279 = vld [vmem:[%s219 + $0x8] sm:$0xf]
      %v280 = vld [vmem:[%s219 + $0xc] sm:$0xf]
      %v281 = vld [vmem:[%s219 + $0x10] sm:$0xf]
      %v282 = vld [vmem:[%s219 + $0x14] sm:$0xf]
      %v283 = vld [vmem:[%s219 + $0x18] sm:$0xf]
      %v284 = vld [vmem:[%s219 + $0x1c] sm:$0xf]
      %v285 = vld [vmem:[%s219 + $0x20] sm:$0xf]
      %v286 = vld [vmem:[%s219 + $0x24] sm:$0xf]
      %v287 = vld [vmem:[%s219 + $0x28] sm:$0xf]
      %v288 = vld [vmem:[%s219 + $0x2c] sm:$0xf]
      %v289 = vld [vmem:[%s219 + $0x30] sm:$0xf]
      %v290 = vld [vmem:[%s219 + $0x34] sm:$0xf]
      %v291 = vld [vmem:[%s219 + $0x38] sm:$0xf]
      %v292 = vld [vmem:[%s219 + $0x3c] sm:$0xf]
      %v293 = vld [vmem:[%s219 + $0x40] sm:$0xf]
      %v294 = vld [vmem:[%s219 + $0x44] sm:$0xf]
      %v295 = vld [vmem:[%s219 + $0x48] sm:$0xf]
      %v296 = vld [vmem:[%s219 + $0x4c] sm:$0xf]
      %v297 = vld [vmem:[%s219 + $0x50] sm:$0xf]
      %v298 = vld [vmem:[%s219 + $0x54] sm:$0xf]
      %v299 = vld [vmem:[%s219 + $0x58] sm:$0xf]
      %v300 = vld [vmem:[%s219 + $0x5c] sm:$0xf]
      %v301 = vld [vmem:[%s219 + $0x60] sm:$0xf]
      %v302 = vld [vmem:[%s219 + $0x64] sm:$0xf]
      %v303 = vld [vmem:[%s219 + $0x68] sm:$0xf]
      %v304 = vld [vmem:[%s219 + $0x6c] sm:$0xf]
      %v305 = vld [vmem:[%s219 + $0x70] sm:$0xf]
      %v306 = vld [vmem:[%s219 + $0x74] sm:$0xf]
      %v307 = vld [vmem:[%s219 + $0x78] sm:$0xf]
      %v308 = vld [vmem:[%s219 + $0x7c] sm:$0xf]
      %v309 = vld [vmem:[%s1] sm:$0x3]
      %v310 = vld [vmem:[%s2] sm:$0x1]
      %v312 = vlaneseq
      %v313 = vshrl.u32 %v312, 7
      %v314 = vsub.s32 0, %v313
      %v315 = vrot.slane %v310, %v314
      %v349 = vunpack.c.l.b16 %v277
      %v350 = vunpack.c.l.b16 %v278
      %v351 = vunpack.c.l.b16 %v279
      %v352 = vunpack.c.l.b16 %v280
      %v353 = vunpack.c.l.b16 %v281
      %v354 = vunpack.c.l.b16 %v282
      %v355 = vunpack.c.l.b16 %v283
      %v356 = vunpack.c.l.b16 %v284
      %v357 = vunpack.c.l.b16 %v285
      %v358 = vunpack.c.l.b16 %v286
      %v359 = vunpack.c.l.b16 %v287
      %v360 = vunpack.c.l.b16 %v288
      %v361 = vunpack.c.l.b16 %v289
      %v362 = vunpack.c.l.b16 %v290
      %v363 = vunpack.c.l.b16 %v291
      %v364 = vunpack.c.l.b16 %v292
      %v365 = vunpack.c.l.b16 %v293
      %v366 = vunpack.c.l.b16 %v294
      %v367 = vunpack.c.l.b16 %v295
      %v368 = vunpack.c.l.b16 %v296
      %v369 = vunpack.c.l.b16 %v297
      %v370 = vunpack.c.l.b16 %v298
      %v371 = vunpack.c.l.b16 %v299
      %v372 = vunpack.c.l.b16 %v300
      %v373 = vunpack.c.l.b16 %v301
      %v374 = vunpack.c.l.b16 %v302
      %v375 = vunpack.c.l.b16 %v303
      %v376 = vunpack.c.l.b16 %v304
      %v377 = vunpack.c.l.b16 %v305
      %v378 = vunpack.c.l.b16 %v306
      %v379 = vunpack.c.l.b16 %v307
      %v380 = vunpack.c.l.b16 %v308
      %v381 = vpack.c.b16 %v350, %v349
      %v382 = vpack.c.b16 %v352, %v351
      %v383 = vpack.c.b16 %v354, %v353
      %v384 = vpack.c.b16 %v356, %v355
      %v385 = vpack.c.b16 %v358, %v357
      %v386 = vpack.c.b16 %v360, %v359
      %v387 = vpack.c.b16 %v362, %v361
      %v388 = vpack.c.b16 %v364, %v363
      %v389 = vpack.c.b16 %v366, %v365
      %v390 = vpack.c.b16 %v368, %v367
      %v391 = vpack.c.b16 %v370, %v369
      %v392 = vpack.c.b16 %v372, %v371
      %v393 = vpack.c.b16 %v374, %v373
      %v394 = vpack.c.b16 %v376, %v375
      %v395 = vpack.c.b16 %v378, %v377
      %v396 = vpack.c.b16 %v380, %v379
      %vm397 = vcmask 31744
      %v399 = vsel %vm397, %v381, 0
      %v402 = vsel %vm397, %v382, 0
      %v405 = vsel %vm397, %v383, 0
      %v408 = vsel %vm397, %v384, 0
      %v411 = vsel %vm397, %v385, 0
      %v414 = vsel %vm397, %v386, 0
      %v417 = vsel %vm397, %v387, 0
      %v420 = vsel %vm397, %v388, 0
      %v423 = vsel %vm397, %v389, 0
      %v426 = vsel %vm397, %v390, 0
      %v429 = vsel %vm397, %v391, 0
      %v432 = vsel %vm397, %v392, 0
      %v435 = vsel %vm397, %v393, 0
      %v438 = vsel %vm397, %v394, 0
      %v441 = vsel %vm397, %v395, 0
      %v444 = vsel %vm397, %v396, 0
      %vm446 = vcmask 1041408
      %v448 = vsel %vm446, %v309, 0
      %450 = vmatprep.subr.bf16.mxu0 0
      %451 = vmatpush1.bf16.msra.mxu0 %v448
      %452 = vmatprep.subr.bf16.mxu0 0
      %453 = vmatpush1.bf16.msra.mxu0 0
      %454 = vmatprep.subr.bf16.mxu0 0
      %455 = vmatpush1.bf16.msra.mxu0 0
      %456 = vmatprep.subr.bf16.mxu0 0
      %457 = vmatpush1.bf16.msra.mxu0 0
      %458 = vmatprep.subr.bf16.mxu0 0
      %459 = vmatpush1.bf16.msra.mxu0 0
      %460 = vmatprep.subr.bf16.mxu0 0
      %461 = vmatpush1.bf16.msra.mxu0 0
      %462 = vmatprep.subr.bf16.mxu0 0
      %463 = vmatpush1.bf16.msra.mxu0 0
      %464 = vmatprep.subr.bf16.mxu0 0
      %465 = vmatpush1.bf16.msra.mxu0 0
      %466 = vmatprep.subr.bf16.mxu0 0
      %467 = vmatpush1.bf16.msra.mxu0 0
      %468 = vmatprep.subr.bf16.mxu0 0
      %469 = vmatpush1.bf16.msra.mxu0 0
      %470 = vmatprep.subr.bf16.mxu0 0
      %471 = vmatpush1.bf16.msra.mxu0 0
      %472 = vmatprep.subr.bf16.mxu0 0
      %473 = vmatpush1.bf16.msra.mxu0 0
      %474 = vmatprep.subr.bf16.mxu0 0
      %475 = vmatpush1.bf16.msra.mxu0 0
      %476 = vmatprep.subr.bf16.mxu0 0
      %477 = vmatpush1.bf16.msra.mxu0 0
      %478 = vmatprep.subr.bf16.mxu0 0
      %479 = vmatpush1.bf16.msra.mxu0 0
      %480 = vmatprep.subr.bf16.mxu0 0
      %481 = vmatpush1.bf16.msra.mxu0 0
      %482 = vmatprep.mubr.bf16.mxu0 0
      %483 = vmatmul.mubr.bf16.gmra.mrb[0].mxu0 %v399
      %v484 = vpop.f32.mrb[0].mxu0
      %v485 = vadd.f32 %v315, %v484
      %v486 = vpop.f32.mrb[0].mxu0
      %v487 = vpop.f32.mrb[0].mxu0
      %v488 = vadd.f32 %v315, %v487
      %v489 = vpop.f32.mrb[0].mxu0
      %490 = vmatprep.mubr.bf16.mxu0 0
      %491 = vmatmul.mubr.bf16.gmra.mrb[0].mxu0 %v402
      %v492 = vpop.f32.mrb[0].mxu0
      %v493 = vadd.f32 %v315, %v492
      %v494 = vpop.f32.mrb[0].mxu0
      %v495 = vpop.f32.mrb[0].mxu0
      %v496 = vadd.f32 %v315, %v495
      %v497 = vpop.f32.mrb[0].mxu0
      %498 = vmatprep.mubr.bf16.mxu0 0
      %499 = vmatmul.mubr.bf16.gmra.mrb[0].mxu0 %v405
      %v500 = vpop.f32.mrb[0].mxu0
      %v501 = vadd.f32 %v315, %v500
      %v502 = vpop.f32.mrb[0].mxu0
      %v503 = vpop.f32.mrb[0].mxu0
      %v504 = vadd.f32 %v315, %v503
      %v505 = vpop.f32.mrb[0].mxu0
      %506 = vmatprep.mubr.bf16.mxu0 0
      %507 = vmatmul.mubr.bf16.gmra.mrb[0].mxu0 %v408
      %v508 = vpop.f32.mrb[0].mxu0
      %v509 = vadd.f32 %v315, %v508
      %v510 = vpop.f32.mrb[0].mxu0
      %v511 = vpop.f32.mrb[0].mxu0
      %v512 = vadd.f32 %v315, %v511
      %v513 = vpop.f32.mrb[0].mxu0
      %514 = vmatprep.mubr.bf16.mxu0 0
      %515 = vmatmul.mubr.bf16.gmra.mrb[0].mxu0 %v411
      %v516 = vpop.f32.mrb[0].mxu0
      %v517 = vadd.f32 %v315, %v516
      %v518 = vpop.f32.mrb[0].mxu0
      %v519 = vpop.f32.mrb[0].mxu0
      %v520 = vadd.f32 %v315, %v519
      %v521 = vpop.f32.mrb[0].mxu0
      %522 = vmatprep.mubr.bf16.mxu0 0
      %523 = vmatmul.mubr.bf16.gmra.mrb[0].mxu0 %v414
      %v524 = vpop.f32.mrb[0].mxu0
      %v525 = vadd.f32 %v315, %v524
      %v526 = vpop.f32.mrb[0].mxu0
      %v527 = vpop.f32.mrb[0].mxu0
      %v528 = vadd.f32 %v315, %v527
      %v529 = vpop.f32.mrb[0].mxu0
      %530 = vmatprep.mubr.bf16.mxu0 0
      %531 = vmatmul.mubr.bf16.gmra.mrb[0].mxu0 %v417
      %v532 = vpop.f32.mrb[0].mxu0
      %v533 = vadd.f32 %v315, %v532
      %v534 = vpop.f32.mrb[0].mxu0
      %v535 = vpop.f32.mrb[0].mxu0
      %v536 = vadd.f32 %v315, %v535
      %v537 = vpop.f32.mrb[0].mxu0
      %538 = vmatprep.mubr.bf16.mxu0 0
      %539 = vmatmul.mubr.bf16.gmra.mrb[0].mxu0 %v420
      %v540 = vpop.f32.mrb[0].mxu0
      %v541 = vadd.f32 %v315, %v540
      %v542 = vpop.f32.mrb[0].mxu0
      %v543 = vpop.f32.mrb[0].mxu0
      %v544 = vadd.f32 %v315, %v543
      %v545 = vpop.f32.mrb[0].mxu0
      %546 = vmatprep.mubr.bf16.mxu0 0
      %547 = vmatmul.mubr.bf16.gmra.mrb[0].mxu0 %v423
      %v548 = vpop.f32.mrb[0].mxu0
      %v549 = vadd.f32 %v315, %v548
      %v550 = vpop.f32.mrb[0].mxu0
      %v551 = vpop.f32.mrb[0].mxu0
      %v552 = vadd.f32 %v315, %v551
      %v553 = vpop.f32.mrb[0].mxu0
      %554 = vmatprep.mubr.bf16.mxu0 0
      %555 = vmatmul.mubr.bf16.gmra.mrb[0].mxu0 %v426
      %v556 = vpop.f32.mrb[0].mxu0
      %v557 = vadd.f32 %v315, %v556
      %v558 = vpop.f32.mrb[0].mxu0
      %v559 = vpop.f32.mrb[0].mxu0
      %v560 = vadd.f32 %v315, %v559
      %v561 = vpop.f32.mrb[0].mxu0
      %562 = vmatprep.mubr.bf16.mxu0 0
      %563 = vmatmul.mubr.bf16.gmra.mrb[0].mxu0 %v429
      %v564 = vpop.f32.mrb[0].mxu0
      %v565 = vadd.f32 %v315, %v564
      %v566 = vpop.f32.mrb[0].mxu0
      %v567 = vpop.f32.mrb[0].mxu0
      %v568 = vadd.f32 %v315, %v567
      %v569 = vpop.f32.mrb[0].mxu0
      %570 = vmatprep.mubr.bf16.mxu0 0
      %571 = vmatmul.mubr.bf16.gmra.mrb[0].mxu0 %v432
      %v572 = vpop.f32.mrb[0].mxu0
      %v573 = vadd.f32 %v315, %v572
      %v574 = vpop.f32.mrb[0].mxu0
      %v575 = vpop.f32.mrb[0].mxu0
      %v576 = vadd.f32 %v315, %v575
      %v577 = vpop.f32.mrb[0].mxu0
      %578 = vmatprep.mubr.bf16.mxu0 0
      %579 = vmatmul.mubr.bf16.gmra.mrb[0].mxu0 %v435
      %v580 = vpop.f32.mrb[0].mxu0
      %v581 = vadd.f32 %v315, %v580
      %v582 = vpop.f32.mrb[0].mxu0
      %v583 = vpop.f32.mrb[0].mxu0
      %v584 = vadd.f32 %v315, %v583
      %v585 = vpop.f32.mrb[0].mxu0
      %586 = vmatprep.mubr.bf16.mxu0 0
      %587 = vmatmul.mubr.bf16.gmra.mrb[0].mxu0 %v438
      %v588 = vpop.f32.mrb[0].mxu0
      %v589 = vadd.f32 %v315, %v588
      %v590 = vpop.f32.mrb[0].mxu0
      %v591 = vpop.f32.mrb[0].mxu0
      %v592 = vadd.f32 %v315, %v591
      %v593 = vpop.f32.mrb[0].mxu0
      %594 = vmatprep.mubr.bf16.mxu0 0
      %595 = vmatmul.mubr.bf16.gmra.mrb[0].mxu0 %v441
      %v596 = vpop.f32.mrb[0].mxu0
      %v597 = vadd.f32 %v315, %v596
      %v598 = vpop.f32.mrb[0].mxu0
      %v599 = vpop.f32.mrb[0].mxu0
      %v600 = vadd.f32 %v315, %v599
      %v601 = vpop.f32.mrb[0].mxu0
      %602 = vmatprep.mubr.bf16.mxu0 0
      %603 = vmatmul.mubr.bf16.gmra.mrb[0].mxu0 %v444
      %v604 = vpop.f32.mrb[0].mxu0
      %v605 = vadd.f32 %v315, %v604
      %v606 = vpop.f32.mrb[0].mxu0
      %v607 = vpop.f32.mrb[0].mxu0
      %v608 = vadd.f32 %v315, %v607
      %v609 = vpop.f32.mrb[0].mxu0
      %610 = vdwg.mxu0
      %v611 = vxor.u32 %v485, 2147483648
      %v612 = vxor.u32 %v488, 2147483648
      %v613 = vxor.u32 %v493, 2147483648
      %v614 = vxor.u32 %v496, 2147483648
      %v615 = vxor.u32 %v501, 2147483648
      %v616 = vxor.u32 %v504, 2147483648
      %v617 = vxor.u32 %v509, 2147483648
      %v618 = vxor.u32 %v512, 2147483648
      %v619 = vxor.u32 %v517, 2147483648
      %v620 = vxor.u32 %v520, 2147483648
      %v621 = vxor.u32 %v525, 2147483648
      %v622 = vxor.u32 %v528, 2147483648
      %v623 = vxor.u32 %v533, 2147483648
      %v624 = vxor.u32 %v536, 2147483648
      %v625 = vxor.u32 %v541, 2147483648
      %v626 = vxor.u32 %v544, 2147483648
      %v627 = vxor.u32 %v549, 2147483648
      %v628 = vxor.u32 %v552, 2147483648
      %v629 = vxor.u32 %v557, 2147483648
      %v630 = vxor.u32 %v560, 2147483648
      %v631 = vxor.u32 %v565, 2147483648
      %v632 = vxor.u32 %v568, 2147483648
      %v633 = vxor.u32 %v573, 2147483648
      %v634 = vxor.u32 %v576, 2147483648
      %v635 = vxor.u32 %v581, 2147483648
      %v636 = vxor.u32 %v584, 2147483648
      %v637 = vxor.u32 %v589, 2147483648
      %v638 = vxor.u32 %v592, 2147483648
      %v639 = vxor.u32 %v597, 2147483648
      %v640 = vxor.u32 %v600, 2147483648
      %v641 = vxor.u32 %v605, 2147483648
      %v642 = vxor.u32 %v608, 2147483648
      %v643 = vmul.f32 %v611, 1.442695
      %v644 = vpow.pop %v643
      %v645 = vmul.f32 %v612, 1.442695
      %v646 = vpow.pop %v645
      %v647 = vmul.f32 %v613, 1.442695
      %v648 = vpow.pop %v647
      %v649 = vmul.f32 %v614, 1.442695
      %v650 = vpow.pop %v649
      %v651 = vmul.f32 %v615, 1.442695
      %v652 = vpow.pop %v651
      %v653 = vmul.f32 %v616, 1.442695
      %v654 = vpow.pop %v653
      %v655 = vmul.f32 %v617, 1.442695
      %v656 = vpow.pop %v655
      %v657 = vmul.f32 %v618, 1.442695
      %v658 = vpow.pop %v657
      %v659 = vmul.f32 %v619, 1.442695
      %v660 = vpow.pop %v659
      %v661 = vmul.f32 %v620, 1.442695
      %v662 = vpow.pop %v661
      %v663 = vmul.f32 %v621, 1.442695
      %v664 = vpow.pop %v663
      %v665 = vmul.f32 %v622, 1.442695
      %v666 = vpow.pop %v665
      %v667 = vmul.f32 %v623, 1.442695
      %v668 = vpow.pop %v667
      %v669 = vmul.f32 %v624, 1.442695
      %v670 = vpow.pop %v669
      %v671 = vmul.f32 %v625, 1.442695
      %v672 = vpow.pop %v671
      %v673 = vmul.f32 %v626, 1.442695
      %v674 = vpow.pop %v673
      %v675 = vmul.f32 %v627, 1.442695
      %v676 = vpow.pop %v675
      %v677 = vmul.f32 %v628, 1.442695
      %v678 = vpow.pop %v677
      %v679 = vmul.f32 %v629, 1.442695
      %v680 = vpow.pop %v679
      %v681 = vmul.f32 %v630, 1.442695
      %v682 = vpow.pop %v681
      %v683 = vmul.f32 %v631, 1.442695
      %v684 = vpow.pop %v683
      %v685 = vmul.f32 %v632, 1.442695
      %v686 = vpow.pop %v685
      %v687 = vmul.f32 %v633, 1.442695
      %v688 = vpow.pop %v687
      %v689 = vmul.f32 %v634, 1.442695
      %v690 = vpow.pop %v689
      %v691 = vmul.f32 %v635, 1.442695
      %v692 = vpow.pop %v691
      %v693 = vmul.f32 %v636, 1.442695
      %v694 = vpow.pop %v693
      %v695 = vmul.f32 %v637, 1.442695
      %v696 = vpow.pop %v695
      %v697 = vmul.f32 %v638, 1.442695
      %v698 = vpow.pop %v697
      %v699 = vmul.f32 %v639, 1.442695
      %v700 = vpow.pop %v699
      %v701 = vmul.f32 %v640, 1.442695
      %v702 = vpow.pop %v701
      %v703 = vmul.f32 %v641, 1.442695
      %v704 = vpow.pop %v703
      %v705 = vmul.f32 %v642, 1.442695
      %v706 = vpow.pop %v705
      %v707 = vadd.f32 %v644, 1.0
      %v708 = vadd.f32 %v646, 1.0
      %v709 = vadd.f32 %v648, 1.0
      %v710 = vadd.f32 %v650, 1.0
      %v711 = vadd.f32 %v652, 1.0
      %v712 = vadd.f32 %v654, 1.0
      %v713 = vadd.f32 %v656, 1.0
      %v714 = vadd.f32 %v658, 1.0
      %v715 = vadd.f32 %v660, 1.0
      %v716 = vadd.f32 %v662, 1.0
      %v717 = vadd.f32 %v664, 1.0
      %v718 = vadd.f32 %v666, 1.0
      %v719 = vadd.f32 %v668, 1.0
      %v720 = vadd.f32 %v670, 1.0
      %v721 = vadd.f32 %v672, 1.0
      %v722 = vadd.f32 %v674, 1.0
      %v723 = vadd.f32 %v676, 1.0
      %v724 = vadd.f32 %v678, 1.0
      %v725 = vadd.f32 %v680, 1.0
      %v726 = vadd.f32 %v682, 1.0
      %v727 = vadd.f32 %v684, 1.0
      %v728 = vadd.f32 %v686, 1.0
      %v729 = vadd.f32 %v688, 1.0
      %v730 = vadd.f32 %v690, 1.0
      %v731 = vadd.f32 %v692, 1.0
      %v732 = vadd.f32 %v694, 1.0
      %v733 = vadd.f32 %v696, 1.0
      %v734 = vadd.f32 %v698, 1.0
      %v735 = vadd.f32 %v700, 1.0
      %v736 = vadd.f32 %v702, 1.0
      %v737 = vadd.f32 %v704, 1.0
      %v738 = vadd.f32 %v706, 1.0
      %v739 = vrcp.pop %v707
      %v740 = vmul.f32 1.0, %v739
      %v741 = vrcp.pop %v708
      %v742 = vmul.f32 1.0, %v741
      %v743 = vrcp.pop %v709
      %v744 = vmul.f32 1.0, %v743
      %v745 = vrcp.pop %v710
      %v746 = vmul.f32 1.0, %v745
      %v747 = vrcp.pop %v711
      %v748 = vmul.f32 1.0, %v747
      %v749 = vrcp.pop %v712
      %v750 = vmul.f32 1.0, %v749
      %v751 = vrcp.pop %v713
      %v752 = vmul.f32 1.0, %v751
      %v753 = vrcp.pop %v714
      %v754 = vmul.f32 1.0, %v753
      %v755 = vrcp.pop %v715
      %v756 = vmul.f32 1.0, %v755
      %v757 = vrcp.pop %v716
      %v758 = vmul.f32 1.0, %v757
      %v759 = vrcp.pop %v717
      %v760 = vmul.f32 1.0, %v759
      %v761 = vrcp.pop %v718
      %v762 = vmul.f32 1.0, %v761
      %v763 = vrcp.pop %v719
      %v764 = vmul.f32 1.0, %v763
      %v765 = vrcp.pop %v720
      %v766 = vmul.f32 1.0, %v765
      %v767 = vrcp.pop %v721
      %v768 = vmul.f32 1.0, %v767
      %v769 = vrcp.pop %v722
      %v770 = vmul.f32 1.0, %v769
      %v771 = vrcp.pop %v723
      %v772 = vmul.f32 1.0, %v771
      %v773 = vrcp.pop %v724
      %v774 = vmul.f32 1.0, %v773
      %v775 = vrcp.pop %v725
      %v776 = vmul.f32 1.0, %v775
      %v777 = vrcp.pop %v726
      %v778 = vmul.f32 1.0, %v777
      %v779 = vrcp.pop %v727
      %v780 = vmul.f32 1.0, %v779
      %v781 = vrcp.pop %v728
      %v782 = vmul.f32 1.0, %v781
      %v783 = vrcp.pop %v729
      %v784 = vmul.f32 1.0, %v783
      %v785 = vrcp.pop %v730
      %v786 = vmul.f32 1.0, %v785
      %v787 = vrcp.pop %v731
      %v788 = vmul.f32 1.0, %v787
      %v789 = vrcp.pop %v732
      %v790 = vmul.f32 1.0, %v789
      %v791 = vrcp.pop %v733
      %v792 = vmul.f32 1.0, %v791
      %v793 = vrcp.pop %v734
      %v794 = vmul.f32 1.0, %v793
      %v795 = vrcp.pop %v735
      %v796 = vmul.f32 1.0, %v795
      %v797 = vrcp.pop %v736
      %v798 = vmul.f32 1.0, %v797
      %v799 = vrcp.pop %v737
      %v800 = vmul.f32 1.0, %v799
      %v801 = vrcp.pop %v738
      %v802 = vmul.f32 1.0, %v801
      %v803 = vmul.f32 %v485, %v740
      %v804 = vmul.f32 %v488, %v742
      %v805 = vmul.f32 %v493, %v744
      %v806 = vmul.f32 %v496, %v746
      %v807 = vmul.f32 %v501, %v748
      %v808 = vmul.f32 %v504, %v750
      %v809 = vmul.f32 %v509, %v752
      %v810 = vmul.f32 %v512, %v754
      %v811 = vmul.f32 %v517, %v756
      %v812 = vmul.f32 %v520, %v758
      %v813 = vmul.f32 %v525, %v760
      %v814 = vmul.f32 %v528, %v762
      %v815 = vmul.f32 %v533, %v764
      %v816 = vmul.f32 %v536, %v766
      %v817 = vmul.f32 %v541, %v768
      %v818 = vmul.f32 %v544, %v770
      %v819 = vmul.f32 %v549, %v772
      %v820 = vmul.f32 %v552, %v774
      %v821 = vmul.f32 %v557, %v776
      %v822 = vmul.f32 %v560, %v778
      %v823 = vmul.f32 %v565, %v780
      %v824 = vmul.f32 %v568, %v782
      %v825 = vmul.f32 %v573, %v784
      %v826 = vmul.f32 %v576, %v786
      %v827 = vmul.f32 %v581, %v788
      %v828 = vmul.f32 %v584, %v790
      %v829 = vmul.f32 %v589, %v792
      %v830 = vmul.f32 %v592, %v794
      %v831 = vmul.f32 %v597, %v796
      %v832 = vmul.f32 %v600, %v798
      %v833 = vmul.f32 %v605, %v800
      %v834 = vmul.f32 %v608, %v802
      %v835 = vpack.c.bf16 %v804, %v803
      %v836 = vpack.c.bf16 %v806, %v805
      %v837 = vpack.c.bf16 %v808, %v807
      %v838 = vpack.c.bf16 %v810, %v809
      %v839 = vpack.c.bf16 %v812, %v811
      %v840 = vpack.c.bf16 %v814, %v813
      %v841 = vpack.c.bf16 %v816, %v815
      %v842 = vpack.c.bf16 %v818, %v817
      %v843 = vpack.c.bf16 %v820, %v819
      %v844 = vpack.c.bf16 %v822, %v821
      %v845 = vpack.c.bf16 %v824, %v823
      %v846 = vpack.c.bf16 %v826, %v825
      %v847 = vpack.c.bf16 %v828, %v827
      %v848 = vpack.c.bf16 %v830, %v829
      %v849 = vpack.c.bf16 %v832, %v831
      %v850 = vpack.c.bf16 %v834, %v833
      %v851 = vld [vmem:[%s3] sm:$0x1]
      %v852 = vld [vmem:[%s4] sm:$0x1]
      %v854 = vlaneseq
      %v855 = vshrl.u32 %v854, 7
      %v856 = vsub.s32 0, %v855
      %v857 = vrot.slane %v852, %v856
      %vm859 = vcmask 15360
      %v861 = vsel %vm859, %v835, 0
      %v864 = vsel %vm859, %v836, 0
      %v867 = vsel %vm859, %v837, 0
      %v870 = vsel %vm859, %v838, 0
      %v873 = vsel %vm859, %v839, 0
      %v876 = vsel %vm859, %v840, 0
      %v879 = vsel %vm859, %v841, 0
      %v882 = vsel %vm859, %v842, 0
      %v885 = vsel %vm859, %v843, 0
      %v888 = vsel %vm859, %v844, 0
      %v891 = vsel %vm859, %v845, 0
      %v894 = vsel %vm859, %v846, 0
      %v897 = vsel %vm859, %v847, 0
      %v900 = vsel %vm859, %v848, 0
      %v903 = vsel %vm859, %v849, 0
      %v906 = vsel %vm859, %v850, 0
      %vm908 = vcmask 1040384
      %v910 = vsel %vm908, %v851, 0
      %912 = vmatprep.subr.bf16.mxu0 0
      %913 = vmatpush1.bf16.msra.mxu0 %v910
      %914 = vmatprep.subr.bf16.mxu0 0
      %915 = vmatpush1.bf16.msra.mxu0 0
      %916 = vmatprep.subr.bf16.mxu0 0
      %917 = vmatpush1.bf16.msra.mxu0 0
      %918 = vmatprep.subr.bf16.mxu0 0
      %919 = vmatpush1.bf16.msra.mxu0 0
      %920 = vmatprep.subr.bf16.mxu0 0
      %921 = vmatpush1.bf16.msra.mxu0 0
      %922 = vmatprep.subr.bf16.mxu0 0
      %923 = vmatpush1.bf16.msra.mxu0 0
      %924 = vmatprep.subr.bf16.mxu0 0
      %925 = vmatpush1.bf16.msra.mxu0 0
      %926 = vmatprep.subr.bf16.mxu0 0
      %927 = vmatpush1.bf16.msra.mxu0 0
      %928 = vmatprep.subr.bf16.mxu0 0
      %929 = vmatpush1.bf16.msra.mxu0 0
      %930 = vmatprep.subr.bf16.mxu0 0
      %931 = vmatpush1.bf16.msra.mxu0 0
      %932 = vmatprep.subr.bf16.mxu0 0
      %933 = vmatpush1.bf16.msra.mxu0 0
      %934 = vmatprep.subr.bf16.mxu0 0
      %935 = vmatpush1.bf16.msra.mxu0 0
      %936 = vmatprep.subr.bf16.mxu0 0
      %937 = vmatpush1.bf16.msra.mxu0 0
      %938 = vmatprep.subr.bf16.mxu0 0
      %939 = vmatpush1.bf16.msra.mxu0 0
      %940 = vmatprep.subr.bf16.mxu0 0
      %941 = vmatpush1.bf16.msra.mxu0 0
      %942 = vmatprep.subr.bf16.mxu0 0
      %943 = vmatpush1.bf16.msra.mxu0 0
      %944 = vmatprep.mubr.bf16.mxu0 0
      %945 = vmatmul.mubr.bf16.gmra.mrb[0].mxu0 %v861
      %v946 = vpop.f32.mrb[0].mxu0
      %v947 = vadd.f32 %v857, %v946
      %v948 = vpop.f32.mrb[0].mxu0
      %v949 = vpop.f32.mrb[0].mxu0
      %v950 = vadd.f32 %v857, %v949
      %v951 = vpop.f32.mrb[0].mxu0
      %952 = vmatprep.mubr.bf16.mxu0 0
      %953 = vmatmul.mubr.bf16.gmra.mrb[0].mxu0 %v864
      %v954 = vpop.f32.mrb[0].mxu0
      %v955 = vadd.f32 %v857, %v954
      %v956 = vpop.f32.mrb[0].mxu0
      %v957 = vpop.f32.mrb[0].mxu0
      %v958 = vadd.f32 %v857, %v957
      %v959 = vpop.f32.mrb[0].mxu0
      %960 = vmatprep.mubr.bf16.mxu0 0
      %961 = vmatmul.mubr.bf16.gmra.mrb[0].mxu0 %v867
      %v962 = vpop.f32.mrb[0].mxu0
      %v963 = vadd.f32 %v857, %v962
      %v964 = vpop.f32.mrb[0].mxu0
      %v965 = vpop.f32.mrb[0].mxu0
      %v966 = vadd.f32 %v857, %v965
      %v967 = vpop.f32.mrb[0].mxu0
      %968 = vmatprep.mubr.bf16.mxu0 0
      %969 = vmatmul.mubr.bf16.gmra.mrb[0].mxu0 %v870
      %v970 = vpop.f32.mrb[0].mxu0
      %v971 = vadd.f32 %v857, %v970
      %v972 = vpop.f32.mrb[0].mxu0
      %v973 = vpop.f32.mrb[0].mxu0
      %v974 = vadd.f32 %v857, %v973
      %v975 = vpop.f32.mrb[0].mxu0
      %976 = vmatprep.mubr.bf16.mxu0 0
      %977 = vmatmul.mubr.bf16.gmra.mrb[0].mxu0 %v873
      %v978 = vpop.f32.mrb[0].mxu0
      %v979 = vadd.f32 %v857, %v978
      %v980 = vpop.f32.mrb[0].mxu0
      %v981 = vpop.f32.mrb[0].mxu0
      %v982 = vadd.f32 %v857, %v981
      %v983 = vpop.f32.mrb[0].mxu0
      %984 = vmatprep.mubr.bf16.mxu0 0
      %985 = vmatmul.mubr.bf16.gmra.mrb[0].mxu0 %v876
      %v986 = vpop.f32.mrb[0].mxu0
      %v987 = vadd.f32 %v857, %v986
      %v988 = vpop.f32.mrb[0].mxu0
      %v989 = vpop.f32.mrb[0].mxu0
      %v990 = vadd.f32 %v857, %v989
      %v991 = vpop.f32.mrb[0].mxu0
      %992 = vmatprep.mubr.bf16.mxu0 0
      %993 = vmatmul.mubr.bf16.gmra.mrb[0].mxu0 %v879
      %v994 = vpop.f32.mrb[0].mxu0
      %v995 = vadd.f32 %v857, %v994
      %v996 = vpop.f32.mrb[0].mxu0
      %v997 = vpop.f32.mrb[0].mxu0
      %v998 = vadd.f32 %v857, %v997
      %v999 = vpop.f32.mrb[0].mxu0
      %1000 = vmatprep.mubr.bf16.mxu0 0
      %1001 = vmatmul.mubr.bf16.gmra.mrb[0].mxu0 %v882
      %v1002 = vpop.f32.mrb[0].mxu0
      %v1003 = vadd.f32 %v857, %v1002
      %v1004 = vpop.f32.mrb[0].mxu0
      %v1005 = vpop.f32.mrb[0].mxu0
      %v1006 = vadd.f32 %v857, %v1005
      %v1007 = vpop.f32.mrb[0].mxu0
      %1008 = vmatprep.mubr.bf16.mxu0 0
      %1009 = vmatmul.mubr.bf16.gmra.mrb[0].mxu0 %v885
      %v1010 = vpop.f32.mrb[0].mxu0
      %v1011 = vadd.f32 %v857, %v1010
      %v1012 = vpop.f32.mrb[0].mxu0
      %v1013 = vpop.f32.mrb[0].mxu0
      %v1014 = vadd.f32 %v857, %v1013
      %v1015 = vpop.f32.mrb[0].mxu0
      %1016 = vmatprep.mubr.bf16.mxu0 0
      %1017 = vmatmul.mubr.bf16.gmra.mrb[0].mxu0 %v888
      %v1018 = vpop.f32.mrb[0].mxu0
      %v1019 = vadd.f32 %v857, %v1018
      %v1020 = vpop.f32.mrb[0].mxu0
      %v1021 = vpop.f32.mrb[0].mxu0
      %v1022 = vadd.f32 %v857, %v1021
      %v1023 = vpop.f32.mrb[0].mxu0
      %1024 = vmatprep.mubr.bf16.mxu0 0
      %1025 = vmatmul.mubr.bf16.gmra.mrb[0].mxu0 %v891
      %v1026 = vpop.f32.mrb[0].mxu0
      %v1027 = vadd.f32 %v857, %v1026
      %v1028 = vpop.f32.mrb[0].mxu0
      %v1029 = vpop.f32.mrb[0].mxu0
      %v1030 = vadd.f32 %v857, %v1029
      %v1031 = vpop.f32.mrb[0].mxu0
      %1032 = vmatprep.mubr.bf16.mxu0 0
      %1033 = vmatmul.mubr.bf16.gmra.mrb[0].mxu0 %v894
      %v1034 = vpop.f32.mrb[0].mxu0
      %v1035 = vadd.f32 %v857, %v1034
      %v1036 = vpop.f32.mrb[0].mxu0
      %v1037 = vpop.f32.mrb[0].mxu0
      %v1038 = vadd.f32 %v857, %v1037
      %v1039 = vpop.f32.mrb[0].mxu0
      %1040 = vmatprep.mubr.bf16.mxu0 0
      %1041 = vmatmul.mubr.bf16.gmra.mrb[0].mxu0 %v897
      %v1042 = vpop.f32.mrb[0].mxu0
      %v1043 = vadd.f32 %v857, %v1042
      %v1044 = vpop.f32.mrb[0].mxu0
      %v1045 = vpop.f32.mrb[0].mxu0
      %v1046 = vadd.f32 %v857, %v1045
      %v1047 = vpop.f32.mrb[0].mxu0
      %1048 = vmatprep.mubr.bf16.mxu0 0
      %1049 = vmatmul.mubr.bf16.gmra.mrb[0].mxu0 %v900
      %v1050 = vpop.f32.mrb[0].mxu0
      %v1051 = vadd.f32 %v857, %v1050
      %v1052 = vpop.f32.mrb[0].mxu0
      %v1053 = vpop.f32.mrb[0].mxu0
      %v1054 = vadd.f32 %v857, %v1053
      %v1055 = vpop.f32.mrb[0].mxu0
      %1056 = vmatprep.mubr.bf16.mxu0 0
      %1057 = vmatmul.mubr.bf16.gmra.mrb[0].mxu0 %v903
      %v1058 = vpop.f32.mrb[0].mxu0
      %v1059 = vadd.f32 %v857, %v1058
      %v1060 = vpop.f32.mrb[0].mxu0
      %v1061 = vpop.f32.mrb[0].mxu0
      %v1062 = vadd.f32 %v857, %v1061
      %v1063 = vpop.f32.mrb[0].mxu0
      %1064 = vmatprep.mubr.bf16.mxu0 0
      %1065 = vmatmul.mubr.bf16.gmra.mrb[0].mxu0 %v906
      %v1066 = vpop.f32.mrb[0].mxu0
      %v1067 = vadd.f32 %v857, %v1066
      %v1068 = vpop.f32.mrb[0].mxu0
      %v1069 = vpop.f32.mrb[0].mxu0
      %v1070 = vadd.f32 %v857, %v1069
      %v1071 = vpop.f32.mrb[0].mxu0
      %1072 = vdwg.mxu0
      %v1089 = vunpack.c.l.b16 %v835
      %v1090 = vunpack.c.h.b16 %v835
      %v1091 = vunpack.c.l.b16 %v836
      %v1092 = vunpack.c.h.b16 %v836
      %v1093 = vunpack.c.l.b16 %v837
      %v1094 = vunpack.c.h.b16 %v837
      %v1095 = vunpack.c.l.b16 %v838
      %v1096 = vunpack.c.h.b16 %v838
      %v1097 = vunpack.c.l.b16 %v839
      %v1098 = vunpack.c.h.b16 %v839
      %v1099 = vunpack.c.l.b16 %v840
      %v1100 = vunpack.c.h.b16 %v840
      %v1101 = vunpack.c.l.b16 %v841
      %v1102 = vunpack.c.h.b16 %v841
      %v1103 = vunpack.c.l.b16 %v842
      %v1104 = vunpack.c.h.b16 %v842
      %v1105 = vunpack.c.l.b16 %v843
      %v1106 = vunpack.c.h.b16 %v843
      %v1107 = vunpack.c.l.b16 %v844
      %v1108 = vunpack.c.h.b16 %v844
      %v1109 = vunpack.c.l.b16 %v845
      %v1110 = vunpack.c.h.b16 %v845
      %v1111 = vunpack.c.l.b16 %v846
      %v1112 = vunpack.c.h.b16 %v846
      %v1113 = vunpack.c.l.b16 %v847
      %v1114 = vunpack.c.h.b16 %v847
      %v1115 = vunpack.c.l.b16 %v848
      %v1116 = vunpack.c.h.b16 %v848
      %v1117 = vunpack.c.l.b16 %v849
      %v1118 = vunpack.c.h.b16 %v849
      %v1119 = vunpack.c.l.b16 %v850
      %v1120 = vunpack.c.h.b16 %v850
      %v1121 = vpack.c.b16 %v1089, %v1089
      %v1122 = vpack.c.b16 %v1090, %v1090
      %v1123 = vpack.c.b16 %v1091, %v1091
      %v1124 = vpack.c.b16 %v1092, %v1092
      %v1125 = vpack.c.b16 %v1093, %v1093
      %v1126 = vpack.c.b16 %v1094, %v1094
      %v1127 = vpack.c.b16 %v1095, %v1095
      %v1128 = vpack.c.b16 %v1096, %v1096
      %v1129 = vpack.c.b16 %v1097, %v1097
      %v1130 = vpack.c.b16 %v1098, %v1098
      %v1131 = vpack.c.b16 %v1099, %v1099
      %v1132 = vpack.c.b16 %v1100, %v1100
      %v1133 = vpack.c.b16 %v1101, %v1101
      %v1134 = vpack.c.b16 %v1102, %v1102
      %v1135 = vpack.c.b16 %v1103, %v1103
      %v1136 = vpack.c.b16 %v1104, %v1104
      %v1137 = vpack.c.b16 %v1105, %v1105
      %v1138 = vpack.c.b16 %v1106, %v1106
      %v1139 = vpack.c.b16 %v1107, %v1107
      %v1140 = vpack.c.b16 %v1108, %v1108
      %v1141 = vpack.c.b16 %v1109, %v1109
      %v1142 = vpack.c.b16 %v1110, %v1110
      %v1143 = vpack.c.b16 %v1111, %v1111
      %v1144 = vpack.c.b16 %v1112, %v1112
      %v1145 = vpack.c.b16 %v1113, %v1113
      %v1146 = vpack.c.b16 %v1114, %v1114
      %v1147 = vpack.c.b16 %v1115, %v1115
      %v1148 = vpack.c.b16 %v1116, %v1116
      %v1149 = vpack.c.b16 %v1117, %v1117
      %v1150 = vpack.c.b16 %v1118, %v1118
      %v1151 = vpack.c.b16 %v1119, %v1119
      %v1152 = vpack.c.b16 %v1120, %v1120
      %vm1153 = vcmask 1040384
      %vm1154 = vcmask 1044484
      %vm1155 = vmor %vm1153, %vm1154
      %v1156 = vrot.slane %v1121, 7
      %v1157 = vrot.slane %v1156, 4
      %v1158 = vrot.slane %v1122, 7
      %v1159 = vsel %vm1155, %v1157, %v1158
      %v1160 = vrot.slane %v1158, 4
      %v1161 = vrot.slane %v1123, 7
      %v1162 = vrot.slane %v1161, 4
      %v1163 = vrot.slane %v1124, 7
      %v1164 = vsel %vm1155, %v1162, %v1163
      %v1165 = vrot.slane %v1163, 4
      %v1166 = vrot.slane %v1125, 7
      %v1167 = vrot.slane %v1166, 4
      %v1168 = vrot.slane %v1126, 7
      %v1169 = vsel %vm1155, %v1167, %v1168
      %v1170 = vrot.slane %v1168, 4
      %v1171 = vrot.slane %v1127, 7
      %v1172 = vrot.slane %v1171, 4
      %v1173 = vrot.slane %v1128, 7
      %v1174 = vsel %vm1155, %v1172, %v1173
      %v1175 = vrot.slane %v1173, 4
      %v1176 = vrot.slane %v1129, 7
      %v1177 = vrot.slane %v1176, 4
      %v1178 = vrot.slane %v1130, 7
      %v1179 = vsel %vm1155, %v1177, %v1178
      %v1180 = vrot.slane %v1178, 4
      %v1181 = vrot.slane %v1131, 7
      %v1182 = vrot.slane %v1181, 4
      %v1183 = vrot.slane %v1132, 7
      %v1184 = vsel %vm1155, %v1182, %v1183
      %v1185 = vrot.slane %v1183, 4
      %v1186 = vrot.slane %v1133, 7
      %v1187 = vrot.slane %v1186, 4
      %v1188 = vrot.slane %v1134, 7
      %v1189 = vsel %vm1155, %v1187, %v1188
      %v1190 = vrot.slane %v1188, 4
      %v1191 = vrot.slane %v1135, 7
      %v1192 = vrot.slane %v1191, 4
      %v1193 = vrot.slane %v1136, 7
      %v1194 = vsel %vm1155, %v1192, %v1193
      %v1195 = vrot.slane %v1193, 4
      %v1196 = vrot.slane %v1137, 7
      %v1197 = vrot.slane %v1196, 4
      %v1198 = vrot.slane %v1138, 7
      %v1199 = vsel %vm1155, %v1197, %v1198
      %v1200 = vrot.slane %v1198, 4
      %v1201 = vrot.slane %v1139, 7
      %v1202 = vrot.slane %v1201, 4
      %v1203 = vrot.slane %v1140, 7
      %v1204 = vsel %vm1155, %v1202, %v1203
      %v1205 = vrot.slane %v1203, 4
      %v1206 = vrot.slane %v1141, 7
      %v1207 = vrot.slane %v1206, 4
      %v1208 = vrot.slane %v1142, 7
      %v1209 = vsel %vm1155, %v1207, %v1208
      %v1210 = vrot.slane %v1208, 4
      %v1211 = vrot.slane %v1143, 7
      %v1212 = vrot.slane %v1211, 4
      %v1213 = vrot.slane %v1144, 7
      %v1214 = vsel %vm1155, %v1212, %v1213
      %v1215 = vrot.slane %v1213, 4
      %v1216 = vrot.slane %v1145, 7
      %v1217 = vrot.slane %v1216, 4
      %v1218 = vrot.slane %v1146, 7
      %v1219 = vsel %vm1155, %v1217, %v1218
      %v1220 = vrot.slane %v1218, 4
      %v1221 = vrot.slane %v1147, 7
      %v1222 = vrot.slane %v1221, 4
      %v1223 = vrot.slane %v1148, 7
      %v1224 = vsel %vm1155, %v1222, %v1223
      %v1225 = vrot.slane %v1223, 4
      %v1226 = vrot.slane %v1149, 7
      %v1227 = vrot.slane %v1226, 4
      %v1228 = vrot.slane %v1150, 7
      %v1229 = vsel %vm1155, %v1227, %v1228
      %v1230 = vrot.slane %v1228, 4
      %v1231 = vrot.slane %v1151, 7
      %v1232 = vrot.slane %v1231, 4
      %v1233 = vrot.slane %v1152, 7
      %v1234 = vsel %vm1155, %v1232, %v1233
      %v1235 = vrot.slane %v1233, 4
      %vm1284 = vcmask 11265
      %1285 = vst.msk [vmem:[%s242] sm:$0xe] %vm1284, %v1156
      %1286 = vst.msk [vmem:[%s242 + $0x4] sm:$0xf] %vm227, %v1159
      %1287 = vst.msk [vmem:[%s242 + $0x8] sm:$0x1] %vm243, %v1160
      %1288 = vst.msk [vmem:[%s242 + $0xc] sm:$0xe] %vm1284, %v1161
      %1289 = vst.msk [vmem:[%s242 + $0x10] sm:$0xf] %vm227, %v1164
      %1290 = vst.msk [vmem:[%s242 + $0x14] sm:$0x1] %vm243, %v1165
      %1291 = vst.msk [vmem:[%s242 + $0x18] sm:$0xe] %vm1284, %v1166
      %1292 = vst.msk [vmem:[%s242 + $0x1c] sm:$0xf] %vm227, %v1169
      %1293 = vst.msk [vmem:[%s242 + $0x20] sm:$0x1] %vm243, %v1170
      %1294 = vst.msk [vmem:[%s242 + $0x24] sm:$0xe] %vm1284, %v1171
      %1295 = vst.msk [vmem:[%s242 + $0x28] sm:$0xf] %vm227, %v1174
      %1296 = vst.msk [vmem:[%s242 + $0x2c] sm:$0x1] %vm243, %v1175
      %1297 = vst.msk [vmem:[%s242 + $0x30] sm:$0xe] %vm1284, %v1176
      %1298 = vst.msk [vmem:[%s242 + $0x34] sm:$0xf] %vm227, %v1179
      %1299 = vst.msk [vmem:[%s242 + $0x38] sm:$0x1] %vm243, %v1180
      %1300 = vst.msk [vmem:[%s242 + $0x3c] sm:$0xe] %vm1284, %v1181
      %1301 = vst.msk [vmem:[%s242 + $0x40] sm:$0xf] %vm227, %v1184
      %1302 = vst.msk [vmem:[%s242 + $0x44] sm:$0x1] %vm243, %v1185
      %1303 = vst.msk [vmem:[%s242 + $0x48] sm:$0xe] %vm1284, %v1186
      %1304 = vst.msk [vmem:[%s242 + $0x4c] sm:$0xf] %vm227, %v1189
      %1305 = vst.msk [vmem:[%s242 + $0x50] sm:$0x1] %vm243, %v1190
      %1306 = vst.msk [vmem:[%s242 + $0x54] sm:$0xe] %vm1284, %v1191
      %1307 = vst.msk [vmem:[%s242 + $0x58] sm:$0xf] %vm227, %v1194
      %1308 = vst.msk [vmem:[%s242 + $0x5c] sm:$0x1] %vm243, %v1195
      %1309 = vst.msk [vmem:[%s242 + $0x60] sm:$0xe] %vm1284, %v1196
      %1310 = vst.msk [vmem:[%s242 + $0x64] sm:$0xf] %vm227, %v1199
      %1311 = vst.msk [vmem:[%s242 + $0x68] sm:$0x1] %vm243, %v1200
      %1312 = vst.msk [vmem:[%s242 + $0x6c] sm:$0xe] %vm1284, %v1201
      %1313 = vst.msk [vmem:[%s242 + $0x70] sm:$0xf] %vm227, %v1204
      %1314 = vst.msk [vmem:[%s242 + $0x74] sm:$0x1] %vm243, %v1205
      %1315 = vst.msk [vmem:[%s242 + $0x78] sm:$0xe] %vm1284, %v1206
      %1316 = vst.msk [vmem:[%s242 + $0x7c] sm:$0xf] %vm227, %v1209
      %1317 = vst.msk [vmem:[%s242 + $0x80] sm:$0x1] %vm243, %v1210
      %1318 = vst.msk [vmem:[%s242 + $0x84] sm:$0xe] %vm1284, %v1211
      %1319 = vst.msk [vmem:[%s242 + $0x88] sm:$0xf] %vm227, %v1214
      %1320 = vst.msk [vmem:[%s242 + $0x8c] sm:$0x1] %vm243, %v1215
      %1321 = vst.msk [vmem:[%s242 + $0x90] sm:$0xe] %vm1284, %v1216
      %1322 = vst.msk [vmem:[%s242 + $0x94] sm:$0xf] %vm227, %v1219
      %1323 = vst.msk [vmem:[%s242 + $0x98] sm:$0x1] %vm243, %v1220
      %1324 = vst.msk [vmem:[%s242 + $0x9c] sm:$0xe] %vm1284, %v1221
      %1325 = vst.msk [vmem:[%s242 + $0xa0] sm:$0xf] %vm227, %v1224
      %1326 = vst.msk [vmem:[%s242 + $0xa4] sm:$0x1] %vm243, %v1225
      %1327 = vst.msk [vmem:[%s242 + $0xa8] sm:$0xe] %vm1284, %v1226
      %1328 = vst.msk [vmem:[%s242 + $0xac] sm:$0xf] %vm227, %v1229
      %1329 = vst.msk [vmem:[%s242 + $0xb0] sm:$0x1] %vm243, %v1230
      %1330 = vst.msk [vmem:[%s242 + $0xb4] sm:$0xe] %vm1284, %v1231
      %1331 = vst.msk [vmem:[%s242 + $0xb8] sm:$0xf] %vm227, %v1234
      %1332 = vst.msk [vmem:[%s242 + $0xbc] sm:$0x1] %vm243, %v1235
      %v1333 = vld [vmem:[%s242] sm:$0xf]
      %v1334 = vld [vmem:[%s242 + $0x4] sm:$0xf]
      %v1335 = vld [vmem:[%s242 + $0xc] sm:$0xf]
      %v1336 = vld [vmem:[%s242 + $0x10] sm:$0xf]
      %v1337 = vld [vmem:[%s242 + $0x18] sm:$0xf]
      %v1338 = vld [vmem:[%s242 + $0x1c] sm:$0xf]
      %v1339 = vld [vmem:[%s242 + $0x24] sm:$0xf]
      %v1340 = vld [vmem:[%s242 + $0x28] sm:$0xf]
      %v1341 = vld [vmem:[%s242 + $0x30] sm:$0xf]
      %v1342 = vld [vmem:[%s242 + $0x34] sm:$0xf]
      %v1343 = vld [vmem:[%s242 + $0x3c] sm:$0xf]
      %v1344 = vld [vmem:[%s242 + $0x40] sm:$0xf]
      %v1345 = vld [vmem:[%s242 + $0x48] sm:$0xf]
      %v1346 = vld [vmem:[%s242 + $0x4c] sm:$0xf]
      %v1347 = vld [vmem:[%s242 + $0x54] sm:$0xf]
      %v1348 = vld [vmem:[%s242 + $0x58] sm:$0xf]
      %v1349 = vld [vmem:[%s242 + $0x60] sm:$0xf]
      %v1350 = vld [vmem:[%s242 + $0x64] sm:$0xf]
      %v1351 = vld [vmem:[%s242 + $0x6c] sm:$0xf]
      %v1352 = vld [vmem:[%s242 + $0x70] sm:$0xf]
      %v1353 = vld [vmem:[%s242 + $0x78] sm:$0xf]
      %v1354 = vld [vmem:[%s242 + $0x7c] sm:$0xf]
      %v1355 = vld [vmem:[%s242 + $0x84] sm:$0xf]
      %v1356 = vld [vmem:[%s242 + $0x88] sm:$0xf]
      %v1357 = vld [vmem:[%s242 + $0x90] sm:$0xf]
      %v1358 = vld [vmem:[%s242 + $0x94] sm:$0xf]
      %v1359 = vld [vmem:[%s242 + $0x9c] sm:$0xf]
      %v1360 = vld [vmem:[%s242 + $0xa0] sm:$0xf]
      %v1361 = vld [vmem:[%s242 + $0xa8] sm:$0xf]
      %v1362 = vld [vmem:[%s242 + $0xac] sm:$0xf]
      %v1363 = vld [vmem:[%s242 + $0xb4] sm:$0xf]
      %v1364 = vld [vmem:[%s242 + $0xb8] sm:$0xf]
      %v1365 = vld [vmem:[%s242 + $0x8] sm:$0x1]
      %v1366 = vld [vmem:[%s242 + $0x14] sm:$0x1]
      %v1367 = vld [vmem:[%s242 + $0x20] sm:$0x1]
      %v1368 = vld [vmem:[%s242 + $0x2c] sm:$0x1]
      %v1369 = vld [vmem:[%s242 + $0x38] sm:$0x1]
      %v1370 = vld [vmem:[%s242 + $0x44] sm:$0x1]
      %v1371 = vld [vmem:[%s242 + $0x50] sm:$0x1]
      %v1372 = vld [vmem:[%s242 + $0x5c] sm:$0x1]
      %v1373 = vld [vmem:[%s242 + $0x68] sm:$0x1]
      %v1374 = vld [vmem:[%s242 + $0x74] sm:$0x1]
      %v1375 = vld [vmem:[%s242 + $0x80] sm:$0x1]
      %v1376 = vld [vmem:[%s242 + $0x8c] sm:$0x1]
      %v1377 = vld [vmem:[%s242 + $0x98] sm:$0x1]
      %v1378 = vld [vmem:[%s242 + $0xa4] sm:$0x1]
      %v1379 = vld [vmem:[%s242 + $0xb0] sm:$0x1]
      %v1380 = vld [vmem:[%s242 + $0xbc] sm:$0x1]
      %vm1381 = vsmask.f32 3328
      %vm1382 = vsmask.f32 7440
      %vm1383 = vmor %vm1381, %vm1382
      %v1385 = vshrl.u32 %v1333, 16
      %v1387 = vrot.slane %v1385, 4
      %v1388 = vshll.u32 %v1333, 16
      %v1390 = vrot.slane %v1388, 5
      %v1391 = vor.u32 %v1387, %v1390
      %v1392 = vrot.slane %v1391, 4
      %v1394 = vshll.u32 %v1334, 16
      %v1396 = vrot.slane %v1394, 5
      %v1397 = vsel %vm1383, %v1392, %v1396
      %v1398 = vshrl.u32 %v1334, 16
      %v1400 = vrot.slane %v1398, 4
      %v1401 = vor.u32 %v1400, %v1396
      %v1402 = vrot.slane %v1401, 4
      %v1404 = vshll.u32 %v1365, 16
      %v1406 = vrot.slane %v1404, 5
      %v1407 = vsel %vm1383, %v1402, %v1406
      %v1409 = vshrl.u32 %v1335, 16
      %v1411 = vrot.slane %v1409, 4
      %v1412 = vshll.u32 %v1335, 16
      %v1414 = vrot.slane %v1412, 5
      %v1415 = vor.u32 %v1411, %v1414
      %v1416 = vrot.slane %v1415, 4
      %v1418 = vshll.u32 %v1336, 16
      %v1420 = vrot.slane %v1418, 5
      %v1421 = vsel %vm1383, %v1416, %v1420
      %v1422 = vshrl.u32 %v1336, 16
      %v1424 = vrot.slane %v1422, 4
      %v1425 = vor.u32 %v1424, %v1420
      %v1426 = vrot.slane %v1425, 4
      %v1428 = vshll.u32 %v1366, 16
      %v1430 = vrot.slane %v1428, 5
      %v1431 = vsel %vm1383, %v1426, %v1430
      %v1433 = vshrl.u32 %v1337, 16
      %v1435 = vrot.slane %v1433, 4
      %v1436 = vshll.u32 %v1337, 16
      %v1438 = vrot.slane %v1436, 5
      %v1439 = vor.u32 %v1435, %v1438
      %v1440 = vrot.slane %v1439, 4
      %v1442 = vshll.u32 %v1338, 16
      %v1444 = vrot.slane %v1442, 5
      %v1445 = vsel %vm1383, %v1440, %v1444
      %v1446 = vshrl.u32 %v1338, 16
      %v1448 = vrot.slane %v1446, 4
      %v1449 = vor.u32 %v1448, %v1444
      %v1450 = vrot.slane %v1449, 4
      %v1452 = vshll.u32 %v1367, 16
      %v1454 = vrot.slane %v1452, 5
      %v1455 = vsel %vm1383, %v1450, %v1454
      %v1457 = vshrl.u32 %v1339, 16
      %v1459 = vrot.slane %v1457, 4
      %v1460 = vshll.u32 %v1339, 16
      %v1462 = vrot.slane %v1460, 5
      %v1463 = vor.u32 %v1459, %v1462
      %v1464 = vrot.slane %v1463, 4
      %v1466 = vshll.u32 %v1340, 16
      %v1468 = vrot.slane %v1466, 5
      %v1469 = vsel %vm1383, %v1464, %v1468
      %v1470 = vshrl.u32 %v1340, 16
      %v1472 = vrot.slane %v1470, 4
      %v1473 = vor.u32 %v1472, %v1468
      %v1474 = vrot.slane %v1473, 4
      %v1476 = vshll.u32 %v1368, 16
      %v1478 = vrot.slane %v1476, 5
      %v1479 = vsel %vm1383, %v1474, %v1478
      %v1481 = vshrl.u32 %v1341, 16
      %v1483 = vrot.slane %v1481, 4
      %v1484 = vshll.u32 %v1341, 16
      %v1486 = vrot.slane %v1484, 5
      %v1487 = vor.u32 %v1483, %v1486
      %v1488 = vrot.slane %v1487, 4
      %v1490 = vshll.u32 %v1342, 16
      %v1492 = vrot.slane %v1490, 5
      %v1493 = vsel %vm1383, %v1488, %v1492
      %v1494 = vshrl.u32 %v1342, 16
      %v1496 = vrot.slane %v1494, 4
      %v1497 = vor.u32 %v1496, %v1492
      %v1498 = vrot.slane %v1497, 4
      %v1500 = vshll.u32 %v1369, 16
      %v1502 = vrot.slane %v1500, 5
      %v1503 = vsel %vm1383, %v1498, %v1502
      %v1505 = vshrl.u32 %v1343, 16
      %v1507 = vrot.slane %v1505, 4
      %v1508 = vshll.u32 %v1343, 16
      %v1510 = vrot.slane %v1508, 5
      %v1511 = vor.u32 %v1507, %v1510
      %v1512 = vrot.slane %v1511, 4
      %v1514 = vshll.u32 %v1344, 16
      %v1516 = vrot.slane %v1514, 5
      %v1517 = vsel %vm1383, %v1512, %v1516
      %v1518 = vshrl.u32 %v1344, 16
      %v1520 = vrot.slane %v1518, 4
      %v1521 = vor.u32 %v1520, %v1516
      %v1522 = vrot.slane %v1521, 4
      %v1524 = vshll.u32 %v1370, 16
      %v1526 = vrot.slane %v1524, 5
      %v1527 = vsel %vm1383, %v1522, %v1526
      %v1529 = vshrl.u32 %v1345, 16
      %v1531 = vrot.slane %v1529, 4
      %v1532 = vshll.u32 %v1345, 16
      %v1534 = vrot.slane %v1532, 5
      %v1535 = vor.u32 %v1531, %v1534
      %v1536 = vrot.slane %v1535, 4
      %v1538 = vshll.u32 %v1346, 16
      %v1540 = vrot.slane %v1538, 5
      %v1541 = vsel %vm1383, %v1536, %v1540
      %v1542 = vshrl.u32 %v1346, 16
      %v1544 = vrot.slane %v1542, 4
      %v1545 = vor.u32 %v1544, %v1540
      %v1546 = vrot.slane %v1545, 4
      %v1548 = vshll.u32 %v1371, 16
      %v1550 = vrot.slane %v1548, 5
      %v1551 = vsel %vm1383, %v1546, %v1550
      %v1553 = vshrl.u32 %v1347, 16
      %v1555 = vrot.slane %v1553, 4
      %v1556 = vshll.u32 %v1347, 16
      %v1558 = vrot.slane %v1556, 5
      %v1559 = vor.u32 %v1555, %v1558
      %v1560 = vrot.slane %v1559, 4
      %v1562 = vshll.u32 %v1348, 16
      %v1564 = vrot.slane %v1562, 5
      %v1565 = vsel %vm1383, %v1560, %v1564
      %v1566 = vshrl.u32 %v1348, 16
      %v1568 = vrot.slane %v1566, 4
      %v1569 = vor.u32 %v1568, %v1564
      %v1570 = vrot.slane %v1569, 4
      %v1572 = vshll.u32 %v1372, 16
      %v1574 = vrot.slane %v1572, 5
      %v1575 = vsel %vm1383, %v1570, %v1574
      %v1577 = vshrl.u32 %v1349, 16
      %v1579 = vrot.slane %v1577, 4
      %v1580 = vshll.u32 %v1349, 16
      %v1582 = vrot.slane %v1580, 5
      %v1583 = vor.u32 %v1579, %v1582
      %v1584 = vrot.slane %v1583, 4
      %v1586 = vshll.u32 %v1350, 16
      %v1588 = vrot.slane %v1586, 5
      %v1589 = vsel %vm1383, %v1584, %v1588
      %v1590 = vshrl.u32 %v1350, 16
      %v1592 = vrot.slane %v1590, 4
      %v1593 = vor.u32 %v1592, %v1588
      %v1594 = vrot.slane %v1593, 4
      %v1596 = vshll.u32 %v1373, 16
      %v1598 = vrot.slane %v1596, 5
      %v1599 = vsel %vm1383, %v1594, %v1598
      %v1601 = vshrl.u32 %v1351, 16
      %v1603 = vrot.slane %v1601, 4
      %v1604 = vshll.u32 %v1351, 16
      %v1606 = vrot.slane %v1604, 5
      %v1607 = vor.u32 %v1603, %v1606
      %v1608 = vrot.slane %v1607, 4
      %v1610 = vshll.u32 %v1352, 16
      %v1612 = vrot.slane %v1610, 5
      %v1613 = vsel %vm1383, %v1608, %v1612
      %v1614 = vshrl.u32 %v1352, 16
      %v1616 = vrot.slane %v1614, 4
      %v1617 = vor.u32 %v1616, %v1612
      %v1618 = vrot.slane %v1617, 4
      %v1620 = vshll.u32 %v1374, 16
      %v1622 = vrot.slane %v1620, 5
      %v1623 = vsel %vm1383, %v1618, %v1622
      %v1625 = vshrl.u32 %v1353, 16
      %v1627 = vrot.slane %v1625, 4
      %v1628 = vshll.u32 %v1353, 16
      %v1630 = vrot.slane %v1628, 5
      %v1631 = vor.u32 %v1627, %v1630
      %v1632 = vrot.slane %v1631, 4
      %v1634 = vshll.u32 %v1354, 16
      %v1636 = vrot.slane %v1634, 5
      %v1637 = vsel %vm1383, %v1632, %v1636
      %v1638 = vshrl.u32 %v1354, 16
      %v1640 = vrot.slane %v1638, 4
      %v1641 = vor.u32 %v1640, %v1636
      %v1642 = vrot.slane %v1641, 4
      %v1644 = vshll.u32 %v1375, 16
      %v1646 = vrot.slane %v1644, 5
      %v1647 = vsel %vm1383, %v1642, %v1646
      %v1649 = vshrl.u32 %v1355, 16
      %v1651 = vrot.slane %v1649, 4
      %v1652 = vshll.u32 %v1355, 16
      %v1654 = vrot.slane %v1652, 5
      %v1655 = vor.u32 %v1651, %v1654
      %v1656 = vrot.slane %v1655, 4
      %v1658 = vshll.u32 %v1356, 16
      %v1660 = vrot.slane %v1658, 5
      %v1661 = vsel %vm1383, %v1656, %v1660
      %v1662 = vshrl.u32 %v1356, 16
      %v1664 = vrot.slane %v1662, 4
      %v1665 = vor.u32 %v1664, %v1660
      %v1666 = vrot.slane %v1665, 4
      %v1668 = vshll.u32 %v1376, 16
      %v1670 = vrot.slane %v1668, 5
      %v1671 = vsel %vm1383, %v1666, %v1670
      %v1673 = vshrl.u32 %v1357, 16
      %v1675 = vrot.slane %v1673, 4
      %v1676 = vshll.u32 %v1357, 16
      %v1678 = vrot.slane %v1676, 5
      %v1679 = vor.u32 %v1675, %v1678
      %v1680 = vrot.slane %v1679, 4
      %v1682 = vshll.u32 %v1358, 16
      %v1684 = vrot.slane %v1682, 5
      %v1685 = vsel %vm1383, %v1680, %v1684
      %v1686 = vshrl.u32 %v1358, 16
      %v1688 = vrot.slane %v1686, 4
      %v1689 = vor.u32 %v1688, %v1684
      %v1690 = vrot.slane %v1689, 4
      %v1692 = vshll.u32 %v1377, 16
      %v1694 = vrot.slane %v1692, 5
      %v1695 = vsel %vm1383, %v1690, %v1694
      %v1697 = vshrl.u32 %v1359, 16
      %v1699 = vrot.slane %v1697, 4
      %v1700 = vshll.u32 %v1359, 16
      %v1702 = vrot.slane %v1700, 5
      %v1703 = vor.u32 %v1699, %v1702
      %v1704 = vrot.slane %v1703, 4
      %v1706 = vshll.u32 %v1360, 16
      %v1708 = vrot.slane %v1706, 5
      %v1709 = vsel %vm1383, %v1704, %v1708
      %v1710 = vshrl.u32 %v1360, 16
      %v1712 = vrot.slane %v1710, 4
      %v1713 = vor.u32 %v1712, %v1708
      %v1714 = vrot.slane %v1713, 4
      %v1716 = vshll.u32 %v1378, 16
      %v1718 = vrot.slane %v1716, 5
      %v1719 = vsel %vm1383, %v1714, %v1718
      %v1721 = vshrl.u32 %v1361, 16
      %v1723 = vrot.slane %v1721, 4
      %v1724 = vshll.u32 %v1361, 16
      %v1726 = vrot.slane %v1724, 5
      %v1727 = vor.u32 %v1723, %v1726
      %v1728 = vrot.slane %v1727, 4
      %v1730 = vshll.u32 %v1362, 16
      %v1732 = vrot.slane %v1730, 5
      %v1733 = vsel %vm1383, %v1728, %v1732
      %v1734 = vshrl.u32 %v1362, 16
      %v1736 = vrot.slane %v1734, 4
      %v1737 = vor.u32 %v1736, %v1732
      %v1738 = vrot.slane %v1737, 4
      %v1740 = vshll.u32 %v1379, 16
      %v1742 = vrot.slane %v1740, 5
      %v1743 = vsel %vm1383, %v1738, %v1742
      %v1745 = vshrl.u32 %v1363, 16
      %v1747 = vrot.slane %v1745, 4
      %v1748 = vshll.u32 %v1363, 16
      %v1750 = vrot.slane %v1748, 5
      %v1751 = vor.u32 %v1747, %v1750
      %v1752 = vrot.slane %v1751, 4
      %v1754 = vshll.u32 %v1364, 16
      %v1756 = vrot.slane %v1754, 5
      %v1757 = vsel %vm1383, %v1752, %v1756
      %v1758 = vshrl.u32 %v1364, 16
      %v1760 = vrot.slane %v1758, 4
      %v1761 = vor.u32 %v1760, %v1756
      %v1762 = vrot.slane %v1761, 4
      %v1764 = vshll.u32 %v1380, 16
      %v1766 = vrot.slane %v1764, 5
      %v1767 = vsel %vm1383, %v1762, %v1766
      %v1800 = vmax.bf16 %v1333, %v1397
      %v1801 = vmax.bf16 %v1334, %v1407
      %v1802 = vmax.bf16 %v1335, %v1421
      %v1803 = vmax.bf16 %v1336, %v1431
      %v1804 = vmax.bf16 %v1337, %v1445
      %v1805 = vmax.bf16 %v1338, %v1455
      %v1806 = vmax.bf16 %v1339, %v1469
      %v1807 = vmax.bf16 %v1340, %v1479
      %v1808 = vmax.bf16 %v1341, %v1493
      %v1809 = vmax.bf16 %v1342, %v1503
      %v1810 = vmax.bf16 %v1343, %v1517
      %v1811 = vmax.bf16 %v1344, %v1527
      %v1812 = vmax.bf16 %v1345, %v1541
      %v1813 = vmax.bf16 %v1346, %v1551
      %v1814 = vmax.bf16 %v1347, %v1565
      %v1815 = vmax.bf16 %v1348, %v1575
      %v1816 = vmax.bf16 %v1349, %v1589
      %v1817 = vmax.bf16 %v1350, %v1599
      %v1818 = vmax.bf16 %v1351, %v1613
      %v1819 = vmax.bf16 %v1352, %v1623
      %v1820 = vmax.bf16 %v1353, %v1637
      %v1821 = vmax.bf16 %v1354, %v1647
      %v1822 = vmax.bf16 %v1355, %v1661
      %v1823 = vmax.bf16 %v1356, %v1671
      %v1824 = vmax.bf16 %v1357, %v1685
      %v1825 = vmax.bf16 %v1358, %v1695
      %v1826 = vmax.bf16 %v1359, %v1709
      %v1827 = vmax.bf16 %v1360, %v1719
      %v1828 = vmax.bf16 %v1361, %v1733
      %v1829 = vmax.bf16 %v1362, %v1743
      %v1830 = vmax.bf16 %v1363, %v1757
      %v1831 = vmax.bf16 %v1364, %v1767
      %v1832 = vld [vmem:[%s242] sm:$0xe]
      %v1833 = vld [vmem:[%s242 + $0xc] sm:$0xe]
      %v1834 = vld [vmem:[%s242 + $0x18] sm:$0xe]
      %v1835 = vld [vmem:[%s242 + $0x24] sm:$0xe]
      %v1836 = vld [vmem:[%s242 + $0x30] sm:$0xe]
      %v1837 = vld [vmem:[%s242 + $0x3c] sm:$0xe]
      %v1838 = vld [vmem:[%s242 + $0x48] sm:$0xe]
      %v1839 = vld [vmem:[%s242 + $0x54] sm:$0xe]
      %v1840 = vld [vmem:[%s242 + $0x60] sm:$0xe]
      %v1841 = vld [vmem:[%s242 + $0x6c] sm:$0xe]
      %v1842 = vld [vmem:[%s242 + $0x78] sm:$0xe]
      %v1843 = vld [vmem:[%s242 + $0x84] sm:$0xe]
      %v1844 = vld [vmem:[%s242 + $0x90] sm:$0xe]
      %v1845 = vld [vmem:[%s242 + $0x9c] sm:$0xe]
      %v1846 = vld [vmem:[%s242 + $0xa8] sm:$0xe]
      %v1847 = vld [vmem:[%s242 + $0xb4] sm:$0xe]
      %vm1896 = vcmask 1042432
      %vm1897 = vcmask 1046532
      %vm1898 = vmor %vm1896, %vm1897
      %v1899 = vrot.slane %v1832, 5
      %v1900 = vrot.slane %v1899, 4
      %v1901 = vrot.slane %v1334, 5
      %v1902 = vsel %vm1898, %v1900, %v1901
      %v1903 = vrot.slane %v1901, 4
      %v1904 = vrot.slane %v1365, 5
      %v1905 = vsel %vm1898, %v1903, %v1904
      %v1906 = vrot.slane %v1833, 5
      %v1907 = vrot.slane %v1906, 4
      %v1908 = vrot.slane %v1336, 5
      %v1909 = vsel %vm1898, %v1907, %v1908
      %v1910 = vrot.slane %v1908, 4
      %v1911 = vrot.slane %v1366, 5
      %v1912 = vsel %vm1898, %v1910, %v1911
      %v1913 = vrot.slane %v1834, 5
      %v1914 = vrot.slane %v1913, 4
      %v1915 = vrot.slane %v1338, 5
      %v1916 = vsel %vm1898, %v1914, %v1915
      %v1917 = vrot.slane %v1915, 4
      %v1918 = vrot.slane %v1367, 5
      %v1919 = vsel %vm1898, %v1917, %v1918
      %v1920 = vrot.slane %v1835, 5
      %v1921 = vrot.slane %v1920, 4
      %v1922 = vrot.slane %v1340, 5
      %v1923 = vsel %vm1898, %v1921, %v1922
      %v1924 = vrot.slane %v1922, 4
      %v1925 = vrot.slane %v1368, 5
      %v1926 = vsel %vm1898, %v1924, %v1925
      %v1927 = vrot.slane %v1836, 5
      %v1928 = vrot.slane %v1927, 4
      %v1929 = vrot.slane %v1342, 5
      %v1930 = vsel %vm1898, %v1928, %v1929
      %v1931 = vrot.slane %v1929, 4
      %v1932 = vrot.slane %v1369, 5
      %v1933 = vsel %vm1898, %v1931, %v1932
      %v1934 = vrot.slane %v1837, 5
      %v1935 = vrot.slane %v1934, 4
      %v1936 = vrot.slane %v1344, 5
      %v1937 = vsel %vm1898, %v1935, %v1936
      %v1938 = vrot.slane %v1936, 4
      %v1939 = vrot.slane %v1370, 5
      %v1940 = vsel %vm1898, %v1938, %v1939
      %v1941 = vrot.slane %v1838, 5
      %v1942 = vrot.slane %v1941, 4
      %v1943 = vrot.slane %v1346, 5
      %v1944 = vsel %vm1898, %v1942, %v1943
      %v1945 = vrot.slane %v1943, 4
      %v1946 = vrot.slane %v1371, 5
      %v1947 = vsel %vm1898, %v1945, %v1946
      %v1948 = vrot.slane %v1839, 5
      %v1949 = vrot.slane %v1948, 4
      %v1950 = vrot.slane %v1348, 5
      %v1951 = vsel %vm1898, %v1949, %v1950
      %v1952 = vrot.slane %v1950, 4
      %v1953 = vrot.slane %v1372, 5
      %v1954 = vsel %vm1898, %v1952, %v1953
      %v1955 = vrot.slane %v1840, 5
      %v1956 = vrot.slane %v1955, 4
      %v1957 = vrot.slane %v1350, 5
      %v1958 = vsel %vm1898, %v1956, %v1957
      %v1959 = vrot.slane %v1957, 4
      %v1960 = vrot.slane %v1373, 5
      %v1961 = vsel %vm1898, %v1959, %v1960
      %v1962 = vrot.slane %v1841, 5
      %v1963 = vrot.slane %v1962, 4
      %v1964 = vrot.slane %v1352, 5
      %v1965 = vsel %vm1898, %v1963, %v1964
      %v1966 = vrot.slane %v1964, 4
      %v1967 = vrot.slane %v1374, 5
      %v1968 = vsel %vm1898, %v1966, %v1967
      %v1969 = vrot.slane %v1842, 5
      %v1970 = vrot.slane %v1969, 4
      %v1971 = vrot.slane %v1354, 5
      %v1972 = vsel %vm1898, %v1970, %v1971
      %v1973 = vrot.slane %v1971, 4
      %v1974 = vrot.slane %v1375, 5
      %v1975 = vsel %vm1898, %v1973, %v1974
      %v1976 = vrot.slane %v1843, 5
      %v1977 = vrot.slane %v1976, 4
      %v1978 = vrot.slane %v1356, 5
      %v1979 = vsel %vm1898, %v1977, %v1978
      %v1980 = vrot.slane %v1978, 4
      %v1981 = vrot.slane %v1376, 5
      %v1982 = vsel %vm1898, %v1980, %v1981
      %v1983 = vrot.slane %v1844, 5
      %v1984 = vrot.slane %v1983, 4
      %v1985 = vrot.slane %v1358, 5
      %v1986 = vsel %vm1898, %v1984, %v1985
      %v1987 = vrot.slane %v1985, 4
      %v1988 = vrot.slane %v1377, 5
      %v1989 = vsel %vm1898, %v1987, %v1988
      %v1990 = vrot.slane %v1845, 5
      %v1991 = vrot.slane %v1990, 4
      %v1992 = vrot.slane %v1360, 5
      %v1993 = vsel %vm1898, %v1991, %v1992
      %v1994 = vrot.slane %v1992, 4
      %v1995 = vrot.slane %v1378, 5
      %v1996 = vsel %vm1898, %v1994, %v1995
      %v1997 = vrot.slane %v1846, 5
      %v1998 = vrot.slane %v1997, 4
      %v1999 = vrot.slane %v1362, 5
      %v2000 = vsel %vm1898, %v1998, %v1999
      %v2001 = vrot.slane %v1999, 4
      %v2002 = vrot.slane %v1379, 5
      %v2003 = vsel %vm1898, %v2001, %v2002
      %v2004 = vrot.slane %v1847, 5
      %v2005 = vrot.slane %v2004, 4
      %v2006 = vrot.slane %v1364, 5
      %v2007 = vsel %vm1898, %v2005, %v2006
      %v2008 = vrot.slane %v2006, 4
      %v2009 = vrot.slane %v1380, 5
      %v2010 = vsel %vm1898, %v2008, %v2009
      %v2043 = vmax.bf16 %v1800, %v1902
      %v2044 = vmax.bf16 %v1801, %v1905
      %v2045 = vmax.bf16 %v1802, %v1909
      %v2046 = vmax.bf16 %v1803, %v1912
      %v2047 = vmax.bf16 %v1804, %v1916
      %v2048 = vmax.bf16 %v1805, %v1919
      %v2049 = vmax.bf16 %v1806, %v1923
      %v2050 = vmax.bf16 %v1807, %v1926
      %v2051 = vmax.bf16 %v1808, %v1930
      %v2052 = vmax.bf16 %v1809, %v1933
      %v2053 = vmax.bf16 %v1810, %v1937
      %v2054 = vmax.bf16 %v1811, %v1940
      %v2055 = vmax.bf16 %v1812, %v1944
      %v2056 = vmax.bf16 %v1813, %v1947
      %v2057 = vmax.bf16 %v1814, %v1951
      %v2058 = vmax.bf16 %v1815, %v1954
      %v2059 = vmax.bf16 %v1816, %v1958
      %v2060 = vmax.bf16 %v1817, %v1961
      %v2061 = vmax.bf16 %v1818, %v1965
      %v2062 = vmax.bf16 %v1819, %v1968
      %v2063 = vmax.bf16 %v1820, %v1972
      %v2064 = vmax.bf16 %v1821, %v1975
      %v2065 = vmax.bf16 %v1822, %v1979
      %v2066 = vmax.bf16 %v1823, %v1982
      %v2067 = vmax.bf16 %v1824, %v1986
      %v2068 = vmax.bf16 %v1825, %v1989
      %v2069 = vmax.bf16 %v1826, %v1993
      %v2070 = vmax.bf16 %v1827, %v1996
      %v2071 = vmax.bf16 %v1828, %v2000
      %v2072 = vmax.bf16 %v1829, %v2003
      %v2073 = vmax.bf16 %v1830, %v2007
      %v2074 = vmax.bf16 %v1831, %v2010
      %v2075 = vld [vmem:[%s242 + $0x8] sm:$0x3]
      %v2076 = vld [vmem:[%s242 + $0x14] sm:$0x3]
      %v2077 = vld [vmem:[%s242 + $0x20] sm:$0x3]
      %v2078 = vld [vmem:[%s242 + $0x2c] sm:$0x3]
      %v2079 = vld [vmem:[%s242 + $0x38] sm:$0x3]
      %v2080 = vld [vmem:[%s242 + $0x44] sm:$0x3]
      %v2081 = vld [vmem:[%s242 + $0x50] sm:$0x3]
      %v2082 = vld [vmem:[%s242 + $0x5c] sm:$0x3]
      %v2083 = vld [vmem:[%s242 + $0x68] sm:$0x3]
      %v2084 = vld [vmem:[%s242 + $0x74] sm:$0x3]
      %v2085 = vld [vmem:[%s242 + $0x80] sm:$0x3]
      %v2086 = vld [vmem:[%s242 + $0x8c] sm:$0x3]
      %v2087 = vld [vmem:[%s242 + $0x98] sm:$0x3]
      %v2088 = vld [vmem:[%s242 + $0xa4] sm:$0x3]
      %v2089 = vld [vmem:[%s242 + $0xb0] sm:$0x3]
      %v2090 = vld [vmem:[%s242 + $0xbc] sm:$0x3]
      %vm2091 = vsmask.f32 2304
      %vm2092 = vsmask.f32 6416
      %vm2093 = vmor %vm2091, %vm2092
      %v2095 = vshrl.u32 %v1832, 16
      %v2097 = vrot.slane %v2095, 5
      %v2098 = vshll.u32 %v1832, 16
      %v2100 = vrot.slane %v2098, 6
      %v2101 = vor.u32 %v2097, %v2100
      %v2102 = vrot.slane %v2101, 4
      %v2103 = vrot.slane %v1398, 5
      %v2104 = vrot.slane %v1394, 6
      %v2105 = vor.u32 %v2103, %v2104
      %v2106 = vsel %vm2093, %v2102, %v2105
      %v2107 = vrot.slane %v2105, 4
      %v2109 = vshrl.u32 %v2075, 16
      %v2111 = vrot.slane %v2109, 5
      %v2112 = vshll.u32 %v2075, 16
      %v2114 = vrot.slane %v2112, 6
      %v2115 = vor.u32 %v2111, %v2114
      %v2116 = vsel %vm2093, %v2107, %v2115
      %v2118 = vshrl.u32 %v1833, 16
      %v2120 = vrot.slane %v2118, 5
      %v2121 = vshll.u32 %v1833, 16
      %v2123 = vrot.slane %v2121, 6
      %v2124 = vor.u32 %v2120, %v2123
      %v2125 = vrot.slane %v2124, 4
      %v2126 = vrot.slane %v1422, 5
      %v2127 = vrot.slane %v1418, 6
      %v2128 = vor.u32 %v2126, %v2127
      %v2129 = vsel %vm2093, %v2125, %v2128
      %v2130 = vrot.slane %v2128, 4
      %v2132 = vshrl.u32 %v2076, 16
      %v2134 = vrot.slane %v2132, 5
      %v2135 = vshll.u32 %v2076, 16
      %v2137 = vrot.slane %v2135, 6
      %v2138 = vor.u32 %v2134, %v2137
      %v2139 = vsel %vm2093, %v2130, %v2138
      %v2141 = vshrl.u32 %v1834, 16
      %v2143 = vrot.slane %v2141, 5
      %v2144 = vshll.u32 %v1834, 16
      %v2146 = vrot.slane %v2144, 6
      %v2147 = vor.u32 %v2143, %v2146
      %v2148 = vrot.slane %v2147, 4
      %v2149 = vrot.slane %v1446, 5
      %v2150 = vrot.slane %v1442, 6
      %v2151 = vor.u32 %v2149, %v2150
      %v2152 = vsel %vm2093, %v2148, %v2151
      %v2153 = vrot.slane %v2151, 4
      %v2155 = vshrl.u32 %v2077, 16
      %v2157 = vrot.slane %v2155, 5
      %v2158 = vshll.u32 %v2077, 16
      %v2160 = vrot.slane %v2158, 6
      %v2161 = vor.u32 %v2157, %v2160
      %v2162 = vsel %vm2093, %v2153, %v2161
      %v2164 = vshrl.u32 %v1835, 16
      %v2166 = vrot.slane %v2164, 5
      %v2167 = vshll.u32 %v1835, 16
      %v2169 = vrot.slane %v2167, 6
      %v2170 = vor.u32 %v2166, %v2169
      %v2171 = vrot.slane %v2170, 4
      %v2172 = vrot.slane %v1470, 5
      %v2173 = vrot.slane %v1466, 6
      %v2174 = vor.u32 %v2172, %v2173
      %v2175 = vsel %vm2093, %v2171, %v2174
      %v2176 = vrot.slane %v2174, 4
      %v2178 = vshrl.u32 %v2078, 16
      %v2180 = vrot.slane %v2178, 5
      %v2181 = vshll.u32 %v2078, 16
      %v2183 = vrot.slane %v2181, 6
      %v2184 = vor.u32 %v2180, %v2183
      %v2185 = vsel %vm2093, %v2176, %v2184
      %v2187 = vshrl.u32 %v1836, 16
      %v2189 = vrot.slane %v2187, 5
      %v2190 = vshll.u32 %v1836, 16
      %v2192 = vrot.slane %v2190, 6
      %v2193 = vor.u32 %v2189, %v2192
      %v2194 = vrot.slane %v2193, 4
      %v2195 = vrot.slane %v1494, 5
      %v2196 = vrot.slane %v1490, 6
      %v2197 = vor.u32 %v2195, %v2196
      %v2198 = vsel %vm2093, %v2194, %v2197
      %v2199 = vrot.slane %v2197, 4
      %v2201 = vshrl.u32 %v2079, 16
      %v2203 = vrot.slane %v2201, 5
      %v2204 = vshll.u32 %v2079, 16
      %v2206 = vrot.slane %v2204, 6
      %v2207 = vor.u32 %v2203, %v2206
      %v2208 = vsel %vm2093, %v2199, %v2207
      %v2210 = vshrl.u32 %v1837, 16
      %v2212 = vrot.slane %v2210, 5
      %v2213 = vshll.u32 %v1837, 16
      %v2215 = vrot.slane %v2213, 6
      %v2216 = vor.u32 %v2212, %v2215
      %v2217 = vrot.slane %v2216, 4
      %v2218 = vrot.slane %v1518, 5
      %v2219 = vrot.slane %v1514, 6
      %v2220 = vor.u32 %v2218, %v2219
      %v2221 = vsel %vm2093, %v2217, %v2220
      %v2222 = vrot.slane %v2220, 4
      %v2224 = vshrl.u32 %v2080, 16
      %v2226 = vrot.slane %v2224, 5
      %v2227 = vshll.u32 %v2080, 16
      %v2229 = vrot.slane %v2227, 6
      %v2230 = vor.u32 %v2226, %v2229
      %v2231 = vsel %vm2093, %v2222, %v2230
      %v2233 = vshrl.u32 %v1838, 16
      %v2235 = vrot.slane %v2233, 5
      %v2236 = vshll.u32 %v1838, 16
      %v2238 = vrot.slane %v2236, 6
      %v2239 = vor.u32 %v2235, %v2238
      %v2240 = vrot.slane %v2239, 4
      %v2241 = vrot.slane %v1542, 5
      %v2242 = vrot.slane %v1538, 6
      %v2243 = vor.u32 %v2241, %v2242
      %v2244 = vsel %vm2093, %v2240, %v2243
      %v2245 = vrot.slane %v2243, 4
      %v2247 = vshrl.u32 %v2081, 16
      %v2249 = vrot.slane %v2247, 5
      %v2250 = vshll.u32 %v2081, 16
      %v2252 = vrot.slane %v2250, 6
      %v2253 = vor.u32 %v2249, %v2252
      %v2254 = vsel %vm2093, %v2245, %v2253
      %v2256 = vshrl.u32 %v1839, 16
      %v2258 = vrot.slane %v2256, 5
      %v2259 = vshll.u32 %v1839, 16
      %v2261 = vrot.slane %v2259, 6
      %v2262 = vor.u32 %v2258, %v2261
      %v2263 = vrot.slane %v2262, 4
      %v2264 = vrot.slane %v1566, 5
      %v2265 = vrot.slane %v1562, 6
      %v2266 = vor.u32 %v2264, %v2265
      %v2267 = vsel %vm2093, %v2263, %v2266
      %v2268 = vrot.slane %v2266, 4
      %v2270 = vshrl.u32 %v2082, 16
      %v2272 = vrot.slane %v2270, 5
      %v2273 = vshll.u32 %v2082, 16
      %v2275 = vrot.slane %v2273, 6
      %v2276 = vor.u32 %v2272, %v2275
      %v2277 = vsel %vm2093, %v2268, %v2276
      %v2279 = vshrl.u32 %v1840, 16
      %v2281 = vrot.slane %v2279, 5
      %v2282 = vshll.u32 %v1840, 16
      %v2284 = vrot.slane %v2282, 6
      %v2285 = vor.u32 %v2281, %v2284
      %v2286 = vrot.slane %v2285, 4
      %v2287 = vrot.slane %v1590, 5
      %v2288 = vrot.slane %v1586, 6
      %v2289 = vor.u32 %v2287, %v2288
      %v2290 = vsel %vm2093, %v2286, %v2289
      %v2291 = vrot.slane %v2289, 4
      %v2293 = vshrl.u32 %v2083, 16
      %v2295 = vrot.slane %v2293, 5
      %v2296 = vshll.u32 %v2083, 16
      %v2298 = vrot.slane %v2296, 6
      %v2299 = vor.u32 %v2295, %v2298
      %v2300 = vsel %vm2093, %v2291, %v2299
      %v2302 = vshrl.u32 %v1841, 16
      %v2304 = vrot.slane %v2302, 5
      %v2305 = vshll.u32 %v1841, 16
      %v2307 = vrot.slane %v2305, 6
      %v2308 = vor.u32 %v2304, %v2307
      %v2309 = vrot.slane %v2308, 4
      %v2310 = vrot.slane %v1614, 5
      %v2311 = vrot.slane %v1610, 6
      %v2312 = vor.u32 %v2310, %v2311
      %v2313 = vsel %vm2093, %v2309, %v2312
      %v2314 = vrot.slane %v2312, 4
      %v2316 = vshrl.u32 %v2084, 16
      %v2318 = vrot.slane %v2316, 5
      %v2319 = vshll.u32 %v2084, 16
      %v2321 = vrot.slane %v2319, 6
      %v2322 = vor.u32 %v2318, %v2321
      %v2323 = vsel %vm2093, %v2314, %v2322
      %v2325 = vshrl.u32 %v1842, 16
      %v2327 = vrot.slane %v2325, 5
      %v2328 = vshll.u32 %v1842, 16
      %v2330 = vrot.slane %v2328, 6
      %v2331 = vor.u32 %v2327, %v2330
      %v2332 = vrot.slane %v2331, 4
      %v2333 = vrot.slane %v1638, 5
      %v2334 = vrot.slane %v1634, 6
      %v2335 = vor.u32 %v2333, %v2334
      %v2336 = vsel %vm2093, %v2332, %v2335
      %v2337 = vrot.slane %v2335, 4
      %v2339 = vshrl.u32 %v2085, 16
      %v2341 = vrot.slane %v2339, 5
      %v2342 = vshll.u32 %v2085, 16
      %v2344 = vrot.slane %v2342, 6
      %v2345 = vor.u32 %v2341, %v2344
      %v2346 = vsel %vm2093, %v2337, %v2345
      %v2348 = vshrl.u32 %v1843, 16
      %v2350 = vrot.slane %v2348, 5
      %v2351 = vshll.u32 %v1843, 16
      %v2353 = vrot.slane %v2351, 6
      %v2354 = vor.u32 %v2350, %v2353
      %v2355 = vrot.slane %v2354, 4
      %v2356 = vrot.slane %v1662, 5
      %v2357 = vrot.slane %v1658, 6
      %v2358 = vor.u32 %v2356, %v2357
      %v2359 = vsel %vm2093, %v2355, %v2358
      %v2360 = vrot.slane %v2358, 4
      %v2362 = vshrl.u32 %v2086, 16
      %v2364 = vrot.slane %v2362, 5
      %v2365 = vshll.u32 %v2086, 16
      %v2367 = vrot.slane %v2365, 6
      %v2368 = vor.u32 %v2364, %v2367
      %v2369 = vsel %vm2093, %v2360, %v2368
      %v2371 = vshrl.u32 %v1844, 16
      %v2373 = vrot.slane %v2371, 5
      %v2374 = vshll.u32 %v1844, 16
      %v2376 = vrot.slane %v2374, 6
      %v2377 = vor.u32 %v2373, %v2376
      %v2378 = vrot.slane %v2377, 4
      %v2379 = vrot.slane %v1686, 5
      %v2380 = vrot.slane %v1682, 6
      %v2381 = vor.u32 %v2379, %v2380
      %v2382 = vsel %vm2093, %v2378, %v2381
      %v2383 = vrot.slane %v2381, 4
      %v2385 = vshrl.u32 %v2087, 16
      %v2387 = vrot.slane %v2385, 5
      %v2388 = vshll.u32 %v2087, 16
      %v2390 = vrot.slane %v2388, 6
      %v2391 = vor.u32 %v2387, %v2390
      %v2392 = vsel %vm2093, %v2383, %v2391
      %v2394 = vshrl.u32 %v1845, 16
      %v2396 = vrot.slane %v2394, 5
      %v2397 = vshll.u32 %v1845, 16
      %v2399 = vrot.slane %v2397, 6
      %v2400 = vor.u32 %v2396, %v2399
      %v2401 = vrot.slane %v2400, 4
      %v2402 = vrot.slane %v1710, 5
      %v2403 = vrot.slane %v1706, 6
      %v2404 = vor.u32 %v2402, %v2403
      %v2405 = vsel %vm2093, %v2401, %v2404
      %v2406 = vrot.slane %v2404, 4
      %v2408 = vshrl.u32 %v2088, 16
      %v2410 = vrot.slane %v2408, 5
      %v2411 = vshll.u32 %v2088, 16
      %v2413 = vrot.slane %v2411, 6
      %v2414 = vor.u32 %v2410, %v2413
      %v2415 = vsel %vm2093, %v2406, %v2414
      %v2417 = vshrl.u32 %v1846, 16
      %v2419 = vrot.slane %v2417, 5
      %v2420 = vshll.u32 %v1846, 16
      %v2422 = vrot.slane %v2420, 6
      %v2423 = vor.u32 %v2419, %v2422
      %v2424 = vrot.slane %v2423, 4
      %v2425 = vrot.slane %v1734, 5
      %v2426 = vrot.slane %v1730, 6
      %v2427 = vor.u32 %v2425, %v2426
      %v2428 = vsel %vm2093, %v2424, %v2427
      %v2429 = vrot.slane %v2427, 4
      %v2431 = vshrl.u32 %v2089, 16
      %v2433 = vrot.slane %v2431, 5
      %v2434 = vshll.u32 %v2089, 16
      %v2436 = vrot.slane %v2434, 6
      %v2437 = vor.u32 %v2433, %v2436
      %v2438 = vsel %vm2093, %v2429, %v2437
      %v2440 = vshrl.u32 %v1847, 16
      %v2442 = vrot.slane %v2440, 5
      %v2443 = vshll.u32 %v1847, 16
      %v2445 = vrot.slane %v2443, 6
      %v2446 = vor.u32 %v2442, %v2445
      %v2447 = vrot.slane %v2446, 4
      %v2448 = vrot.slane %v1758, 5
      %v2449 = vrot.slane %v1754, 6
      %v2450 = vor.u32 %v2448, %v2449
      %v2451 = vsel %vm2093, %v2447, %v2450
      %v2452 = vrot.slane %v2450, 4
      %v2454 = vshrl.u32 %v2090, 16
      %v2456 = vrot.slane %v2454, 5
      %v2457 = vshll.u32 %v2090, 16
      %v2459 = vrot.slane %v2457, 6
      %v2460 = vor.u32 %v2456, %v2459
      %v2461 = vsel %vm2093, %v2452, %v2460
      %v2494 = vmax.bf16 %v2043, %v2106
      %v2495 = vmax.bf16 %v2044, %v2116
      %v2496 = vmax.bf16 %v2045, %v2129
      %v2497 = vmax.bf16 %v2046, %v2139
      %v2498 = vmax.bf16 %v2047, %v2152
      %v2499 = vmax.bf16 %v2048, %v2162
      %v2500 = vmax.bf16 %v2049, %v2175
      %v2501 = vmax.bf16 %v2050, %v2185
      %v2502 = vmax.bf16 %v2051, %v2198
      %v2503 = vmax.bf16 %v2052, %v2208
      %v2504 = vmax.bf16 %v2053, %v2221
      %v2505 = vmax.bf16 %v2054, %v2231
      %v2506 = vmax.bf16 %v2055, %v2244
      %v2507 = vmax.bf16 %v2056, %v2254
      %v2508 = vmax.bf16 %v2057, %v2267
      %v2509 = vmax.bf16 %v2058, %v2277
      %v2510 = vmax.bf16 %v2059, %v2290
      %v2511 = vmax.bf16 %v2060, %v2300
      %v2512 = vmax.bf16 %v2061, %v2313
      %v2513 = vmax.bf16 %v2062, %v2323
      %v2514 = vmax.bf16 %v2063, %v2336
      %v2515 = vmax.bf16 %v2064, %v2346
      %v2516 = vmax.bf16 %v2065, %v2359
      %v2517 = vmax.bf16 %v2066, %v2369
      %v2518 = vmax.bf16 %v2067, %v2382
      %v2519 = vmax.bf16 %v2068, %v2392
      %v2520 = vmax.bf16 %v2069, %v2405
      %v2521 = vmax.bf16 %v2070, %v2415
      %v2522 = vmax.bf16 %v2071, %v2428
      %v2523 = vmax.bf16 %v2072, %v2438
      %v2524 = vmax.bf16 %v2073, %v2451
      %v2525 = vmax.bf16 %v2074, %v2461
      %v2526 = vld [vmem:[%s242] sm:$0xc]
      %v2527 = vld [vmem:[%s242 + $0xc] sm:$0xc]
      %v2528 = vld [vmem:[%s242 + $0x18] sm:$0xc]
      %v2529 = vld [vmem:[%s242 + $0x24] sm:$0xc]
      %v2530 = vld [vmem:[%s242 + $0x30] sm:$0xc]
      %v2531 = vld [vmem:[%s242 + $0x3c] sm:$0xc]
      %v2532 = vld [vmem:[%s242 + $0x48] sm:$0xc]
      %v2533 = vld [vmem:[%s242 + $0x54] sm:$0xc]
      %v2534 = vld [vmem:[%s242 + $0x60] sm:$0xc]
      %v2535 = vld [vmem:[%s242 + $0x6c] sm:$0xc]
      %v2536 = vld [vmem:[%s242 + $0x78] sm:$0xc]
      %v2537 = vld [vmem:[%s242 + $0x84] sm:$0xc]
      %v2538 = vld [vmem:[%s242 + $0x90] sm:$0xc]
      %v2539 = vld [vmem:[%s242 + $0x9c] sm:$0xc]
      %v2540 = vld [vmem:[%s242 + $0xa8] sm:$0xc]
      %v2541 = vld [vmem:[%s242 + $0xb4] sm:$0xc]
      %vm2574 = vcmask 1041408
      %vm2575 = vcmask 1045508
      %vm2576 = vmor %vm2574, %vm2575
      %v2577 = vrot.slane %v2526, 6
      %v2578 = vrot.slane %v2577, 4
      %v2579 = vrot.slane %v1334, 6
      %v2580 = vsel %vm2576, %v2578, %v2579
      %v2581 = vrot.slane %v2579, 4
      %v2582 = vrot.slane %v2075, 6
      %v2583 = vsel %vm2576, %v2581, %v2582
      %v2584 = vrot.slane %v2527, 6
      %v2585 = vrot.slane %v2584, 4
      %v2586 = vrot.slane %v1336, 6
      %v2587 = vsel %vm2576, %v2585, %v2586
      %v2588 = vrot.slane %v2586, 4
      %v2589 = vrot.slane %v2076, 6
      %v2590 = vsel %vm2576, %v2588, %v2589
      %v2591 = vrot.slane %v2528, 6
      %v2592 = vrot.slane %v2591, 4
      %v2593 = vrot.slane %v1338, 6
      %v2594 = vsel %vm2576, %v2592, %v2593
      %v2595 = vrot.slane %v2593, 4
      %v2596 = vrot.slane %v2077, 6
      %v2597 = vsel %vm2576, %v2595, %v2596
      %v2598 = vrot.slane %v2529, 6
      %v2599 = vrot.slane %v2598, 4
      %v2600 = vrot.slane %v1340, 6
      %v2601 = vsel %vm2576, %v2599, %v2600
      %v2602 = vrot.slane %v2600, 4
      %v2603 = vrot.slane %v2078, 6
      %v2604 = vsel %vm2576, %v2602, %v2603
      %v2605 = vrot.slane %v2530, 6
      %v2606 = vrot.slane %v2605, 4
      %v2607 = vrot.slane %v1342, 6
      %v2608 = vsel %vm2576, %v2606, %v2607
      %v2609 = vrot.slane %v2607, 4
      %v2610 = vrot.slane %v2079, 6
      %v2611 = vsel %vm2576, %v2609, %v2610
      %v2612 = vrot.slane %v2531, 6
      %v2613 = vrot.slane %v2612, 4
      %v2614 = vrot.slane %v1344, 6
      %v2615 = vsel %vm2576, %v2613, %v2614
      %v2616 = vrot.slane %v2614, 4
      %v2617 = vrot.slane %v2080, 6
      %v2618 = vsel %vm2576, %v2616, %v2617
      %v2619 = vrot.slane %v2532, 6
      %v2620 = vrot.slane %v2619, 4
      %v2621 = vrot.slane %v1346, 6
      %v2622 = vsel %vm2576, %v2620, %v2621
      %v2623 = vrot.slane %v2621, 4
      %v2624 = vrot.slane %v2081, 6
      %v2625 = vsel %vm2576, %v2623, %v2624
      %v2626 = vrot.slane %v2533, 6
      %v2627 = vrot.slane %v2626, 4
      %v2628 = vrot.slane %v1348, 6
      %v2629 = vsel %vm2576, %v2627, %v2628
      %v2630 = vrot.slane %v2628, 4
      %v2631 = vrot.slane %v2082, 6
      %v2632 = vsel %vm2576, %v2630, %v2631
      %v2633 = vrot.slane %v2534, 6
      %v2634 = vrot.slane %v2633, 4
      %v2635 = vrot.slane %v1350, 6
      %v2636 = vsel %vm2576, %v2634, %v2635
      %v2637 = vrot.slane %v2635, 4
      %v2638 = vrot.slane %v2083, 6
      %v2639 = vsel %vm2576, %v2637, %v2638
      %v2640 = vrot.slane %v2535, 6
      %v2641 = vrot.slane %v2640, 4
      %v2642 = vrot.slane %v1352, 6
      %v2643 = vsel %vm2576, %v2641, %v2642
      %v2644 = vrot.slane %v2642, 4
      %v2645 = vrot.slane %v2084, 6
      %v2646 = vsel %vm2576, %v2644, %v2645
      %v2647 = vrot.slane %v2536, 6
      %v2648 = vrot.slane %v2647, 4
      %v2649 = vrot.slane %v1354, 6
      %v2650 = vsel %vm2576, %v2648, %v2649
      %v2651 = vrot.slane %v2649, 4
      %v2652 = vrot.slane %v2085, 6
      %v2653 = vsel %vm2576, %v2651, %v2652
      %v2654 = vrot.slane %v2537, 6
      %v2655 = vrot.slane %v2654, 4
      %v2656 = vrot.slane %v1356, 6
      %v2657 = vsel %vm2576, %v2655, %v2656
      %v2658 = vrot.slane %v2656, 4
      %v2659 = vrot.slane %v2086, 6
      %v2660 = vsel %vm2576, %v2658, %v2659
      %v2661 = vrot.slane %v2538, 6
      %v2662 = vrot.slane %v2661, 4
      %v2663 = vrot.slane %v1358, 6
      %v2664 = vsel %vm2576, %v2662, %v2663
      %v2665 = vrot.slane %v2663, 4
      %v2666 = vrot.slane %v2087, 6
      %v2667 = vsel %vm2576, %v2665, %v2666
      %v2668 = vrot.slane %v2539, 6
      %v2669 = vrot.slane %v2668, 4
      %v2670 = vrot.slane %v1360, 6
      %v2671 = vsel %vm2576, %v2669, %v2670
      %v2672 = vrot.slane %v2670, 4
      %v2673 = vrot.slane %v2088, 6
      %v2674 = vsel %vm2576, %v2672, %v2673
      %v2675 = vrot.slane %v2540, 6
      %v2676 = vrot.slane %v2675, 4
      %v2677 = vrot.slane %v1362, 6
      %v2678 = vsel %vm2576, %v2676, %v2677
      %v2679 = vrot.slane %v2677, 4
      %v2680 = vrot.slane %v2089, 6
      %v2681 = vsel %vm2576, %v2679, %v2680
      %v2682 = vrot.slane %v2541, 6
      %v2683 = vrot.slane %v2682, 4
      %v2684 = vrot.slane %v1364, 6
      %v2685 = vsel %vm2576, %v2683, %v2684
      %v2686 = vrot.slane %v2684, 4
      %v2687 = vrot.slane %v2090, 6
      %v2688 = vsel %vm2576, %v2686, %v2687
      %v2721 = vmax.bf16 %v2494, %v2580
      %v2722 = vmax.bf16 %v2495, %v2583
      %v2723 = vmax.bf16 %v2496, %v2587
      %v2724 = vmax.bf16 %v2497, %v2590
      %v2725 = vmax.bf16 %v2498, %v2594
      %v2726 = vmax.bf16 %v2499, %v2597
      %v2727 = vmax.bf16 %v2500, %v2601
      %v2728 = vmax.bf16 %v2501, %v2604
      %v2729 = vmax.bf16 %v2502, %v2608
      %v2730 = vmax.bf16 %v2503, %v2611
      %v2731 = vmax.bf16 %v2504, %v2615
      %v2732 = vmax.bf16 %v2505, %v2618
      %v2733 = vmax.bf16 %v2506, %v2622
      %v2734 = vmax.bf16 %v2507, %v2625
      %v2735 = vmax.bf16 %v2508, %v2629
      %v2736 = vmax.bf16 %v2509, %v2632
      %v2737 = vmax.bf16 %v2510, %v2636
      %v2738 = vmax.bf16 %v2511, %v2639
      %v2739 = vmax.bf16 %v2512, %v2643
      %v2740 = vmax.bf16 %v2513, %v2646
      %v2741 = vmax.bf16 %v2514, %v2650
      %v2742 = vmax.bf16 %v2515, %v2653
      %v2743 = vmax.bf16 %v2516, %v2657
      %v2744 = vmax.bf16 %v2517, %v2660
      %v2745 = vmax.bf16 %v2518, %v2664
      %v2746 = vmax.bf16 %v2519, %v2667
      %v2747 = vmax.bf16 %v2520, %v2671
      %v2748 = vmax.bf16 %v2521, %v2674
      %v2749 = vmax.bf16 %v2522, %v2678
      %v2750 = vmax.bf16 %v2523, %v2681
      %v2751 = vmax.bf16 %v2524, %v2685
      %v2752 = vmax.bf16 %v2525, %v2688
      %2753 = vst.msk [vmem:[%s242] sm:$0xf] %vm227, %v2721
      %2754 = vst.msk [vmem:[%s242 + $0x4] sm:$0xf] %vm227, %v2722
      %2755 = vst.msk [vmem:[%s242 + $0xc] sm:$0xf] %vm227, %v2723
      %2756 = vst.msk [vmem:[%s242 + $0x10] sm:$0xf] %vm227, %v2724
      %2757 = vst.msk [vmem:[%s242 + $0x18] sm:$0xf] %vm227, %v2725
      %2758 = vst.msk [vmem:[%s242 + $0x1c] sm:$0xf] %vm227, %v2726
      %2759 = vst.msk [vmem:[%s242 + $0x24] sm:$0xf] %vm227, %v2727
      %2760 = vst.msk [vmem:[%s242 + $0x28] sm:$0xf] %vm227, %v2728
      %2761 = vst.msk [vmem:[%s242 + $0x30] sm:$0xf] %vm227, %v2729
      %2762 = vst.msk [vmem:[%s242 + $0x34] sm:$0xf] %vm227, %v2730
      %2763 = vst.msk [vmem:[%s242 + $0x3c] sm:$0xf] %vm227, %v2731
      %2764 = vst.msk [vmem:[%s242 + $0x40] sm:$0xf] %vm227, %v2732
      %2765 = vst.msk [vmem:[%s242 + $0x48] sm:$0xf] %vm227, %v2733
      %2766 = vst.msk [vmem:[%s242 + $0x4c] sm:$0xf] %vm227, %v2734
      %2767 = vst.msk [vmem:[%s242 + $0x54] sm:$0xf] %vm227, %v2735
      %2768 = vst.msk [vmem:[%s242 + $0x58] sm:$0xf] %vm227, %v2736
      %2769 = vst.msk [vmem:[%s242 + $0x60] sm:$0xf] %vm227, %v2737
      %2770 = vst.msk [vmem:[%s242 + $0x64] sm:$0xf] %vm227, %v2738
      %2771 = vst.msk [vmem:[%s242 + $0x6c] sm:$0xf] %vm227, %v2739
      %2772 = vst.msk [vmem:[%s242 + $0x70] sm:$0xf] %vm227, %v2740
      %2773 = vst.msk [vmem:[%s242 + $0x78] sm:$0xf] %vm227, %v2741
      %2774 = vst.msk [vmem:[%s242 + $0x7c] sm:$0xf] %vm227, %v2742
      %2775 = vst.msk [vmem:[%s242 + $0x84] sm:$0xf] %vm227, %v2743
      %2776 = vst.msk [vmem:[%s242 + $0x88] sm:$0xf] %vm227, %v2744
      %2777 = vst.msk [vmem:[%s242 + $0x90] sm:$0xf] %vm227, %v2745
      %2778 = vst.msk [vmem:[%s242 + $0x94] sm:$0xf] %vm227, %v2746
      %2779 = vst.msk [vmem:[%s242 + $0x9c] sm:$0xf] %vm227, %v2747
      %2780 = vst.msk [vmem:[%s242 + $0xa0] sm:$0xf] %vm227, %v2748
      %2781 = vst.msk [vmem:[%s242 + $0xa8] sm:$0xf] %vm227, %v2749
      %2782 = vst.msk [vmem:[%s242 + $0xac] sm:$0xf] %vm227, %v2750
      %2783 = vst.msk [vmem:[%s242 + $0xb4] sm:$0xf] %vm227, %v2751
      %2784 = vst.msk [vmem:[%s242 + $0xb8] sm:$0xf] %vm227, %v2752
      %v2785 = vld [vmem:[#allocation2] sm:$0xf]
      %v2786 = vld [vmem:[#allocation2 + $0x4] sm:$0xf]
      %v2787 = vld [vmem:[#allocation2 + $0xc] sm:$0xf]
      %v2788 = vld [vmem:[#allocation2 + $0x10] sm:$0xf]
      %v2789 = vld [vmem:[#allocation2 + $0x18] sm:$0xf]
      %v2790 = vld [vmem:[#allocation2 + $0x1c] sm:$0xf]
      %v2791 = vld [vmem:[#allocation2 + $0x24] sm:$0xf]
      %v2792 = vld [vmem:[#allocation2 + $0x28] sm:$0xf]
      %v2793 = vld [vmem:[#allocation2 + $0x30] sm:$0xf]
      %v2794 = vld [vmem:[#allocation2 + $0x34] sm:$0xf]
      %v2795 = vld [vmem:[#allocation2 + $0x3c] sm:$0xf]
      %v2796 = vld [vmem:[#allocation2 + $0x40] sm:$0xf]
      %v2797 = vld [vmem:[#allocation2 + $0x48] sm:$0xf]
      %v2798 = vld [vmem:[#allocation2 + $0x4c] sm:$0xf]
      %v2799 = vld [vmem:[#allocation2 + $0x54] sm:$0xf]
      %v2800 = vld [vmem:[#allocation2 + $0x58] sm:$0xf]
      %v2801 = vld [vmem:[#allocation2 + $0x60] sm:$0xf]
      %v2802 = vld [vmem:[#allocation2 + $0x64] sm:$0xf]
      %v2803 = vld [vmem:[#allocation2 + $0x6c] sm:$0xf]
      %v2804 = vld [vmem:[#allocation2 + $0x70] sm:$0xf]
      %v2805 = vld [vmem:[#allocation2 + $0x78] sm:$0xf]
      %v2806 = vld [vmem:[#allocation2 + $0x7c] sm:$0xf]
      %v2807 = vld [vmem:[#allocation2 + $0x84] sm:$0xf]
      %v2808 = vld [vmem:[#allocation2 + $0x88] sm:$0xf]
      %v2809 = vld [vmem:[#allocation2 + $0x90] sm:$0xf]
      %v2810 = vld [vmem:[#allocation2 + $0x94] sm:$0xf]
      %v2811 = vld [vmem:[#allocation2 + $0x9c] sm:$0xf]
      %v2812 = vld [vmem:[#allocation2 + $0xa0] sm:$0xf]
      %v2813 = vld [vmem:[#allocation2 + $0xa8] sm:$0xf]
      %v2814 = vld [vmem:[#allocation2 + $0xac] sm:$0xf]
      %v2815 = vld [vmem:[#allocation2 + $0xb4] sm:$0xf]
      %v2816 = vld [vmem:[#allocation2 + $0xb8] sm:$0xf]
      %s2817 = scalar_lea.vmem [#allocation2], 12
      %v2818 = vld [vmem:[%s2817] sm:$0xf]
      %v2819 = vld [vmem:[%s2817 + $0x4] sm:$0xf]
      %v2820 = vld [vmem:[%s2817 + $0xc] sm:$0xf]
      %v2821 = vld [vmem:[%s2817 + $0x10] sm:$0xf]
      %v2822 = vld [vmem:[%s2817 + $0x18] sm:$0xf]
      %v2823 = vld [vmem:[%s2817 + $0x1c] sm:$0xf]
      %v2824 = vld [vmem:[%s2817 + $0x24] sm:$0xf]
      %v2825 = vld [vmem:[%s2817 + $0x28] sm:$0xf]
      %v2826 = vld [vmem:[%s2817 + $0x30] sm:$0xf]
      %v2827 = vld [vmem:[%s2817 + $0x34] sm:$0xf]
      %v2828 = vld [vmem:[%s2817 + $0x3c] sm:$0xf]
      %v2829 = vld [vmem:[%s2817 + $0x40] sm:$0xf]
      %v2830 = vld [vmem:[%s2817 + $0x48] sm:$0xf]
      %v2831 = vld [vmem:[%s2817 + $0x4c] sm:$0xf]
      %v2832 = vld [vmem:[%s2817 + $0x54] sm:$0xf]
      %v2833 = vld [vmem:[%s2817 + $0x58] sm:$0xf]
      %v2834 = vld [vmem:[%s2817 + $0x60] sm:$0xf]
      %v2835 = vld [vmem:[%s2817 + $0x64] sm:$0xf]
      %v2836 = vld [vmem:[%s2817 + $0x6c] sm:$0xf]
      %v2837 = vld [vmem:[%s2817 + $0x70] sm:$0xf]
      %v2838 = vld [vmem:[%s2817 + $0x78] sm:$0xf]
      %v2839 = vld [vmem:[%s2817 + $0x7c] sm:$0xf]
      %v2840 = vld [vmem:[%s2817 + $0x84] sm:$0xf]
      %v2841 = vld [vmem:[%s2817 + $0x88] sm:$0xf]
      %v2842 = vld [vmem:[%s2817 + $0x90] sm:$0xf]
      %v2843 = vld [vmem:[%s2817 + $0x94] sm:$0xf]
      %v2844 = vld [vmem:[%s2817 + $0x9c] sm:$0xf]
      %v2845 = vld [vmem:[%s2817 + $0xa0] sm:$0xf]
      %v2846 = vld [vmem:[%s2817 + $0xa8] sm:$0xf]
      %v2847 = vld [vmem:[%s2817 + $0xac] sm:$0xf]
      %v2848 = vld [vmem:[%s2817 + $0xb4] sm:$0xf]
      %v2849 = vld [vmem:[%s2817 + $0xb8] sm:$0xf]
      %v2850 = vmax.bf16 %v2785, %v2818
      %v2851 = vmax.bf16 %v2786, %v2819
      %v2852 = vmax.bf16 %v2787, %v2820
      %v2853 = vmax.bf16 %v2788, %v2821
      %v2854 = vmax.bf16 %v2789, %v2822
      %v2855 = vmax.bf16 %v2790, %v2823
      %v2856 = vmax.bf16 %v2791, %v2824
      %v2857 = vmax.bf16 %v2792, %v2825
      %v2858 = vmax.bf16 %v2793, %v2826
      %v2859 = vmax.bf16 %v2794, %v2827
      %v2860 = vmax.bf16 %v2795, %v2828
      %v2861 = vmax.bf16 %v2796, %v2829
      %v2862 = vmax.bf16 %v2797, %v2830
      %v2863 = vmax.bf16 %v2798, %v2831
      %v2864 = vmax.bf16 %v2799, %v2832
      %v2865 = vmax.bf16 %v2800, %v2833
      %v2866 = vmax.bf16 %v2801, %v2834
      %v2867 = vmax.bf16 %v2802, %v2835
      %v2868 = vmax.bf16 %v2803, %v2836
      %v2869 = vmax.bf16 %v2804, %v2837
      %v2870 = vmax.bf16 %v2805, %v2838
      %v2871 = vmax.bf16 %v2806, %v2839
      %v2872 = vmax.bf16 %v2807, %v2840
      %v2873 = vmax.bf16 %v2808, %v2841
      %v2874 = vmax.bf16 %v2809, %v2842
      %v2875 = vmax.bf16 %v2810, %v2843
      %v2876 = vmax.bf16 %v2811, %v2844
      %v2877 = vmax.bf16 %v2812, %v2845
      %v2878 = vmax.bf16 %v2813, %v2846
      %v2879 = vmax.bf16 %v2814, %v2847
      %v2880 = vmax.bf16 %v2815, %v2848
      %v2881 = vmax.bf16 %v2816, %v2849
      %v2882 = vld [vmem:[%s242] sm:$0xf]
      %v2883 = vld [vmem:[%s242 + $0x4] sm:$0xf]
      %v2884 = vld [vmem:[%s242 + $0xc] sm:$0xf]
      %v2885 = vld [vmem:[%s242 + $0x10] sm:$0xf]
      %v2886 = vld [vmem:[%s242 + $0x18] sm:$0xf]
      %v2887 = vld [vmem:[%s242 + $0x1c] sm:$0xf]
      %v2888 = vld [vmem:[%s242 + $0x24] sm:$0xf]
      %v2889 = vld [vmem:[%s242 + $0x28] sm:$0xf]
      %v2890 = vld [vmem:[%s242 + $0x30] sm:$0xf]
      %v2891 = vld [vmem:[%s242 + $0x34] sm:$0xf]
      %v2892 = vld [vmem:[%s242 + $0x3c] sm:$0xf]
      %v2893 = vld [vmem:[%s242 + $0x40] sm:$0xf]
      %v2894 = vld [vmem:[%s242 + $0x48] sm:$0xf]
      %v2895 = vld [vmem:[%s242 + $0x4c] sm:$0xf]
      %v2896 = vld [vmem:[%s242 + $0x54] sm:$0xf]
      %v2897 = vld [vmem:[%s242 + $0x58] sm:$0xf]
      %v2898 = vld [vmem:[%s242 + $0x60] sm:$0xf]
      %v2899 = vld [vmem:[%s242 + $0x64] sm:$0xf]
      %v2900 = vld [vmem:[%s242 + $0x6c] sm:$0xf]
      %v2901 = vld [vmem:[%s242 + $0x70] sm:$0xf]
      %v2902 = vld [vmem:[%s242 + $0x78] sm:$0xf]
      %v2903 = vld [vmem:[%s242 + $0x7c] sm:$0xf]
      %v2904 = vld [vmem:[%s242 + $0x84] sm:$0xf]
      %v2905 = vld [vmem:[%s242 + $0x88] sm:$0xf]
      %v2906 = vld [vmem:[%s242 + $0x90] sm:$0xf]
      %v2907 = vld [vmem:[%s242 + $0x94] sm:$0xf]
      %v2908 = vld [vmem:[%s242 + $0x9c] sm:$0xf]
      %v2909 = vld [vmem:[%s242 + $0xa0] sm:$0xf]
      %v2910 = vld [vmem:[%s242 + $0xa8] sm:$0xf]
      %v2911 = vld [vmem:[%s242 + $0xac] sm:$0xf]
      %v2912 = vld [vmem:[%s242 + $0xb4] sm:$0xf]
      %v2913 = vld [vmem:[%s242 + $0xb8] sm:$0xf]
      %v2914 = vmax.bf16 %v2850, %v2882
      %v2915 = vmax.bf16 %v2851, %v2883
      %v2916 = vmax.bf16 %v2852, %v2884
      %v2917 = vmax.bf16 %v2853, %v2885
      %v2918 = vmax.bf16 %v2854, %v2886
      %v2919 = vmax.bf16 %v2855, %v2887
      %v2920 = vmax.bf16 %v2856, %v2888
      %v2921 = vmax.bf16 %v2857, %v2889
      %v2922 = vmax.bf16 %v2858, %v2890
      %v2923 = vmax.bf16 %v2859, %v2891
      %v2924 = vmax.bf16 %v2860, %v2892
      %v2925 = vmax.bf16 %v2861, %v2893
      %v2926 = vmax.bf16 %v2862, %v2894
      %v2927 = vmax.bf16 %v2863, %v2895
      %v2928 = vmax.bf16 %v2864, %v2896
      %v2929 = vmax.bf16 %v2865, %v2897
      %v2930 = vmax.bf16 %v2866, %v2898
      %v2931 = vmax.bf16 %v2867, %v2899
      %v2932 = vmax.bf16 %v2868, %v2900
      %v2933 = vmax.bf16 %v2869, %v2901
      %v2934 = vmax.bf16 %v2870, %v2902
      %v2935 = vmax.bf16 %v2871, %v2903
      %v2936 = vmax.bf16 %v2872, %v2904
      %v2937 = vmax.bf16 %v2873, %v2905
      %v2938 = vmax.bf16 %v2874, %v2906
      %v2939 = vmax.bf16 %v2875, %v2907
      %v2940 = vmax.bf16 %v2876, %v2908
      %v2941 = vmax.bf16 %v2877, %v2909
      %v2942 = vmax.bf16 %v2878, %v2910
      %v2943 = vmax.bf16 %v2879, %v2911
      %v2944 = vmax.bf16 %v2880, %v2912
      %v2945 = vmax.bf16 %v2881, %v2913
      %s2946 = scalar_lea.vmem [#allocation2], 36
      %v2947 = vld [vmem:[%s2946] sm:$0xf]
      %v2948 = vld [vmem:[%s2946 + $0x4] sm:$0xf]
      %v2949 = vld [vmem:[%s2946 + $0xc] sm:$0xf]
      %v2950 = vld [vmem:[%s2946 + $0x10] sm:$0xf]
      %v2951 = vld [vmem:[%s2946 + $0x18] sm:$0xf]
      %v2952 = vld [vmem:[%s2946 + $0x1c] sm:$0xf]
      %v2953 = vld [vmem:[%s2946 + $0x24] sm:$0xf]
      %v2954 = vld [vmem:[%s2946 + $0x28] sm:$0xf]
      %v2955 = vld [vmem:[%s2946 + $0x30] sm:$0xf]
      %v2956 = vld [vmem:[%s2946 + $0x34] sm:$0xf]
      %v2957 = vld [vmem:[%s2946 + $0x3c] sm:$0xf]
      %v2958 = vld [vmem:[%s2946 + $0x40] sm:$0xf]
      %v2959 = vld [vmem:[%s2946 + $0x48] sm:$0xf]
      %v2960 = vld [vmem:[%s2946 + $0x4c] sm:$0xf]
      %v2961 = vld [vmem:[%s2946 + $0x54] sm:$0xf]
      %v2962 = vld [vmem:[%s2946 + $0x58] sm:$0xf]
      %v2963 = vld [vmem:[%s2946 + $0x60] sm:$0xf]
      %v2964 = vld [vmem:[%s2946 + $0x64] sm:$0xf]
      %v2965 = vld [vmem:[%s2946 + $0x6c] sm:$0xf]
      %v2966 = vld [vmem:[%s2946 + $0x70] sm:$0xf]
      %v2967 = vld [vmem:[%s2946 + $0x78] sm:$0xf]
      %v2968 = vld [vmem:[%s2946 + $0x7c] sm:$0xf]
      %v2969 = vld [vmem:[%s2946 + $0x84] sm:$0xf]
      %v2970 = vld [vmem:[%s2946 + $0x88] sm:$0xf]
      %v2971 = vld [vmem:[%s2946 + $0x90] sm:$0xf]
      %v2972 = vld [vmem:[%s2946 + $0x94] sm:$0xf]
      %v2973 = vld [vmem:[%s2946 + $0x9c] sm:$0xf]
      %v2974 = vld [vmem:[%s2946 + $0xa0] sm:$0xf]
      %v2975 = vld [vmem:[%s2946 + $0xa8] sm:$0xf]
      %v2976 = vld [vmem:[%s2946 + $0xac] sm:$0xf]
      %v2977 = vld [vmem:[%s2946 + $0xb4] sm:$0xf]
      %v2978 = vld [vmem:[%s2946 + $0xb8] sm:$0xf]
      %v2979 = vmax.bf16 %v2914, %v2947
      %v2980 = vmax.bf16 %v2915, %v2948
      %v2981 = vmax.bf16 %v2916, %v2949
      %v2982 = vmax.bf16 %v2917, %v2950
      %v2983 = vmax.bf16 %v2918, %v2951
      %v2984 = vmax.bf16 %v2919, %v2952
      %v2985 = vmax.bf16 %v2920, %v2953
      %v2986 = vmax.bf16 %v2921, %v2954
      %v2987 = vmax.bf16 %v2922, %v2955
      %v2988 = vmax.bf16 %v2923, %v2956
      %v2989 = vmax.bf16 %v2924, %v2957
      %v2990 = vmax.bf16 %v2925, %v2958
      %v2991 = vmax.bf16 %v2926, %v2959
      %v2992 = vmax.bf16 %v2927, %v2960
      %v2993 = vmax.bf16 %v2928, %v2961
      %v2994 = vmax.bf16 %v2929, %v2962
      %v2995 = vmax.bf16 %v2930, %v2963
      %v2996 = vmax.bf16 %v2931, %v2964
      %v2997 = vmax.bf16 %v2932, %v2965
      %v2998 = vmax.bf16 %v2933, %v2966
      %v2999 = vmax.bf16 %v2934, %v2967
      %v3000 = vmax.bf16 %v2935, %v2968
      %v3001 = vmax.bf16 %v2936, %v2969
      %v3002 = vmax.bf16 %v2937, %v2970
      %v3003 = vmax.bf16 %v2938, %v2971
      %v3004 = vmax.bf16 %v2939, %v2972
      %v3005 = vmax.bf16 %v2940, %v2973
      %v3006 = vmax.bf16 %v2941, %v2974
      %v3007 = vmax.bf16 %v2942, %v2975
      %v3008 = vmax.bf16 %v2943, %v2976
      %v3009 = vmax.bf16 %v2944, %v2977
      %v3010 = vmax.bf16 %v2945, %v2978
      %s3011 = scalar_lea.vmem [#allocation2], 48
      %v3012 = vld [vmem:[%s3011] sm:$0xf]
      %v3013 = vld [vmem:[%s3011 + $0x4] sm:$0xf]
      %v3014 = vld [vmem:[%s3011 + $0xc] sm:$0xf]
      %v3015 = vld [vmem:[%s3011 + $0x10] sm:$0xf]
      %v3016 = vld [vmem:[%s3011 + $0x18] sm:$0xf]
      %v3017 = vld [vmem:[%s3011 + $0x1c] sm:$0xf]
      %v3018 = vld [vmem:[%s3011 + $0x24] sm:$0xf]
      %v3019 = vld [vmem:[%s3011 + $0x28] sm:$0xf]
      %v3020 = vld [vmem:[%s3011 + $0x30] sm:$0xf]
      %v3021 = vld [vmem:[%s3011 + $0x34] sm:$0xf]
      %v3022 = vld [vmem:[%s3011 + $0x3c] sm:$0xf]
      %v3023 = vld [vmem:[%s3011 + $0x40] sm:$0xf]
      %v3024 = vld [vmem:[%s3011 + $0x48] sm:$0xf]
      %v3025 = vld [vmem:[%s3011 + $0x4c] sm:$0xf]
      %v3026 = vld [vmem:[%s3011 + $0x54] sm:$0xf]
      %v3027 = vld [vmem:[%s3011 + $0x58] sm:$0xf]
      %v3028 = vld [vmem:[%s3011 + $0x60] sm:$0xf]
      %v3029 = vld [vmem:[%s3011 + $0x64] sm:$0xf]
      %v3030 = vld [vmem:[%s3011 + $0x6c] sm:$0xf]
      %v3031 = vld [vmem:[%s3011 + $0x70] sm:$0xf]
      %v3032 = vld [vmem:[%s3011 + $0x78] sm:$0xf]
      %v3033 = vld [vmem:[%s3011 + $0x7c] sm:$0xf]
      %v3034 = vld [vmem:[%s3011 + $0x84] sm:$0xf]
      %v3035 = vld [vmem:[%s3011 + $0x88] sm:$0xf]
      %v3036 = vld [vmem:[%s3011 + $0x90] sm:$0xf]
      %v3037 = vld [vmem:[%s3011 + $0x94] sm:$0xf]
      %v3038 = vld [vmem:[%s3011 + $0x9c] sm:$0xf]
      %v3039 = vld [vmem:[%s3011 + $0xa0] sm:$0xf]
      %v3040 = vld [vmem:[%s3011 + $0xa8] sm:$0xf]
      %v3041 = vld [vmem:[%s3011 + $0xac] sm:$0xf]
      %v3042 = vld [vmem:[%s3011 + $0xb4] sm:$0xf]
      %v3043 = vld [vmem:[%s3011 + $0xb8] sm:$0xf]
      %v3044 = vmax.bf16 %v2979, %v3012
      %v3045 = vmax.bf16 %v2980, %v3013
      %v3046 = vmax.bf16 %v2981, %v3014
      %v3047 = vmax.bf16 %v2982, %v3015
      %v3048 = vmax.bf16 %v2983, %v3016
      %v3049 = vmax.bf16 %v2984, %v3017
      %v3050 = vmax.bf16 %v2985, %v3018
      %v3051 = vmax.bf16 %v2986, %v3019
      %v3052 = vmax.bf16 %v2987, %v3020
      %v3053 = vmax.bf16 %v2988, %v3021
      %v3054 = vmax.bf16 %v2989, %v3022
      %v3055 = vmax.bf16 %v2990, %v3023
      %v3056 = vmax.bf16 %v2991, %v3024
      %v3057 = vmax.bf16 %v2992, %v3025
      %v3058 = vmax.bf16 %v2993, %v3026
      %v3059 = vmax.bf16 %v2994, %v3027
      %v3060 = vmax.bf16 %v2995, %v3028
      %v3061 = vmax.bf16 %v2996, %v3029
      %v3062 = vmax.bf16 %v2997, %v3030
      %v3063 = vmax.bf16 %v2998, %v3031
      %v3064 = vmax.bf16 %v2999, %v3032
      %v3065 = vmax.bf16 %v3000, %v3033
      %v3066 = vmax.bf16 %v3001, %v3034
      %v3067 = vmax.bf16 %v3002, %v3035
      %v3068 = vmax.bf16 %v3003, %v3036
      %v3069 = vmax.bf16 %v3004, %v3037
      %v3070 = vmax.bf16 %v3005, %v3038
      %v3071 = vmax.bf16 %v3006, %v3039
      %v3072 = vmax.bf16 %v3007, %v3040
      %v3073 = vmax.bf16 %v3008, %v3041
      %v3074 = vmax.bf16 %v3009, %v3042
      %v3075 = vmax.bf16 %v3010, %v3043
      %3076 = vst.msk [vmem:[%s242] sm:$0x1] %vm243, 4286644096
      %3077 = vst.msk [vmem:[%s242 + $0xc] sm:$0x1] %vm243, 4286644096
      %3078 = vst.msk [vmem:[%s242 + $0x18] sm:$0x1] %vm243, 4286644096
      %3079 = vst.msk [vmem:[%s242 + $0x24] sm:$0x1] %vm243, 4286644096
      %3080 = vst.msk [vmem:[%s242 + $0x30] sm:$0x1] %vm243, 4286644096
      %3081 = vst.msk [vmem:[%s242 + $0x3c] sm:$0x1] %vm243, 4286644096
      %3082 = vst.msk [vmem:[%s242 + $0x48] sm:$0x1] %vm243, 4286644096
      %3083 = vst.msk [vmem:[%s242 + $0x54] sm:$0x1] %vm243, 4286644096
      %3084 = vst.msk [vmem:[%s242 + $0x60] sm:$0x1] %vm243, 4286644096
      %3085 = vst.msk [vmem:[%s242 + $0x6c] sm:$0x1] %vm243, 4286644096
      %3086 = vst.msk [vmem:[%s242 + $0x78] sm:$0x1] %vm243, 4286644096
      %3087 = vst.msk [vmem:[%s242 + $0x84] sm:$0x1] %vm243, 4286644096
      %3088 = vst.msk [vmem:[%s242 + $0x90] sm:$0x1] %vm243, 4286644096
      %3089 = vst.msk [vmem:[%s242 + $0x9c] sm:$0x1] %vm243, 4286644096
      %3090 = vst.msk [vmem:[%s242 + $0xa8] sm:$0x1] %vm243, 4286644096
      %3091 = vst.msk [vmem:[%s242 + $0xb4] sm:$0x1] %vm243, 4286644096
      %s3092 = scalar_lea.vmem %s3, 1
      %v3093 = vld [vmem:[%s3092] sm:$0x1]
      %v3126 = vunpack.c.l.b16 %v3044
      %v3127 = vunpack.c.l.b16 %v3045
      %v3128 = vunpack.c.l.b16 %v3046
      %v3129 = vunpack.c.l.b16 %v3047
      %v3130 = vunpack.c.l.b16 %v3048
      %v3131 = vunpack.c.l.b16 %v3049
      %v3132 = vunpack.c.l.b16 %v3050
      %v3133 = vunpack.c.l.b16 %v3051
      %v3134 = vunpack.c.l.b16 %v3052
      %v3135 = vunpack.c.l.b16 %v3053
      %v3136 = vunpack.c.l.b16 %v3054
      %v3137 = vunpack.c.l.b16 %v3055
      %v3138 = vunpack.c.l.b16 %v3056
      %v3139 = vunpack.c.l.b16 %v3057
      %v3140 = vunpack.c.l.b16 %v3058
      %v3141 = vunpack.c.l.b16 %v3059
      %v3142 = vunpack.c.l.b16 %v3060
      %v3143 = vunpack.c.l.b16 %v3061
      %v3144 = vunpack.c.l.b16 %v3062
      %v3145 = vunpack.c.l.b16 %v3063
      %v3146 = vunpack.c.l.b16 %v3064
      %v3147 = vunpack.c.l.b16 %v3065
      %v3148 = vunpack.c.l.b16 %v3066
      %v3149 = vunpack.c.l.b16 %v3067
      %v3150 = vunpack.c.l.b16 %v3068
      %v3151 = vunpack.c.l.b16 %v3069
      %v3152 = vunpack.c.l.b16 %v3070
      %v3153 = vunpack.c.l.b16 %v3071
      %v3154 = vunpack.c.l.b16 %v3072
      %v3155 = vunpack.c.l.b16 %v3073
      %v3156 = vunpack.c.l.b16 %v3074
      %v3157 = vunpack.c.l.b16 %v3075
      %v3158 = vpack.c.b16 %v3127, %v3126
      %v3159 = vpack.c.b16 %v3129, %v3128
      %v3160 = vpack.c.b16 %v3131, %v3130
      %v3161 = vpack.c.b16 %v3133, %v3132
      %v3162 = vpack.c.b16 %v3135, %v3134
      %v3163 = vpack.c.b16 %v3137, %v3136
      %v3164 = vpack.c.b16 %v3139, %v3138
      %v3165 = vpack.c.b16 %v3141, %v3140
      %v3166 = vpack.c.b16 %v3143, %v3142
      %v3167 = vpack.c.b16 %v3145, %v3144
      %v3168 = vpack.c.b16 %v3147, %v3146
      %v3169 = vpack.c.b16 %v3149, %v3148
      %v3170 = vpack.c.b16 %v3151, %v3150
      %v3171 = vpack.c.b16 %v3153, %v3152
      %v3172 = vpack.c.b16 %v3155, %v3154
      %v3173 = vpack.c.b16 %v3157, %v3156
      %v3175 = vsel %vm859, %v3158, 0
      %v3178 = vsel %vm859, %v3159, 0
      %v3181 = vsel %vm859, %v3160, 0
      %v3184 = vsel %vm859, %v3161, 0
      %v3187 = vsel %vm859, %v3162, 0
      %v3190 = vsel %vm859, %v3163, 0
      %v3193 = vsel %vm859, %v3164, 0
      %v3196 = vsel %vm859, %v3165, 0
      %v3199 = vsel %vm859, %v3166, 0
      %v3202 = vsel %vm859, %v3167, 0
      %v3205 = vsel %vm859, %v3168, 0
      %v3208 = vsel %vm859, %v3169, 0
      %v3211 = vsel %vm859, %v3170, 0
      %v3214 = vsel %vm859, %v3171, 0
      %v3217 = vsel %vm859, %v3172, 0
      %v3220 = vsel %vm859, %v3173, 0
      %v3223 = vsel %vm908, %v3093, 0
      %3225 = vmatprep.subr.bf16.mxu0 0
      %3226 = vmatpush1.bf16.msra.mxu0 %v3223
      %3227 = vmatprep.subr.bf16.mxu0 0
      %3228 = vmatpush1.bf16.msra.mxu0 0
      %3229 = vmatprep.subr.bf16.mxu0 0
      %3230 = vmatpush1.bf16.msra.mxu0 0
      %3231 = vmatprep.subr.bf16.mxu0 0
      %3232 = vmatpush1.bf16.msra.mxu0 0
      %3233 = vmatprep.subr.bf16.mxu0 0
      %3234 = vmatpush1.bf16.msra.mxu0 0
      %3235 = vmatprep.subr.bf16.mxu0 0
      %3236 = vmatpush1.bf16.msra.mxu0 0
      %3237 = vmatprep.subr.bf16.mxu0 0
      %3238 = vmatpush1.bf16.msra.mxu0 0
      %3239 = vmatprep.subr.bf16.mxu0 0
      %3240 = vmatpush1.bf16.msra.mxu0 0
      %3241 = vmatprep.subr.bf16.mxu0 0
      %3242 = vmatpush1.bf16.msra.mxu0 0
      %3243 = vmatprep.subr.bf16.mxu0 0
      %3244 = vmatpush1.bf16.msra.mxu0 0
      %3245 = vmatprep.subr.bf16.mxu0 0
      %3246 = vmatpush1.bf16.msra.mxu0 0
      %3247 = vmatprep.subr.bf16.mxu0 0
      %3248 = vmatpush1.bf16.msra.mxu0 0
      %3249 = vmatprep.subr.bf16.mxu0 0
      %3250 = vmatpush1.bf16.msra.mxu0 0
      %3251 = vmatprep.subr.bf16.mxu0 0
      %3252 = vmatpush1.bf16.msra.mxu0 0
      %3253 = vmatprep.subr.bf16.mxu0 0
      %3254 = vmatpush1.bf16.msra.mxu0 0
      %3255 = vmatprep.subr.bf16.mxu0 0
      %3256 = vmatpush1.bf16.msra.mxu0 0
      %3257 = vmatprep.mubr.bf16.mxu0 0
      %3258 = vmatmul.mubr.bf16.gmra.mrb[0].mxu0 %v3175
      %v3259 = vpop.f32.mrb[0].mxu0
      %v3260 = vadd.f32 0.0, %v3259
      %v3261 = vpop.f32.mrb[0].mxu0
      %v3262 = vpop.f32.mrb[0].mxu0
      %v3263 = vadd.f32 0.0, %v3262
      %v3264 = vpop.f32.mrb[0].mxu0
      %3265 = vmatprep.mubr.bf16.mxu0 0
      %3266 = vmatmul.mubr.bf16.gmra.mrb[0].mxu0 %v3178
      %v3267 = vpop.f32.mrb[0].mxu0
      %v3268 = vadd.f32 0.0, %v3267
      %v3269 = vpop.f32.mrb[0].mxu0
      %v3270 = vpop.f32.mrb[0].mxu0
      %v3271 = vadd.f32 0.0, %v3270
      %v3272 = vpop.f32.mrb[0].mxu0
      %3273 = vmatprep.mubr.bf16.mxu0 0
      %3274 = vmatmul.mubr.bf16.gmra.mrb[0].mxu0 %v3181
      %v3275 = vpop.f32.mrb[0].mxu0
      %v3276 = vadd.f32 0.0, %v3275
      %v3277 = vpop.f32.mrb[0].mxu0
      %v3278 = vpop.f32.mrb[0].mxu0
      %v3279 = vadd.f32 0.0, %v3278
      %v3280 = vpop.f32.mrb[0].mxu0
      %3281 = vmatprep.mubr.bf16.mxu0 0
      %3282 = vmatmul.mubr.bf16.gmra.mrb[0].mxu0 %v3184
      %v3283 = vpop.f32.mrb[0].mxu0
      %v3284 = vadd.f32 0.0, %v3283
      %v3285 = vpop.f32.mrb[0].mxu0
      %v3286 = vpop.f32.mrb[0].mxu0
      %v3287 = vadd.f32 0.0, %v3286
      %v3288 = vpop.f32.mrb[0].mxu0
      %3289 = vmatprep.mubr.bf16.mxu0 0
      %3290 = vmatmul.mubr.bf16.gmra.mrb[0].mxu0 %v3187
      %v3291 = vpop.f32.mrb[0].mxu0
      %v3292 = vadd.f32 0.0, %v3291
      %v3293 = vpop.f32.mrb[0].mxu0
      %v3294 = vpop.f32.mrb[0].mxu0
      %v3295 = vadd.f32 0.0, %v3294
      %v3296 = vpop.f32.mrb[0].mxu0
      %3297 = vmatprep.mubr.bf16.mxu0 0
      %3298 = vmatmul.mubr.bf16.gmra.mrb[0].mxu0 %v3190
      %v3299 = vpop.f32.mrb[0].mxu0
      %v3300 = vadd.f32 0.0, %v3299
      %v3301 = vpop.f32.mrb[0].mxu0
      %v3302 = vpop.f32.mrb[0].mxu0
      %v3303 = vadd.f32 0.0, %v3302
      %v3304 = vpop.f32.mrb[0].mxu0
      %3305 = vmatprep.mubr.bf16.mxu0 0
      %3306 = vmatmul.mubr.bf16.gmra.mrb[0].mxu0 %v3193
      %v3307 = vpop.f32.mrb[0].mxu0
      %v3308 = vadd.f32 0.0, %v3307
      %v3309 = vpop.f32.mrb[0].mxu0
      %v3310 = vpop.f32.mrb[0].mxu0
      %v3311 = vadd.f32 0.0, %v3310
      %v3312 = vpop.f32.mrb[0].mxu0
      %3313 = vmatprep.mubr.bf16.mxu0 0
      %3314 = vmatmul.mubr.bf16.gmra.mrb[0].mxu0 %v3196
      %v3315 = vpop.f32.mrb[0].mxu0
      %v3316 = vadd.f32 0.0, %v3315
      %v3317 = vpop.f32.mrb[0].mxu0
      %v3318 = vpop.f32.mrb[0].mxu0
      %v3319 = vadd.f32 0.0, %v3318
      %v3320 = vpop.f32.mrb[0].mxu0
      %3321 = vmatprep.mubr.bf16.mxu0 0
      %3322 = vmatmul.mubr.bf16.gmra.mrb[0].mxu0 %v3199
      %v3323 = vpop.f32.mrb[0].mxu0
      %v3324 = vadd.f32 0.0, %v3323
      %v3325 = vpop.f32.mrb[0].mxu0
      %v3326 = vpop.f32.mrb[0].mxu0
      %v3327 = vadd.f32 0.0, %v3326
      %v3328 = vpop.f32.mrb[0].mxu0
      %3329 = vmatprep.mubr.bf16.mxu0 0
      %3330 = vmatmul.mubr.bf16.gmra.mrb[0].mxu0 %v3202
      %v3331 = vpop.f32.mrb[0].mxu0
      %v3332 = vadd.f32 0.0, %v3331
      %v3333 = vpop.f32.mrb[0].mxu0
      %v3334 = vpop.f32.mrb[0].mxu0
      %v3335 = vadd.f32 0.0, %v3334
      %v3336 = vpop.f32.mrb[0].mxu0
      %3337 = vmatprep.mubr.bf16.mxu0 0
      %3338 = vmatmul.mubr.bf16.gmra.mrb[0].mxu0 %v3205
      %v3339 = vpop.f32.mrb[0].mxu0
      %v3340 = vadd.f32 0.0, %v3339
      %v3341 = vpop.f32.mrb[0].mxu0
      %v3342 = vpop.f32.mrb[0].mxu0
      %v3343 = vadd.f32 0.0, %v3342
      %v3344 = vpop.f32.mrb[0].mxu0
      %3345 = vmatprep.mubr.bf16.mxu0 0
      %3346 = vmatmul.mubr.bf16.gmra.mrb[0].mxu0 %v3208
      %v3347 = vpop.f32.mrb[0].mxu0
      %v3348 = vadd.f32 0.0, %v3347
      %v3349 = vpop.f32.mrb[0].mxu0
      %v3350 = vpop.f32.mrb[0].mxu0
      %v3351 = vadd.f32 0.0, %v3350
      %v3352 = vpop.f32.mrb[0].mxu0
      %3353 = vmatprep.mubr.bf16.mxu0 0
      %3354 = vmatmul.mubr.bf16.gmra.mrb[0].mxu0 %v3211
      %v3355 = vpop.f32.mrb[0].mxu0
      %v3356 = vadd.f32 0.0, %v3355
      %v3357 = vpop.f32.mrb[0].mxu0
      %v3358 = vpop.f32.mrb[0].mxu0
      %v3359 = vadd.f32 0.0, %v3358
      %v3360 = vpop.f32.mrb[0].mxu0
      %3361 = vmatprep.mubr.bf16.mxu0 0
      %3362 = vmatmul.mubr.bf16.gmra.mrb[0].mxu0 %v3214
      %v3363 = vpop.f32.mrb[0].mxu0
      %v3364 = vadd.f32 0.0, %v3363
      %v3365 = vpop.f32.mrb[0].mxu0
      %v3366 = vpop.f32.mrb[0].mxu0
      %v3367 = vadd.f32 0.0, %v3366
      %v3368 = vpop.f32.mrb[0].mxu0
      %3369 = vmatprep.mubr.bf16.mxu0 0
      %3370 = vmatmul.mubr.bf16.gmra.mrb[0].mxu0 %v3217
      %v3371 = vpop.f32.mrb[0].mxu0
      %v3372 = vadd.f32 0.0, %v3371
      %v3373 = vpop.f32.mrb[0].mxu0
      %v3374 = vpop.f32.mrb[0].mxu0
      %v3375 = vadd.f32 0.0, %v3374
      %v3376 = vpop.f32.mrb[0].mxu0
      %3377 = vmatprep.mubr.bf16.mxu0 0
      %3378 = vmatmul.mubr.bf16.gmra.mrb[0].mxu0 %v3220
      %v3379 = vpop.f32.mrb[0].mxu0
      %v3380 = vadd.f32 0.0, %v3379
      %v3381 = vpop.f32.mrb[0].mxu0
      %v3382 = vpop.f32.mrb[0].mxu0
      %v3383 = vadd.f32 0.0, %v3382
      %v3384 = vpop.f32.mrb[0].mxu0
      %3385 = vdwg.mxu0
      %v3386 = vadd.f32 %v947, %v3260
      %v3387 = vadd.f32 %v950, %v3263
      %v3388 = vadd.f32 %v955, %v3268
      %v3389 = vadd.f32 %v958, %v3271
      %v3390 = vadd.f32 %v963, %v3276
      %v3391 = vadd.f32 %v966, %v3279
      %v3392 = vadd.f32 %v971, %v3284
      %v3393 = vadd.f32 %v974, %v3287
      %v3394 = vadd.f32 %v979, %v3292
      %v3395 = vadd.f32 %v982, %v3295
      %v3396 = vadd.f32 %v987, %v3300
      %v3397 = vadd.f32 %v990, %v3303
      %v3398 = vadd.f32 %v995, %v3308
      %v3399 = vadd.f32 %v998, %v3311
      %v3400 = vadd.f32 %v1003, %v3316
      %v3401 = vadd.f32 %v1006, %v3319
      %v3402 = vadd.f32 %v1011, %v3324
      %v3403 = vadd.f32 %v1014, %v3327
      %v3404 = vadd.f32 %v1019, %v3332
      %v3405 = vadd.f32 %v1022, %v3335
      %v3406 = vadd.f32 %v1027, %v3340
      %v3407 = vadd.f32 %v1030, %v3343
      %v3408 = vadd.f32 %v1035, %v3348
      %v3409 = vadd.f32 %v1038, %v3351
      %v3410 = vadd.f32 %v1043, %v3356
      %v3411 = vadd.f32 %v1046, %v3359
      %v3412 = vadd.f32 %v1051, %v3364
      %v3413 = vadd.f32 %v1054, %v3367
      %v3414 = vadd.f32 %v1059, %v3372
      %v3415 = vadd.f32 %v1062, %v3375
      %v3416 = vadd.f32 %v1067, %v3380
      %v3417 = vadd.f32 %v1070, %v3383
      %v3418 = vrot.slane %v3044, 7
      %v3419 = vrot.slane %v3418, 4
      %v3420 = vrot.slane %v3045, 7
      %v3421 = vsel %vm1155, %v3419, %v3420
      %v3422 = vrot.slane %v3420, 4
      %v3423 = vrot.slane %v3046, 7
      %v3424 = vrot.slane %v3423, 4
      %v3425 = vrot.slane %v3047, 7
      %v3426 = vsel %vm1155, %v3424, %v3425
      %v3427 = vrot.slane %v3425, 4
      %v3428 = vrot.slane %v3048, 7
      %v3429 = vrot.slane %v3428, 4
      %v3430 = vrot.slane %v3049, 7
      %v3431 = vsel %vm1155, %v3429, %v3430
      %v3432 = vrot.slane %v3430, 4
      %v3433 = vrot.slane %v3050, 7
      %v3434 = vrot.slane %v3433, 4
      %v3435 = vrot.slane %v3051, 7
      %v3436 = vsel %vm1155, %v3434, %v3435
      %v3437 = vrot.slane %v3435, 4
      %v3438 = vrot.slane %v3052, 7
      %v3439 = vrot.slane %v3438, 4
      %v3440 = vrot.slane %v3053, 7
      %v3441 = vsel %vm1155, %v3439, %v3440
      %v3442 = vrot.slane %v3440, 4
      %v3443 = vrot.slane %v3054, 7
      %v3444 = vrot.slane %v3443, 4
      %v3445 = vrot.slane %v3055, 7
      %v3446 = vsel %vm1155, %v3444, %v3445
      %v3447 = vrot.slane %v3445, 4
      %v3448 = vrot.slane %v3056, 7
      %v3449 = vrot.slane %v3448, 4
      %v3450 = vrot.slane %v3057, 7
      %v3451 = vsel %vm1155, %v3449, %v3450
      %v3452 = vrot.slane %v3450, 4
      %v3453 = vrot.slane %v3058, 7
      %v3454 = vrot.slane %v3453, 4
      %v3455 = vrot.slane %v3059, 7
      %v3456 = vsel %vm1155, %v3454, %v3455
      %v3457 = vrot.slane %v3455, 4
      %v3458 = vrot.slane %v3060, 7
      %v3459 = vrot.slane %v3458, 4
      %v3460 = vrot.slane %v3061, 7
      %v3461 = vsel %vm1155, %v3459, %v3460
      %v3462 = vrot.slane %v3460, 4
      %v3463 = vrot.slane %v3062, 7
      %v3464 = vrot.slane %v3463, 4
      %v3465 = vrot.slane %v3063, 7
      %v3466 = vsel %vm1155, %v3464, %v3465
      %v3467 = vrot.slane %v3465, 4
      %v3468 = vrot.slane %v3064, 7
      %v3469 = vrot.slane %v3468, 4
      %v3470 = vrot.slane %v3065, 7
      %v3471 = vsel %vm1155, %v3469, %v3470
      %v3472 = vrot.slane %v3470, 4
      %v3473 = vrot.slane %v3066, 7
      %v3474 = vrot.slane %v3473, 4
      %v3475 = vrot.slane %v3067, 7
      %v3476 = vsel %vm1155, %v3474, %v3475
      %v3477 = vrot.slane %v3475, 4
      %v3478 = vrot.slane %v3068, 7
      %v3479 = vrot.slane %v3478, 4
      %v3480 = vrot.slane %v3069, 7
      %v3481 = vsel %vm1155, %v3479, %v3480
      %v3482 = vrot.slane %v3480, 4
      %v3483 = vrot.slane %v3070, 7
      %v3484 = vrot.slane %v3483, 4
      %v3485 = vrot.slane %v3071, 7
      %v3486 = vsel %vm1155, %v3484, %v3485
      %v3487 = vrot.slane %v3485, 4
      %v3488 = vrot.slane %v3072, 7
      %v3489 = vrot.slane %v3488, 4
      %v3490 = vrot.slane %v3073, 7
      %v3491 = vsel %vm1155, %v3489, %v3490
      %v3492 = vrot.slane %v3490, 4
      %v3493 = vrot.slane %v3074, 7
      %v3494 = vrot.slane %v3493, 4
      %v3495 = vrot.slane %v3075, 7
      %v3496 = vsel %vm1155, %v3494, %v3495
      %v3497 = vrot.slane %v3495, 4
      %3546 = vst.msk [vmem:[%s242] sm:$0xe] %vm1284, %v3418
      %3547 = vst.msk [vmem:[%s242 + $0x4] sm:$0xf] %vm227, %v3421
      %3548 = vst.msk [vmem:[%s242 + $0x8] sm:$0x1] %vm243, %v3422
      %3549 = vst.msk [vmem:[%s242 + $0xc] sm:$0xe] %vm1284, %v3423
      %3550 = vst.msk [vmem:[%s242 + $0x10] sm:$0xf] %vm227, %v3426
      %3551 = vst.msk [vmem:[%s242 + $0x14] sm:$0x1] %vm243, %v3427
      %3552 = vst.msk [vmem:[%s242 + $0x18] sm:$0xe] %vm1284, %v3428
      %3553 = vst.msk [vmem:[%s242 + $0x1c] sm:$0xf] %vm227, %v3431
      %3554 = vst.msk [vmem:[%s242 + $0x20] sm:$0x1] %vm243, %v3432
      %3555 = vst.msk [vmem:[%s242 + $0x24] sm:$0xe] %vm1284, %v3433
      %3556 = vst.msk [vmem:[%s242 + $0x28] sm:$0xf] %vm227, %v3436
      %3557 = vst.msk [vmem:[%s242 + $0x2c] sm:$0x1] %vm243, %v3437
      %3558 = vst.msk [vmem:[%s242 + $0x30] sm:$0xe] %vm1284, %v3438
      %3559 = vst.msk [vmem:[%s242 + $0x34] sm:$0xf] %vm227, %v3441
      %3560 = vst.msk [vmem:[%s242 + $0x38] sm:$0x1] %vm243, %v3442
      %3561 = vst.msk [vmem:[%s242 + $0x3c] sm:$0xe] %vm1284, %v3443
      %3562 = vst.msk [vmem:[%s242 + $0x40] sm:$0xf] %vm227, %v3446
      %3563 = vst.msk [vmem:[%s242 + $0x44] sm:$0x1] %vm243, %v3447
      %3564 = vst.msk [vmem:[%s242 + $0x48] sm:$0xe] %vm1284, %v3448
      %3565 = vst.msk [vmem:[%s242 + $0x4c] sm:$0xf] %vm227, %v3451
      %3566 = vst.msk [vmem:[%s242 + $0x50] sm:$0x1] %vm243, %v3452
      %3567 = vst.msk [vmem:[%s242 + $0x54] sm:$0xe] %vm1284, %v3453
      %3568 = vst.msk [vmem:[%s242 + $0x58] sm:$0xf] %vm227, %v3456
      %3569 = vst.msk [vmem:[%s242 + $0x5c] sm:$0x1] %vm243, %v3457
      %3570 = vst.msk [vmem:[%s242 + $0x60] sm:$0xe] %vm1284, %v3458
      %3571 = vst.msk [vmem:[%s242 + $0x64] sm:$0xf] %vm227, %v3461
      %3572 = vst.msk [vmem:[%s242 + $0x68] sm:$0x1] %vm243, %v3462
      %3573 = vst.msk [vmem:[%s242 + $0x6c] sm:$0xe] %vm1284, %v3463
      %3574 = vst.msk [vmem:[%s242 + $0x70] sm:$0xf] %vm227, %v3466
      %3575 = vst.msk [vmem:[%s242 + $0x74] sm:$0x1] %vm243, %v3467
      %3576 = vst.msk [vmem:[%s242 + $0x78] sm:$0xe] %vm1284, %v3468
      %3577 = vst.msk [vmem:[%s242 + $0x7c] sm:$0xf] %vm227, %v3471
      %3578 = vst.msk [vmem:[%s242 + $0x80] sm:$0x1] %vm243, %v3472
      %3579 = vst.msk [vmem:[%s242 + $0x84] sm:$0xe] %vm1284, %v3473
      %3580 = vst.msk [vmem:[%s242 + $0x88] sm:$0xf] %vm227, %v3476
      %3581 = vst.msk [vmem:[%s242 + $0x8c] sm:$0x1] %vm243, %v3477
      %3582 = vst.msk [vmem:[%s242 + $0x90] sm:$0xe] %vm1284, %v3478
      %3583 = vst.msk [vmem:[%s242 + $0x94] sm:$0xf] %vm227, %v3481
      %3584 = vst.msk [vmem:[%s242 + $0x98] sm:$0x1] %vm243, %v3482
      %3585 = vst.msk [vmem:[%s242 + $0x9c] sm:$0xe] %vm1284, %v3483
      %3586 = vst.msk [vmem:[%s242 + $0xa0] sm:$0xf] %vm227, %v3486
      %3587 = vst.msk [vmem:[%s242 + $0xa4] sm:$0x1] %vm243, %v3487
      %3588 = vst.msk [vmem:[%s242 + $0xa8] sm:$0xe] %vm1284, %v3488
      %3589 = vst.msk [vmem:[%s242 + $0xac] sm:$0xf] %vm227, %v3491
      %3590 = vst.msk [vmem:[%s242 + $0xb0] sm:$0x1] %vm243, %v3492
      %3591 = vst.msk [vmem:[%s242 + $0xb4] sm:$0xe] %vm1284, %v3493
      %3592 = vst.msk [vmem:[%s242 + $0xb8] sm:$0xf] %vm227, %v3496
      %3593 = vst.msk [vmem:[%s242 + $0xbc] sm:$0x1] %vm243, %v3497
      %v3594 = vld [vmem:[%s242] sm:$0xf]
      %v3595 = vld [vmem:[%s242 + $0x4] sm:$0xf]
      %v3596 = vld [vmem:[%s242 + $0xc] sm:$0xf]
      %v3597 = vld [vmem:[%s242 + $0x10] sm:$0xf]
      %v3598 = vld [vmem:[%s242 + $0x18] sm:$0xf]
      %v3599 = vld [vmem:[%s242 + $0x1c] sm:$0xf]
      %v3600 = vld [vmem:[%s242 + $0x24] sm:$0xf]
      %v3601 = vld [vmem:[%s242 + $0x28] sm:$0xf]
      %v3602 = vld [vmem:[%s242 + $0x30] sm:$0xf]
      %v3603 = vld [vmem:[%s242 + $0x34] sm:$0xf]
      %v3604 = vld [vmem:[%s242 + $0x3c] sm:$0xf]
      %v3605 = vld [vmem:[%s242 + $0x40] sm:$0xf]
      %v3606 = vld [vmem:[%s242 + $0x48] sm:$0xf]
      %v3607 = vld [vmem:[%s242 + $0x4c] sm:$0xf]
      %v3608 = vld [vmem:[%s242 + $0x54] sm:$0xf]
      %v3609 = vld [vmem:[%s242 + $0x58] sm:$0xf]
      %v3610 = vld [vmem:[%s242 + $0x60] sm:$0xf]
      %v3611 = vld [vmem:[%s242 + $0x64] sm:$0xf]
      %v3612 = vld [vmem:[%s242 + $0x6c] sm:$0xf]
      %v3613 = vld [vmem:[%s242 + $0x70] sm:$0xf]
      %v3614 = vld [vmem:[%s242 + $0x78] sm:$0xf]
      %v3615 = vld [vmem:[%s242 + $0x7c] sm:$0xf]
      %v3616 = vld [vmem:[%s242 + $0x84] sm:$0xf]
      %v3617 = vld [vmem:[%s242 + $0x88] sm:$0xf]
      %v3618 = vld [vmem:[%s242 + $0x90] sm:$0xf]
      %v3619 = vld [vmem:[%s242 + $0x94] sm:$0xf]
      %v3620 = vld [vmem:[%s242 + $0x9c] sm:$0xf]
      %v3621 = vld [vmem:[%s242 + $0xa0] sm:$0xf]
      %v3622 = vld [vmem:[%s242 + $0xa8] sm:$0xf]
      %v3623 = vld [vmem:[%s242 + $0xac] sm:$0xf]
      %v3624 = vld [vmem:[%s242 + $0xb4] sm:$0xf]
      %v3625 = vld [vmem:[%s242 + $0xb8] sm:$0xf]
      %v3626 = vld [vmem:[%s242 + $0x8] sm:$0x1]
      %v3627 = vld [vmem:[%s242 + $0x14] sm:$0x1]
      %v3628 = vld [vmem:[%s242 + $0x20] sm:$0x1]
      %v3629 = vld [vmem:[%s242 + $0x2c] sm:$0x1]
      %v3630 = vld [vmem:[%s242 + $0x38] sm:$0x1]
      %v3631 = vld [vmem:[%s242 + $0x44] sm:$0x1]
      %v3632 = vld [vmem:[%s242 + $0x50] sm:$0x1]
      %v3633 = vld [vmem:[%s242 + $0x5c] sm:$0x1]
      %v3634 = vld [vmem:[%s242 + $0x68] sm:$0x1]
      %v3635 = vld [vmem:[%s242 + $0x74] sm:$0x1]
      %v3636 = vld [vmem:[%s242 + $0x80] sm:$0x1]
      %v3637 = vld [vmem:[%s242 + $0x8c] sm:$0x1]
      %v3638 = vld [vmem:[%s242 + $0x98] sm:$0x1]
      %v3639 = vld [vmem:[%s242 + $0xa4] sm:$0x1]
      %v3640 = vld [vmem:[%s242 + $0xb0] sm:$0x1]
      %v3641 = vld [vmem:[%s242 + $0xbc] sm:$0x1]
      %v3643 = vshrl.u32 %v3594, 16
      %v3645 = vrot.slane %v3643, 4
      %v3646 = vshll.u32 %v3594, 16
      %v3648 = vrot.slane %v3646, 5
      %v3649 = vor.u32 %v3645, %v3648
      %v3650 = vrot.slane %v3649, 4
      %v3652 = vshll.u32 %v3595, 16
      %v3654 = vrot.slane %v3652, 5
      %v3655 = vsel %vm1383, %v3650, %v3654
      %v3656 = vshrl.u32 %v3595, 16
      %v3658 = vrot.slane %v3656, 4
      %v3659 = vor.u32 %v3658, %v3654
      %v3660 = vrot.slane %v3659, 4
      %v3662 = vshll.u32 %v3626, 16
      %v3664 = vrot.slane %v3662, 5
      %v3665 = vsel %vm1383, %v3660, %v3664
      %v3667 = vshrl.u32 %v3596, 16
      %v3669 = vrot.slane %v3667, 4
      %v3670 = vshll.u32 %v3596, 16
      %v3672 = vrot.slane %v3670, 5
      %v3673 = vor.u32 %v3669, %v3672
      %v3674 = vrot.slane %v3673, 4
      %v3676 = vshll.u32 %v3597, 16
      %v3678 = vrot.slane %v3676, 5
      %v3679 = vsel %vm1383, %v3674, %v3678
      %v3680 = vshrl.u32 %v3597, 16
      %v3682 = vrot.slane %v3680, 4
      %v3683 = vor.u32 %v3682, %v3678
      %v3684 = vrot.slane %v3683, 4
      %v3686 = vshll.u32 %v3627, 16
      %v3688 = vrot.slane %v3686, 5
      %v3689 = vsel %vm1383, %v3684, %v3688
      %v3691 = vshrl.u32 %v3598, 16
      %v3693 = vrot.slane %v3691, 4
      %v3694 = vshll.u32 %v3598, 16
      %v3696 = vrot.slane %v3694, 5
      %v3697 = vor.u32 %v3693, %v3696
      %v3698 = vrot.slane %v3697, 4
      %v3700 = vshll.u32 %v3599, 16
      %v3702 = vrot.slane %v3700, 5
      %v3703 = vsel %vm1383, %v3698, %v3702
      %v3704 = vshrl.u32 %v3599, 16
      %v3706 = vrot.slane %v3704, 4
      %v3707 = vor.u32 %v3706, %v3702
      %v3708 = vrot.slane %v3707, 4
      %v3710 = vshll.u32 %v3628, 16
      %v3712 = vrot.slane %v3710, 5
      %v3713 = vsel %vm1383, %v3708, %v3712
      %v3715 = vshrl.u32 %v3600, 16
      %v3717 = vrot.slane %v3715, 4
      %v3718 = vshll.u32 %v3600, 16
      %v3720 = vrot.slane %v3718, 5
      %v3721 = vor.u32 %v3717, %v3720
      %v3722 = vrot.slane %v3721, 4
      %v3724 = vshll.u32 %v3601, 16
      %v3726 = vrot.slane %v3724, 5
      %v3727 = vsel %vm1383, %v3722, %v3726
      %v3728 = vshrl.u32 %v3601, 16
      %v3730 = vrot.slane %v3728, 4
      %v3731 = vor.u32 %v3730, %v3726
      %v3732 = vrot.slane %v3731, 4
      %v3734 = vshll.u32 %v3629, 16
      %v3736 = vrot.slane %v3734, 5
      %v3737 = vsel %vm1383, %v3732, %v3736
      %v3739 = vshrl.u32 %v3602, 16
      %v3741 = vrot.slane %v3739, 4
      %v3742 = vshll.u32 %v3602, 16
      %v3744 = vrot.slane %v3742, 5
      %v3745 = vor.u32 %v3741, %v3744
      %v3746 = vrot.slane %v3745, 4
      %v3748 = vshll.u32 %v3603, 16
      %v3750 = vrot.slane %v3748, 5
      %v3751 = vsel %vm1383, %v3746, %v3750
      %v3752 = vshrl.u32 %v3603, 16
      %v3754 = vrot.slane %v3752, 4
      %v3755 = vor.u32 %v3754, %v3750
      %v3756 = vrot.slane %v3755, 4
      %v3758 = vshll.u32 %v3630, 16
      %v3760 = vrot.slane %v3758, 5
      %v3761 = vsel %vm1383, %v3756, %v3760
      %v3763 = vshrl.u32 %v3604, 16
      %v3765 = vrot.slane %v3763, 4
      %v3766 = vshll.u32 %v3604, 16
      %v3768 = vrot.slane %v3766, 5
      %v3769 = vor.u32 %v3765, %v3768
      %v3770 = vrot.slane %v3769, 4
      %v3772 = vshll.u32 %v3605, 16
      %v3774 = vrot.slane %v3772, 5
      %v3775 = vsel %vm1383, %v3770, %v3774
      %v3776 = vshrl.u32 %v3605, 16
      %v3778 = vrot.slane %v3776, 4
      %v3779 = vor.u32 %v3778, %v3774
      %v3780 = vrot.slane %v3779, 4
      %v3782 = vshll.u32 %v3631, 16
      %v3784 = vrot.slane %v3782, 5
      %v3785 = vsel %vm1383, %v3780, %v3784
      %v3787 = vshrl.u32 %v3606, 16
      %v3789 = vrot.slane %v3787, 4
      %v3790 = vshll.u32 %v3606, 16
      %v3792 = vrot.slane %v3790, 5
      %v3793 = vor.u32 %v3789, %v3792
      %v3794 = vrot.slane %v3793, 4
      %v3796 = vshll.u32 %v3607, 16
      %v3798 = vrot.slane %v3796, 5
      %v3799 = vsel %vm1383, %v3794, %v3798
      %v3800 = vshrl.u32 %v3607, 16
      %v3802 = vrot.slane %v3800, 4
      %v3803 = vor.u32 %v3802, %v3798
      %v3804 = vrot.slane %v3803, 4
      %v3806 = vshll.u32 %v3632, 16
      %v3808 = vrot.slane %v3806, 5
      %v3809 = vsel %vm1383, %v3804, %v3808
      %v3811 = vshrl.u32 %v3608, 16
      %v3813 = vrot.slane %v3811, 4
      %v3814 = vshll.u32 %v3608, 16
      %v3816 = vrot.slane %v3814, 5
      %v3817 = vor.u32 %v3813, %v3816
      %v3818 = vrot.slane %v3817, 4
      %v3820 = vshll.u32 %v3609, 16
      %v3822 = vrot.slane %v3820, 5
      %v3823 = vsel %vm1383, %v3818, %v3822
      %v3824 = vshrl.u32 %v3609, 16
      %v3826 = vrot.slane %v3824, 4
      %v3827 = vor.u32 %v3826, %v3822
      %v3828 = vrot.slane %v3827, 4
      %v3830 = vshll.u32 %v3633, 16
      %v3832 = vrot.slane %v3830, 5
      %v3833 = vsel %vm1383, %v3828, %v3832
      %v3835 = vshrl.u32 %v3610, 16
      %v3837 = vrot.slane %v3835, 4
      %v3838 = vshll.u32 %v3610, 16
      %v3840 = vrot.slane %v3838, 5
      %v3841 = vor.u32 %v3837, %v3840
      %v3842 = vrot.slane %v3841, 4
      %v3844 = vshll.u32 %v3611, 16
      %v3846 = vrot.slane %v3844, 5
      %v3847 = vsel %vm1383, %v3842, %v3846
      %v3848 = vshrl.u32 %v3611, 16
      %v3850 = vrot.slane %v3848, 4
      %v3851 = vor.u32 %v3850, %v3846
      %v3852 = vrot.slane %v3851, 4
      %v3854 = vshll.u32 %v3634, 16
      %v3856 = vrot.slane %v3854, 5
      %v3857 = vsel %vm1383, %v3852, %v3856
      %v3859 = vshrl.u32 %v3612, 16
      %v3861 = vrot.slane %v3859, 4
      %v3862 = vshll.u32 %v3612, 16
      %v3864 = vrot.slane %v3862, 5
      %v3865 = vor.u32 %v3861, %v3864
      %v3866 = vrot.slane %v3865, 4
      %v3868 = vshll.u32 %v3613, 16
      %v3870 = vrot.slane %v3868, 5
      %v3871 = vsel %vm1383, %v3866, %v3870
      %v3872 = vshrl.u32 %v3613, 16
      %v3874 = vrot.slane %v3872, 4
      %v3875 = vor.u32 %v3874, %v3870
      %v3876 = vrot.slane %v3875, 4
      %v3878 = vshll.u32 %v3635, 16
      %v3880 = vrot.slane %v3878, 5
      %v3881 = vsel %vm1383, %v3876, %v3880
      %v3883 = vshrl.u32 %v3614, 16
      %v3885 = vrot.slane %v3883, 4
      %v3886 = vshll.u32 %v3614, 16
      %v3888 = vrot.slane %v3886, 5
      %v3889 = vor.u32 %v3885, %v3888
      %v3890 = vrot.slane %v3889, 4
      %v3892 = vshll.u32 %v3615, 16
      %v3894 = vrot.slane %v3892, 5
      %v3895 = vsel %vm1383, %v3890, %v3894
      %v3896 = vshrl.u32 %v3615, 16
      %v3898 = vrot.slane %v3896, 4
      %v3899 = vor.u32 %v3898, %v3894
      %v3900 = vrot.slane %v3899, 4
      %v3902 = vshll.u32 %v3636, 16
      %v3904 = vrot.slane %v3902, 5
      %v3905 = vsel %vm1383, %v3900, %v3904
      %v3907 = vshrl.u32 %v3616, 16
      %v3909 = vrot.slane %v3907, 4
      %v3910 = vshll.u32 %v3616, 16
      %v3912 = vrot.slane %v3910, 5
      %v3913 = vor.u32 %v3909, %v3912
      %v3914 = vrot.slane %v3913, 4
      %v3916 = vshll.u32 %v3617, 16
      %v3918 = vrot.slane %v3916, 5
      %v3919 = vsel %vm1383, %v3914, %v3918
      %v3920 = vshrl.u32 %v3617, 16
      %v3922 = vrot.slane %v3920, 4
      %v3923 = vor.u32 %v3922, %v3918
      %v3924 = vrot.slane %v3923, 4
      %v3926 = vshll.u32 %v3637, 16
      %v3928 = vrot.slane %v3926, 5
      %v3929 = vsel %vm1383, %v3924, %v3928
      %v3931 = vshrl.u32 %v3618, 16
      %v3933 = vrot.slane %v3931, 4
      %v3934 = vshll.u32 %v3618, 16
      %v3936 = vrot.slane %v3934, 5
      %v3937 = vor.u32 %v3933, %v3936
      %v3938 = vrot.slane %v3937, 4
      %v3940 = vshll.u32 %v3619, 16
      %v3942 = vrot.slane %v3940, 5
      %v3943 = vsel %vm1383, %v3938, %v3942
      %v3944 = vshrl.u32 %v3619, 16
      %v3946 = vrot.slane %v3944, 4
      %v3947 = vor.u32 %v3946, %v3942
      %v3948 = vrot.slane %v3947, 4
      %v3950 = vshll.u32 %v3638, 16
      %v3952 = vrot.slane %v3950, 5
      %v3953 = vsel %vm1383, %v3948, %v3952
      %v3955 = vshrl.u32 %v3620, 16
      %v3957 = vrot.slane %v3955, 4
      %v3958 = vshll.u32 %v3620, 16
      %v3960 = vrot.slane %v3958, 5
      %v3961 = vor.u32 %v3957, %v3960
      %v3962 = vrot.slane %v3961, 4
      %v3964 = vshll.u32 %v3621, 16
      %v3966 = vrot.slane %v3964, 5
      %v3967 = vsel %vm1383, %v3962, %v3966
      %v3968 = vshrl.u32 %v3621, 16
      %v3970 = vrot.slane %v3968, 4
      %v3971 = vor.u32 %v3970, %v3966
      %v3972 = vrot.slane %v3971, 4
      %v3974 = vshll.u32 %v3639, 16
      %v3976 = vrot.slane %v3974, 5
      %v3977 = vsel %vm1383, %v3972, %v3976
      %v3979 = vshrl.u32 %v3622, 16
      %v3981 = vrot.slane %v3979, 4
      %v3982 = vshll.u32 %v3622, 16
      %v3984 = vrot.slane %v3982, 5
      %v3985 = vor.u32 %v3981, %v3984
      %v3986 = vrot.slane %v3985, 4
      %v3988 = vshll.u32 %v3623, 16
      %v3990 = vrot.slane %v3988, 5
      %v3991 = vsel %vm1383, %v3986, %v3990
      %v3992 = vshrl.u32 %v3623, 16
      %v3994 = vrot.slane %v3992, 4
      %v3995 = vor.u32 %v3994, %v3990
      %v3996 = vrot.slane %v3995, 4
      %v3998 = vshll.u32 %v3640, 16
      %v4000 = vrot.slane %v3998, 5
      %v4001 = vsel %vm1383, %v3996, %v4000
      %v4003 = vshrl.u32 %v3624, 16
      %v4005 = vrot.slane %v4003, 4
      %v4006 = vshll.u32 %v3624, 16
      %v4008 = vrot.slane %v4006, 5
      %v4009 = vor.u32 %v4005, %v4008
      %v4010 = vrot.slane %v4009, 4
      %v4012 = vshll.u32 %v3625, 16
      %v4014 = vrot.slane %v4012, 5
      %v4015 = vsel %vm1383, %v4010, %v4014
      %v4016 = vshrl.u32 %v3625, 16
      %v4018 = vrot.slane %v4016, 4
      %v4019 = vor.u32 %v4018, %v4014
      %v4020 = vrot.slane %v4019, 4
      %v4022 = vshll.u32 %v3641, 16
      %v4024 = vrot.slane %v4022, 5
      %v4025 = vsel %vm1383, %v4020, %v4024
      %v4058 = vmax.bf16 %v3594, %v3655
      %v4059 = vmax.bf16 %v3595, %v3665
      %v4060 = vmax.bf16 %v3596, %v3679
      %v4061 = vmax.bf16 %v3597, %v3689
      %v4062 = vmax.bf16 %v3598, %v3703
      %v4063 = vmax.bf16 %v3599, %v3713
      %v4064 = vmax.bf16 %v3600, %v3727
      %v4065 = vmax.bf16 %v3601, %v3737
      %v4066 = vmax.bf16 %v3602, %v3751
      %v4067 = vmax.bf16 %v3603, %v3761
      %v4068 = vmax.bf16 %v3604, %v3775
      %v4069 = vmax.bf16 %v3605, %v3785
      %v4070 = vmax.bf16 %v3606, %v3799
      %v4071 = vmax.bf16 %v3607, %v3809
      %v4072 = vmax.bf16 %v3608, %v3823
      %v4073 = vmax.bf16 %v3609, %v3833
      %v4074 = vmax.bf16 %v3610, %v3847
      %v4075 = vmax.bf16 %v3611, %v3857
      %v4076 = vmax.bf16 %v3612, %v3871
      %v4077 = vmax.bf16 %v3613, %v3881
      %v4078 = vmax.bf16 %v3614, %v3895
      %v4079 = vmax.bf16 %v3615, %v3905
      %v4080 = vmax.bf16 %v3616, %v3919
      %v4081 = vmax.bf16 %v3617, %v3929
      %v4082 = vmax.bf16 %v3618, %v3943
      %v4083 = vmax.bf16 %v3619, %v3953
      %v4084 = vmax.bf16 %v3620, %v3967
      %v4085 = vmax.bf16 %v3621, %v3977
      %v4086 = vmax.bf16 %v3622, %v3991
      %v4087 = vmax.bf16 %v3623, %v4001
      %v4088 = vmax.bf16 %v3624, %v4015
      %v4089 = vmax.bf16 %v3625, %v4025
      %v4090 = vld [vmem:[%s242] sm:$0xe]
      %v4091 = vld [vmem:[%s242 + $0xc] sm:$0xe]
      %v4092 = vld [vmem:[%s242 + $0x18] sm:$0xe]
      %v4093 = vld [vmem:[%s242 + $0x24] sm:$0xe]
      %v4094 = vld [vmem:[%s242 + $0x30] sm:$0xe]
      %v4095 = vld [vmem:[%s242 + $0x3c] sm:$0xe]
      %v4096 = vld [vmem:[%s242 + $0x48] sm:$0xe]
      %v4097 = vld [vmem:[%s242 + $0x54] sm:$0xe]
      %v4098 = vld [vmem:[%s242 + $0x60] sm:$0xe]
      %v4099 = vld [vmem:[%s242 + $0x6c] sm:$0xe]
      %v4100 = vld [vmem:[%s242 + $0x78] sm:$0xe]
      %v4101 = vld [vmem:[%s242 + $0x84] sm:$0xe]
      %v4102 = vld [vmem:[%s242 + $0x90] sm:$0xe]
      %v4103 = vld [vmem:[%s242 + $0x9c] sm:$0xe]
      %v4104 = vld [vmem:[%s242 + $0xa8] sm:$0xe]
      %v4105 = vld [vmem:[%s242 + $0xb4] sm:$0xe]
      %v4154 = vrot.slane %v4090, 5
      %v4155 = vrot.slane %v4154, 4
      %v4156 = vrot.slane %v3595, 5
      %v4157 = vsel %vm1898, %v4155, %v4156
      %v4158 = vrot.slane %v4156, 4
      %v4159 = vrot.slane %v3626, 5
      %v4160 = vsel %vm1898, %v4158, %v4159
      %v4161 = vrot.slane %v4091, 5
      %v4162 = vrot.slane %v4161, 4
      %v4163 = vrot.slane %v3597, 5
      %v4164 = vsel %vm1898, %v4162, %v4163
      %v4165 = vrot.slane %v4163, 4
      %v4166 = vrot.slane %v3627, 5
      %v4167 = vsel %vm1898, %v4165, %v4166
      %v4168 = vrot.slane %v4092, 5
      %v4169 = vrot.slane %v4168, 4
      %v4170 = vrot.slane %v3599, 5
      %v4171 = vsel %vm1898, %v4169, %v4170
      %v4172 = vrot.slane %v4170, 4
      %v4173 = vrot.slane %v3628, 5
      %v4174 = vsel %vm1898, %v4172, %v4173
      %v4175 = vrot.slane %v4093, 5
      %v4176 = vrot.slane %v4175, 4
      %v4177 = vrot.slane %v3601, 5
      %v4178 = vsel %vm1898, %v4176, %v4177
      %v4179 = vrot.slane %v4177, 4
      %v4180 = vrot.slane %v3629, 5
      %v4181 = vsel %vm1898, %v4179, %v4180
      %v4182 = vrot.slane %v4094, 5
      %v4183 = vrot.slane %v4182, 4
      %v4184 = vrot.slane %v3603, 5
      %v4185 = vsel %vm1898, %v4183, %v4184
      %v4186 = vrot.slane %v4184, 4
      %v4187 = vrot.slane %v3630, 5
      %v4188 = vsel %vm1898, %v4186, %v4187
      %v4189 = vrot.slane %v4095, 5
      %v4190 = vrot.slane %v4189, 4
      %v4191 = vrot.slane %v3605, 5
      %v4192 = vsel %vm1898, %v4190, %v4191
      %v4193 = vrot.slane %v4191, 4
      %v4194 = vrot.slane %v3631, 5
      %v4195 = vsel %vm1898, %v4193, %v4194
      %v4196 = vrot.slane %v4096, 5
      %v4197 = vrot.slane %v4196, 4
      %v4198 = vrot.slane %v3607, 5
      %v4199 = vsel %vm1898, %v4197, %v4198
      %v4200 = vrot.slane %v4198, 4
      %v4201 = vrot.slane %v3632, 5
      %v4202 = vsel %vm1898, %v4200, %v4201
      %v4203 = vrot.slane %v4097, 5
      %v4204 = vrot.slane %v4203, 4
      %v4205 = vrot.slane %v3609, 5
      %v4206 = vsel %vm1898, %v4204, %v4205
      %v4207 = vrot.slane %v4205, 4
      %v4208 = vrot.slane %v3633, 5
      %v4209 = vsel %vm1898, %v4207, %v4208
      %v4210 = vrot.slane %v4098, 5
      %v4211 = vrot.slane %v4210, 4
      %v4212 = vrot.slane %v3611, 5
      %v4213 = vsel %vm1898, %v4211, %v4212
      %v4214 = vrot.slane %v4212, 4
      %v4215 = vrot.slane %v3634, 5
      %v4216 = vsel %vm1898, %v4214, %v4215
      %v4217 = vrot.slane %v4099, 5
      %v4218 = vrot.slane %v4217, 4
      %v4219 = vrot.slane %v3613, 5
      %v4220 = vsel %vm1898, %v4218, %v4219
      %v4221 = vrot.slane %v4219, 4
      %v4222 = vrot.slane %v3635, 5
      %v4223 = vsel %vm1898, %v4221, %v4222
      %v4224 = vrot.slane %v4100, 5
      %v4225 = vrot.slane %v4224, 4
      %v4226 = vrot.slane %v3615, 5
      %v4227 = vsel %vm1898, %v4225, %v4226
      %v4228 = vrot.slane %v4226, 4
      %v4229 = vrot.slane %v3636, 5
      %v4230 = vsel %vm1898, %v4228, %v4229
      %v4231 = vrot.slane %v4101, 5
      %v4232 = vrot.slane %v4231, 4
      %v4233 = vrot.slane %v3617, 5
      %v4234 = vsel %vm1898, %v4232, %v4233
      %v4235 = vrot.slane %v4233, 4
      %v4236 = vrot.slane %v3637, 5
      %v4237 = vsel %vm1898, %v4235, %v4236
      %v4238 = vrot.slane %v4102, 5
      %v4239 = vrot.slane %v4238, 4
      %v4240 = vrot.slane %v3619, 5
      %v4241 = vsel %vm1898, %v4239, %v4240
      %v4242 = vrot.slane %v4240, 4
      %v4243 = vrot.slane %v3638, 5
      %v4244 = vsel %vm1898, %v4242, %v4243
      %v4245 = vrot.slane %v4103, 5
      %v4246 = vrot.slane %v4245, 4
      %v4247 = vrot.slane %v3621, 5
      %v4248 = vsel %vm1898, %v4246, %v4247
      %v4249 = vrot.slane %v4247, 4
      %v4250 = vrot.slane %v3639, 5
      %v4251 = vsel %vm1898, %v4249, %v4250
      %v4252 = vrot.slane %v4104, 5
      %v4253 = vrot.slane %v4252, 4
      %v4254 = vrot.slane %v3623, 5
      %v4255 = vsel %vm1898, %v4253, %v4254
      %v4256 = vrot.slane %v4254, 4
      %v4257 = vrot.slane %v3640, 5
      %v4258 = vsel %vm1898, %v4256, %v4257
      %v4259 = vrot.slane %v4105, 5
      %v4260 = vrot.slane %v4259, 4
      %v4261 = vrot.slane %v3625, 5
      %v4262 = vsel %vm1898, %v4260, %v4261
      %v4263 = vrot.slane %v4261, 4
      %v4264 = vrot.slane %v3641, 5
      %v4265 = vsel %vm1898, %v4263, %v4264
      %v4298 = vmax.bf16 %v4058, %v4157
      %v4299 = vmax.bf16 %v4059, %v4160
      %v4300 = vmax.bf16 %v4060, %v4164
      %v4301 = vmax.bf16 %v4061, %v4167
      %v4302 = vmax.bf16 %v4062, %v4171
      %v4303 = vmax.bf16 %v4063, %v4174
      %v4304 = vmax.bf16 %v4064, %v4178
      %v4305 = vmax.bf16 %v4065, %v4181
      %v4306 = vmax.bf16 %v4066, %v4185
      %v4307 = vmax.bf16 %v4067, %v4188
      %v4308 = vmax.bf16 %v4068, %v4192
      %v4309 = vmax.bf16 %v4069, %v4195
      %v4310 = vmax.bf16 %v4070, %v4199
      %v4311 = vmax.bf16 %v4071, %v4202
      %v4312 = vmax.bf16 %v4072, %v4206
      %v4313 = vmax.bf16 %v4073, %v4209
      %v4314 = vmax.bf16 %v4074, %v4213
      %v4315 = vmax.bf16 %v4075, %v4216
      %v4316 = vmax.bf16 %v4076, %v4220
      %v4317 = vmax.bf16 %v4077, %v4223
      %v4318 = vmax.bf16 %v4078, %v4227
      %v4319 = vmax.bf16 %v4079, %v4230
      %v4320 = vmax.bf16 %v4080, %v4234
      %v4321 = vmax.bf16 %v4081, %v4237
      %v4322 = vmax.bf16 %v4082, %v4241
      %v4323 = vmax.bf16 %v4083, %v4244
      %v4324 = vmax.bf16 %v4084, %v4248
      %v4325 = vmax.bf16 %v4085, %v4251
      %v4326 = vmax.bf16 %v4086, %v4255
      %v4327 = vmax.bf16 %v4087, %v4258
      %v4328 = vmax.bf16 %v4088, %v4262
      %v4329 = vmax.bf16 %v4089, %v4265
      %v4330 = vld [vmem:[%s242 + $0x8] sm:$0x3]
      %v4331 = vld [vmem:[%s242 + $0x14] sm:$0x3]
      %v4332 = vld [vmem:[%s242 + $0x20] sm:$0x3]
      %v4333 = vld [vmem:[%s242 + $0x2c] sm:$0x3]
      %v4334 = vld [vmem:[%s242 + $0x38] sm:$0x3]
      %v4335 = vld [vmem:[%s242 + $0x44] sm:$0x3]
      %v4336 = vld [vmem:[%s242 + $0x50] sm:$0x3]
      %v4337 = vld [vmem:[%s242 + $0x5c] sm:$0x3]
      %v4338 = vld [vmem:[%s242 + $0x68] sm:$0x3]
      %v4339 = vld [vmem:[%s242 + $0x74] sm:$0x3]
      %v4340 = vld [vmem:[%s242 + $0x80] sm:$0x3]
      %v4341 = vld [vmem:[%s242 + $0x8c] sm:$0x3]
      %v4342 = vld [vmem:[%s242 + $0x98] sm:$0x3]
      %v4343 = vld [vmem:[%s242 + $0xa4] sm:$0x3]
      %v4344 = vld [vmem:[%s242 + $0xb0] sm:$0x3]
      %v4345 = vld [vmem:[%s242 + $0xbc] sm:$0x3]
      %v4347 = vshrl.u32 %v4090, 16
      %v4349 = vrot.slane %v4347, 5
      %v4350 = vshll.u32 %v4090, 16
      %v4352 = vrot.slane %v4350, 6
      %v4353 = vor.u32 %v4349, %v4352
      %v4354 = vrot.slane %v4353, 4
      %v4355 = vrot.slane %v3656, 5
      %v4356 = vrot.slane %v3652, 6
      %v4357 = vor.u32 %v4355, %v4356
      %v4358 = vsel %vm2093, %v4354, %v4357
      %v4359 = vrot.slane %v4357, 4
      %v4361 = vshrl.u32 %v4330, 16
      %v4363 = vrot.slane %v4361, 5
      %v4364 = vshll.u32 %v4330, 16
      %v4366 = vrot.slane %v4364, 6
      %v4367 = vor.u32 %v4363, %v4366
      %v4368 = vsel %vm2093, %v4359, %v4367
      %v4370 = vshrl.u32 %v4091, 16
      %v4372 = vrot.slane %v4370, 5
      %v4373 = vshll.u32 %v4091, 16
      %v4375 = vrot.slane %v4373, 6
      %v4376 = vor.u32 %v4372, %v4375
      %v4377 = vrot.slane %v4376, 4
      %v4378 = vrot.slane %v3680, 5
      %v4379 = vrot.slane %v3676, 6
      %v4380 = vor.u32 %v4378, %v4379
      %v4381 = vsel %vm2093, %v4377, %v4380
      %v4382 = vrot.slane %v4380, 4
      %v4384 = vshrl.u32 %v4331, 16
      %v4386 = vrot.slane %v4384, 5
      %v4387 = vshll.u32 %v4331, 16
      %v4389 = vrot.slane %v4387, 6
      %v4390 = vor.u32 %v4386, %v4389
      %v4391 = vsel %vm2093, %v4382, %v4390
      %v4393 = vshrl.u32 %v4092, 16
      %v4395 = vrot.slane %v4393, 5
      %v4396 = vshll.u32 %v4092, 16
      %v4398 = vrot.slane %v4396, 6
      %v4399 = vor.u32 %v4395, %v4398
      %v4400 = vrot.slane %v4399, 4
      %v4401 = vrot.slane %v3704, 5
      %v4402 = vrot.slane %v3700, 6
      %v4403 = vor.u32 %v4401, %v4402
      %v4404 = vsel %vm2093, %v4400, %v4403
      %v4405 = vrot.slane %v4403, 4
      %v4407 = vshrl.u32 %v4332, 16
      %v4409 = vrot.slane %v4407, 5
      %v4410 = vshll.u32 %v4332, 16
      %v4412 = vrot.slane %v4410, 6
      %v4413 = vor.u32 %v4409, %v4412
      %v4414 = vsel %vm2093, %v4405, %v4413
      %v4416 = vshrl.u32 %v4093, 16
      %v4418 = vrot.slane %v4416, 5
      %v4419 = vshll.u32 %v4093, 16
      %v4421 = vrot.slane %v4419, 6
      %v4422 = vor.u32 %v4418, %v4421
      %v4423 = vrot.slane %v4422, 4
      %v4424 = vrot.slane %v3728, 5
      %v4425 = vrot.slane %v3724, 6
      %v4426 = vor.u32 %v4424, %v4425
      %v4427 = vsel %vm2093, %v4423, %v4426
      %v4428 = vrot.slane %v4426, 4
      %v4430 = vshrl.u32 %v4333, 16
      %v4432 = vrot.slane %v4430, 5
      %v4433 = vshll.u32 %v4333, 16
      %v4435 = vrot.slane %v4433, 6
      %v4436 = vor.u32 %v4432, %v4435
      %v4437 = vsel %vm2093, %v4428, %v4436
      %v4439 = vshrl.u32 %v4094, 16
      %v4441 = vrot.slane %v4439, 5
      %v4442 = vshll.u32 %v4094, 16
      %v4444 = vrot.slane %v4442, 6
      %v4445 = vor.u32 %v4441, %v4444
      %v4446 = vrot.slane %v4445, 4
      %v4447 = vrot.slane %v3752, 5
      %v4448 = vrot.slane %v3748, 6
      %v4449 = vor.u32 %v4447, %v4448
      %v4450 = vsel %vm2093, %v4446, %v4449
      %v4451 = vrot.slane %v4449, 4
      %v4453 = vshrl.u32 %v4334, 16
      %v4455 = vrot.slane %v4453, 5
      %v4456 = vshll.u32 %v4334, 16
      %v4458 = vrot.slane %v4456, 6
      %v4459 = vor.u32 %v4455, %v4458
      %v4460 = vsel %vm2093, %v4451, %v4459
      %v4462 = vshrl.u32 %v4095, 16
      %v4464 = vrot.slane %v4462, 5
      %v4465 = vshll.u32 %v4095, 16
      %v4467 = vrot.slane %v4465, 6
      %v4468 = vor.u32 %v4464, %v4467
      %v4469 = vrot.slane %v4468, 4
      %v4470 = vrot.slane %v3776, 5
      %v4471 = vrot.slane %v3772, 6
      %v4472 = vor.u32 %v4470, %v4471
      %v4473 = vsel %vm2093, %v4469, %v4472
      %v4474 = vrot.slane %v4472, 4
      %v4476 = vshrl.u32 %v4335, 16
      %v4478 = vrot.slane %v4476, 5
      %v4479 = vshll.u32 %v4335, 16
      %v4481 = vrot.slane %v4479, 6
      %v4482 = vor.u32 %v4478, %v4481
      %v4483 = vsel %vm2093, %v4474, %v4482
      %v4485 = vshrl.u32 %v4096, 16
      %v4487 = vrot.slane %v4485, 5
      %v4488 = vshll.u32 %v4096, 16
      %v4490 = vrot.slane %v4488, 6
      %v4491 = vor.u32 %v4487, %v4490
      %v4492 = vrot.slane %v4491, 4
      %v4493 = vrot.slane %v3800, 5
      %v4494 = vrot.slane %v3796, 6
      %v4495 = vor.u32 %v4493, %v4494
      %v4496 = vsel %vm2093, %v4492, %v4495
      %v4497 = vrot.slane %v4495, 4
      %v4499 = vshrl.u32 %v4336, 16
      %v4501 = vrot.slane %v4499, 5
      %v4502 = vshll.u32 %v4336, 16
      %v4504 = vrot.slane %v4502, 6
      %v4505 = vor.u32 %v4501, %v4504
      %v4506 = vsel %vm2093, %v4497, %v4505
      %v4508 = vshrl.u32 %v4097, 16
      %v4510 = vrot.slane %v4508, 5
      %v4511 = vshll.u32 %v4097, 16
      %v4513 = vrot.slane %v4511, 6
      %v4514 = vor.u32 %v4510, %v4513
      %v4515 = vrot.slane %v4514, 4
      %v4516 = vrot.slane %v3824, 5
      %v4517 = vrot.slane %v3820, 6
      %v4518 = vor.u32 %v4516, %v4517
      %v4519 = vsel %vm2093, %v4515, %v4518
      %v4520 = vrot.slane %v4518, 4
      %v4522 = vshrl.u32 %v4337, 16
      %v4524 = vrot.slane %v4522, 5
      %v4525 = vshll.u32 %v4337, 16
      %v4527 = vrot.slane %v4525, 6
      %v4528 = vor.u32 %v4524, %v4527
      %v4529 = vsel %vm2093, %v4520, %v4528
      %v4531 = vshrl.u32 %v4098, 16
      %v4533 = vrot.slane %v4531, 5
      %v4534 = vshll.u32 %v4098, 16
      %v4536 = vrot.slane %v4534, 6
      %v4537 = vor.u32 %v4533, %v4536
      %v4538 = vrot.slane %v4537, 4
      %v4539 = vrot.slane %v3848, 5
      %v4540 = vrot.slane %v3844, 6
      %v4541 = vor.u32 %v4539, %v4540
      %v4542 = vsel %vm2093, %v4538, %v4541
      %v4543 = vrot.slane %v4541, 4
      %v4545 = vshrl.u32 %v4338, 16
      %v4547 = vrot.slane %v4545, 5
      %v4548 = vshll.u32 %v4338, 16
      %v4550 = vrot.slane %v4548, 6
      %v4551 = vor.u32 %v4547, %v4550
      %v4552 = vsel %vm2093, %v4543, %v4551
      %v4554 = vshrl.u32 %v4099, 16
      %v4556 = vrot.slane %v4554, 5
      %v4557 = vshll.u32 %v4099, 16
      %v4559 = vrot.slane %v4557, 6
      %v4560 = vor.u32 %v4556, %v4559
      %v4561 = vrot.slane %v4560, 4
      %v4562 = vrot.slane %v3872, 5
      %v4563 = vrot.slane %v3868, 6
      %v4564 = vor.u32 %v4562, %v4563
      %v4565 = vsel %vm2093, %v4561, %v4564
      %v4566 = vrot.slane %v4564, 4
      %v4568 = vshrl.u32 %v4339, 16
      %v4570 = vrot.slane %v4568, 5
      %v4571 = vshll.u32 %v4339, 16
      %v4573 = vrot.slane %v4571, 6
      %v4574 = vor.u32 %v4570, %v4573
      %v4575 = vsel %vm2093, %v4566, %v4574
      %v4577 = vshrl.u32 %v4100, 16
      %v4579 = vrot.slane %v4577, 5
      %v4580 = vshll.u32 %v4100, 16
      %v4582 = vrot.slane %v4580, 6
      %v4583 = vor.u32 %v4579, %v4582
      %v4584 = vrot.slane %v4583, 4
      %v4585 = vrot.slane %v3896, 5
      %v4586 = vrot.slane %v3892, 6
      %v4587 = vor.u32 %v4585, %v4586
      %v4588 = vsel %vm2093, %v4584, %v4587
      %v4589 = vrot.slane %v4587, 4
      %v4591 = vshrl.u32 %v4340, 16
      %v4593 = vrot.slane %v4591, 5
      %v4594 = vshll.u32 %v4340, 16
      %v4596 = vrot.slane %v4594, 6
      %v4597 = vor.u32 %v4593, %v4596
      %v4598 = vsel %vm2093, %v4589, %v4597
      %v4600 = vshrl.u32 %v4101, 16
      %v4602 = vrot.slane %v4600, 5
      %v4603 = vshll.u32 %v4101, 16
      %v4605 = vrot.slane %v4603, 6
      %v4606 = vor.u32 %v4602, %v4605
      %v4607 = vrot.slane %v4606, 4
      %v4608 = vrot.slane %v3920, 5
      %v4609 = vrot.slane %v3916, 6
      %v4610 = vor.u32 %v4608, %v4609
      %v4611 = vsel %vm2093, %v4607, %v4610
      %v4612 = vrot.slane %v4610, 4
      %v4614 = vshrl.u32 %v4341, 16
      %v4616 = vrot.slane %v4614, 5
      %v4617 = vshll.u32 %v4341, 16
      %v4619 = vrot.slane %v4617, 6
      %v4620 = vor.u32 %v4616, %v4619
      %v4621 = vsel %vm2093, %v4612, %v4620
      %v4623 = vshrl.u32 %v4102, 16
      %v4625 = vrot.slane %v4623, 5
      %v4626 = vshll.u32 %v4102, 16
      %v4628 = vrot.slane %v4626, 6
      %v4629 = vor.u32 %v4625, %v4628
      %v4630 = vrot.slane %v4629, 4
      %v4631 = vrot.slane %v3944, 5
      %v4632 = vrot.slane %v3940, 6
      %v4633 = vor.u32 %v4631, %v4632
      %v4634 = vsel %vm2093, %v4630, %v4633
      %v4635 = vrot.slane %v4633, 4
      %v4637 = vshrl.u32 %v4342, 16
      %v4639 = vrot.slane %v4637, 5
      %v4640 = vshll.u32 %v4342, 16
      %v4642 = vrot.slane %v4640, 6
      %v4643 = vor.u32 %v4639, %v4642
      %v4644 = vsel %vm2093, %v4635, %v4643
      %v4646 = vshrl.u32 %v4103, 16
      %v4648 = vrot.slane %v4646, 5
      %v4649 = vshll.u32 %v4103, 16
      %v4651 = vrot.slane %v4649, 6
      %v4652 = vor.u32 %v4648, %v4651
      %v4653 = vrot.slane %v4652, 4
      %v4654 = vrot.slane %v3968, 5
      %v4655 = vrot.slane %v3964, 6
      %v4656 = vor.u32 %v4654, %v4655
      %v4657 = vsel %vm2093, %v4653, %v4656
      %v4658 = vrot.slane %v4656, 4
      %v4660 = vshrl.u32 %v4343, 16
      %v4662 = vrot.slane %v4660, 5
      %v4663 = vshll.u32 %v4343, 16
      %v4665 = vrot.slane %v4663, 6
      %v4666 = vor.u32 %v4662, %v4665
      %v4667 = vsel %vm2093, %v4658, %v4666
      %v4669 = vshrl.u32 %v4104, 16
      %v4671 = vrot.slane %v4669, 5
      %v4672 = vshll.u32 %v4104, 16
      %v4674 = vrot.slane %v4672, 6
      %v4675 = vor.u32 %v4671, %v4674
      %v4676 = vrot.slane %v4675, 4
      %v4677 = vrot.slane %v3992, 5
      %v4678 = vrot.slane %v3988, 6
      %v4679 = vor.u32 %v4677, %v4678
      %v4680 = vsel %vm2093, %v4676, %v4679
      %v4681 = vrot.slane %v4679, 4
      %v4683 = vshrl.u32 %v4344, 16
      %v4685 = vrot.slane %v4683, 5
      %v4686 = vshll.u32 %v4344, 16
      %v4688 = vrot.slane %v4686, 6
      %v4689 = vor.u32 %v4685, %v4688
      %v4690 = vsel %vm2093, %v4681, %v4689
      %v4692 = vshrl.u32 %v4105, 16
      %v4694 = vrot.slane %v4692, 5
      %v4695 = vshll.u32 %v4105, 16
      %v4697 = vrot.slane %v4695, 6
      %v4698 = vor.u32 %v4694, %v4697
      %v4699 = vrot.slane %v4698, 4
      %v4700 = vrot.slane %v4016, 5
      %v4701 = vrot.slane %v4012, 6
      %v4702 = vor.u32 %v4700, %v4701
      %v4703 = vsel %vm2093, %v4699, %v4702
      %v4704 = vrot.slane %v4702, 4
      %v4706 = vshrl.u32 %v4345, 16
      %v4708 = vrot.slane %v4706, 5
      %v4709 = vshll.u32 %v4345, 16
      %v4711 = vrot.slane %v4709, 6
      %v4712 = vor.u32 %v4708, %v4711
      %v4713 = vsel %vm2093, %v4704, %v4712
      %v4746 = vmax.bf16 %v4298, %v4358
      %v4747 = vmax.bf16 %v4299, %v4368
      %v4748 = vmax.bf16 %v4300, %v4381
      %v4749 = vmax.bf16 %v4301, %v4391
      %v4750 = vmax.bf16 %v4302, %v4404
      %v4751 = vmax.bf16 %v4303, %v4414
      %v4752 = vmax.bf16 %v4304, %v4427
      %v4753 = vmax.bf16 %v4305, %v4437
      %v4754 = vmax.bf16 %v4306, %v4450
      %v4755 = vmax.bf16 %v4307, %v4460
      %v4756 = vmax.bf16 %v4308, %v4473
      %v4757 = vmax.bf16 %v4309, %v4483
      %v4758 = vmax.bf16 %v4310, %v4496
      %v4759 = vmax.bf16 %v4311, %v4506
      %v4760 = vmax.bf16 %v4312, %v4519
      %v4761 = vmax.bf16 %v4313, %v4529
      %v4762 = vmax.bf16 %v4314, %v4542
      %v4763 = vmax.bf16 %v4315, %v4552
      %v4764 = vmax.bf16 %v4316, %v4565
      %v4765 = vmax.bf16 %v4317, %v4575
      %v4766 = vmax.bf16 %v4318, %v4588
      %v4767 = vmax.bf16 %v4319, %v4598
      %v4768 = vmax.bf16 %v4320, %v4611
      %v4769 = vmax.bf16 %v4321, %v4621
      %v4770 = vmax.bf16 %v4322, %v4634
      %v4771 = vmax.bf16 %v4323, %v4644
      %v4772 = vmax.bf16 %v4324, %v4657
      %v4773 = vmax.bf16 %v4325, %v4667
      %v4774 = vmax.bf16 %v4326, %v4680
      %v4775 = vmax.bf16 %v4327, %v4690
      %v4776 = vmax.bf16 %v4328, %v4703
      %v4777 = vmax.bf16 %v4329, %v4713
      %v4778 = vld [vmem:[%s242] sm:$0xc]
      %v4779 = vld [vmem:[%s242 + $0xc] sm:$0xc]
      %v4780 = vld [vmem:[%s242 + $0x18] sm:$0xc]
      %v4781 = vld [vmem:[%s242 + $0x24] sm:$0xc]
      %v4782 = vld [vmem:[%s242 + $0x30] sm:$0xc]
      %v4783 = vld [vmem:[%s242 + $0x3c] sm:$0xc]
      %v4784 = vld [vmem:[%s242 + $0x48] sm:$0xc]
      %v4785 = vld [vmem:[%s242 + $0x54] sm:$0xc]
      %v4786 = vld [vmem:[%s242 + $0x60] sm:$0xc]
      %v4787 = vld [vmem:[%s242 + $0x6c] sm:$0xc]
      %v4788 = vld [vmem:[%s242 + $0x78] sm:$0xc]
      %v4789 = vld [vmem:[%s242 + $0x84] sm:$0xc]
      %v4790 = vld [vmem:[%s242 + $0x90] sm:$0xc]
      %v4791 = vld [vmem:[%s242 + $0x9c] sm:$0xc]
      %v4792 = vld [vmem:[%s242 + $0xa8] sm:$0xc]
      %v4793 = vld [vmem:[%s242 + $0xb4] sm:$0xc]
      %v4826 = vrot.slane %v4778, 6
      %v4827 = vrot.slane %v4826, 4
      %v4828 = vrot.slane %v3595, 6
      %v4829 = vsel %vm2576, %v4827, %v4828
      %v4830 = vrot.slane %v4828, 4
      %v4831 = vrot.slane %v4330, 6
      %v4832 = vsel %vm2576, %v4830, %v4831
      %v4833 = vrot.slane %v4779, 6
      %v4834 = vrot.slane %v4833, 4
      %v4835 = vrot.slane %v3597, 6
      %v4836 = vsel %vm2576, %v4834, %v4835
      %v4837 = vrot.slane %v4835, 4
      %v4838 = vrot.slane %v4331, 6
      %v4839 = vsel %vm2576, %v4837, %v4838
      %v4840 = vrot.slane %v4780, 6
      %v4841 = vrot.slane %v4840, 4
      %v4842 = vrot.slane %v3599, 6
      %v4843 = vsel %vm2576, %v4841, %v4842
      %v4844 = vrot.slane %v4842, 4
      %v4845 = vrot.slane %v4332, 6
      %v4846 = vsel %vm2576, %v4844, %v4845
      %v4847 = vrot.slane %v4781, 6
      %v4848 = vrot.slane %v4847, 4
      %v4849 = vrot.slane %v3601, 6
      %v4850 = vsel %vm2576, %v4848, %v4849
      %v4851 = vrot.slane %v4849, 4
      %v4852 = vrot.slane %v4333, 6
      %v4853 = vsel %vm2576, %v4851, %v4852
      %v4854 = vrot.slane %v4782, 6
      %v4855 = vrot.slane %v4854, 4
      %v4856 = vrot.slane %v3603, 6
      %v4857 = vsel %vm2576, %v4855, %v4856
      %v4858 = vrot.slane %v4856, 4
      %v4859 = vrot.slane %v4334, 6
      %v4860 = vsel %vm2576, %v4858, %v4859
      %v4861 = vrot.slane %v4783, 6
      %v4862 = vrot.slane %v4861, 4
      %v4863 = vrot.slane %v3605, 6
      %v4864 = vsel %vm2576, %v4862, %v4863
      %v4865 = vrot.slane %v4863, 4
      %v4866 = vrot.slane %v4335, 6
      %v4867 = vsel %vm2576, %v4865, %v4866
      %v4868 = vrot.slane %v4784, 6
      %v4869 = vrot.slane %v4868, 4
      %v4870 = vrot.slane %v3607, 6
      %v4871 = vsel %vm2576, %v4869, %v4870
      %v4872 = vrot.slane %v4870, 4
      %v4873 = vrot.slane %v4336, 6
      %v4874 = vsel %vm2576, %v4872, %v4873
      %v4875 = vrot.slane %v4785, 6
      %v4876 = vrot.slane %v4875, 4
      %v4877 = vrot.slane %v3609, 6
      %v4878 = vsel %vm2576, %v4876, %v4877
      %v4879 = vrot.slane %v4877, 4
      %v4880 = vrot.slane %v4337, 6
      %v4881 = vsel %vm2576, %v4879, %v4880
      %v4882 = vrot.slane %v4786, 6
      %v4883 = vrot.slane %v4882, 4
      %v4884 = vrot.slane %v3611, 6
      %v4885 = vsel %vm2576, %v4883, %v4884
      %v4886 = vrot.slane %v4884, 4
      %v4887 = vrot.slane %v4338, 6
      %v4888 = vsel %vm2576, %v4886, %v4887
      %v4889 = vrot.slane %v4787, 6
      %v4890 = vrot.slane %v4889, 4
      %v4891 = vrot.slane %v3613, 6
      %v4892 = vsel %vm2576, %v4890, %v4891
      %v4893 = vrot.slane %v4891, 4
      %v4894 = vrot.slane %v4339, 6
      %v4895 = vsel %vm2576, %v4893, %v4894
      %v4896 = vrot.slane %v4788, 6
      %v4897 = vrot.slane %v4896, 4
      %v4898 = vrot.slane %v3615, 6
      %v4899 = vsel %vm2576, %v4897, %v4898
      %v4900 = vrot.slane %v4898, 4
      %v4901 = vrot.slane %v4340, 6
      %v4902 = vsel %vm2576, %v4900, %v4901
      %v4903 = vrot.slane %v4789, 6
      %v4904 = vrot.slane %v4903, 4
      %v4905 = vrot.slane %v3617, 6
      %v4906 = vsel %vm2576, %v4904, %v4905
      %v4907 = vrot.slane %v4905, 4
      %v4908 = vrot.slane %v4341, 6
      %v4909 = vsel %vm2576, %v4907, %v4908
      %v4910 = vrot.slane %v4790, 6
      %v4911 = vrot.slane %v4910, 4
      %v4912 = vrot.slane %v3619, 6
      %v4913 = vsel %vm2576, %v4911, %v4912
      %v4914 = vrot.slane %v4912, 4
      %v4915 = vrot.slane %v4342, 6
      %v4916 = vsel %vm2576, %v4914, %v4915
      %v4917 = vrot.slane %v4791, 6
      %v4918 = vrot.slane %v4917, 4
      %v4919 = vrot.slane %v3621, 6
      %v4920 = vsel %vm2576, %v4918, %v4919
      %v4921 = vrot.slane %v4919, 4
      %v4922 = vrot.slane %v4343, 6
      %v4923 = vsel %vm2576, %v4921, %v4922
      %v4924 = vrot.slane %v4792, 6
      %v4925 = vrot.slane %v4924, 4
      %v4926 = vrot.slane %v3623, 6
      %v4927 = vsel %vm2576, %v4925, %v4926
      %v4928 = vrot.slane %v4926, 4
      %v4929 = vrot.slane %v4344, 6
      %v4930 = vsel %vm2576, %v4928, %v4929
      %v4931 = vrot.slane %v4793, 6
      %v4932 = vrot.slane %v4931, 4
      %v4933 = vrot.slane %v3625, 6
      %v4934 = vsel %vm2576, %v4932, %v4933
      %v4935 = vrot.slane %v4933, 4
      %v4936 = vrot.slane %v4345, 6
      %v4937 = vsel %vm2576, %v4935, %v4936
      %v4970 = vmax.bf16 %v4746, %v4829
      %v4971 = vmax.bf16 %v4747, %v4832
      %v4972 = vmax.bf16 %v4748, %v4836
      %v4973 = vmax.bf16 %v4749, %v4839
      %v4974 = vmax.bf16 %v4750, %v4843
      %v4975 = vmax.bf16 %v4751, %v4846
      %v4976 = vmax.bf16 %v4752, %v4850
      %v4977 = vmax.bf16 %v4753, %v4853
      %v4978 = vmax.bf16 %v4754, %v4857
      %v4979 = vmax.bf16 %v4755, %v4860
      %v4980 = vmax.bf16 %v4756, %v4864
      %v4981 = vmax.bf16 %v4757, %v4867
      %v4982 = vmax.bf16 %v4758, %v4871
      %v4983 = vmax.bf16 %v4759, %v4874
      %v4984 = vmax.bf16 %v4760, %v4878
      %v4985 = vmax.bf16 %v4761, %v4881
      %v4986 = vmax.bf16 %v4762, %v4885
      %v4987 = vmax.bf16 %v4763, %v4888
      %v4988 = vmax.bf16 %v4764, %v4892
      %v4989 = vmax.bf16 %v4765, %v4895
      %v4990 = vmax.bf16 %v4766, %v4899
      %v4991 = vmax.bf16 %v4767, %v4902
      %v4992 = vmax.bf16 %v4768, %v4906
      %v4993 = vmax.bf16 %v4769, %v4909
      %v4994 = vmax.bf16 %v4770, %v4913
      %v4995 = vmax.bf16 %v4771, %v4916
      %v4996 = vmax.bf16 %v4772, %v4920
      %v4997 = vmax.bf16 %v4773, %v4923
      %v4998 = vmax.bf16 %v4774, %v4927
      %v4999 = vmax.bf16 %v4775, %v4930
      %v5000 = vmax.bf16 %v4776, %v4934
      %v5001 = vmax.bf16 %v4777, %v4937
      %5002 = vst.msk [vmem:[%s242] sm:$0xf] %vm227, %v4970
      %5003 = vst.msk [vmem:[%s242 + $0x4] sm:$0xf] %vm227, %v4971
      %5004 = vst.msk [vmem:[%s242 + $0xc] sm:$0xf] %vm227, %v4972
      %5005 = vst.msk [vmem:[%s242 + $0x10] sm:$0xf] %vm227, %v4973
      %5006 = vst.msk [vmem:[%s242 + $0x18] sm:$0xf] %vm227, %v4974
      %5007 = vst.msk [vmem:[%s242 + $0x1c] sm:$0xf] %vm227, %v4975
      %5008 = vst.msk [vmem:[%s242 + $0x24] sm:$0xf] %vm227, %v4976
      %5009 = vst.msk [vmem:[%s242 + $0x28] sm:$0xf] %vm227, %v4977
      %5010 = vst.msk [vmem:[%s242 + $0x30] sm:$0xf] %vm227, %v4978
      %5011 = vst.msk [vmem:[%s242 + $0x34] sm:$0xf] %vm227, %v4979
      %5012 = vst.msk [vmem:[%s242 + $0x3c] sm:$0xf] %vm227, %v4980
      %5013 = vst.msk [vmem:[%s242 + $0x40] sm:$0xf] %vm227, %v4981
      %5014 = vst.msk [vmem:[%s242 + $0x48] sm:$0xf] %vm227, %v4982
      %5015 = vst.msk [vmem:[%s242 + $0x4c] sm:$0xf] %vm227, %v4983
      %5016 = vst.msk [vmem:[%s242 + $0x54] sm:$0xf] %vm227, %v4984
      %5017 = vst.msk [vmem:[%s242 + $0x58] sm:$0xf] %vm227, %v4985
      %5018 = vst.msk [vmem:[%s242 + $0x60] sm:$0xf] %vm227, %v4986
      %5019 = vst.msk [vmem:[%s242 + $0x64] sm:$0xf] %vm227, %v4987
      %5020 = vst.msk [vmem:[%s242 + $0x6c] sm:$0xf] %vm227, %v4988
      %5021 = vst.msk [vmem:[%s242 + $0x70] sm:$0xf] %vm227, %v4989
      %5022 = vst.msk [vmem:[%s242 + $0x78] sm:$0xf] %vm227, %v4990
      %5023 = vst.msk [vmem:[%s242 + $0x7c] sm:$0xf] %vm227, %v4991
      %5024 = vst.msk [vmem:[%s242 + $0x84] sm:$0xf] %vm227, %v4992
      %5025 = vst.msk [vmem:[%s242 + $0x88] sm:$0xf] %vm227, %v4993
      %5026 = vst.msk [vmem:[%s242 + $0x90] sm:$0xf] %vm227, %v4994
      %5027 = vst.msk [vmem:[%s242 + $0x94] sm:$0xf] %vm227, %v4995
      %5028 = vst.msk [vmem:[%s242 + $0x9c] sm:$0xf] %vm227, %v4996
      %5029 = vst.msk [vmem:[%s242 + $0xa0] sm:$0xf] %vm227, %v4997
      %5030 = vst.msk [vmem:[%s242 + $0xa8] sm:$0xf] %vm227, %v4998
      %5031 = vst.msk [vmem:[%s242 + $0xac] sm:$0xf] %vm227, %v4999
      %5032 = vst.msk [vmem:[%s242 + $0xb4] sm:$0xf] %vm227, %v5000
      %5033 = vst.msk [vmem:[%s242 + $0xb8] sm:$0xf] %vm227, %v5001
      %v5034 = vld [vmem:[#allocation2] sm:$0xf]
      %v5035 = vld [vmem:[#allocation2 + $0x4] sm:$0xf]
      %v5036 = vld [vmem:[#allocation2 + $0xc] sm:$0xf]
      %v5037 = vld [vmem:[#allocation2 + $0x10] sm:$0xf]
      %v5038 = vld [vmem:[#allocation2 + $0x18] sm:$0xf]
      %v5039 = vld [vmem:[#allocation2 + $0x1c] sm:$0xf]
      %v5040 = vld [vmem:[#allocation2 + $0x24] sm:$0xf]
      %v5041 = vld [vmem:[#allocation2 + $0x28] sm:$0xf]
      %v5042 = vld [vmem:[#allocation2 + $0x30] sm:$0xf]
      %v5043 = vld [vmem:[#allocation2 + $0x34] sm:$0xf]
      %v5044 = vld [vmem:[#allocation2 + $0x3c] sm:$0xf]
      %v5045 = vld [vmem:[#allocation2 + $0x40] sm:$0xf]
      %v5046 = vld [vmem:[#allocation2 + $0x48] sm:$0xf]
      %v5047 = vld [vmem:[#allocation2 + $0x4c] sm:$0xf]
      %v5048 = vld [vmem:[#allocation2 + $0x54] sm:$0xf]
      %v5049 = vld [vmem:[#allocation2 + $0x58] sm:$0xf]
      %v5050 = vld [vmem:[#allocation2 + $0x60] sm:$0xf]
      %v5051 = vld [vmem:[#allocation2 + $0x64] sm:$0xf]
      %v5052 = vld [vmem:[#allocation2 + $0x6c] sm:$0xf]
      %v5053 = vld [vmem:[#allocation2 + $0x70] sm:$0xf]
      %v5054 = vld [vmem:[#allocation2 + $0x78] sm:$0xf]
      %v5055 = vld [vmem:[#allocation2 + $0x7c] sm:$0xf]
      %v5056 = vld [vmem:[#allocation2 + $0x84] sm:$0xf]
      %v5057 = vld [vmem:[#allocation2 + $0x88] sm:$0xf]
      %v5058 = vld [vmem:[#allocation2 + $0x90] sm:$0xf]
      %v5059 = vld [vmem:[#allocation2 + $0x94] sm:$0xf]
      %v5060 = vld [vmem:[#allocation2 + $0x9c] sm:$0xf]
      %v5061 = vld [vmem:[#allocation2 + $0xa0] sm:$0xf]
      %v5062 = vld [vmem:[#allocation2 + $0xa8] sm:$0xf]
      %v5063 = vld [vmem:[#allocation2 + $0xac] sm:$0xf]
      %v5064 = vld [vmem:[#allocation2 + $0xb4] sm:$0xf]
      %v5065 = vld [vmem:[#allocation2 + $0xb8] sm:$0xf]
      %v5066 = vld [vmem:[%s2817] sm:$0xf]
      %v5067 = vld [vmem:[%s2817 + $0x4] sm:$0xf]
      %v5068 = vld [vmem:[%s2817 + $0xc] sm:$0xf]
      %v5069 = vld [vmem:[%s2817 + $0x10] sm:$0xf]
      %v5070 = vld [vmem:[%s2817 + $0x18] sm:$0xf]
      %v5071 = vld [vmem:[%s2817 + $0x1c] sm:$0xf]
      %v5072 = vld [vmem:[%s2817 + $0x24] sm:$0xf]
      %v5073 = vld [vmem:[%s2817 + $0x28] sm:$0xf]
      %v5074 = vld [vmem:[%s2817 + $0x30] sm:$0xf]
      %v5075 = vld [vmem:[%s2817 + $0x34] sm:$0xf]
      %v5076 = vld [vmem:[%s2817 + $0x3c] sm:$0xf]
      %v5077 = vld [vmem:[%s2817 + $0x40] sm:$0xf]
      %v5078 = vld [vmem:[%s2817 + $0x48] sm:$0xf]
      %v5079 = vld [vmem:[%s2817 + $0x4c] sm:$0xf]
      %v5080 = vld [vmem:[%s2817 + $0x54] sm:$0xf]
      %v5081 = vld [vmem:[%s2817 + $0x58] sm:$0xf]
      %v5082 = vld [vmem:[%s2817 + $0x60] sm:$0xf]
      %v5083 = vld [vmem:[%s2817 + $0x64] sm:$0xf]
      %v5084 = vld [vmem:[%s2817 + $0x6c] sm:$0xf]
      %v5085 = vld [vmem:[%s2817 + $0x70] sm:$0xf]
      %v5086 = vld [vmem:[%s2817 + $0x78] sm:$0xf]
      %v5087 = vld [vmem:[%s2817 + $0x7c] sm:$0xf]
      %v5088 = vld [vmem:[%s2817 + $0x84] sm:$0xf]
      %v5089 = vld [vmem:[%s2817 + $0x88] sm:$0xf]
      %v5090 = vld [vmem:[%s2817 + $0x90] sm:$0xf]
      %v5091 = vld [vmem:[%s2817 + $0x94] sm:$0xf]
      %v5092 = vld [vmem:[%s2817 + $0x9c] sm:$0xf]
      %v5093 = vld [vmem:[%s2817 + $0xa0] sm:$0xf]
      %v5094 = vld [vmem:[%s2817 + $0xa8] sm:$0xf]
      %v5095 = vld [vmem:[%s2817 + $0xac] sm:$0xf]
      %v5096 = vld [vmem:[%s2817 + $0xb4] sm:$0xf]
      %v5097 = vld [vmem:[%s2817 + $0xb8] sm:$0xf]
      %v5098 = vmax.bf16 %v5034, %v5066
      %v5099 = vmax.bf16 %v5035, %v5067
      %v5100 = vmax.bf16 %v5036, %v5068
      %v5101 = vmax.bf16 %v5037, %v5069
      %v5102 = vmax.bf16 %v5038, %v5070
      %v5103 = vmax.bf16 %v5039, %v5071
      %v5104 = vmax.bf16 %v5040, %v5072
      %v5105 = vmax.bf16 %v5041, %v5073
      %v5106 = vmax.bf16 %v5042, %v5074
      %v5107 = vmax.bf16 %v5043, %v5075
      %v5108 = vmax.bf16 %v5044, %v5076
      %v5109 = vmax.bf16 %v5045, %v5077
      %v5110 = vmax.bf16 %v5046, %v5078
      %v5111 = vmax.bf16 %v5047, %v5079
      %v5112 = vmax.bf16 %v5048, %v5080
      %v5113 = vmax.bf16 %v5049, %v5081
      %v5114 = vmax.bf16 %v5050, %v5082
      %v5115 = vmax.bf16 %v5051, %v5083
      %v5116 = vmax.bf16 %v5052, %v5084
      %v5117 = vmax.bf16 %v5053, %v5085
      %v5118 = vmax.bf16 %v5054, %v5086
      %v5119 = vmax.bf16 %v5055, %v5087
      %v5120 = vmax.bf16 %v5056, %v5088
      %v5121 = vmax.bf16 %v5057, %v5089
      %v5122 = vmax.bf16 %v5058, %v5090
      %v5123 = vmax.bf16 %v5059, %v5091
      %v5124 = vmax.bf16 %v5060, %v5092
      %v5125 = vmax.bf16 %v5061, %v5093
      %v5126 = vmax.bf16 %v5062, %v5094
      %v5127 = vmax.bf16 %v5063, %v5095
      %v5128 = vmax.bf16 %v5064, %v5096
      %v5129 = vmax.bf16 %v5065, %v5097
      %v5130 = vld [vmem:[%s242] sm:$0xf]
      %v5131 = vld [vmem:[%s242 + $0x4] sm:$0xf]
      %v5132 = vld [vmem:[%s242 + $0xc] sm:$0xf]
      %v5133 = vld [vmem:[%s242 + $0x10] sm:$0xf]
      %v5134 = vld [vmem:[%s242 + $0x18] sm:$0xf]
      %v5135 = vld [vmem:[%s242 + $0x1c] sm:$0xf]
      %v5136 = vld [vmem:[%s242 + $0x24] sm:$0xf]
      %v5137 = vld [vmem:[%s242 + $0x28] sm:$0xf]
      %v5138 = vld [vmem:[%s242 + $0x30] sm:$0xf]
      %v5139 = vld [vmem:[%s242 + $0x34] sm:$0xf]
      %v5140 = vld [vmem:[%s242 + $0x3c] sm:$0xf]
      %v5141 = vld [vmem:[%s242 + $0x40] sm:$0xf]
      %v5142 = vld [vmem:[%s242 + $0x48] sm:$0xf]
      %v5143 = vld [vmem:[%s242 + $0x4c] sm:$0xf]
      %v5144 = vld [vmem:[%s242 + $0x54] sm:$0xf]
      %v5145 = vld [vmem:[%s242 + $0x58] sm:$0xf]
      %v5146 = vld [vmem:[%s242 + $0x60] sm:$0xf]
      %v5147 = vld [vmem:[%s242 + $0x64] sm:$0xf]
      %v5148 = vld [vmem:[%s242 + $0x6c] sm:$0xf]
      %v5149 = vld [vmem:[%s242 + $0x70] sm:$0xf]
      %v5150 = vld [vmem:[%s242 + $0x78] sm:$0xf]
      %v5151 = vld [vmem:[%s242 + $0x7c] sm:$0xf]
      %v5152 = vld [vmem:[%s242 + $0x84] sm:$0xf]
      %v5153 = vld [vmem:[%s242 + $0x88] sm:$0xf]
      %v5154 = vld [vmem:[%s242 + $0x90] sm:$0xf]
      %v5155 = vld [vmem:[%s242 + $0x94] sm:$0xf]
      %v5156 = vld [vmem:[%s242 + $0x9c] sm:$0xf]
      %v5157 = vld [vmem:[%s242 + $0xa0] sm:$0xf]
      %v5158 = vld [vmem:[%s242 + $0xa8] sm:$0xf]
      %v5159 = vld [vmem:[%s242 + $0xac] sm:$0xf]
      %v5160 = vld [vmem:[%s242 + $0xb4] sm:$0xf]
      %v5161 = vld [vmem:[%s242 + $0xb8] sm:$0xf]
      %v5162 = vmax.bf16 %v5098, %v5130
      %v5163 = vmax.bf16 %v5099, %v5131
      %v5164 = vmax.bf16 %v5100, %v5132
      %v5165 = vmax.bf16 %v5101, %v5133
      %v5166 = vmax.bf16 %v5102, %v5134
      %v5167 = vmax.bf16 %v5103, %v5135
      %v5168 = vmax.bf16 %v5104, %v5136
      %v5169 = vmax.bf16 %v5105, %v5137
      %v5170 = vmax.bf16 %v5106, %v5138
      %v5171 = vmax.bf16 %v5107, %v5139
      %v5172 = vmax.bf16 %v5108, %v5140
      %v5173 = vmax.bf16 %v5109, %v5141
      %v5174 = vmax.bf16 %v5110, %v5142
      %v5175 = vmax.bf16 %v5111, %v5143
      %v5176 = vmax.bf16 %v5112, %v5144
      %v5177 = vmax.bf16 %v5113, %v5145
      %v5178 = vmax.bf16 %v5114, %v5146
      %v5179 = vmax.bf16 %v5115, %v5147
      %v5180 = vmax.bf16 %v5116, %v5148
      %v5181 = vmax.bf16 %v5117, %v5149
      %v5182 = vmax.bf16 %v5118, %v5150
      %v5183 = vmax.bf16 %v5119, %v5151
      %v5184 = vmax.bf16 %v5120, %v5152
      %v5185 = vmax.bf16 %v5121, %v5153
      %v5186 = vmax.bf16 %v5122, %v5154
      %v5187 = vmax.bf16 %v5123, %v5155
      %v5188 = vmax.bf16 %v5124, %v5156
      %v5189 = vmax.bf16 %v5125, %v5157
      %v5190 = vmax.bf16 %v5126, %v5158
      %v5191 = vmax.bf16 %v5127, %v5159
      %v5192 = vmax.bf16 %v5128, %v5160
      %v5193 = vmax.bf16 %v5129, %v5161
      %v5194 = vld [vmem:[%s2946] sm:$0xf]
      %v5195 = vld [vmem:[%s2946 + $0x4] sm:$0xf]
      %v5196 = vld [vmem:[%s2946 + $0xc] sm:$0xf]
      %v5197 = vld [vmem:[%s2946 + $0x10] sm:$0xf]
      %v5198 = vld [vmem:[%s2946 + $0x18] sm:$0xf]
      %v5199 = vld [vmem:[%s2946 + $0x1c] sm:$0xf]
      %v5200 = vld [vmem:[%s2946 + $0x24] sm:$0xf]
      %v5201 = vld [vmem:[%s2946 + $0x28] sm:$0xf]
      %v5202 = vld [vmem:[%s2946 + $0x30] sm:$0xf]
      %v5203 = vld [vmem:[%s2946 + $0x34] sm:$0xf]
      %v5204 = vld [vmem:[%s2946 + $0x3c] sm:$0xf]
      %v5205 = vld [vmem:[%s2946 + $0x40] sm:$0xf]
      %v5206 = vld [vmem:[%s2946 + $0x48] sm:$0xf]
      %v5207 = vld [vmem:[%s2946 + $0x4c] sm:$0xf]
      %v5208 = vld [vmem:[%s2946 + $0x54] sm:$0xf]
      %v5209 = vld [vmem:[%s2946 + $0x58] sm:$0xf]
      %v5210 = vld [vmem:[%s2946 + $0x60] sm:$0xf]
      %v5211 = vld [vmem:[%s2946 + $0x64] sm:$0xf]
      %v5212 = vld [vmem:[%s2946 + $0x6c] sm:$0xf]
      %v5213 = vld [vmem:[%s2946 + $0x70] sm:$0xf]
      %v5214 = vld [vmem:[%s2946 + $0x78] sm:$0xf]
      %v5215 = vld [vmem:[%s2946 + $0x7c] sm:$0xf]
      %v5216 = vld [vmem:[%s2946 + $0x84] sm:$0xf]
      %v5217 = vld [vmem:[%s2946 + $0x88] sm:$0xf]
      %v5218 = vld [vmem:[%s2946 + $0x90] sm:$0xf]
      %v5219 = vld [vmem:[%s2946 + $0x94] sm:$0xf]
      %v5220 = vld [vmem:[%s2946 + $0x9c] sm:$0xf]
      %v5221 = vld [vmem:[%s2946 + $0xa0] sm:$0xf]
      %v5222 = vld [vmem:[%s2946 + $0xa8] sm:$0xf]
      %v5223 = vld [vmem:[%s2946 + $0xac] sm:$0xf]
      %v5224 = vld [vmem:[%s2946 + $0xb4] sm:$0xf]
      %v5225 = vld [vmem:[%s2946 + $0xb8] sm:$0xf]
      %v5226 = vmax.bf16 %v5162, %v5194
      %v5227 = vmax.bf16 %v5163, %v5195
      %v5228 = vmax.bf16 %v5164, %v5196
      %v5229 = vmax.bf16 %v5165, %v5197
      %v5230 = vmax.bf16 %v5166, %v5198
      %v5231 = vmax.bf16 %v5167, %v5199
      %v5232 = vmax.bf16 %v5168, %v5200
      %v5233 = vmax.bf16 %v5169, %v5201
      %v5234 = vmax.bf16 %v5170, %v5202
      %v5235 = vmax.bf16 %v5171, %v5203
      %v5236 = vmax.bf16 %v5172, %v5204
      %v5237 = vmax.bf16 %v5173, %v5205
      %v5238 = vmax.bf16 %v5174, %v5206
      %v5239 = vmax.bf16 %v5175, %v5207
      %v5240 = vmax.bf16 %v5176, %v5208
      %v5241 = vmax.bf16 %v5177, %v5209
      %v5242 = vmax.bf16 %v5178, %v5210
      %v5243 = vmax.bf16 %v5179, %v5211
      %v5244 = vmax.bf16 %v5180, %v5212
      %v5245 = vmax.bf16 %v5181, %v5213
      %v5246 = vmax.bf16 %v5182, %v5214
      %v5247 = vmax.bf16 %v5183, %v5215
      %v5248 = vmax.bf16 %v5184, %v5216
      %v5249 = vmax.bf16 %v5185, %v5217
      %v5250 = vmax.bf16 %v5186, %v5218
      %v5251 = vmax.bf16 %v5187, %v5219
      %v5252 = vmax.bf16 %v5188, %v5220
      %v5253 = vmax.bf16 %v5189, %v5221
      %v5254 = vmax.bf16 %v5190, %v5222
      %v5255 = vmax.bf16 %v5191, %v5223
      %v5256 = vmax.bf16 %v5192, %v5224
      %v5257 = vmax.bf16 %v5193, %v5225
      %v5258 = vld [vmem:[%s3011] sm:$0xf]
      %v5259 = vld [vmem:[%s3011 + $0x4] sm:$0xf]
      %v5260 = vld [vmem:[%s3011 + $0xc] sm:$0xf]
      %v5261 = vld [vmem:[%s3011 + $0x10] sm:$0xf]
      %v5262 = vld [vmem:[%s3011 + $0x18] sm:$0xf]
      %v5263 = vld [vmem:[%s3011 + $0x1c] sm:$0xf]
      %v5264 = vld [vmem:[%s3011 + $0x24] sm:$0xf]
      %v5265 = vld [vmem:[%s3011 + $0x28] sm:$0xf]
      %v5266 = vld [vmem:[%s3011 + $0x30] sm:$0xf]
      %v5267 = vld [vmem:[%s3011 + $0x34] sm:$0xf]
      %v5268 = vld [vmem:[%s3011 + $0x3c] sm:$0xf]
      %v5269 = vld [vmem:[%s3011 + $0x40] sm:$0xf]
      %v5270 = vld [vmem:[%s3011 + $0x48] sm:$0xf]
      %v5271 = vld [vmem:[%s3011 + $0x4c] sm:$0xf]
      %v5272 = vld [vmem:[%s3011 + $0x54] sm:$0xf]
      %v5273 = vld [vmem:[%s3011 + $0x58] sm:$0xf]
      %v5274 = vld [vmem:[%s3011 + $0x60] sm:$0xf]
      %v5275 = vld [vmem:[%s3011 + $0x64] sm:$0xf]
      %v5276 = vld [vmem:[%s3011 + $0x6c] sm:$0xf]
      %v5277 = vld [vmem:[%s3011 + $0x70] sm:$0xf]
      %v5278 = vld [vmem:[%s3011 + $0x78] sm:$0xf]
      %v5279 = vld [vmem:[%s3011 + $0x7c] sm:$0xf]
      %v5280 = vld [vmem:[%s3011 + $0x84] sm:$0xf]
      %v5281 = vld [vmem:[%s3011 + $0x88] sm:$0xf]
      %v5282 = vld [vmem:[%s3011 + $0x90] sm:$0xf]
      %v5283 = vld [vmem:[%s3011 + $0x94] sm:$0xf]
      %v5284 = vld [vmem:[%s3011 + $0x9c] sm:$0xf]
      %v5285 = vld [vmem:[%s3011 + $0xa0] sm:$0xf]
      %v5286 = vld [vmem:[%s3011 + $0xa8] sm:$0xf]
      %v5287 = vld [vmem:[%s3011 + $0xac] sm:$0xf]
      %v5288 = vld [vmem:[%s3011 + $0xb4] sm:$0xf]
      %v5289 = vld [vmem:[%s3011 + $0xb8] sm:$0xf]
      %v5290 = vmax.bf16 %v5226, %v5258
      %v5291 = vmax.bf16 %v5227, %v5259
      %v5292 = vmax.bf16 %v5228, %v5260
      %v5293 = vmax.bf16 %v5229, %v5261
      %v5294 = vmax.bf16 %v5230, %v5262
      %v5295 = vmax.bf16 %v5231, %v5263
      %v5296 = vmax.bf16 %v5232, %v5264
      %v5297 = vmax.bf16 %v5233, %v5265
      %v5298 = vmax.bf16 %v5234, %v5266
      %v5299 = vmax.bf16 %v5235, %v5267
      %v5300 = vmax.bf16 %v5236, %v5268
      %v5301 = vmax.bf16 %v5237, %v5269
      %v5302 = vmax.bf16 %v5238, %v5270
      %v5303 = vmax.bf16 %v5239, %v5271
      %v5304 = vmax.bf16 %v5240, %v5272
      %v5305 = vmax.bf16 %v5241, %v5273
      %v5306 = vmax.bf16 %v5242, %v5274
      %v5307 = vmax.bf16 %v5243, %v5275
      %v5308 = vmax.bf16 %v5244, %v5276
      %v5309 = vmax.bf16 %v5245, %v5277
      %v5310 = vmax.bf16 %v5246, %v5278
      %v5311 = vmax.bf16 %v5247, %v5279
      %v5312 = vmax.bf16 %v5248, %v5280
      %v5313 = vmax.bf16 %v5249, %v5281
      %v5314 = vmax.bf16 %v5250, %v5282
      %v5315 = vmax.bf16 %v5251, %v5283
      %v5316 = vmax.bf16 %v5252, %v5284
      %v5317 = vmax.bf16 %v5253, %v5285
      %v5318 = vmax.bf16 %v5254, %v5286
      %v5319 = vmax.bf16 %v5255, %v5287
      %v5320 = vmax.bf16 %v5256, %v5288
      %v5321 = vmax.bf16 %v5257, %v5289
      %5322 = vst.msk [vmem:[%s242] sm:$0x1] %vm243, 4286644096
      %5323 = vst.msk [vmem:[%s242 + $0xc] sm:$0x1] %vm243, 4286644096
      %5324 = vst.msk [vmem:[%s242 + $0x18] sm:$0x1] %vm243, 4286644096
      %5325 = vst.msk [vmem:[%s242 + $0x24] sm:$0x1] %vm243, 4286644096
      %5326 = vst.msk [vmem:[%s242 + $0x30] sm:$0x1] %vm243, 4286644096
      %5327 = vst.msk [vmem:[%s242 + $0x3c] sm:$0x1] %vm243, 4286644096
      %5328 = vst.msk [vmem:[%s242 + $0x48] sm:$0x1] %vm243, 4286644096
      %5329 = vst.msk [vmem:[%s242 + $0x54] sm:$0x1] %vm243, 4286644096
      %5330 = vst.msk [vmem:[%s242 + $0x60] sm:$0x1] %vm243, 4286644096
      %5331 = vst.msk [vmem:[%s242 + $0x6c] sm:$0x1] %vm243, 4286644096
      %5332 = vst.msk [vmem:[%s242 + $0x78] sm:$0x1] %vm243, 4286644096
      %5333 = vst.msk [vmem:[%s242 + $0x84] sm:$0x1] %vm243, 4286644096
      %5334 = vst.msk [vmem:[%s242 + $0x90] sm:$0x1] %vm243, 4286644096
      %5335 = vst.msk [vmem:[%s242 + $0x9c] sm:$0x1] %vm243, 4286644096
      %5336 = vst.msk [vmem:[%s242 + $0xa8] sm:$0x1] %vm243, 4286644096
      %5337 = vst.msk [vmem:[%s242 + $0xb4] sm:$0x1] %vm243, 4286644096
      %s5338 = scalar_lea.vmem %s3, 2
      %v5339 = vld [vmem:[%s5338] sm:$0x1]
      %v5372 = vunpack.c.l.b16 %v5290
      %v5373 = vunpack.c.l.b16 %v5291
      %v5374 = vunpack.c.l.b16 %v5292
      %v5375 = vunpack.c.l.b16 %v5293
      %v5376 = vunpack.c.l.b16 %v5294
      %v5377 = vunpack.c.l.b16 %v5295
      %v5378 = vunpack.c.l.b16 %v5296
      %v5379 = vunpack.c.l.b16 %v5297
      %v5380 = vunpack.c.l.b16 %v5298
      %v5381 = vunpack.c.l.b16 %v5299
      %v5382 = vunpack.c.l.b16 %v5300
      %v5383 = vunpack.c.l.b16 %v5301
      %v5384 = vunpack.c.l.b16 %v5302
      %v5385 = vunpack.c.l.b16 %v5303
      %v5386 = vunpack.c.l.b16 %v5304
      %v5387 = vunpack.c.l.b16 %v5305
      %v5388 = vunpack.c.l.b16 %v5306
      %v5389 = vunpack.c.l.b16 %v5307
      %v5390 = vunpack.c.l.b16 %v5308
      %v5391 = vunpack.c.l.b16 %v5309
      %v5392 = vunpack.c.l.b16 %v5310
      %v5393 = vunpack.c.l.b16 %v5311
      %v5394 = vunpack.c.l.b16 %v5312
      %v5395 = vunpack.c.l.b16 %v5313
      %v5396 = vunpack.c.l.b16 %v5314
      %v5397 = vunpack.c.l.b16 %v5315
      %v5398 = vunpack.c.l.b16 %v5316
      %v5399 = vunpack.c.l.b16 %v5317
      %v5400 = vunpack.c.l.b16 %v5318
      %v5401 = vunpack.c.l.b16 %v5319
      %v5402 = vunpack.c.l.b16 %v5320
      %v5403 = vunpack.c.l.b16 %v5321
      %v5404 = vpack.c.b16 %v5373, %v5372
      %v5405 = vpack.c.b16 %v5375, %v5374
      %v5406 = vpack.c.b16 %v5377, %v5376
      %v5407 = vpack.c.b16 %v5379, %v5378
      %v5408 = vpack.c.b16 %v5381, %v5380
      %v5409 = vpack.c.b16 %v5383, %v5382
      %v5410 = vpack.c.b16 %v5385, %v5384
      %v5411 = vpack.c.b16 %v5387, %v5386
      %v5412 = vpack.c.b16 %v5389, %v5388
      %v5413 = vpack.c.b16 %v5391, %v5390
      %v5414 = vpack.c.b16 %v5393, %v5392
      %v5415 = vpack.c.b16 %v5395, %v5394
      %v5416 = vpack.c.b16 %v5397, %v5396
      %v5417 = vpack.c.b16 %v5399, %v5398
      %v5418 = vpack.c.b16 %v5401, %v5400
      %v5419 = vpack.c.b16 %v5403, %v5402
      %v5421 = vsel %vm859, %v5404, 0
      %v5424 = vsel %vm859, %v5405, 0
      %v5427 = vsel %vm859, %v5406, 0
      %v5430 = vsel %vm859, %v5407, 0
      %v5433 = vsel %vm859, %v5408, 0
      %v5436 = vsel %vm859, %v5409, 0
      %v5439 = vsel %vm859, %v5410, 0
      %v5442 = vsel %vm859, %v5411, 0
      %v5445 = vsel %vm859, %v5412, 0
      %v5448 = vsel %vm859, %v5413, 0
      %v5451 = vsel %vm859, %v5414, 0
      %v5454 = vsel %vm859, %v5415, 0
      %v5457 = vsel %vm859, %v5416, 0
      %v5460 = vsel %vm859, %v5417, 0
      %v5463 = vsel %vm859, %v5418, 0
      %v5466 = vsel %vm859, %v5419, 0
      %v5469 = vsel %vm908, %v5339, 0
      %5471 = vmatprep.subr.bf16.mxu0 0
      %5472 = vmatpush1.bf16.msra.mxu0 %v5469
      %5473 = vmatprep.subr.bf16.mxu0 0
      %5474 = vmatpush1.bf16.msra.mxu0 0
      %5475 = vmatprep.subr.bf16.mxu0 0
      %5476 = vmatpush1.bf16.msra.mxu0 0
      %5477 = vmatprep.subr.bf16.mxu0 0
      %5478 = vmatpush1.bf16.msra.mxu0 0
      %5479 = vmatprep.subr.bf16.mxu0 0
      %5480 = vmatpush1.bf16.msra.mxu0 0
      %5481 = vmatprep.subr.bf16.mxu0 0
      %5482 = vmatpush1.bf16.msra.mxu0 0
      %5483 = vmatprep.subr.bf16.mxu0 0
      %5484 = vmatpush1.bf16.msra.mxu0 0
      %5485 = vmatprep.subr.bf16.mxu0 0
      %5486 = vmatpush1.bf16.msra.mxu0 0
      %5487 = vmatprep.subr.bf16.mxu0 0
      %5488 = vmatpush1.bf16.msra.mxu0 0
      %5489 = vmatprep.subr.bf16.mxu0 0
      %5490 = vmatpush1.bf16.msra.mxu0 0
      %5491 = vmatprep.subr.bf16.mxu0 0
      %5492 = vmatpush1.bf16.msra.mxu0 0
      %5493 = vmatprep.subr.bf16.mxu0 0
      %5494 = vmatpush1.bf16.msra.mxu0 0
      %5495 = vmatprep.subr.bf16.mxu0 0
      %5496 = vmatpush1.bf16.msra.mxu0 0
      %5497 = vmatprep.subr.bf16.mxu0 0
      %5498 = vmatpush1.bf16.msra.mxu0 0
      %5499 = vmatprep.subr.bf16.mxu0 0
      %5500 = vmatpush1.bf16.msra.mxu0 0
      %5501 = vmatprep.subr.bf16.mxu0 0
      %5502 = vmatpush1.bf16.msra.mxu0 0
      %5503 = vmatprep.mubr.bf16.mxu0 0
      %5504 = vmatmul.mubr.bf16.gmra.mrb[0].mxu0 %v5421
      %v5505 = vpop.f32.mrb[0].mxu0
      %v5506 = vadd.f32 0.0, %v5505
      %v5507 = vpop.f32.mrb[0].mxu0
      %v5508 = vpop.f32.mrb[0].mxu0
      %v5509 = vadd.f32 0.0, %v5508
      %v5510 = vpop.f32.mrb[0].mxu0
      %5511 = vmatprep.mubr.bf16.mxu0 0
      %5512 = vmatmul.mubr.bf16.gmra.mrb[0].mxu0 %v5424
      %v5513 = vpop.f32.mrb[0].mxu0
      %v5514 = vadd.f32 0.0, %v5513
      %v5515 = vpop.f32.mrb[0].mxu0
      %v5516 = vpop.f32.mrb[0].mxu0
      %v5517 = vadd.f32 0.0, %v5516
      %v5518 = vpop.f32.mrb[0].mxu0
      %5519 = vmatprep.mubr.bf16.mxu0 0
      %5520 = vmatmul.mubr.bf16.gmra.mrb[0].mxu0 %v5427
      %v5521 = vpop.f32.mrb[0].mxu0
      %v5522 = vadd.f32 0.0, %v5521
      %v5523 = vpop.f32.mrb[0].mxu0
      %v5524 = vpop.f32.mrb[0].mxu0
      %v5525 = vadd.f32 0.0, %v5524
      %v5526 = vpop.f32.mrb[0].mxu0
      %5527 = vmatprep.mubr.bf16.mxu0 0
      %5528 = vmatmul.mubr.bf16.gmra.mrb[0].mxu0 %v5430
      %v5529 = vpop.f32.mrb[0].mxu0
      %v5530 = vadd.f32 0.0, %v5529
      %v5531 = vpop.f32.mrb[0].mxu0
      %v5532 = vpop.f32.mrb[0].mxu0
      %v5533 = vadd.f32 0.0, %v5532
      %v5534 = vpop.f32.mrb[0].mxu0
      %5535 = vmatprep.mubr.bf16.mxu0 0
      %5536 = vmatmul.mubr.bf16.gmra.mrb[0].mxu0 %v5433
      %v5537 = vpop.f32.mrb[0].mxu0
      %v5538 = vadd.f32 0.0, %v5537
      %v5539 = vpop.f32.mrb[0].mxu0
      %v5540 = vpop.f32.mrb[0].mxu0
      %v5541 = vadd.f32 0.0, %v5540
      %v5542 = vpop.f32.mrb[0].mxu0
      %5543 = vmatprep.mubr.bf16.mxu0 0
      %5544 = vmatmul.mubr.bf16.gmra.mrb[0].mxu0 %v5436
      %v5545 = vpop.f32.mrb[0].mxu0
      %v5546 = vadd.f32 0.0, %v5545
      %v5547 = vpop.f32.mrb[0].mxu0
      %v5548 = vpop.f32.mrb[0].mxu0
      %v5549 = vadd.f32 0.0, %v5548
      %v5550 = vpop.f32.mrb[0].mxu0
      %5551 = vmatprep.mubr.bf16.mxu0 0
      %5552 = vmatmul.mubr.bf16.gmra.mrb[0].mxu0 %v5439
      %v5553 = vpop.f32.mrb[0].mxu0
      %v5554 = vadd.f32 0.0, %v5553
      %v5555 = vpop.f32.mrb[0].mxu0
      %v5556 = vpop.f32.mrb[0].mxu0
      %v5557 = vadd.f32 0.0, %v5556
      %v5558 = vpop.f32.mrb[0].mxu0
      %5559 = vmatprep.mubr.bf16.mxu0 0
      %5560 = vmatmul.mubr.bf16.gmra.mrb[0].mxu0 %v5442
      %v5561 = vpop.f32.mrb[0].mxu0
      %v5562 = vadd.f32 0.0, %v5561
      %v5563 = vpop.f32.mrb[0].mxu0
      %v5564 = vpop.f32.mrb[0].mxu0
      %v5565 = vadd.f32 0.0, %v5564
      %v5566 = vpop.f32.mrb[0].mxu0
      %5567 = vmatprep.mubr.bf16.mxu0 0
      %5568 = vmatmul.mubr.bf16.gmra.mrb[0].mxu0 %v5445
      %v5569 = vpop.f32.mrb[0].mxu0
      %v5570 = vadd.f32 0.0, %v5569
      %v5571 = vpop.f32.mrb[0].mxu0
      %v5572 = vpop.f32.mrb[0].mxu0
      %v5573 = vadd.f32 0.0, %v5572
      %v5574 = vpop.f32.mrb[0].mxu0
      %5575 = vmatprep.mubr.bf16.mxu0 0
      %5576 = vmatmul.mubr.bf16.gmra.mrb[0].mxu0 %v5448
      %v5577 = vpop.f32.mrb[0].mxu0
      %v5578 = vadd.f32 0.0, %v5577
      %v5579 = vpop.f32.mrb[0].mxu0
      %v5580 = vpop.f32.mrb[0].mxu0
      %v5581 = vadd.f32 0.0, %v5580
      %v5582 = vpop.f32.mrb[0].mxu0
      %5583 = vmatprep.mubr.bf16.mxu0 0
      %5584 = vmatmul.mubr.bf16.gmra.mrb[0].mxu0 %v5451
      %v5585 = vpop.f32.mrb[0].mxu0
      %v5586 = vadd.f32 0.0, %v5585
      %v5587 = vpop.f32.mrb[0].mxu0
      %v5588 = vpop.f32.mrb[0].mxu0
      %v5589 = vadd.f32 0.0, %v5588
      %v5590 = vpop.f32.mrb[0].mxu0
      %5591 = vmatprep.mubr.bf16.mxu0 0
      %5592 = vmatmul.mubr.bf16.gmra.mrb[0].mxu0 %v5454
      %v5593 = vpop.f32.mrb[0].mxu0
      %v5594 = vadd.f32 0.0, %v5593
      %v5595 = vpop.f32.mrb[0].mxu0
      %v5596 = vpop.f32.mrb[0].mxu0
      %v5597 = vadd.f32 0.0, %v5596
      %v5598 = vpop.f32.mrb[0].mxu0
      %5599 = vmatprep.mubr.bf16.mxu0 0
      %5600 = vmatmul.mubr.bf16.gmra.mrb[0].mxu0 %v5457
      %v5601 = vpop.f32.mrb[0].mxu0
      %v5602 = vadd.f32 0.0, %v5601
      %v5603 = vpop.f32.mrb[0].mxu0
      %v5604 = vpop.f32.mrb[0].mxu0
      %v5605 = vadd.f32 0.0, %v5604
      %v5606 = vpop.f32.mrb[0].mxu0
      %5607 = vmatprep.mubr.bf16.mxu0 0
      %5608 = vmatmul.mubr.bf16.gmra.mrb[0].mxu0 %v5460
      %v5609 = vpop.f32.mrb[0].mxu0
      %v5610 = vadd.f32 0.0, %v5609
      %v5611 = vpop.f32.mrb[0].mxu0
      %v5612 = vpop.f32.mrb[0].mxu0
      %v5613 = vadd.f32 0.0, %v5612
      %v5614 = vpop.f32.mrb[0].mxu0
      %5615 = vmatprep.mubr.bf16.mxu0 0
      %5616 = vmatmul.mubr.bf16.gmra.mrb[0].mxu0 %v5463
      %v5617 = vpop.f32.mrb[0].mxu0
      %v5618 = vadd.f32 0.0, %v5617
      %v5619 = vpop.f32.mrb[0].mxu0
      %v5620 = vpop.f32.mrb[0].mxu0
      %v5621 = vadd.f32 0.0, %v5620
      %v5622 = vpop.f32.mrb[0].mxu0
      %5623 = vmatprep.mubr.bf16.mxu0 0
      %5624 = vmatmul.mubr.bf16.gmra.mrb[0].mxu0 %v5466
      %v5625 = vpop.f32.mrb[0].mxu0
      %v5626 = vadd.f32 0.0, %v5625
      %v5627 = vpop.f32.mrb[0].mxu0
      %v5628 = vpop.f32.mrb[0].mxu0
      %v5629 = vadd.f32 0.0, %v5628
      %v5630 = vpop.f32.mrb[0].mxu0
      %5631 = vdwg.mxu0
      %v5632 = vadd.f32 %v3386, %v5506
      %v5633 = vadd.f32 %v3387, %v5509
      %v5634 = vadd.f32 %v3388, %v5514
      %v5635 = vadd.f32 %v3389, %v5517
      %v5636 = vadd.f32 %v3390, %v5522
      %v5637 = vadd.f32 %v3391, %v5525
      %v5638 = vadd.f32 %v3392, %v5530
      %v5639 = vadd.f32 %v3393, %v5533
      %v5640 = vadd.f32 %v3394, %v5538
      %v5641 = vadd.f32 %v3395, %v5541
      %v5642 = vadd.f32 %v3396, %v5546
      %v5643 = vadd.f32 %v3397, %v5549
      %v5644 = vadd.f32 %v3398, %v5554
      %v5645 = vadd.f32 %v3399, %v5557
      %v5646 = vadd.f32 %v3400, %v5562
      %v5647 = vadd.f32 %v3401, %v5565
      %v5648 = vadd.f32 %v3402, %v5570
      %v5649 = vadd.f32 %v3403, %v5573
      %v5650 = vadd.f32 %v3404, %v5578
      %v5651 = vadd.f32 %v3405, %v5581
      %v5652 = vadd.f32 %v3406, %v5586
      %v5653 = vadd.f32 %v3407, %v5589
      %v5654 = vadd.f32 %v3408, %v5594
      %v5655 = vadd.f32 %v3409, %v5597
      %v5656 = vadd.f32 %v3410, %v5602
      %v5657 = vadd.f32 %v3411, %v5605
      %v5658 = vadd.f32 %v3412, %v5610
      %v5659 = vadd.f32 %v3413, %v5613
      %v5660 = vadd.f32 %v3414, %v5618
      %v5661 = vadd.f32 %v3415, %v5621
      %v5662 = vadd.f32 %v3416, %v5626
      %v5663 = vadd.f32 %v3417, %v5629
      %v5664 = vrot.slane %v5290, 7
      %v5665 = vrot.slane %v5664, 4
      %v5666 = vrot.slane %v5291, 7
      %v5667 = vsel %vm1155, %v5665, %v5666
      %v5668 = vrot.slane %v5666, 4
      %v5669 = vrot.slane %v5292, 7
      %v5670 = vrot.slane %v5669, 4
      %v5671 = vrot.slane %v5293, 7
      %v5672 = vsel %vm1155, %v5670, %v5671
      %v5673 = vrot.slane %v5671, 4
      %v5674 = vrot.slane %v5294, 7
      %v5675 = vrot.slane %v5674, 4
      %v5676 = vrot.slane %v5295, 7
      %v5677 = vsel %vm1155, %v5675, %v5676
      %v5678 = vrot.slane %v5676, 4
      %v5679 = vrot.slane %v5296, 7
      %v5680 = vrot.slane %v5679, 4
      %v5681 = vrot.slane %v5297, 7
      %v5682 = vsel %vm1155, %v5680, %v5681
      %v5683 = vrot.slane %v5681, 4
      %v5684 = vrot.slane %v5298, 7
      %v5685 = vrot.slane %v5684, 4
      %v5686 = vrot.slane %v5299, 7
      %v5687 = vsel %vm1155, %v5685, %v5686
      %v5688 = vrot.slane %v5686, 4
      %v5689 = vrot.slane %v5300, 7
      %v5690 = vrot.slane %v5689, 4
      %v5691 = vrot.slane %v5301, 7
      %v5692 = vsel %vm1155, %v5690, %v5691
      %v5693 = vrot.slane %v5691, 4
      %v5694 = vrot.slane %v5302, 7
      %v5695 = vrot.slane %v5694, 4
      %v5696 = vrot.slane %v5303, 7
      %v5697 = vsel %vm1155, %v5695, %v5696
      %v5698 = vrot.slane %v5696, 4
      %v5699 = vrot.slane %v5304, 7
      %v5700 = vrot.slane %v5699, 4
      %v5701 = vrot.slane %v5305, 7
      %v5702 = vsel %vm1155, %v5700, %v5701
      %v5703 = vrot.slane %v5701, 4
      %v5704 = vrot.slane %v5306, 7
      %v5705 = vrot.slane %v5704, 4
      %v5706 = vrot.slane %v5307, 7
      %v5707 = vsel %vm1155, %v5705, %v5706
      %v5708 = vrot.slane %v5706, 4
      %v5709 = vrot.slane %v5308, 7
      %v5710 = vrot.slane %v5709, 4
      %v5711 = vrot.slane %v5309, 7
      %v5712 = vsel %vm1155, %v5710, %v5711
      %v5713 = vrot.slane %v5711, 4
      %v5714 = vrot.slane %v5310, 7
      %v5715 = vrot.slane %v5714, 4
      %v5716 = vrot.slane %v5311, 7
      %v5717 = vsel %vm1155, %v5715, %v5716
      %v5718 = vrot.slane %v5716, 4
      %v5719 = vrot.slane %v5312, 7
      %v5720 = vrot.slane %v5719, 4
      %v5721 = vrot.slane %v5313, 7
      %v5722 = vsel %vm1155, %v5720, %v5721
      %v5723 = vrot.slane %v5721, 4
      %v5724 = vrot.slane %v5314, 7
      %v5725 = vrot.slane %v5724, 4
      %v5726 = vrot.slane %v5315, 7
      %v5727 = vsel %vm1155, %v5725, %v5726
      %v5728 = vrot.slane %v5726, 4
      %v5729 = vrot.slane %v5316, 7
      %v5730 = vrot.slane %v5729, 4
      %v5731 = vrot.slane %v5317, 7
      %v5732 = vsel %vm1155, %v5730, %v5731
      %v5733 = vrot.slane %v5731, 4
      %v5734 = vrot.slane %v5318, 7
      %v5735 = vrot.slane %v5734, 4
      %v5736 = vrot.slane %v5319, 7
      %v5737 = vsel %vm1155, %v5735, %v5736
      %v5738 = vrot.slane %v5736, 4
      %v5739 = vrot.slane %v5320, 7
      %v5740 = vrot.slane %v5739, 4
      %v5741 = vrot.slane %v5321, 7
      %v5742 = vsel %vm1155, %v5740, %v5741
      %v5743 = vrot.slane %v5741, 4
      %5792 = vst.msk [vmem:[%s242] sm:$0xe] %vm1284, %v5664
      %5793 = vst.msk [vmem:[%s242 + $0x4] sm:$0xf] %vm227, %v5667
      %5794 = vst.msk [vmem:[%s242 + $0x8] sm:$0x1] %vm243, %v5668
      %5795 = vst.msk [vmem:[%s242 + $0xc] sm:$0xe] %vm1284, %v5669
      %5796 = vst.msk [vmem:[%s242 + $0x10] sm:$0xf] %vm227, %v5672
      %5797 = vst.msk [vmem:[%s242 + $0x14] sm:$0x1] %vm243, %v5673
      %5798 = vst.msk [vmem:[%s242 + $0x18] sm:$0xe] %vm1284, %v5674
      %5799 = vst.msk [vmem:[%s242 + $0x1c] sm:$0xf] %vm227, %v5677
      %5800 = vst.msk [vmem:[%s242 + $0x20] sm:$0x1] %vm243, %v5678
      %5801 = vst.msk [vmem:[%s242 + $0x24] sm:$0xe] %vm1284, %v5679
      %5802 = vst.msk [vmem:[%s242 + $0x28] sm:$0xf] %vm227, %v5682
      %5803 = vst.msk [vmem:[%s242 + $0x2c] sm:$0x1] %vm243, %v5683
      %5804 = vst.msk [vmem:[%s242 + $0x30] sm:$0xe] %vm1284, %v5684
      %5805 = vst.msk [vmem:[%s242 + $0x34] sm:$0xf] %vm227, %v5687
      %5806 = vst.msk [vmem:[%s242 + $0x38] sm:$0x1] %vm243, %v5688
      %5807 = vst.msk [vmem:[%s242 + $0x3c] sm:$0xe] %vm1284, %v5689
      %5808 = vst.msk [vmem:[%s242 + $0x40] sm:$0xf] %vm227, %v5692
      %5809 = vst.msk [vmem:[%s242 + $0x44] sm:$0x1] %vm243, %v5693
      %5810 = vst.msk [vmem:[%s242 + $0x48] sm:$0xe] %vm1284, %v5694
      %5811 = vst.msk [vmem:[%s242 + $0x4c] sm:$0xf] %vm227, %v5697
      %5812 = vst.msk [vmem:[%s242 + $0x50] sm:$0x1] %vm243, %v5698
      %5813 = vst.msk [vmem:[%s242 + $0x54] sm:$0xe] %vm1284, %v5699
      %5814 = vst.msk [vmem:[%s242 + $0x58] sm:$0xf] %vm227, %v5702
      %5815 = vst.msk [vmem:[%s242 + $0x5c] sm:$0x1] %vm243, %v5703
      %5816 = vst.msk [vmem:[%s242 + $0x60] sm:$0xe] %vm1284, %v5704
      %5817 = vst.msk [vmem:[%s242 + $0x64] sm:$0xf] %vm227, %v5707
      %5818 = vst.msk [vmem:[%s242 + $0x68] sm:$0x1] %vm243, %v5708
      %5819 = vst.msk [vmem:[%s242 + $0x6c] sm:$0xe] %vm1284, %v5709
      %5820 = vst.msk [vmem:[%s242 + $0x70] sm:$0xf] %vm227, %v5712
      %5821 = vst.msk [vmem:[%s242 + $0x74] sm:$0x1] %vm243, %v5713
      %5822 = vst.msk [vmem:[%s242 + $0x78] sm:$0xe] %vm1284, %v5714
      %5823 = vst.msk [vmem:[%s242 + $0x7c] sm:$0xf] %vm227, %v5717
      %5824 = vst.msk [vmem:[%s242 + $0x80] sm:$0x1] %vm243, %v5718
      %5825 = vst.msk [vmem:[%s242 + $0x84] sm:$0xe] %vm1284, %v5719
      %5826 = vst.msk [vmem:[%s242 + $0x88] sm:$0xf] %vm227, %v5722
      %5827 = vst.msk [vmem:[%s242 + $0x8c] sm:$0x1] %vm243, %v5723
      %5828 = vst.msk [vmem:[%s242 + $0x90] sm:$0xe] %vm1284, %v5724
      %5829 = vst.msk [vmem:[%s242 + $0x94] sm:$0xf] %vm227, %v5727
      %5830 = vst.msk [vmem:[%s242 + $0x98] sm:$0x1] %vm243, %v5728
      %5831 = vst.msk [vmem:[%s242 + $0x9c] sm:$0xe] %vm1284, %v5729
      %5832 = vst.msk [vmem:[%s242 + $0xa0] sm:$0xf] %vm227, %v5732
      %5833 = vst.msk [vmem:[%s242 + $0xa4] sm:$0x1] %vm243, %v5733
      %5834 = vst.msk [vmem:[%s242 + $0xa8] sm:$0xe] %vm1284, %v5734
      %5835 = vst.msk [vmem:[%s242 + $0xac] sm:$0xf] %vm227, %v5737
      %5836 = vst.msk [vmem:[%s242 + $0xb0] sm:$0x1] %vm243, %v5738
      %5837 = vst.msk [vmem:[%s242 + $0xb4] sm:$0xe] %vm1284, %v5739
      %5838 = vst.msk [vmem:[%s242 + $0xb8] sm:$0xf] %vm227, %v5742
      %5839 = vst.msk [vmem:[%s242 + $0xbc] sm:$0x1] %vm243, %v5743
      %v5840 = vld [vmem:[%s242] sm:$0xf]
      %v5841 = vld [vmem:[%s242 + $0x4] sm:$0xf]
      %v5842 = vld [vmem:[%s242 + $0xc] sm:$0xf]
      %v5843 = vld [vmem:[%s242 + $0x10] sm:$0xf]
      %v5844 = vld [vmem:[%s242 + $0x18] sm:$0xf]
      %v5845 = vld [vmem:[%s242 + $0x1c] sm:$0xf]
      %v5846 = vld [vmem:[%s242 + $0x24] sm:$0xf]
      %v5847 = vld [vmem:[%s242 + $0x28] sm:$0xf]
      %v5848 = vld [vmem:[%s242 + $0x30] sm:$0xf]
      %v5849 = vld [vmem:[%s242 + $0x34] sm:$0xf]
      %v5850 = vld [vmem:[%s242 + $0x3c] sm:$0xf]
      %v5851 = vld [vmem:[%s242 + $0x40] sm:$0xf]
      %v5852 = vld [vmem:[%s242 + $0x48] sm:$0xf]
      %v5853 = vld [vmem:[%s242 + $0x4c] sm:$0xf]
      %v5854 = vld [vmem:[%s242 + $0x54] sm:$0xf]
      %v5855 = vld [vmem:[%s242 + $0x58] sm:$0xf]
      %v5856 = vld [vmem:[%s242 + $0x60] sm:$0xf]
      %v5857 = vld [vmem:[%s242 + $0x64] sm:$0xf]
      %v5858 = vld [vmem:[%s242 + $0x6c] sm:$0xf]
      %v5859 = vld [vmem:[%s242 + $0x70] sm:$0xf]
      %v5860 = vld [vmem:[%s242 + $0x78] sm:$0xf]
      %v5861 = vld [vmem:[%s242 + $0x7c] sm:$0xf]
      %v5862 = vld [vmem:[%s242 + $0x84] sm:$0xf]
      %v5863 = vld [vmem:[%s242 + $0x88] sm:$0xf]
      %v5864 = vld [vmem:[%s242 + $0x90] sm:$0xf]
      %v5865 = vld [vmem:[%s242 + $0x94] sm:$0xf]
      %v5866 = vld [vmem:[%s242 + $0x9c] sm:$0xf]
      %v5867 = vld [vmem:[%s242 + $0xa0] sm:$0xf]
      %v5868 = vld [vmem:[%s242 + $0xa8] sm:$0xf]
      %v5869 = vld [vmem:[%s242 + $0xac] sm:$0xf]
      %v5870 = vld [vmem:[%s242 + $0xb4] sm:$0xf]
      %v5871 = vld [vmem:[%s242 + $0xb8] sm:$0xf]
      %v5872 = vld [vmem:[%s242 + $0x8] sm:$0x1]
      %v5873 = vld [vmem:[%s242 + $0x14] sm:$0x1]
      %v5874 = vld [vmem:[%s242 + $0x20] sm:$0x1]
      %v5875 = vld [vmem:[%s242 + $0x2c] sm:$0x1]
      %v5876 = vld [vmem:[%s242 + $0x38] sm:$0x1]
      %v5877 = vld [vmem:[%s242 + $0x44] sm:$0x1]
      %v5878 = vld [vmem:[%s242 + $0x50] sm:$0x1]
      %v5879 = vld [vmem:[%s242 + $0x5c] sm:$0x1]
      %v5880 = vld [vmem:[%s242 + $0x68] sm:$0x1]
      %v5881 = vld [vmem:[%s242 + $0x74] sm:$0x1]
      %v5882 = vld [vmem:[%s242 + $0x80] sm:$0x1]
      %v5883 = vld [vmem:[%s242 + $0x8c] sm:$0x1]
      %v5884 = vld [vmem:[%s242 + $0x98] sm:$0x1]
      %v5885 = vld [vmem:[%s242 + $0xa4] sm:$0x1]
      %v5886 = vld [vmem:[%s242 + $0xb0] sm:$0x1]
      %v5887 = vld [vmem:[%s242 + $0xbc] sm:$0x1]
      %v5889 = vshrl.u32 %v5840, 16
      %v5891 = vrot.slane %v5889, 4
      %v5892 = vshll.u32 %v5840, 16
      %v5894 = vrot.slane %v5892, 5
      %v5895 = vor.u32 %v5891, %v5894
      %v5896 = vrot.slane %v5895, 4
      %v5898 = vshll.u32 %v5841, 16
      %v5900 = vrot.slane %v5898, 5
      %v5901 = vsel %vm1383, %v5896, %v5900
      %v5902 = vshrl.u32 %v5841, 16
      %v5904 = vrot.slane %v5902, 4
      %v5905 = vor.u32 %v5904, %v5900
      %v5906 = vrot.slane %v5905, 4
      %v5908 = vshll.u32 %v5872, 16
      %v5910 = vrot.slane %v5908, 5
      %v5911 = vsel %vm1383, %v5906, %v5910
      %v5913 = vshrl.u32 %v5842, 16
      %v5915 = vrot.slane %v5913, 4
      %v5916 = vshll.u32 %v5842, 16
      %v5918 = vrot.slane %v5916, 5
      %v5919 = vor.u32 %v5915, %v5918
      %v5920 = vrot.slane %v5919, 4
      %v5922 = vshll.u32 %v5843, 16
      %v5924 = vrot.slane %v5922, 5
      %v5925 = vsel %vm1383, %v5920, %v5924
      %v5926 = vshrl.u32 %v5843, 16
      %v5928 = vrot.slane %v5926, 4
      %v5929 = vor.u32 %v5928, %v5924
      %v5930 = vrot.slane %v5929, 4
      %v5932 = vshll.u32 %v5873, 16
      %v5934 = vrot.slane %v5932, 5
      %v5935 = vsel %vm1383, %v5930, %v5934
      %v5937 = vshrl.u32 %v5844, 16
      %v5939 = vrot.slane %v5937, 4
      %v5940 = vshll.u32 %v5844, 16
      %v5942 = vrot.slane %v5940, 5
      %v5943 = vor.u32 %v5939, %v5942
      %v5944 = vrot.slane %v5943, 4
      %v5946 = vshll.u32 %v5845, 16
      %v5948 = vrot.slane %v5946, 5
      %v5949 = vsel %vm1383, %v5944, %v5948
      %v5950 = vshrl.u32 %v5845, 16
      %v5952 = vrot.slane %v5950, 4
      %v5953 = vor.u32 %v5952, %v5948
      %v5954 = vrot.slane %v5953, 4
      %v5956 = vshll.u32 %v5874, 16
      %v5958 = vrot.slane %v5956, 5
      %v5959 = vsel %vm1383, %v5954, %v5958
      %v5961 = vshrl.u32 %v5846, 16
      %v5963 = vrot.slane %v5961, 4
      %v5964 = vshll.u32 %v5846, 16
      %v5966 = vrot.slane %v5964, 5
      %v5967 = vor.u32 %v5963, %v5966
      %v5968 = vrot.slane %v5967, 4
      %v5970 = vshll.u32 %v5847, 16
      %v5972 = vrot.slane %v5970, 5
      %v5973 = vsel %vm1383, %v5968, %v5972
      %v5974 = vshrl.u32 %v5847, 16
      %v5976 = vrot.slane %v5974, 4
      %v5977 = vor.u32 %v5976, %v5972
      %v5978 = vrot.slane %v5977, 4
      %v5980 = vshll.u32 %v5875, 16
      %v5982 = vrot.slane %v5980, 5
      %v5983 = vsel %vm1383, %v5978, %v5982
      %v5985 = vshrl.u32 %v5848, 16
      %v5987 = vrot.slane %v5985, 4
      %v5988 = vshll.u32 %v5848, 16
      %v5990 = vrot.slane %v5988, 5
      %v5991 = vor.u32 %v5987, %v5990
      %v5992 = vrot.slane %v5991, 4
      %v5994 = vshll.u32 %v5849, 16
      %v5996 = vrot.slane %v5994, 5
      %v5997 = vsel %vm1383, %v5992, %v5996
      %v5998 = vshrl.u32 %v5849, 16
      %v6000 = vrot.slane %v5998, 4
      %v6001 = vor.u32 %v6000, %v5996
      %v6002 = vrot.slane %v6001, 4
      %v6004 = vshll.u32 %v5876, 16
      %v6006 = vrot.slane %v6004, 5
      %v6007 = vsel %vm1383, %v6002, %v6006
      %v6009 = vshrl.u32 %v5850, 16
      %v6011 = vrot.slane %v6009, 4
      %v6012 = vshll.u32 %v5850, 16
      %v6014 = vrot.slane %v6012, 5
      %v6015 = vor.u32 %v6011, %v6014
      %v6016 = vrot.slane %v6015, 4
      %v6018 = vshll.u32 %v5851, 16
      %v6020 = vrot.slane %v6018, 5
      %v6021 = vsel %vm1383, %v6016, %v6020
      %v6022 = vshrl.u32 %v5851, 16
      %v6024 = vrot.slane %v6022, 4
      %v6025 = vor.u32 %v6024, %v6020
      %v6026 = vrot.slane %v6025, 4
      %v6028 = vshll.u32 %v5877, 16
      %v6030 = vrot.slane %v6028, 5
      %v6031 = vsel %vm1383, %v6026, %v6030
      %v6033 = vshrl.u32 %v5852, 16
      %v6035 = vrot.slane %v6033, 4
      %v6036 = vshll.u32 %v5852, 16
      %v6038 = vrot.slane %v6036, 5
      %v6039 = vor.u32 %v6035, %v6038
      %v6040 = vrot.slane %v6039, 4
      %v6042 = vshll.u32 %v5853, 16
      %v6044 = vrot.slane %v6042, 5
      %v6045 = vsel %vm1383, %v6040, %v6044
      %v6046 = vshrl.u32 %v5853, 16
      %v6048 = vrot.slane %v6046, 4
      %v6049 = vor.u32 %v6048, %v6044
      %v6050 = vrot.slane %v6049, 4
      %v6052 = vshll.u32 %v5878, 16
      %v6054 = vrot.slane %v6052, 5
      %v6055 = vsel %vm1383, %v6050, %v6054
      %v6057 = vshrl.u32 %v5854, 16
      %v6059 = vrot.slane %v6057, 4
      %v6060 = vshll.u32 %v5854, 16
      %v6062 = vrot.slane %v6060, 5
      %v6063 = vor.u32 %v6059, %v6062
      %v6064 = vrot.slane %v6063, 4
      %v6066 = vshll.u32 %v5855, 16
      %v6068 = vrot.slane %v6066, 5
      %v6069 = vsel %vm1383, %v6064, %v6068
      %v6070 = vshrl.u32 %v5855, 16
      %v6072 = vrot.slane %v6070, 4
      %v6073 = vor.u32 %v6072, %v6068
      %v6074 = vrot.slane %v6073, 4
      %v6076 = vshll.u32 %v5879, 16
      %v6078 = vrot.slane %v6076, 5
      %v6079 = vsel %vm1383, %v6074, %v6078
      %v6081 = vshrl.u32 %v5856, 16
      %v6083 = vrot.slane %v6081, 4
      %v6084 = vshll.u32 %v5856, 16
      %v6086 = vrot.slane %v6084, 5
      %v6087 = vor.u32 %v6083, %v6086
      %v6088 = vrot.slane %v6087, 4
      %v6090 = vshll.u32 %v5857, 16
      %v6092 = vrot.slane %v6090, 5
      %v6093 = vsel %vm1383, %v6088, %v6092
      %v6094 = vshrl.u32 %v5857, 16
      %v6096 = vrot.slane %v6094, 4
      %v6097 = vor.u32 %v6096, %v6092
      %v6098 = vrot.slane %v6097, 4
      %v6100 = vshll.u32 %v5880, 16
      %v6102 = vrot.slane %v6100, 5
      %v6103 = vsel %vm1383, %v6098, %v6102
      %v6105 = vshrl.u32 %v5858, 16
      %v6107 = vrot.slane %v6105, 4
      %v6108 = vshll.u32 %v5858, 16
      %v6110 = vrot.slane %v6108, 5
      %v6111 = vor.u32 %v6107, %v6110
      %v6112 = vrot.slane %v6111, 4
      %v6114 = vshll.u32 %v5859, 16
      %v6116 = vrot.slane %v6114, 5
      %v6117 = vsel %vm1383, %v6112, %v6116
      %v6118 = vshrl.u32 %v5859, 16
      %v6120 = vrot.slane %v6118, 4
      %v6121 = vor.u32 %v6120, %v6116
      %v6122 = vrot.slane %v6121, 4
      %v6124 = vshll.u32 %v5881, 16
      %v6126 = vrot.slane %v6124, 5
      %v6127 = vsel %vm1383, %v6122, %v6126
      %v6129 = vshrl.u32 %v5860, 16
      %v6131 = vrot.slane %v6129, 4
      %v6132 = vshll.u32 %v5860, 16
      %v6134 = vrot.slane %v6132, 5
      %v6135 = vor.u32 %v6131, %v6134
      %v6136 = vrot.slane %v6135, 4
      %v6138 = vshll.u32 %v5861, 16
      %v6140 = vrot.slane %v6138, 5
      %v6141 = vsel %vm1383, %v6136, %v6140
      %v6142 = vshrl.u32 %v5861, 16
      %v6144 = vrot.slane %v6142, 4
      %v6145 = vor.u32 %v6144, %v6140
      %v6146 = vrot.slane %v6145, 4
      %v6148 = vshll.u32 %v5882, 16
      %v6150 = vrot.slane %v6148, 5
      %v6151 = vsel %vm1383, %v6146, %v6150
      %v6153 = vshrl.u32 %v5862, 16
      %v6155 = vrot.slane %v6153, 4
      %v6156 = vshll.u32 %v5862, 16
      %v6158 = vrot.slane %v6156, 5
      %v6159 = vor.u32 %v6155, %v6158
      %v6160 = vrot.slane %v6159, 4
      %v6162 = vshll.u32 %v5863, 16
      %v6164 = vrot.slane %v6162, 5
      %v6165 = vsel %vm1383, %v6160, %v6164
      %v6166 = vshrl.u32 %v5863, 16
      %v6168 = vrot.slane %v6166, 4
      %v6169 = vor.u32 %v6168, %v6164
      %v6170 = vrot.slane %v6169, 4
      %v6172 = vshll.u32 %v5883, 16
      %v6174 = vrot.slane %v6172, 5
      %v6175 = vsel %vm1383, %v6170, %v6174
      %v6177 = vshrl.u32 %v5864, 16
      %v6179 = vrot.slane %v6177, 4
      %v6180 = vshll.u32 %v5864, 16
      %v6182 = vrot.slane %v6180, 5
      %v6183 = vor.u32 %v6179, %v6182
      %v6184 = vrot.slane %v6183, 4
      %v6186 = vshll.u32 %v5865, 16
      %v6188 = vrot.slane %v6186, 5
      %v6189 = vsel %vm1383, %v6184, %v6188
      %v6190 = vshrl.u32 %v5865, 16
      %v6192 = vrot.slane %v6190, 4
      %v6193 = vor.u32 %v6192, %v6188
      %v6194 = vrot.slane %v6193, 4
      %v6196 = vshll.u32 %v5884, 16
      %v6198 = vrot.slane %v6196, 5
      %v6199 = vsel %vm1383, %v6194, %v6198
      %v6201 = vshrl.u32 %v5866, 16
      %v6203 = vrot.slane %v6201, 4
      %v6204 = vshll.u32 %v5866, 16
      %v6206 = vrot.slane %v6204, 5
      %v6207 = vor.u32 %v6203, %v6206
      %v6208 = vrot.slane %v6207, 4
      %v6210 = vshll.u32 %v5867, 16
      %v6212 = vrot.slane %v6210, 5
      %v6213 = vsel %vm1383, %v6208, %v6212
      %v6214 = vshrl.u32 %v5867, 16
      %v6216 = vrot.slane %v6214, 4
      %v6217 = vor.u32 %v6216, %v6212
      %v6218 = vrot.slane %v6217, 4
      %v6220 = vshll.u32 %v5885, 16
      %v6222 = vrot.slane %v6220, 5
      %v6223 = vsel %vm1383, %v6218, %v6222
      %v6225 = vshrl.u32 %v5868, 16
      %v6227 = vrot.slane %v6225, 4
      %v6228 = vshll.u32 %v5868, 16
      %v6230 = vrot.slane %v6228, 5
      %v6231 = vor.u32 %v6227, %v6230
      %v6232 = vrot.slane %v6231, 4
      %v6234 = vshll.u32 %v5869, 16
      %v6236 = vrot.slane %v6234, 5
      %v6237 = vsel %vm1383, %v6232, %v6236
      %v6238 = vshrl.u32 %v5869, 16
      %v6240 = vrot.slane %v6238, 4
      %v6241 = vor.u32 %v6240, %v6236
      %v6242 = vrot.slane %v6241, 4
      %v6244 = vshll.u32 %v5886, 16
      %v6246 = vrot.slane %v6244, 5
      %v6247 = vsel %vm1383, %v6242, %v6246
      %v6249 = vshrl.u32 %v5870, 16
      %v6251 = vrot.slane %v6249, 4
      %v6252 = vshll.u32 %v5870, 16
      %v6254 = vrot.slane %v6252, 5
      %v6255 = vor.u32 %v6251, %v6254
      %v6256 = vrot.slane %v6255, 4
      %v6258 = vshll.u32 %v5871, 16
      %v6260 = vrot.slane %v6258, 5
      %v6261 = vsel %vm1383, %v6256, %v6260
      %v6262 = vshrl.u32 %v5871, 16
      %v6264 = vrot.slane %v6262, 4
      %v6265 = vor.u32 %v6264, %v6260
      %v6266 = vrot.slane %v6265, 4
      %v6268 = vshll.u32 %v5887, 16
      %v6270 = vrot.slane %v6268, 5
      %v6271 = vsel %vm1383, %v6266, %v6270
      %v6304 = vmax.bf16 %v5840, %v5901
      %v6305 = vmax.bf16 %v5841, %v5911
      %v6306 = vmax.bf16 %v5842, %v5925
      %v6307 = vmax.bf16 %v5843, %v5935
      %v6308 = vmax.bf16 %v5844, %v5949
      %v6309 = vmax.bf16 %v5845, %v5959
      %v6310 = vmax.bf16 %v5846, %v5973
      %v6311 = vmax.bf16 %v5847, %v5983
      %v6312 = vmax.bf16 %v5848, %v5997
      %v6313 = vmax.bf16 %v5849, %v6007
      %v6314 = vmax.bf16 %v5850, %v6021
      %v6315 = vmax.bf16 %v5851, %v6031
      %v6316 = vmax.bf16 %v5852, %v6045
      %v6317 = vmax.bf16 %v5853, %v6055
      %v6318 = vmax.bf16 %v5854, %v6069
      %v6319 = vmax.bf16 %v5855, %v6079
      %v6320 = vmax.bf16 %v5856, %v6093
      %v6321 = vmax.bf16 %v5857, %v6103
      %v6322 = vmax.bf16 %v5858, %v6117
      %v6323 = vmax.bf16 %v5859, %v6127
      %v6324 = vmax.bf16 %v5860, %v6141
      %v6325 = vmax.bf16 %v5861, %v6151
      %v6326 = vmax.bf16 %v5862, %v6165
      %v6327 = vmax.bf16 %v5863, %v6175
      %v6328 = vmax.bf16 %v5864, %v6189
      %v6329 = vmax.bf16 %v5865, %v6199
      %v6330 = vmax.bf16 %v5866, %v6213
      %v6331 = vmax.bf16 %v5867, %v6223
      %v6332 = vmax.bf16 %v5868, %v6237
      %v6333 = vmax.bf16 %v5869, %v6247
      %v6334 = vmax.bf16 %v5870, %v6261
      %v6335 = vmax.bf16 %v5871, %v6271
      %v6336 = vld [vmem:[%s242] sm:$0xe]
      %v6337 = vld [vmem:[%s242 + $0xc] sm:$0xe]
      %v6338 = vld [vmem:[%s242 + $0x18] sm:$0xe]
      %v6339 = vld [vmem:[%s242 + $0x24] sm:$0xe]
      %v6340 = vld [vmem:[%s242 + $0x30] sm:$0xe]
      %v6341 = vld [vmem:[%s242 + $0x3c] sm:$0xe]
      %v6342 = vld [vmem:[%s242 + $0x48] sm:$0xe]
      %v6343 = vld [vmem:[%s242 + $0x54] sm:$0xe]
      %v6344 = vld [vmem:[%s242 + $0x60] sm:$0xe]
      %v6345 = vld [vmem:[%s242 + $0x6c] sm:$0xe]
      %v6346 = vld [vmem:[%s242 + $0x78] sm:$0xe]
      %v6347 = vld [vmem:[%s242 + $0x84] sm:$0xe]
      %v6348 = vld [vmem:[%s242 + $0x90] sm:$0xe]
      %v6349 = vld [vmem:[%s242 + $0x9c] sm:$0xe]
      %v6350 = vld [vmem:[%s242 + $0xa8] sm:$0xe]
      %v6351 = vld [vmem:[%s242 + $0xb4] sm:$0xe]
      %v6400 = vrot.slane %v6336, 5
      %v6401 = vrot.slane %v6400, 4
      %v6402 = vrot.slane %v5841, 5
      %v6403 = vsel %vm1898, %v6401, %v6402
      %v6404 = vrot.slane %v6402, 4
      %v6405 = vrot.slane %v5872, 5
      %v6406 = vsel %vm1898, %v6404, %v6405
      %v6407 = vrot.slane %v6337, 5
      %v6408 = vrot.slane %v6407, 4
      %v6409 = vrot.slane %v5843, 5
      %v6410 = vsel %vm1898, %v6408, %v6409
      %v6411 = vrot.slane %v6409, 4
      %v6412 = vrot.slane %v5873, 5
      %v6413 = vsel %vm1898, %v6411, %v6412
      %v6414 = vrot.slane %v6338, 5
      %v6415 = vrot.slane %v6414, 4
      %v6416 = vrot.slane %v5845, 5
      %v6417 = vsel %vm1898, %v6415, %v6416
      %v6418 = vrot.slane %v6416, 4
      %v6419 = vrot.slane %v5874, 5
      %v6420 = vsel %vm1898, %v6418, %v6419
      %v6421 = vrot.slane %v6339, 5
      %v6422 = vrot.slane %v6421, 4
      %v6423 = vrot.slane %v5847, 5
      %v6424 = vsel %vm1898, %v6422, %v6423
      %v6425 = vrot.slane %v6423, 4
      %v6426 = vrot.slane %v5875, 5
      %v6427 = vsel %vm1898, %v6425, %v6426
      %v6428 = vrot.slane %v6340, 5
      %v6429 = vrot.slane %v6428, 4
      %v6430 = vrot.slane %v5849, 5
      %v6431 = vsel %vm1898, %v6429, %v6430
      %v6432 = vrot.slane %v6430, 4
      %v6433 = vrot.slane %v5876, 5
      %v6434 = vsel %vm1898, %v6432, %v6433
      %v6435 = vrot.slane %v6341, 5
      %v6436 = vrot.slane %v6435, 4
      %v6437 = vrot.slane %v5851, 5
      %v6438 = vsel %vm1898, %v6436, %v6437
      %v6439 = vrot.slane %v6437, 4
      %v6440 = vrot.slane %v5877, 5
      %v6441 = vsel %vm1898, %v6439, %v6440
      %v6442 = vrot.slane %v6342, 5
      %v6443 = vrot.slane %v6442, 4
      %v6444 = vrot.slane %v5853, 5
      %v6445 = vsel %vm1898, %v6443, %v6444
      %v6446 = vrot.slane %v6444, 4
      %v6447 = vrot.slane %v5878, 5
      %v6448 = vsel %vm1898, %v6446, %v6447
      %v6449 = vrot.slane %v6343, 5
      %v6450 = vrot.slane %v6449, 4
      %v6451 = vrot.slane %v5855, 5
      %v6452 = vsel %vm1898, %v6450, %v6451
      %v6453 = vrot.slane %v6451, 4
      %v6454 = vrot.slane %v5879, 5
      %v6455 = vsel %vm1898, %v6453, %v6454
      %v6456 = vrot.slane %v6344, 5
      %v6457 = vrot.slane %v6456, 4
      %v6458 = vrot.slane %v5857, 5
      %v6459 = vsel %vm1898, %v6457, %v6458
      %v6460 = vrot.slane %v6458, 4
      %v6461 = vrot.slane %v5880, 5
      %v6462 = vsel %vm1898, %v6460, %v6461
      %v6463 = vrot.slane %v6345, 5
      %v6464 = vrot.slane %v6463, 4
      %v6465 = vrot.slane %v5859, 5
      %v6466 = vsel %vm1898, %v6464, %v6465
      %v6467 = vrot.slane %v6465, 4
      %v6468 = vrot.slane %v5881, 5
      %v6469 = vsel %vm1898, %v6467, %v6468
      %v6470 = vrot.slane %v6346, 5
      %v6471 = vrot.slane %v6470, 4
      %v6472 = vrot.slane %v5861, 5
      %v6473 = vsel %vm1898, %v6471, %v6472
      %v6474 = vrot.slane %v6472, 4
      %v6475 = vrot.slane %v5882, 5
      %v6476 = vsel %vm1898, %v6474, %v6475
      %v6477 = vrot.slane %v6347, 5
      %v6478 = vrot.slane %v6477, 4
      %v6479 = vrot.slane %v5863, 5
      %v6480 = vsel %vm1898, %v6478, %v6479
      %v6481 = vrot.slane %v6479, 4
      %v6482 = vrot.slane %v5883, 5
      %v6483 = vsel %vm1898, %v6481, %v6482
      %v6484 = vrot.slane %v6348, 5
      %v6485 = vrot.slane %v6484, 4
      %v6486 = vrot.slane %v5865, 5
      %v6487 = vsel %vm1898, %v6485, %v6486
      %v6488 = vrot.slane %v6486, 4
      %v6489 = vrot.slane %v5884, 5
      %v6490 = vsel %vm1898, %v6488, %v6489
      %v6491 = vrot.slane %v6349, 5
      %v6492 = vrot.slane %v6491, 4
      %v6493 = vrot.slane %v5867, 5
      %v6494 = vsel %vm1898, %v6492, %v6493
      %v6495 = vrot.slane %v6493, 4
      %v6496 = vrot.slane %v5885, 5
      %v6497 = vsel %vm1898, %v6495, %v6496
      %v6498 = vrot.slane %v6350, 5
      %v6499 = vrot.slane %v6498, 4
      %v6500 = vrot.slane %v5869, 5
      %v6501 = vsel %vm1898, %v6499, %v6500
      %v6502 = vrot.slane %v6500, 4
      %v6503 = vrot.slane %v5886, 5
      %v6504 = vsel %vm1898, %v6502, %v6503
      %v6505 = vrot.slane %v6351, 5
      %v6506 = vrot.slane %v6505, 4
      %v6507 = vrot.slane %v5871, 5
      %v6508 = vsel %vm1898, %v6506, %v6507
      %v6509 = vrot.slane %v6507, 4
      %v6510 = vrot.slane %v5887, 5
      %v6511 = vsel %vm1898, %v6509, %v6510
      %v6544 = vmax.bf16 %v6304, %v6403
      %v6545 = vmax.bf16 %v6305, %v6406
      %v6546 = vmax.bf16 %v6306, %v6410
      %v6547 = vmax.bf16 %v6307, %v6413
      %v6548 = vmax.bf16 %v6308, %v6417
      %v6549 = vmax.bf16 %v6309, %v6420
      %v6550 = vmax.bf16 %v6310, %v6424
      %v6551 = vmax.bf16 %v6311, %v6427
      %v6552 = vmax.bf16 %v6312, %v6431
      %v6553 = vmax.bf16 %v6313, %v6434
      %v6554 = vmax.bf16 %v6314, %v6438
      %v6555 = vmax.bf16 %v6315, %v6441
      %v6556 = vmax.bf16 %v6316, %v6445
      %v6557 = vmax.bf16 %v6317, %v6448
      %v6558 = vmax.bf16 %v6318, %v6452
      %v6559 = vmax.bf16 %v6319, %v6455
      %v6560 = vmax.bf16 %v6320, %v6459
      %v6561 = vmax.bf16 %v6321, %v6462
      %v6562 = vmax.bf16 %v6322, %v6466
      %v6563 = vmax.bf16 %v6323, %v6469
      %v6564 = vmax.bf16 %v6324, %v6473
      %v6565 = vmax.bf16 %v6325, %v6476
      %v6566 = vmax.bf16 %v6326, %v6480
      %v6567 = vmax.bf16 %v6327, %v6483
      %v6568 = vmax.bf16 %v6328, %v6487
      %v6569 = vmax.bf16 %v6329, %v6490
      %v6570 = vmax.bf16 %v6330, %v6494
      %v6571 = vmax.bf16 %v6331, %v6497
      %v6572 = vmax.bf16 %v6332, %v6501
      %v6573 = vmax.bf16 %v6333, %v6504
      %v6574 = vmax.bf16 %v6334, %v6508
      %v6575 = vmax.bf16 %v6335, %v6511
      %v6576 = vld [vmem:[%s242 + $0x8] sm:$0x3]
      %v6577 = vld [vmem:[%s242 + $0x14] sm:$0x3]
      %v6578 = vld [vmem:[%s242 + $0x20] sm:$0x3]
      %v6579 = vld [vmem:[%s242 + $0x2c] sm:$0x3]
      %v6580 = vld [vmem:[%s242 + $0x38] sm:$0x3]
      %v6581 = vld [vmem:[%s242 + $0x44] sm:$0x3]
      %v6582 = vld [vmem:[%s242 + $0x50] sm:$0x3]
      %v6583 = vld [vmem:[%s242 + $0x5c] sm:$0x3]
      %v6584 = vld [vmem:[%s242 + $0x68] sm:$0x3]
      %v6585 = vld [vmem:[%s242 + $0x74] sm:$0x3]
      %v6586 = vld [vmem:[%s242 + $0x80] sm:$0x3]
      %v6587 = vld [vmem:[%s242 + $0x8c] sm:$0x3]
      %v6588 = vld [vmem:[%s242 + $0x98] sm:$0x3]
      %v6589 = vld [vmem:[%s242 + $0xa4] sm:$0x3]
      %v6590 = vld [vmem:[%s242 + $0xb0] sm:$0x3]
      %v6591 = vld [vmem:[%s242 + $0xbc] sm:$0x3]
      %v6593 = vshrl.u32 %v6336, 16
      %v6595 = vrot.slane %v6593, 5
      %v6596 = vshll.u32 %v6336, 16
      %v6598 = vrot.slane %v6596, 6
      %v6599 = vor.u32 %v6595, %v6598
      %v6600 = vrot.slane %v6599, 4
      %v6601 = vrot.slane %v5902, 5
      %v6602 = vrot.slane %v5898, 6
      %v6603 = vor.u32 %v6601, %v6602
      %v6604 = vsel %vm2093, %v6600, %v6603
      %v6605 = vrot.slane %v6603, 4
      %v6607 = vshrl.u32 %v6576, 16
      %v6609 = vrot.slane %v6607, 5
      %v6610 = vshll.u32 %v6576, 16
      %v6612 = vrot.slane %v6610, 6
      %v6613 = vor.u32 %v6609, %v6612
      %v6614 = vsel %vm2093, %v6605, %v6613
      %v6616 = vshrl.u32 %v6337, 16
      %v6618 = vrot.slane %v6616, 5
      %v6619 = vshll.u32 %v6337, 16
      %v6621 = vrot.slane %v6619, 6
      %v6622 = vor.u32 %v6618, %v6621
      %v6623 = vrot.slane %v6622, 4
      %v6624 = vrot.slane %v5926, 5
      %v6625 = vrot.slane %v5922, 6
      %v6626 = vor.u32 %v6624, %v6625
      %v6627 = vsel %vm2093, %v6623, %v6626
      %v6628 = vrot.slane %v6626, 4
      %v6630 = vshrl.u32 %v6577, 16
      %v6632 = vrot.slane %v6630, 5
      %v6633 = vshll.u32 %v6577, 16
      %v6635 = vrot.slane %v6633, 6
      %v6636 = vor.u32 %v6632, %v6635
      %v6637 = vsel %vm2093, %v6628, %v6636
      %v6639 = vshrl.u32 %v6338, 16
      %v6641 = vrot.slane %v6639, 5
      %v6642 = vshll.u32 %v6338, 16
      %v6644 = vrot.slane %v6642, 6
      %v6645 = vor.u32 %v6641, %v6644
      %v6646 = vrot.slane %v6645, 4
      %v6647 = vrot.slane %v5950, 5
      %v6648 = vrot.slane %v5946, 6
      %v6649 = vor.u32 %v6647, %v6648
      %v6650 = vsel %vm2093, %v6646, %v6649
      %v6651 = vrot.slane %v6649, 4
      %v6653 = vshrl.u32 %v6578, 16
      %v6655 = vrot.slane %v6653, 5
      %v6656 = vshll.u32 %v6578, 16
      %v6658 = vrot.slane %v6656, 6
      %v6659 = vor.u32 %v6655, %v6658
      %v6660 = vsel %vm2093, %v6651, %v6659
      %v6662 = vshrl.u32 %v6339, 16
      %v6664 = vrot.slane %v6662, 5
      %v6665 = vshll.u32 %v6339, 16
      %v6667 = vrot.slane %v6665, 6
      %v6668 = vor.u32 %v6664, %v6667
      %v6669 = vrot.slane %v6668, 4
      %v6670 = vrot.slane %v5974, 5
      %v6671 = vrot.slane %v5970, 6
      %v6672 = vor.u32 %v6670, %v6671
      %v6673 = vsel %vm2093, %v6669, %v6672
      %v6674 = vrot.slane %v6672, 4
      %v6676 = vshrl.u32 %v6579, 16
      %v6678 = vrot.slane %v6676, 5
      %v6679 = vshll.u32 %v6579, 16
      %v6681 = vrot.slane %v6679, 6
      %v6682 = vor.u32 %v6678, %v6681
      %v6683 = vsel %vm2093, %v6674, %v6682
      %v6685 = vshrl.u32 %v6340, 16
      %v6687 = vrot.slane %v6685, 5
      %v6688 = vshll.u32 %v6340, 16
      %v6690 = vrot.slane %v6688, 6
      %v6691 = vor.u32 %v6687, %v6690
      %v6692 = vrot.slane %v6691, 4
      %v6693 = vrot.slane %v5998, 5
      %v6694 = vrot.slane %v5994, 6
      %v6695 = vor.u32 %v6693, %v6694
      %v6696 = vsel %vm2093, %v6692, %v6695
      %v6697 = vrot.slane %v6695, 4
      %v6699 = vshrl.u32 %v6580, 16
      %v6701 = vrot.slane %v6699, 5
      %v6702 = vshll.u32 %v6580, 16
      %v6704 = vrot.slane %v6702, 6
      %v6705 = vor.u32 %v6701, %v6704
      %v6706 = vsel %vm2093, %v6697, %v6705
      %v6708 = vshrl.u32 %v6341, 16
      %v6710 = vrot.slane %v6708, 5
      %v6711 = vshll.u32 %v6341, 16
      %v6713 = vrot.slane %v6711, 6
      %v6714 = vor.u32 %v6710, %v6713
      %v6715 = vrot.slane %v6714, 4
      %v6716 = vrot.slane %v6022, 5
      %v6717 = vrot.slane %v6018, 6
      %v6718 = vor.u32 %v6716, %v6717
      %v6719 = vsel %vm2093, %v6715, %v6718
      %v6720 = vrot.slane %v6718, 4
      %v6722 = vshrl.u32 %v6581, 16
      %v6724 = vrot.slane %v6722, 5
      %v6725 = vshll.u32 %v6581, 16
      %v6727 = vrot.slane %v6725, 6
      %v6728 = vor.u32 %v6724, %v6727
      %v6729 = vsel %vm2093, %v6720, %v6728
      %v6731 = vshrl.u32 %v6342, 16
      %v6733 = vrot.slane %v6731, 5
      %v6734 = vshll.u32 %v6342, 16
      %v6736 = vrot.slane %v6734, 6
      %v6737 = vor.u32 %v6733, %v6736
      %v6738 = vrot.slane %v6737, 4
      %v6739 = vrot.slane %v6046, 5
      %v6740 = vrot.slane %v6042, 6
      %v6741 = vor.u32 %v6739, %v6740
      %v6742 = vsel %vm2093, %v6738, %v6741
      %v6743 = vrot.slane %v6741, 4
      %v6745 = vshrl.u32 %v6582, 16
      %v6747 = vrot.slane %v6745, 5
      %v6748 = vshll.u32 %v6582, 16
      %v6750 = vrot.slane %v6748, 6
      %v6751 = vor.u32 %v6747, %v6750
      %v6752 = vsel %vm2093, %v6743, %v6751
      %v6754 = vshrl.u32 %v6343, 16
      %v6756 = vrot.slane %v6754, 5
      %v6757 = vshll.u32 %v6343, 16
      %v6759 = vrot.slane %v6757, 6
      %v6760 = vor.u32 %v6756, %v6759
      %v6761 = vrot.slane %v6760, 4
      %v6762 = vrot.slane %v6070, 5
      %v6763 = vrot.slane %v6066, 6
      %v6764 = vor.u32 %v6762, %v6763
      %v6765 = vsel %vm2093, %v6761, %v6764
      %v6766 = vrot.slane %v6764, 4
      %v6768 = vshrl.u32 %v6583, 16
      %v6770 = vrot.slane %v6768, 5
      %v6771 = vshll.u32 %v6583, 16
      %v6773 = vrot.slane %v6771, 6
      %v6774 = vor.u32 %v6770, %v6773
      %v6775 = vsel %vm2093, %v6766, %v6774
      %v6777 = vshrl.u32 %v6344, 16
      %v6779 = vrot.slane %v6777, 5
      %v6780 = vshll.u32 %v6344, 16
      %v6782 = vrot.slane %v6780, 6
      %v6783 = vor.u32 %v6779, %v6782
      %v6784 = vrot.slane %v6783, 4
      %v6785 = vrot.slane %v6094, 5
      %v6786 = vrot.slane %v6090, 6
      %v6787 = vor.u32 %v6785, %v6786
      %v6788 = vsel %vm2093, %v6784, %v6787
      %v6789 = vrot.slane %v6787, 4
      %v6791 = vshrl.u32 %v6584, 16
      %v6793 = vrot.slane %v6791, 5
      %v6794 = vshll.u32 %v6584, 16
      %v6796 = vrot.slane %v6794, 6
      %v6797 = vor.u32 %v6793, %v6796
      %v6798 = vsel %vm2093, %v6789, %v6797
      %v6800 = vshrl.u32 %v6345, 16
      %v6802 = vrot.slane %v6800, 5
      %v6803 = vshll.u32 %v6345, 16
      %v6805 = vrot.slane %v6803, 6
      %v6806 = vor.u32 %v6802, %v6805
      %v6807 = vrot.slane %v6806, 4
      %v6808 = vrot.slane %v6118, 5
      %v6809 = vrot.slane %v6114, 6
      %v6810 = vor.u32 %v6808, %v6809
      %v6811 = vsel %vm2093, %v6807, %v6810
      %v6812 = vrot.slane %v6810, 4
      %v6814 = vshrl.u32 %v6585, 16
      %v6816 = vrot.slane %v6814, 5
      %v6817 = vshll.u32 %v6585, 16
      %v6819 = vrot.slane %v6817, 6
      %v6820 = vor.u32 %v6816, %v6819
      %v6821 = vsel %vm2093, %v6812, %v6820
      %v6823 = vshrl.u32 %v6346, 16
      %v6825 = vrot.slane %v6823, 5
      %v6826 = vshll.u32 %v6346, 16
      %v6828 = vrot.slane %v6826, 6
      %v6829 = vor.u32 %v6825, %v6828
      %v6830 = vrot.slane %v6829, 4
      %v6831 = vrot.slane %v6142, 5
      %v6832 = vrot.slane %v6138, 6
      %v6833 = vor.u32 %v6831, %v6832
      %v6834 = vsel %vm2093, %v6830, %v6833
      %v6835 = vrot.slane %v6833, 4
      %v6837 = vshrl.u32 %v6586, 16
      %v6839 = vrot.slane %v6837, 5
      %v6840 = vshll.u32 %v6586, 16
      %v6842 = vrot.slane %v6840, 6
      %v6843 = vor.u32 %v6839, %v6842
      %v6844 = vsel %vm2093, %v6835, %v6843
      %v6846 = vshrl.u32 %v6347, 16
      %v6848 = vrot.slane %v6846, 5
      %v6849 = vshll.u32 %v6347, 16
      %v6851 = vrot.slane %v6849, 6
      %v6852 = vor.u32 %v6848, %v6851
      %v6853 = vrot.slane %v6852, 4
      %v6854 = vrot.slane %v6166, 5
      %v6855 = vrot.slane %v6162, 6
      %v6856 = vor.u32 %v6854, %v6855
      %v6857 = vsel %vm2093, %v6853, %v6856
      %v6858 = vrot.slane %v6856, 4
      %v6860 = vshrl.u32 %v6587, 16
      %v6862 = vrot.slane %v6860, 5
      %v6863 = vshll.u32 %v6587, 16
      %v6865 = vrot.slane %v6863, 6
      %v6866 = vor.u32 %v6862, %v6865
      %v6867 = vsel %vm2093, %v6858, %v6866
      %v6869 = vshrl.u32 %v6348, 16
      %v6871 = vrot.slane %v6869, 5
      %v6872 = vshll.u32 %v6348, 16
      %v6874 = vrot.slane %v6872, 6
      %v6875 = vor.u32 %v6871, %v6874
      %v6876 = vrot.slane %v6875, 4
      %v6877 = vrot.slane %v6190, 5
      %v6878 = vrot.slane %v6186, 6
      %v6879 = vor.u32 %v6877, %v6878
      %v6880 = vsel %vm2093, %v6876, %v6879
      %v6881 = vrot.slane %v6879, 4
      %v6883 = vshrl.u32 %v6588, 16
      %v6885 = vrot.slane %v6883, 5
      %v6886 = vshll.u32 %v6588, 16
      %v6888 = vrot.slane %v6886, 6
      %v6889 = vor.u32 %v6885, %v6888
      %v6890 = vsel %vm2093, %v6881, %v6889
      %v6892 = vshrl.u32 %v6349, 16
      %v6894 = vrot.slane %v6892, 5
      %v6895 = vshll.u32 %v6349, 16
      %v6897 = vrot.slane %v6895, 6
      %v6898 = vor.u32 %v6894, %v6897
      %v6899 = vrot.slane %v6898, 4
      %v6900 = vrot.slane %v6214, 5
      %v6901 = vrot.slane %v6210, 6
      %v6902 = vor.u32 %v6900, %v6901
      %v6903 = vsel %vm2093, %v6899, %v6902
      %v6904 = vrot.slane %v6902, 4
      %v6906 = vshrl.u32 %v6589, 16
      %v6908 = vrot.slane %v6906, 5
      %v6909 = vshll.u32 %v6589, 16
      %v6911 = vrot.slane %v6909, 6
      %v6912 = vor.u32 %v6908, %v6911
      %v6913 = vsel %vm2093, %v6904, %v6912
      %v6915 = vshrl.u32 %v6350, 16
      %v6917 = vrot.slane %v6915, 5
      %v6918 = vshll.u32 %v6350, 16
      %v6920 = vrot.slane %v6918, 6
      %v6921 = vor.u32 %v6917, %v6920
      %v6922 = vrot.slane %v6921, 4
      %v6923 = vrot.slane %v6238, 5
      %v6924 = vrot.slane %v6234, 6
      %v6925 = vor.u32 %v6923, %v6924
      %v6926 = vsel %vm2093, %v6922, %v6925
      %v6927 = vrot.slane %v6925, 4
      %v6929 = vshrl.u32 %v6590, 16
      %v6931 = vrot.slane %v6929, 5
      %v6932 = vshll.u32 %v6590, 16
      %v6934 = vrot.slane %v6932, 6
      %v6935 = vor.u32 %v6931, %v6934
      %v6936 = vsel %vm2093, %v6927, %v6935
      %v6938 = vshrl.u32 %v6351, 16
      %v6940 = vrot.slane %v6938, 5
      %v6941 = vshll.u32 %v6351, 16
      %v6943 = vrot.slane %v6941, 6
      %v6944 = vor.u32 %v6940, %v6943
      %v6945 = vrot.slane %v6944, 4
      %v6946 = vrot.slane %v6262, 5
      %v6947 = vrot.slane %v6258, 6
      %v6948 = vor.u32 %v6946, %v6947
      %v6949 = vsel %vm2093, %v6945, %v6948
      %v6950 = vrot.slane %v6948, 4
      %v6952 = vshrl.u32 %v6591, 16
      %v6954 = vrot.slane %v6952, 5
      %v6955 = vshll.u32 %v6591, 16
      %v6957 = vrot.slane %v6955, 6
      %v6958 = vor.u32 %v6954, %v6957
      %v6959 = vsel %vm2093, %v6950, %v6958
      %v6992 = vmax.bf16 %v6544, %v6604
      %v6993 = vmax.bf16 %v6545, %v6614
      %v6994 = vmax.bf16 %v6546, %v6627
      %v6995 = vmax.bf16 %v6547, %v6637
      %v6996 = vmax.bf16 %v6548, %v6650
      %v6997 = vmax.bf16 %v6549, %v6660
      %v6998 = vmax.bf16 %v6550, %v6673
      %v6999 = vmax.bf16 %v6551, %v6683
      %v7000 = vmax.bf16 %v6552, %v6696
      %v7001 = vmax.bf16 %v6553, %v6706
      %v7002 = vmax.bf16 %v6554, %v6719
      %v7003 = vmax.bf16 %v6555, %v6729
      %v7004 = vmax.bf16 %v6556, %v6742
      %v7005 = vmax.bf16 %v6557, %v6752
      %v7006 = vmax.bf16 %v6558, %v6765
      %v7007 = vmax.bf16 %v6559, %v6775
      %v7008 = vmax.bf16 %v6560, %v6788
      %v7009 = vmax.bf16 %v6561, %v6798
      %v7010 = vmax.bf16 %v6562, %v6811
      %v7011 = vmax.bf16 %v6563, %v6821
      %v7012 = vmax.bf16 %v6564, %v6834
      %v7013 = vmax.bf16 %v6565, %v6844
      %v7014 = vmax.bf16 %v6566, %v6857
      %v7015 = vmax.bf16 %v6567, %v6867
      %v7016 = vmax.bf16 %v6568, %v6880
      %v7017 = vmax.bf16 %v6569, %v6890
      %v7018 = vmax.bf16 %v6570, %v6903
      %v7019 = vmax.bf16 %v6571, %v6913
      %v7020 = vmax.bf16 %v6572, %v6926
      %v7021 = vmax.bf16 %v6573, %v6936
      %v7022 = vmax.bf16 %v6574, %v6949
      %v7023 = vmax.bf16 %v6575, %v6959
      %v7024 = vld [vmem:[%s242] sm:$0xc]
      %v7025 = vld [vmem:[%s242 + $0xc] sm:$0xc]
      %v7026 = vld [vmem:[%s242 + $0x18] sm:$0xc]
      %v7027 = vld [vmem:[%s242 + $0x24] sm:$0xc]
      %v7028 = vld [vmem:[%s242 + $0x30] sm:$0xc]
      %v7029 = vld [vmem:[%s242 + $0x3c] sm:$0xc]
      %v7030 = vld [vmem:[%s242 + $0x48] sm:$0xc]
      %v7031 = vld [vmem:[%s242 + $0x54] sm:$0xc]
      %v7032 = vld [vmem:[%s242 + $0x60] sm:$0xc]
      %v7033 = vld [vmem:[%s242 + $0x6c] sm:$0xc]
      %v7034 = vld [vmem:[%s242 + $0x78] sm:$0xc]
      %v7035 = vld [vmem:[%s242 + $0x84] sm:$0xc]
      %v7036 = vld [vmem:[%s242 + $0x90] sm:$0xc]
      %v7037 = vld [vmem:[%s242 + $0x9c] sm:$0xc]
      %v7038 = vld [vmem:[%s242 + $0xa8] sm:$0xc]
      %v7039 = vld [vmem:[%s242 + $0xb4] sm:$0xc]
      %v7072 = vrot.slane %v7024, 6
      %v7073 = vrot.slane %v7072, 4
      %v7074 = vrot.slane %v5841, 6
      %v7075 = vsel %vm2576, %v7073, %v7074
      %v7076 = vrot.slane %v7074, 4
      %v7077 = vrot.slane %v6576, 6
      %v7078 = vsel %vm2576, %v7076, %v7077
      %v7079 = vrot.slane %v7025, 6
      %v7080 = vrot.slane %v7079, 4
      %v7081 = vrot.slane %v5843, 6
      %v7082 = vsel %vm2576, %v7080, %v7081
      %v7083 = vrot.slane %v7081, 4
      %v7084 = vrot.slane %v6577, 6
      %v7085 = vsel %vm2576, %v7083, %v7084
      %v7086 = vrot.slane %v7026, 6
      %v7087 = vrot.slane %v7086, 4
      %v7088 = vrot.slane %v5845, 6
      %v7089 = vsel %vm2576, %v7087, %v7088
      %v7090 = vrot.slane %v7088, 4
      %v7091 = vrot.slane %v6578, 6
      %v7092 = vsel %vm2576, %v7090, %v7091
      %v7093 = vrot.slane %v7027, 6
      %v7094 = vrot.slane %v7093, 4
      %v7095 = vrot.slane %v5847, 6
      %v7096 = vsel %vm2576, %v7094, %v7095
      %v7097 = vrot.slane %v7095, 4
      %v7098 = vrot.slane %v6579, 6
      %v7099 = vsel %vm2576, %v7097, %v7098
      %v7100 = vrot.slane %v7028, 6
      %v7101 = vrot.slane %v7100, 4
      %v7102 = vrot.slane %v5849, 6
      %v7103 = vsel %vm2576, %v7101, %v7102
      %v7104 = vrot.slane %v7102, 4
      %v7105 = vrot.slane %v6580, 6
      %v7106 = vsel %vm2576, %v7104, %v7105
      %v7107 = vrot.slane %v7029, 6
      %v7108 = vrot.slane %v7107, 4
      %v7109 = vrot.slane %v5851, 6
      %v7110 = vsel %vm2576, %v7108, %v7109
      %v7111 = vrot.slane %v7109, 4
      %v7112 = vrot.slane %v6581, 6
      %v7113 = vsel %vm2576, %v7111, %v7112
      %v7114 = vrot.slane %v7030, 6
      %v7115 = vrot.slane %v7114, 4
      %v7116 = vrot.slane %v5853, 6
      %v7117 = vsel %vm2576, %v7115, %v7116
      %v7118 = vrot.slane %v7116, 4
      %v7119 = vrot.slane %v6582, 6
      %v7120 = vsel %vm2576, %v7118, %v7119
      %v7121 = vrot.slane %v7031, 6
      %v7122 = vrot.slane %v7121, 4
      %v7123 = vrot.slane %v5855, 6
      %v7124 = vsel %vm2576, %v7122, %v7123
      %v7125 = vrot.slane %v7123, 4
      %v7126 = vrot.slane %v6583, 6
      %v7127 = vsel %vm2576, %v7125, %v7126
      %v7128 = vrot.slane %v7032, 6
      %v7129 = vrot.slane %v7128, 4
      %v7130 = vrot.slane %v5857, 6
      %v7131 = vsel %vm2576, %v7129, %v7130
      %v7132 = vrot.slane %v7130, 4
      %v7133 = vrot.slane %v6584, 6
      %v7134 = vsel %vm2576, %v7132, %v7133
      %v7135 = vrot.slane %v7033, 6
      %v7136 = vrot.slane %v7135, 4
      %v7137 = vrot.slane %v5859, 6
      %v7138 = vsel %vm2576, %v7136, %v7137
      %v7139 = vrot.slane %v7137, 4
      %v7140 = vrot.slane %v6585, 6
      %v7141 = vsel %vm2576, %v7139, %v7140
      %v7142 = vrot.slane %v7034, 6
      %v7143 = vrot.slane %v7142, 4
      %v7144 = vrot.slane %v5861, 6
      %v7145 = vsel %vm2576, %v7143, %v7144
      %v7146 = vrot.slane %v7144, 4
      %v7147 = vrot.slane %v6586, 6
      %v7148 = vsel %vm2576, %v7146, %v7147
      %v7149 = vrot.slane %v7035, 6
      %v7150 = vrot.slane %v7149, 4
      %v7151 = vrot.slane %v5863, 6
      %v7152 = vsel %vm2576, %v7150, %v7151
      %v7153 = vrot.slane %v7151, 4
      %v7154 = vrot.slane %v6587, 6
      %v7155 = vsel %vm2576, %v7153, %v7154
      %v7156 = vrot.slane %v7036, 6
      %v7157 = vrot.slane %v7156, 4
      %v7158 = vrot.slane %v5865, 6
      %v7159 = vsel %vm2576, %v7157, %v7158
      %v7160 = vrot.slane %v7158, 4
      %v7161 = vrot.slane %v6588, 6
      %v7162 = vsel %vm2576, %v7160, %v7161
      %v7163 = vrot.slane %v7037, 6
      %v7164 = vrot.slane %v7163, 4
      %v7165 = vrot.slane %v5867, 6
      %v7166 = vsel %vm2576, %v7164, %v7165
      %v7167 = vrot.slane %v7165, 4
      %v7168 = vrot.slane %v6589, 6
      %v7169 = vsel %vm2576, %v7167, %v7168
      %v7170 = vrot.slane %v7038, 6
      %v7171 = vrot.slane %v7170, 4
      %v7172 = vrot.slane %v5869, 6
      %v7173 = vsel %vm2576, %v7171, %v7172
      %v7174 = vrot.slane %v7172, 4
      %v7175 = vrot.slane %v6590, 6
      %v7176 = vsel %vm2576, %v7174, %v7175
      %v7177 = vrot.slane %v7039, 6
      %v7178 = vrot.slane %v7177, 4
      %v7179 = vrot.slane %v5871, 6
      %v7180 = vsel %vm2576, %v7178, %v7179
      %v7181 = vrot.slane %v7179, 4
      %v7182 = vrot.slane %v6591, 6
      %v7183 = vsel %vm2576, %v7181, %v7182
      %v7216 = vmax.bf16 %v6992, %v7075
      %v7217 = vmax.bf16 %v6993, %v7078
      %v7218 = vmax.bf16 %v6994, %v7082
      %v7219 = vmax.bf16 %v6995, %v7085
      %v7220 = vmax.bf16 %v6996, %v7089
      %v7221 = vmax.bf16 %v6997, %v7092
      %v7222 = vmax.bf16 %v6998, %v7096
      %v7223 = vmax.bf16 %v6999, %v7099
      %v7224 = vmax.bf16 %v7000, %v7103
      %v7225 = vmax.bf16 %v7001, %v7106
      %v7226 = vmax.bf16 %v7002, %v7110
      %v7227 = vmax.bf16 %v7003, %v7113
      %v7228 = vmax.bf16 %v7004, %v7117
      %v7229 = vmax.bf16 %v7005, %v7120
      %v7230 = vmax.bf16 %v7006, %v7124
      %v7231 = vmax.bf16 %v7007, %v7127
      %v7232 = vmax.bf16 %v7008, %v7131
      %v7233 = vmax.bf16 %v7009, %v7134
      %v7234 = vmax.bf16 %v7010, %v7138
      %v7235 = vmax.bf16 %v7011, %v7141
      %v7236 = vmax.bf16 %v7012, %v7145
      %v7237 = vmax.bf16 %v7013, %v7148
      %v7238 = vmax.bf16 %v7014, %v7152
      %v7239 = vmax.bf16 %v7015, %v7155
      %v7240 = vmax.bf16 %v7016, %v7159
      %v7241 = vmax.bf16 %v7017, %v7162
      %v7242 = vmax.bf16 %v7018, %v7166
      %v7243 = vmax.bf16 %v7019, %v7169
      %v7244 = vmax.bf16 %v7020, %v7173
      %v7245 = vmax.bf16 %v7021, %v7176
      %v7246 = vmax.bf16 %v7022, %v7180
      %v7247 = vmax.bf16 %v7023, %v7183
      %7248 = vst.msk [vmem:[%s242] sm:$0xf] %vm227, %v7216
      %7249 = vst.msk [vmem:[%s242 + $0x4] sm:$0xf] %vm227, %v7217
      %7250 = vst.msk [vmem:[%s242 + $0xc] sm:$0xf] %vm227, %v7218
      %7251 = vst.msk [vmem:[%s242 + $0x10] sm:$0xf] %vm227, %v7219
      %7252 = vst.msk [vmem:[%s242 + $0x18] sm:$0xf] %vm227, %v7220
      %7253 = vst.msk [vmem:[%s242 + $0x1c] sm:$0xf] %vm227, %v7221
      %7254 = vst.msk [vmem:[%s242 + $0x24] sm:$0xf] %vm227, %v7222
      %7255 = vst.msk [vmem:[%s242 + $0x28] sm:$0xf] %vm227, %v7223
      %7256 = vst.msk [vmem:[%s242 + $0x30] sm:$0xf] %vm227, %v7224
      %7257 = vst.msk [vmem:[%s242 + $0x34] sm:$0xf] %vm227, %v7225
      %7258 = vst.msk [vmem:[%s242 + $0x3c] sm:$0xf] %vm227, %v7226
      %7259 = vst.msk [vmem:[%s242 + $0x40] sm:$0xf] %vm227, %v7227
      %7260 = vst.msk [vmem:[%s242 + $0x48] sm:$0xf] %vm227, %v7228
      %7261 = vst.msk [vmem:[%s242 + $0x4c] sm:$0xf] %vm227, %v7229
      %7262 = vst.msk [vmem:[%s242 + $0x54] sm:$0xf] %vm227, %v7230
      %7263 = vst.msk [vmem:[%s242 + $0x58] sm:$0xf] %vm227, %v7231
      %7264 = vst.msk [vmem:[%s242 + $0x60] sm:$0xf] %vm227, %v7232
      %7265 = vst.msk [vmem:[%s242 + $0x64] sm:$0xf] %vm227, %v7233
      %7266 = vst.msk [vmem:[%s242 + $0x6c] sm:$0xf] %vm227, %v7234
      %7267 = vst.msk [vmem:[%s242 + $0x70] sm:$0xf] %vm227, %v7235
      %7268 = vst.msk [vmem:[%s242 + $0x78] sm:$0xf] %vm227, %v7236
      %7269 = vst.msk [vmem:[%s242 + $0x7c] sm:$0xf] %vm227, %v7237
      %7270 = vst.msk [vmem:[%s242 + $0x84] sm:$0xf] %vm227, %v7238
      %7271 = vst.msk [vmem:[%s242 + $0x88] sm:$0xf] %vm227, %v7239
      %7272 = vst.msk [vmem:[%s242 + $0x90] sm:$0xf] %vm227, %v7240
      %7273 = vst.msk [vmem:[%s242 + $0x94] sm:$0xf] %vm227, %v7241
      %7274 = vst.msk [vmem:[%s242 + $0x9c] sm:$0xf] %vm227, %v7242
      %7275 = vst.msk [vmem:[%s242 + $0xa0] sm:$0xf] %vm227, %v7243
      %7276 = vst.msk [vmem:[%s242 + $0xa8] sm:$0xf] %vm227, %v7244
      %7277 = vst.msk [vmem:[%s242 + $0xac] sm:$0xf] %vm227, %v7245
      %7278 = vst.msk [vmem:[%s242 + $0xb4] sm:$0xf] %vm227, %v7246
      %7279 = vst.msk [vmem:[%s242 + $0xb8] sm:$0xf] %vm227, %v7247
      %v7280 = vld [vmem:[#allocation2] sm:$0xf]
      %v7281 = vld [vmem:[#allocation2 + $0x4] sm:$0xf]
      %v7282 = vld [vmem:[#allocation2 + $0xc] sm:$0xf]
      %v7283 = vld [vmem:[#allocation2 + $0x10] sm:$0xf]
      %v7284 = vld [vmem:[#allocation2 + $0x18] sm:$0xf]
      %v7285 = vld [vmem:[#allocation2 + $0x1c] sm:$0xf]
      %v7286 = vld [vmem:[#allocation2 + $0x24] sm:$0xf]
      %v7287 = vld [vmem:[#allocation2 + $0x28] sm:$0xf]
      %v7288 = vld [vmem:[#allocation2 + $0x30] sm:$0xf]
      %v7289 = vld [vmem:[#allocation2 + $0x34] sm:$0xf]
      %v7290 = vld [vmem:[#allocation2 + $0x3c] sm:$0xf]
      %v7291 = vld [vmem:[#allocation2 + $0x40] sm:$0xf]
      %v7292 = vld [vmem:[#allocation2 + $0x48] sm:$0xf]
      %v7293 = vld [vmem:[#allocation2 + $0x4c] sm:$0xf]
      %v7294 = vld [vmem:[#allocation2 + $0x54] sm:$0xf]
      %v7295 = vld [vmem:[#allocation2 + $0x58] sm:$0xf]
      %v7296 = vld [vmem:[#allocation2 + $0x60] sm:$0xf]
      %v7297 = vld [vmem:[#allocation2 + $0x64] sm:$0xf]
      %v7298 = vld [vmem:[#allocation2 + $0x6c] sm:$0xf]
      %v7299 = vld [vmem:[#allocation2 + $0x70] sm:$0xf]
      %v7300 = vld [vmem:[#allocation2 + $0x78] sm:$0xf]
      %v7301 = vld [vmem:[#allocation2 + $0x7c] sm:$0xf]
      %v7302 = vld [vmem:[#allocation2 + $0x84] sm:$0xf]
      %v7303 = vld [vmem:[#allocation2 + $0x88] sm:$0xf]
      %v7304 = vld [vmem:[#allocation2 + $0x90] sm:$0xf]
      %v7305 = vld [vmem:[#allocation2 + $0x94] sm:$0xf]
      %v7306 = vld [vmem:[#allocation2 + $0x9c] sm:$0xf]
      %v7307 = vld [vmem:[#allocation2 + $0xa0] sm:$0xf]
      %v7308 = vld [vmem:[#allocation2 + $0xa8] sm:$0xf]
      %v7309 = vld [vmem:[#allocation2 + $0xac] sm:$0xf]
      %v7310 = vld [vmem:[#allocation2 + $0xb4] sm:$0xf]
      %v7311 = vld [vmem:[#allocation2 + $0xb8] sm:$0xf]
      %v7312 = vld [vmem:[%s2817] sm:$0xf]
      %v7313 = vld [vmem:[%s2817 + $0x4] sm:$0xf]
      %v7314 = vld [vmem:[%s2817 + $0xc] sm:$0xf]
      %v7315 = vld [vmem:[%s2817 + $0x10] sm:$0xf]
      %v7316 = vld [vmem:[%s2817 + $0x18] sm:$0xf]
      %v7317 = vld [vmem:[%s2817 + $0x1c] sm:$0xf]
      %v7318 = vld [vmem:[%s2817 + $0x24] sm:$0xf]
      %v7319 = vld [vmem:[%s2817 + $0x28] sm:$0xf]
      %v7320 = vld [vmem:[%s2817 + $0x30] sm:$0xf]
      %v7321 = vld [vmem:[%s2817 + $0x34] sm:$0xf]
      %v7322 = vld [vmem:[%s2817 + $0x3c] sm:$0xf]
      %v7323 = vld [vmem:[%s2817 + $0x40] sm:$0xf]
      %v7324 = vld [vmem:[%s2817 + $0x48] sm:$0xf]
      %v7325 = vld [vmem:[%s2817 + $0x4c] sm:$0xf]
      %v7326 = vld [vmem:[%s2817 + $0x54] sm:$0xf]
      %v7327 = vld [vmem:[%s2817 + $0x58] sm:$0xf]
      %v7328 = vld [vmem:[%s2817 + $0x60] sm:$0xf]
      %v7329 = vld [vmem:[%s2817 + $0x64] sm:$0xf]
      %v7330 = vld [vmem:[%s2817 + $0x6c] sm:$0xf]
      %v7331 = vld [vmem:[%s2817 + $0x70] sm:$0xf]
      %v7332 = vld [vmem:[%s2817 + $0x78] sm:$0xf]
      %v7333 = vld [vmem:[%s2817 + $0x7c] sm:$0xf]
      %v7334 = vld [vmem:[%s2817 + $0x84] sm:$0xf]
      %v7335 = vld [vmem:[%s2817 + $0x88] sm:$0xf]
      %v7336 = vld [vmem:[%s2817 + $0x90] sm:$0xf]
      %v7337 = vld [vmem:[%s2817 + $0x94] sm:$0xf]
      %v7338 = vld [vmem:[%s2817 + $0x9c] sm:$0xf]
      %v7339 = vld [vmem:[%s2817 + $0xa0] sm:$0xf]
      %v7340 = vld [vmem:[%s2817 + $0xa8] sm:$0xf]
      %v7341 = vld [vmem:[%s2817 + $0xac] sm:$0xf]
      %v7342 = vld [vmem:[%s2817 + $0xb4] sm:$0xf]
      %v7343 = vld [vmem:[%s2817 + $0xb8] sm:$0xf]
      %v7344 = vmax.bf16 %v7280, %v7312
      %v7345 = vmax.bf16 %v7281, %v7313
      %v7346 = vmax.bf16 %v7282, %v7314
      %v7347 = vmax.bf16 %v7283, %v7315
      %v7348 = vmax.bf16 %v7284, %v7316
      %v7349 = vmax.bf16 %v7285, %v7317
      %v7350 = vmax.bf16 %v7286, %v7318
      %v7351 = vmax.bf16 %v7287, %v7319
      %v7352 = vmax.bf16 %v7288, %v7320
      %v7353 = vmax.bf16 %v7289, %v7321
      %v7354 = vmax.bf16 %v7290, %v7322
      %v7355 = vmax.bf16 %v7291, %v7323
      %v7356 = vmax.bf16 %v7292, %v7324
      %v7357 = vmax.bf16 %v7293, %v7325
      %v7358 = vmax.bf16 %v7294, %v7326
      %v7359 = vmax.bf16 %v7295, %v7327
      %v7360 = vmax.bf16 %v7296, %v7328
      %v7361 = vmax.bf16 %v7297, %v7329
      %v7362 = vmax.bf16 %v7298, %v7330
      %v7363 = vmax.bf16 %v7299, %v7331
      %v7364 = vmax.bf16 %v7300, %v7332
      %v7365 = vmax.bf16 %v7301, %v7333
      %v7366 = vmax.bf16 %v7302, %v7334
      %v7367 = vmax.bf16 %v7303, %v7335
      %v7368 = vmax.bf16 %v7304, %v7336
      %v7369 = vmax.bf16 %v7305, %v7337
      %v7370 = vmax.bf16 %v7306, %v7338
      %v7371 = vmax.bf16 %v7307, %v7339
      %v7372 = vmax.bf16 %v7308, %v7340
      %v7373 = vmax.bf16 %v7309, %v7341
      %v7374 = vmax.bf16 %v7310, %v7342
      %v7375 = vmax.bf16 %v7311, %v7343
      %v7376 = vld [vmem:[%s242] sm:$0xf]
      %v7377 = vld [vmem:[%s242 + $0x4] sm:$0xf]
      %v7378 = vld [vmem:[%s242 + $0xc] sm:$0xf]
      %v7379 = vld [vmem:[%s242 + $0x10] sm:$0xf]
      %v7380 = vld [vmem:[%s242 + $0x18] sm:$0xf]
      %v7381 = vld [vmem:[%s242 + $0x1c] sm:$0xf]
      %v7382 = vld [vmem:[%s242 + $0x24] sm:$0xf]
      %v7383 = vld [vmem:[%s242 + $0x28] sm:$0xf]
      %v7384 = vld [vmem:[%s242 + $0x30] sm:$0xf]
      %v7385 = vld [vmem:[%s242 + $0x34] sm:$0xf]
      %v7386 = vld [vmem:[%s242 + $0x3c] sm:$0xf]
      %v7387 = vld [vmem:[%s242 + $0x40] sm:$0xf]
      %v7388 = vld [vmem:[%s242 + $0x48] sm:$0xf]
      %v7389 = vld [vmem:[%s242 + $0x4c] sm:$0xf]
      %v7390 = vld [vmem:[%s242 + $0x54] sm:$0xf]
      %v7391 = vld [vmem:[%s242 + $0x58] sm:$0xf]
      %v7392 = vld [vmem:[%s242 + $0x60] sm:$0xf]
      %v7393 = vld [vmem:[%s242 + $0x64] sm:$0xf]
      %v7394 = vld [vmem:[%s242 + $0x6c] sm:$0xf]
      %v7395 = vld [vmem:[%s242 + $0x70] sm:$0xf]
      %v7396 = vld [vmem:[%s242 + $0x78] sm:$0xf]
      %v7397 = vld [vmem:[%s242 + $0x7c] sm:$0xf]
      %v7398 = vld [vmem:[%s242 + $0x84] sm:$0xf]
      %v7399 = vld [vmem:[%s242 + $0x88] sm:$0xf]
      %v7400 = vld [vmem:[%s242 + $0x90] sm:$0xf]
      %v7401 = vld [vmem:[%s242 + $0x94] sm:$0xf]
      %v7402 = vld [vmem:[%s242 + $0x9c] sm:$0xf]
      %v7403 = vld [vmem:[%s242 + $0xa0] sm:$0xf]
      %v7404 = vld [vmem:[%s242 + $0xa8] sm:$0xf]
      %v7405 = vld [vmem:[%s242 + $0xac] sm:$0xf]
      %v7406 = vld [vmem:[%s242 + $0xb4] sm:$0xf]
      %v7407 = vld [vmem:[%s242 + $0xb8] sm:$0xf]
      %v7408 = vmax.bf16 %v7344, %v7376
      %v7409 = vmax.bf16 %v7345, %v7377
      %v7410 = vmax.bf16 %v7346, %v7378
      %v7411 = vmax.bf16 %v7347, %v7379
      %v7412 = vmax.bf16 %v7348, %v7380
      %v7413 = vmax.bf16 %v7349, %v7381
      %v7414 = vmax.bf16 %v7350, %v7382
      %v7415 = vmax.bf16 %v7351, %v7383
      %v7416 = vmax.bf16 %v7352, %v7384
      %v7417 = vmax.bf16 %v7353, %v7385
      %v7418 = vmax.bf16 %v7354, %v7386
      %v7419 = vmax.bf16 %v7355, %v7387
      %v7420 = vmax.bf16 %v7356, %v7388
      %v7421 = vmax.bf16 %v7357, %v7389
      %v7422 = vmax.bf16 %v7358, %v7390
      %v7423 = vmax.bf16 %v7359, %v7391
      %v7424 = vmax.bf16 %v7360, %v7392
      %v7425 = vmax.bf16 %v7361, %v7393
      %v7426 = vmax.bf16 %v7362, %v7394
      %v7427 = vmax.bf16 %v7363, %v7395
      %v7428 = vmax.bf16 %v7364, %v7396
      %v7429 = vmax.bf16 %v7365, %v7397
      %v7430 = vmax.bf16 %v7366, %v7398
      %v7431 = vmax.bf16 %v7367, %v7399
      %v7432 = vmax.bf16 %v7368, %v7400
      %v7433 = vmax.bf16 %v7369, %v7401
      %v7434 = vmax.bf16 %v7370, %v7402
      %v7435 = vmax.bf16 %v7371, %v7403
      %v7436 = vmax.bf16 %v7372, %v7404
      %v7437 = vmax.bf16 %v7373, %v7405
      %v7438 = vmax.bf16 %v7374, %v7406
      %v7439 = vmax.bf16 %v7375, %v7407
      %v7440 = vld [vmem:[%s2946] sm:$0xf]
      %v7441 = vld [vmem:[%s2946 + $0x4] sm:$0xf]
      %v7442 = vld [vmem:[%s2946 + $0xc] sm:$0xf]
      %v7443 = vld [vmem:[%s2946 + $0x10] sm:$0xf]
      %v7444 = vld [vmem:[%s2946 + $0x18] sm:$0xf]
      %v7445 = vld [vmem:[%s2946 + $0x1c] sm:$0xf]
      %v7446 = vld [vmem:[%s2946 + $0x24] sm:$0xf]
      %v7447 = vld [vmem:[%s2946 + $0x28] sm:$0xf]
      %v7448 = vld [vmem:[%s2946 + $0x30] sm:$0xf]
      %v7449 = vld [vmem:[%s2946 + $0x34] sm:$0xf]
      %v7450 = vld [vmem:[%s2946 + $0x3c] sm:$0xf]
      %v7451 = vld [vmem:[%s2946 + $0x40] sm:$0xf]
      %v7452 = vld [vmem:[%s2946 + $0x48] sm:$0xf]
      %v7453 = vld [vmem:[%s2946 + $0x4c] sm:$0xf]
      %v7454 = vld [vmem:[%s2946 + $0x54] sm:$0xf]
      %v7455 = vld [vmem:[%s2946 + $0x58] sm:$0xf]
      %v7456 = vld [vmem:[%s2946 + $0x60] sm:$0xf]
      %v7457 = vld [vmem:[%s2946 + $0x64] sm:$0xf]
      %v7458 = vld [vmem:[%s2946 + $0x6c] sm:$0xf]
      %v7459 = vld [vmem:[%s2946 + $0x70] sm:$0xf]
      %v7460 = vld [vmem:[%s2946 + $0x78] sm:$0xf]
      %v7461 = vld [vmem:[%s2946 + $0x7c] sm:$0xf]
      %v7462 = vld [vmem:[%s2946 + $0x84] sm:$0xf]
      %v7463 = vld [vmem:[%s2946 + $0x88] sm:$0xf]
      %v7464 = vld [vmem:[%s2946 + $0x90] sm:$0xf]
      %v7465 = vld [vmem:[%s2946 + $0x94] sm:$0xf]
      %v7466 = vld [vmem:[%s2946 + $0x9c] sm:$0xf]
      %v7467 = vld [vmem:[%s2946 + $0xa0] sm:$0xf]
      %v7468 = vld [vmem:[%s2946 + $0xa8] sm:$0xf]
      %v7469 = vld [vmem:[%s2946 + $0xac] sm:$0xf]
      %v7470 = vld [vmem:[%s2946 + $0xb4] sm:$0xf]
      %v7471 = vld [vmem:[%s2946 + $0xb8] sm:$0xf]
      %v7472 = vmax.bf16 %v7408, %v7440
      %v7473 = vmax.bf16 %v7409, %v7441
      %v7474 = vmax.bf16 %v7410, %v7442
      %v7475 = vmax.bf16 %v7411, %v7443
      %v7476 = vmax.bf16 %v7412, %v7444
      %v7477 = vmax.bf16 %v7413, %v7445
      %v7478 = vmax.bf16 %v7414, %v7446
      %v7479 = vmax.bf16 %v7415, %v7447
      %v7480 = vmax.bf16 %v7416, %v7448
      %v7481 = vmax.bf16 %v7417, %v7449
      %v7482 = vmax.bf16 %v7418, %v7450
      %v7483 = vmax.bf16 %v7419, %v7451
      %v7484 = vmax.bf16 %v7420, %v7452
      %v7485 = vmax.bf16 %v7421, %v7453
      %v7486 = vmax.bf16 %v7422, %v7454
      %v7487 = vmax.bf16 %v7423, %v7455
      %v7488 = vmax.bf16 %v7424, %v7456
      %v7489 = vmax.bf16 %v7425, %v7457
      %v7490 = vmax.bf16 %v7426, %v7458
      %v7491 = vmax.bf16 %v7427, %v7459
      %v7492 = vmax.bf16 %v7428, %v7460
      %v7493 = vmax.bf16 %v7429, %v7461
      %v7494 = vmax.bf16 %v7430, %v7462
      %v7495 = vmax.bf16 %v7431, %v7463
      %v7496 = vmax.bf16 %v7432, %v7464
      %v7497 = vmax.bf16 %v7433, %v7465
      %v7498 = vmax.bf16 %v7434, %v7466
      %v7499 = vmax.bf16 %v7435, %v7467
      %v7500 = vmax.bf16 %v7436, %v7468
      %v7501 = vmax.bf16 %v7437, %v7469
      %v7502 = vmax.bf16 %v7438, %v7470
      %v7503 = vmax.bf16 %v7439, %v7471
      %v7504 = vld [vmem:[%s3011] sm:$0xf]
      %v7505 = vld [vmem:[%s3011 + $0x4] sm:$0xf]
      %v7506 = vld [vmem:[%s3011 + $0xc] sm:$0xf]
      %v7507 = vld [vmem:[%s3011 + $0x10] sm:$0xf]
      %v7508 = vld [vmem:[%s3011 + $0x18] sm:$0xf]
      %v7509 = vld [vmem:[%s3011 + $0x1c] sm:$0xf]
      %v7510 = vld [vmem:[%s3011 + $0x24] sm:$0xf]
      %v7511 = vld [vmem:[%s3011 + $0x28] sm:$0xf]
      %v7512 = vld [vmem:[%s3011 + $0x30] sm:$0xf]
      %v7513 = vld [vmem:[%s3011 + $0x34] sm:$0xf]
      %v7514 = vld [vmem:[%s3011 + $0x3c] sm:$0xf]
      %v7515 = vld [vmem:[%s3011 + $0x40] sm:$0xf]
      %v7516 = vld [vmem:[%s3011 + $0x48] sm:$0xf]
      %v7517 = vld [vmem:[%s3011 + $0x4c] sm:$0xf]
      %v7518 = vld [vmem:[%s3011 + $0x54] sm:$0xf]
      %v7519 = vld [vmem:[%s3011 + $0x58] sm:$0xf]
      %v7520 = vld [vmem:[%s3011 + $0x60] sm:$0xf]
      %v7521 = vld [vmem:[%s3011 + $0x64] sm:$0xf]
      %v7522 = vld [vmem:[%s3011 + $0x6c] sm:$0xf]
      %v7523 = vld [vmem:[%s3011 + $0x70] sm:$0xf]
      %v7524 = vld [vmem:[%s3011 + $0x78] sm:$0xf]
      %v7525 = vld [vmem:[%s3011 + $0x7c] sm:$0xf]
      %v7526 = vld [vmem:[%s3011 + $0x84] sm:$0xf]
      %v7527 = vld [vmem:[%s3011 + $0x88] sm:$0xf]
      %v7528 = vld [vmem:[%s3011 + $0x90] sm:$0xf]
      %v7529 = vld [vmem:[%s3011 + $0x94] sm:$0xf]
      %v7530 = vld [vmem:[%s3011 + $0x9c] sm:$0xf]
      %v7531 = vld [vmem:[%s3011 + $0xa0] sm:$0xf]
      %v7532 = vld [vmem:[%s3011 + $0xa8] sm:$0xf]
      %v7533 = vld [vmem:[%s3011 + $0xac] sm:$0xf]
      %v7534 = vld [vmem:[%s3011 + $0xb4] sm:$0xf]
      %v7535 = vld [vmem:[%s3011 + $0xb8] sm:$0xf]
      %v7536 = vmax.bf16 %v7472, %v7504
      %v7537 = vmax.bf16 %v7473, %v7505
      %v7538 = vmax.bf16 %v7474, %v7506
      %v7539 = vmax.bf16 %v7475, %v7507
      %v7540 = vmax.bf16 %v7476, %v7508
      %v7541 = vmax.bf16 %v7477, %v7509
      %v7542 = vmax.bf16 %v7478, %v7510
      %v7543 = vmax.bf16 %v7479, %v7511
      %v7544 = vmax.bf16 %v7480, %v7512
      %v7545 = vmax.bf16 %v7481, %v7513
      %v7546 = vmax.bf16 %v7482, %v7514
      %v7547 = vmax.bf16 %v7483, %v7515
      %v7548 = vmax.bf16 %v7484, %v7516
      %v7549 = vmax.bf16 %v7485, %v7517
      %v7550 = vmax.bf16 %v7486, %v7518
      %v7551 = vmax.bf16 %v7487, %v7519
      %v7552 = vmax.bf16 %v7488, %v7520
      %v7553 = vmax.bf16 %v7489, %v7521
      %v7554 = vmax.bf16 %v7490, %v7522
      %v7555 = vmax.bf16 %v7491, %v7523
      %v7556 = vmax.bf16 %v7492, %v7524
      %v7557 = vmax.bf16 %v7493, %v7525
      %v7558 = vmax.bf16 %v7494, %v7526
      %v7559 = vmax.bf16 %v7495, %v7527
      %v7560 = vmax.bf16 %v7496, %v7528
      %v7561 = vmax.bf16 %v7497, %v7529
      %v7562 = vmax.bf16 %v7498, %v7530
      %v7563 = vmax.bf16 %v7499, %v7531
      %v7564 = vmax.bf16 %v7500, %v7532
      %v7565 = vmax.bf16 %v7501, %v7533
      %v7566 = vmax.bf16 %v7502, %v7534
      %v7567 = vmax.bf16 %v7503, %v7535
      %7568 = vst.msk [vmem:[%s242] sm:$0x1] %vm243, 4286644096
      %7569 = vst.msk [vmem:[%s242 + $0xc] sm:$0x1] %vm243, 4286644096
      %7570 = vst.msk [vmem:[%s242 + $0x18] sm:$0x1] %vm243, 4286644096
      %7571 = vst.msk [vmem:[%s242 + $0x24] sm:$0x1] %vm243, 4286644096
      %7572 = vst.msk [vmem:[%s242 + $0x30] sm:$0x1] %vm243, 4286644096
      %7573 = vst.msk [vmem:[%s242 + $0x3c] sm:$0x1] %vm243, 4286644096
      %7574 = vst.msk [vmem:[%s242 + $0x48] sm:$0x1] %vm243, 4286644096
      %7575 = vst.msk [vmem:[%s242 + $0x54] sm:$0x1] %vm243, 4286644096
      %7576 = vst.msk [vmem:[%s242 + $0x60] sm:$0x1] %vm243, 4286644096
      %7577 = vst.msk [vmem:[%s242 + $0x6c] sm:$0x1] %vm243, 4286644096
      %7578 = vst.msk [vmem:[%s242 + $0x78] sm:$0x1] %vm243, 4286644096
      %7579 = vst.msk [vmem:[%s242 + $0x84] sm:$0x1] %vm243, 4286644096
      %7580 = vst.msk [vmem:[%s242 + $0x90] sm:$0x1] %vm243, 4286644096
      %7581 = vst.msk [vmem:[%s242 + $0x9c] sm:$0x1] %vm243, 4286644096
      %7582 = vst.msk [vmem:[%s242 + $0xa8] sm:$0x1] %vm243, 4286644096
      %7583 = vst.msk [vmem:[%s242 + $0xb4] sm:$0x1] %vm243, 4286644096
      %s7584 = scalar_lea.vmem %s3, 3
      %v7585 = vld [vmem:[%s7584] sm:$0x1]
      %v7618 = vunpack.c.l.b16 %v7536
      %v7619 = vunpack.c.l.b16 %v7537
      %v7620 = vunpack.c.l.b16 %v7538
      %v7621 = vunpack.c.l.b16 %v7539
      %v7622 = vunpack.c.l.b16 %v7540
      %v7623 = vunpack.c.l.b16 %v7541
      %v7624 = vunpack.c.l.b16 %v7542
      %v7625 = vunpack.c.l.b16 %v7543
      %v7626 = vunpack.c.l.b16 %v7544
      %v7627 = vunpack.c.l.b16 %v7545
      %v7628 = vunpack.c.l.b16 %v7546
      %v7629 = vunpack.c.l.b16 %v7547
      %v7630 = vunpack.c.l.b16 %v7548
      %v7631 = vunpack.c.l.b16 %v7549
      %v7632 = vunpack.c.l.b16 %v7550
      %v7633 = vunpack.c.l.b16 %v7551
      %v7634 = vunpack.c.l.b16 %v7552
      %v7635 = vunpack.c.l.b16 %v7553
      %v7636 = vunpack.c.l.b16 %v7554
      %v7637 = vunpack.c.l.b16 %v7555
      %v7638 = vunpack.c.l.b16 %v7556
      %v7639 = vunpack.c.l.b16 %v7557
      %v7640 = vunpack.c.l.b16 %v7558
      %v7641 = vunpack.c.l.b16 %v7559
      %v7642 = vunpack.c.l.b16 %v7560
      %v7643 = vunpack.c.l.b16 %v7561
      %v7644 = vunpack.c.l.b16 %v7562
      %v7645 = vunpack.c.l.b16 %v7563
      %v7646 = vunpack.c.l.b16 %v7564
      %v7647 = vunpack.c.l.b16 %v7565
      %v7648 = vunpack.c.l.b16 %v7566
      %v7649 = vunpack.c.l.b16 %v7567
      %v7650 = vpack.c.b16 %v7619, %v7618
      %v7651 = vpack.c.b16 %v7621, %v7620
      %v7652 = vpack.c.b16 %v7623, %v7622
      %v7653 = vpack.c.b16 %v7625, %v7624
      %v7654 = vpack.c.b16 %v7627, %v7626
      %v7655 = vpack.c.b16 %v7629, %v7628
      %v7656 = vpack.c.b16 %v7631, %v7630
      %v7657 = vpack.c.b16 %v7633, %v7632
      %v7658 = vpack.c.b16 %v7635, %v7634
      %v7659 = vpack.c.b16 %v7637, %v7636
      %v7660 = vpack.c.b16 %v7639, %v7638
      %v7661 = vpack.c.b16 %v7641, %v7640
      %v7662 = vpack.c.b16 %v7643, %v7642
      %v7663 = vpack.c.b16 %v7645, %v7644
      %v7664 = vpack.c.b16 %v7647, %v7646
      %v7665 = vpack.c.b16 %v7649, %v7648
      %v7667 = vsel %vm859, %v7650, 0
      %v7670 = vsel %vm859, %v7651, 0
      %v7673 = vsel %vm859, %v7652, 0
      %v7676 = vsel %vm859, %v7653, 0
      %v7679 = vsel %vm859, %v7654, 0
      %v7682 = vsel %vm859, %v7655, 0
      %v7685 = vsel %vm859, %v7656, 0
      %v7688 = vsel %vm859, %v7657, 0
      %v7691 = vsel %vm859, %v7658, 0
      %v7694 = vsel %vm859, %v7659, 0
      %v7697 = vsel %vm859, %v7660, 0
      %v7700 = vsel %vm859, %v7661, 0
      %v7703 = vsel %vm859, %v7662, 0
      %v7706 = vsel %vm859, %v7663, 0
      %v7709 = vsel %vm859, %v7664, 0
      %v7712 = vsel %vm859, %v7665, 0
      %v7715 = vsel %vm908, %v7585, 0
      %7717 = vmatprep.subr.bf16.mxu0 0
      %7718 = vmatpush1.bf16.msra.mxu0 %v7715
      %7719 = vmatprep.subr.bf16.mxu0 0
      %7720 = vmatpush1.bf16.msra.mxu0 0
      %7721 = vmatprep.subr.bf16.mxu0 0
      %7722 = vmatpush1.bf16.msra.mxu0 0
      %7723 = vmatprep.subr.bf16.mxu0 0
      %7724 = vmatpush1.bf16.msra.mxu0 0
      %7725 = vmatprep.subr.bf16.mxu0 0
      %7726 = vmatpush1.bf16.msra.mxu0 0
      %7727 = vmatprep.subr.bf16.mxu0 0
      %7728 = vmatpush1.bf16.msra.mxu0 0
      %7729 = vmatprep.subr.bf16.mxu0 0
      %7730 = vmatpush1.bf16.msra.mxu0 0
      %7731 = vmatprep.subr.bf16.mxu0 0
      %7732 = vmatpush1.bf16.msra.mxu0 0
      %7733 = vmatprep.subr.bf16.mxu0 0
      %7734 = vmatpush1.bf16.msra.mxu0 0
      %7735 = vmatprep.subr.bf16.mxu0 0
      %7736 = vmatpush1.bf16.msra.mxu0 0
      %7737 = vmatprep.subr.bf16.mxu0 0
      %7738 = vmatpush1.bf16.msra.mxu0 0
      %7739 = vmatprep.subr.bf16.mxu0 0
      %7740 = vmatpush1.bf16.msra.mxu0 0
      %7741 = vmatprep.subr.bf16.mxu0 0
      %7742 = vmatpush1.bf16.msra.mxu0 0
      %7743 = vmatprep.subr.bf16.mxu0 0
      %7744 = vmatpush1.bf16.msra.mxu0 0
      %7745 = vmatprep.subr.bf16.mxu0 0
      %7746 = vmatpush1.bf16.msra.mxu0 0
      %7747 = vmatprep.subr.bf16.mxu0 0
      %7748 = vmatpush1.bf16.msra.mxu0 0
      %7749 = vmatprep.mubr.bf16.mxu0 0
      %7750 = vmatmul.mubr.bf16.gmra.mrb[0].mxu0 %v7667
      %v7751 = vpop.f32.mrb[0].mxu0
      %v7752 = vadd.f32 0.0, %v7751
      %v7753 = vpop.f32.mrb[0].mxu0
      %v7754 = vpop.f32.mrb[0].mxu0
      %v7755 = vadd.f32 0.0, %v7754
      %v7756 = vpop.f32.mrb[0].mxu0
      %7757 = vmatprep.mubr.bf16.mxu0 0
      %7758 = vmatmul.mubr.bf16.gmra.mrb[0].mxu0 %v7670
      %v7759 = vpop.f32.mrb[0].mxu0
      %v7760 = vadd.f32 0.0, %v7759
      %v7761 = vpop.f32.mrb[0].mxu0
      %v7762 = vpop.f32.mrb[0].mxu0
      %v7763 = vadd.f32 0.0, %v7762
      %v7764 = vpop.f32.mrb[0].mxu0
      %7765 = vmatprep.mubr.bf16.mxu0 0
      %7766 = vmatmul.mubr.bf16.gmra.mrb[0].mxu0 %v7673
      %v7767 = vpop.f32.mrb[0].mxu0
      %v7768 = vadd.f32 0.0, %v7767
      %v7769 = vpop.f32.mrb[0].mxu0
      %v7770 = vpop.f32.mrb[0].mxu0
      %v7771 = vadd.f32 0.0, %v7770
      %v7772 = vpop.f32.mrb[0].mxu0
      %7773 = vmatprep.mubr.bf16.mxu0 0
      %7774 = vmatmul.mubr.bf16.gmra.mrb[0].mxu0 %v7676
      %v7775 = vpop.f32.mrb[0].mxu0
      %v7776 = vadd.f32 0.0, %v7775
      %v7777 = vpop.f32.mrb[0].mxu0
      %v7778 = vpop.f32.mrb[0].mxu0
      %v7779 = vadd.f32 0.0, %v7778
      %v7780 = vpop.f32.mrb[0].mxu0
      %7781 = vmatprep.mubr.bf16.mxu0 0
      %7782 = vmatmul.mubr.bf16.gmra.mrb[0].mxu0 %v7679
      %v7783 = vpop.f32.mrb[0].mxu0
      %v7784 = vadd.f32 0.0, %v7783
      %v7785 = vpop.f32.mrb[0].mxu0
      %v7786 = vpop.f32.mrb[0].mxu0
      %v7787 = vadd.f32 0.0, %v7786
      %v7788 = vpop.f32.mrb[0].mxu0
      %7789 = vmatprep.mubr.bf16.mxu0 0
      %7790 = vmatmul.mubr.bf16.gmra.mrb[0].mxu0 %v7682
      %v7791 = vpop.f32.mrb[0].mxu0
      %v7792 = vadd.f32 0.0, %v7791
      %v7793 = vpop.f32.mrb[0].mxu0
      %v7794 = vpop.f32.mrb[0].mxu0
      %v7795 = vadd.f32 0.0, %v7794
      %v7796 = vpop.f32.mrb[0].mxu0
      %7797 = vmatprep.mubr.bf16.mxu0 0
      %7798 = vmatmul.mubr.bf16.gmra.mrb[0].mxu0 %v7685
      %v7799 = vpop.f32.mrb[0].mxu0
      %v7800 = vadd.f32 0.0, %v7799
      %v7801 = vpop.f32.mrb[0].mxu0
      %v7802 = vpop.f32.mrb[0].mxu0
      %v7803 = vadd.f32 0.0, %v7802
      %v7804 = vpop.f32.mrb[0].mxu0
      %7805 = vmatprep.mubr.bf16.mxu0 0
      %7806 = vmatmul.mubr.bf16.gmra.mrb[0].mxu0 %v7688
      %v7807 = vpop.f32.mrb[0].mxu0
      %v7808 = vadd.f32 0.0, %v7807
      %v7809 = vpop.f32.mrb[0].mxu0
      %v7810 = vpop.f32.mrb[0].mxu0
      %v7811 = vadd.f32 0.0, %v7810
      %v7812 = vpop.f32.mrb[0].mxu0
      %7813 = vmatprep.mubr.bf16.mxu0 0
      %7814 = vmatmul.mubr.bf16.gmra.mrb[0].mxu0 %v7691
      %v7815 = vpop.f32.mrb[0].mxu0
      %v7816 = vadd.f32 0.0, %v7815
      %v7817 = vpop.f32.mrb[0].mxu0
      %v7818 = vpop.f32.mrb[0].mxu0
      %v7819 = vadd.f32 0.0, %v7818
      %v7820 = vpop.f32.mrb[0].mxu0
      %7821 = vmatprep.mubr.bf16.mxu0 0
      %7822 = vmatmul.mubr.bf16.gmra.mrb[0].mxu0 %v7694
      %v7823 = vpop.f32.mrb[0].mxu0
      %v7824 = vadd.f32 0.0, %v7823
      %v7825 = vpop.f32.mrb[0].mxu0
      %v7826 = vpop.f32.mrb[0].mxu0
      %v7827 = vadd.f32 0.0, %v7826
      %v7828 = vpop.f32.mrb[0].mxu0
      %7829 = vmatprep.mubr.bf16.mxu0 0
      %7830 = vmatmul.mubr.bf16.gmra.mrb[0].mxu0 %v7697
      %v7831 = vpop.f32.mrb[0].mxu0
      %v7832 = vadd.f32 0.0, %v7831
      %v7833 = vpop.f32.mrb[0].mxu0
      %v7834 = vpop.f32.mrb[0].mxu0
      %v7835 = vadd.f32 0.0, %v7834
      %v7836 = vpop.f32.mrb[0].mxu0
      %7837 = vmatprep.mubr.bf16.mxu0 0
      %7838 = vmatmul.mubr.bf16.gmra.mrb[0].mxu0 %v7700
      %v7839 = vpop.f32.mrb[0].mxu0
      %v7840 = vadd.f32 0.0, %v7839
      %v7841 = vpop.f32.mrb[0].mxu0
      %v7842 = vpop.f32.mrb[0].mxu0
      %v7843 = vadd.f32 0.0, %v7842
      %v7844 = vpop.f32.mrb[0].mxu0
      %7845 = vmatprep.mubr.bf16.mxu0 0
      %7846 = vmatmul.mubr.bf16.gmra.mrb[0].mxu0 %v7703
      %v7847 = vpop.f32.mrb[0].mxu0
      %v7848 = vadd.f32 0.0, %v7847
      %v7849 = vpop.f32.mrb[0].mxu0
      %v7850 = vpop.f32.mrb[0].mxu0
      %v7851 = vadd.f32 0.0, %v7850
      %v7852 = vpop.f32.mrb[0].mxu0
      %7853 = vmatprep.mubr.bf16.mxu0 0
      %7854 = vmatmul.mubr.bf16.gmra.mrb[0].mxu0 %v7706
      %v7855 = vpop.f32.mrb[0].mxu0
      %v7856 = vadd.f32 0.0, %v7855
      %v7857 = vpop.f32.mrb[0].mxu0
      %v7858 = vpop.f32.mrb[0].mxu0
      %v7859 = vadd.f32 0.0, %v7858
      %v7860 = vpop.f32.mrb[0].mxu0
      %7861 = vmatprep.mubr.bf16.mxu0 0
      %7862 = vmatmul.mubr.bf16.gmra.mrb[0].mxu0 %v7709
      %v7863 = vpop.f32.mrb[0].mxu0
      %v7864 = vadd.f32 0.0, %v7863
      %v7865 = vpop.f32.mrb[0].mxu0
      %v7866 = vpop.f32.mrb[0].mxu0
      %v7867 = vadd.f32 0.0, %v7866
      %v7868 = vpop.f32.mrb[0].mxu0
      %7869 = vmatprep.mubr.bf16.mxu0 0
      %7870 = vmatmul.mubr.bf16.gmra.mrb[0].mxu0 %v7712
      %v7871 = vpop.f32.mrb[0].mxu0
      %v7872 = vadd.f32 0.0, %v7871
      %v7873 = vpop.f32.mrb[0].mxu0
      %v7874 = vpop.f32.mrb[0].mxu0
      %v7875 = vadd.f32 0.0, %v7874
      %v7876 = vpop.f32.mrb[0].mxu0
      %7877 = vdwg.mxu0
      %v7878 = vadd.f32 %v5632, %v7752
      %v7879 = vadd.f32 %v5633, %v7755
      %v7880 = vadd.f32 %v5634, %v7760
      %v7881 = vadd.f32 %v5635, %v7763
      %v7882 = vadd.f32 %v5636, %v7768
      %v7883 = vadd.f32 %v5637, %v7771
      %v7884 = vadd.f32 %v5638, %v7776
      %v7885 = vadd.f32 %v5639, %v7779
      %v7886 = vadd.f32 %v5640, %v7784
      %v7887 = vadd.f32 %v5641, %v7787
      %v7888 = vadd.f32 %v5642, %v7792
      %v7889 = vadd.f32 %v5643, %v7795
      %v7890 = vadd.f32 %v5644, %v7800
      %v7891 = vadd.f32 %v5645, %v7803
      %v7892 = vadd.f32 %v5646, %v7808
      %v7893 = vadd.f32 %v5647, %v7811
      %v7894 = vadd.f32 %v5648, %v7816
      %v7895 = vadd.f32 %v5649, %v7819
      %v7896 = vadd.f32 %v5650, %v7824
      %v7897 = vadd.f32 %v5651, %v7827
      %v7898 = vadd.f32 %v5652, %v7832
      %v7899 = vadd.f32 %v5653, %v7835
      %v7900 = vadd.f32 %v5654, %v7840
      %v7901 = vadd.f32 %v5655, %v7843
      %v7902 = vadd.f32 %v5656, %v7848
      %v7903 = vadd.f32 %v5657, %v7851
      %v7904 = vadd.f32 %v5658, %v7856
      %v7905 = vadd.f32 %v5659, %v7859
      %v7906 = vadd.f32 %v5660, %v7864
      %v7907 = vadd.f32 %v5661, %v7867
      %v7908 = vadd.f32 %v5662, %v7872
      %v7909 = vadd.f32 %v5663, %v7875
      %v7910 = vxor.u32 %v7878, 2147483648
      %v7911 = vxor.u32 %v7879, 2147483648
      %v7912 = vxor.u32 %v7880, 2147483648
      %v7913 = vxor.u32 %v7881, 2147483648
      %v7914 = vxor.u32 %v7882, 2147483648
      %v7915 = vxor.u32 %v7883, 2147483648
      %v7916 = vxor.u32 %v7884, 2147483648
      %v7917 = vxor.u32 %v7885, 2147483648
      %v7918 = vxor.u32 %v7886, 2147483648
      %v7919 = vxor.u32 %v7887, 2147483648
      %v7920 = vxor.u32 %v7888, 2147483648
      %v7921 = vxor.u32 %v7889, 2147483648
      %v7922 = vxor.u32 %v7890, 2147483648
      %v7923 = vxor.u32 %v7891, 2147483648
      %v7924 = vxor.u32 %v7892, 2147483648
      %v7925 = vxor.u32 %v7893, 2147483648
      %v7926 = vxor.u32 %v7894, 2147483648
      %v7927 = vxor.u32 %v7895, 2147483648
      %v7928 = vxor.u32 %v7896, 2147483648
      %v7929 = vxor.u32 %v7897, 2147483648
      %v7930 = vxor.u32 %v7898, 2147483648
      %v7931 = vxor.u32 %v7899, 2147483648
      %v7932 = vxor.u32 %v7900, 2147483648
      %v7933 = vxor.u32 %v7901, 2147483648
      %v7934 = vxor.u32 %v7902, 2147483648
      %v7935 = vxor.u32 %v7903, 2147483648
      %v7936 = vxor.u32 %v7904, 2147483648
      %v7937 = vxor.u32 %v7905, 2147483648
      %v7938 = vxor.u32 %v7906, 2147483648
      %v7939 = vxor.u32 %v7907, 2147483648
      %v7940 = vxor.u32 %v7908, 2147483648
      %v7941 = vxor.u32 %v7909, 2147483648
      %v7942 = vmul.f32 %v7910, 1.442695
      %v7943 = vpow.pop %v7942
      %v7944 = vmul.f32 %v7911, 1.442695
      %v7945 = vpow.pop %v7944
      %v7946 = vmul.f32 %v7912, 1.442695
      %v7947 = vpow.pop %v7946
      %v7948 = vmul.f32 %v7913, 1.442695
      %v7949 = vpow.pop %v7948
      %v7950 = vmul.f32 %v7914, 1.442695
      %v7951 = vpow.pop %v7950
      %v7952 = vmul.f32 %v7915, 1.442695
      %v7953 = vpow.pop %v7952
      %v7954 = vmul.f32 %v7916, 1.442695
      %v7955 = vpow.pop %v7954
      %v7956 = vmul.f32 %v7917, 1.442695
      %v7957 = vpow.pop %v7956
      %v7958 = vmul.f32 %v7918, 1.442695
      %v7959 = vpow.pop %v7958
      %v7960 = vmul.f32 %v7919, 1.442695
      %v7961 = vpow.pop %v7960
      %v7962 = vmul.f32 %v7920, 1.442695
      %v7963 = vpow.pop %v7962
      %v7964 = vmul.f32 %v7921, 1.442695
      %v7965 = vpow.pop %v7964
      %v7966 = vmul.f32 %v7922, 1.442695
      %v7967 = vpow.pop %v7966
      %v7968 = vmul.f32 %v7923, 1.442695
      %v7969 = vpow.pop %v7968
      %v7970 = vmul.f32 %v7924, 1.442695
      %v7971 = vpow.pop %v7970
      %v7972 = vmul.f32 %v7925, 1.442695
      %v7973 = vpow.pop %v7972
      %v7974 = vmul.f32 %v7926, 1.442695
      %v7975 = vpow.pop %v7974
      %v7976 = vmul.f32 %v7927, 1.442695
      %v7977 = vpow.pop %v7976
      %v7978 = vmul.f32 %v7928, 1.442695
      %v7979 = vpow.pop %v7978
      %v7980 = vmul.f32 %v7929, 1.442695
      %v7981 = vpow.pop %v7980
      %v7982 = vmul.f32 %v7930, 1.442695
      %v7983 = vpow.pop %v7982
      %v7984 = vmul.f32 %v7931, 1.442695
      %v7985 = vpow.pop %v7984
      %v7986 = vmul.f32 %v7932, 1.442695
      %v7987 = vpow.pop %v7986
      %v7988 = vmul.f32 %v7933, 1.442695
      %v7989 = vpow.pop %v7988
      %v7990 = vmul.f32 %v7934, 1.442695
      %v7991 = vpow.pop %v7990
      %v7992 = vmul.f32 %v7935, 1.442695
      %v7993 = vpow.pop %v7992
      %v7994 = vmul.f32 %v7936, 1.442695
      %v7995 = vpow.pop %v7994
      %v7996 = vmul.f32 %v7937, 1.442695
      %v7997 = vpow.pop %v7996
      %v7998 = vmul.f32 %v7938, 1.442695
      %v7999 = vpow.pop %v7998
      %v8000 = vmul.f32 %v7939, 1.442695
      %v8001 = vpow.pop %v8000
      %v8002 = vmul.f32 %v7940, 1.442695
      %v8003 = vpow.pop %v8002
      %v8004 = vmul.f32 %v7941, 1.442695
      %v8005 = vpow.pop %v8004
      %v8006 = vadd.f32 %v7943, 1.0
      %v8007 = vadd.f32 %v7945, 1.0
      %v8008 = vadd.f32 %v7947, 1.0
      %v8009 = vadd.f32 %v7949, 1.0
      %v8010 = vadd.f32 %v7951, 1.0
      %v8011 = vadd.f32 %v7953, 1.0
      %v8012 = vadd.f32 %v7955, 1.0
      %v8013 = vadd.f32 %v7957, 1.0
      %v8014 = vadd.f32 %v7959, 1.0
      %v8015 = vadd.f32 %v7961, 1.0
      %v8016 = vadd.f32 %v7963, 1.0
      %v8017 = vadd.f32 %v7965, 1.0
      %v8018 = vadd.f32 %v7967, 1.0
      %v8019 = vadd.f32 %v7969, 1.0
      %v8020 = vadd.f32 %v7971, 1.0
      %v8021 = vadd.f32 %v7973, 1.0
      %v8022 = vadd.f32 %v7975, 1.0
      %v8023 = vadd.f32 %v7977, 1.0
      %v8024 = vadd.f32 %v7979, 1.0
      %v8025 = vadd.f32 %v7981, 1.0
      %v8026 = vadd.f32 %v7983, 1.0
      %v8027 = vadd.f32 %v7985, 1.0
      %v8028 = vadd.f32 %v7987, 1.0
      %v8029 = vadd.f32 %v7989, 1.0
      %v8030 = vadd.f32 %v7991, 1.0
      %v8031 = vadd.f32 %v7993, 1.0
      %v8032 = vadd.f32 %v7995, 1.0
      %v8033 = vadd.f32 %v7997, 1.0
      %v8034 = vadd.f32 %v7999, 1.0
      %v8035 = vadd.f32 %v8001, 1.0
      %v8036 = vadd.f32 %v8003, 1.0
      %v8037 = vadd.f32 %v8005, 1.0
      %v8038 = vrcp.pop %v8006
      %v8039 = vmul.f32 1.0, %v8038
      %v8040 = vrcp.pop %v8007
      %v8041 = vmul.f32 1.0, %v8040
      %v8042 = vrcp.pop %v8008
      %v8043 = vmul.f32 1.0, %v8042
      %v8044 = vrcp.pop %v8009
      %v8045 = vmul.f32 1.0, %v8044
      %v8046 = vrcp.pop %v8010
      %v8047 = vmul.f32 1.0, %v8046
      %v8048 = vrcp.pop %v8011
      %v8049 = vmul.f32 1.0, %v8048
      %v8050 = vrcp.pop %v8012
      %v8051 = vmul.f32 1.0, %v8050
      %v8052 = vrcp.pop %v8013
      %v8053 = vmul.f32 1.0, %v8052
      %v8054 = vrcp.pop %v8014
      %v8055 = vmul.f32 1.0, %v8054
      %v8056 = vrcp.pop %v8015
      %v8057 = vmul.f32 1.0, %v8056
      %v8058 = vrcp.pop %v8016
      %v8059 = vmul.f32 1.0, %v8058
      %v8060 = vrcp.pop %v8017
      %v8061 = vmul.f32 1.0, %v8060
      %v8062 = vrcp.pop %v8018
      %v8063 = vmul.f32 1.0, %v8062
      %v8064 = vrcp.pop %v8019
      %v8065 = vmul.f32 1.0, %v8064
      %v8066 = vrcp.pop %v8020
      %v8067 = vmul.f32 1.0, %v8066
      %v8068 = vrcp.pop %v8021
      %v8069 = vmul.f32 1.0, %v8068
      %v8070 = vrcp.pop %v8022
      %v8071 = vmul.f32 1.0, %v8070
      %v8072 = vrcp.pop %v8023
      %v8073 = vmul.f32 1.0, %v8072
      %v8074 = vrcp.pop %v8024
      %v8075 = vmul.f32 1.0, %v8074
      %v8076 = vrcp.pop %v8025
      %v8077 = vmul.f32 1.0, %v8076
      %v8078 = vrcp.pop %v8026
      %v8079 = vmul.f32 1.0, %v8078
      %v8080 = vrcp.pop %v8027
      %v8081 = vmul.f32 1.0, %v8080
      %v8082 = vrcp.pop %v8028
      %v8083 = vmul.f32 1.0, %v8082
      %v8084 = vrcp.pop %v8029
      %v8085 = vmul.f32 1.0, %v8084
      %v8086 = vrcp.pop %v8030
      %v8087 = vmul.f32 1.0, %v8086
      %v8088 = vrcp.pop %v8031
      %v8089 = vmul.f32 1.0, %v8088
      %v8090 = vrcp.pop %v8032
      %v8091 = vmul.f32 1.0, %v8090
      %v8092 = vrcp.pop %v8033
      %v8093 = vmul.f32 1.0, %v8092
      %v8094 = vrcp.pop %v8034
      %v8095 = vmul.f32 1.0, %v8094
      %v8096 = vrcp.pop %v8035
      %v8097 = vmul.f32 1.0, %v8096
      %v8098 = vrcp.pop %v8036
      %v8099 = vmul.f32 1.0, %v8098
      %v8100 = vrcp.pop %v8037
      %v8101 = vmul.f32 1.0, %v8100
      %v8102 = vmul.f32 %v7878, %v8039
      %v8103 = vmul.f32 %v7879, %v8041
      %v8104 = vmul.f32 %v7880, %v8043
      %v8105 = vmul.f32 %v7881, %v8045
      %v8106 = vmul.f32 %v7882, %v8047
      %v8107 = vmul.f32 %v7883, %v8049
      %v8108 = vmul.f32 %v7884, %v8051
      %v8109 = vmul.f32 %v7885, %v8053
      %v8110 = vmul.f32 %v7886, %v8055
      %v8111 = vmul.f32 %v7887, %v8057
      %v8112 = vmul.f32 %v7888, %v8059
      %v8113 = vmul.f32 %v7889, %v8061
      %v8114 = vmul.f32 %v7890, %v8063
      %v8115 = vmul.f32 %v7891, %v8065
      %v8116 = vmul.f32 %v7892, %v8067
      %v8117 = vmul.f32 %v7893, %v8069
      %v8118 = vmul.f32 %v7894, %v8071
      %v8119 = vmul.f32 %v7895, %v8073
      %v8120 = vmul.f32 %v7896, %v8075
      %v8121 = vmul.f32 %v7897, %v8077
      %v8122 = vmul.f32 %v7898, %v8079
      %v8123 = vmul.f32 %v7899, %v8081
      %v8124 = vmul.f32 %v7900, %v8083
      %v8125 = vmul.f32 %v7901, %v8085
      %v8126 = vmul.f32 %v7902, %v8087
      %v8127 = vmul.f32 %v7903, %v8089
      %v8128 = vmul.f32 %v7904, %v8091
      %v8129 = vmul.f32 %v7905, %v8093
      %v8130 = vmul.f32 %v7906, %v8095
      %v8131 = vmul.f32 %v7907, %v8097
      %v8132 = vmul.f32 %v7908, %v8099
      %v8133 = vmul.f32 %v7909, %v8101
      %vm8134 = vcmask 64512
      %8135 = vst.msk [vmem:[%s224] sm:$0xff] %vm8134, %v8102
      %8136 = vst.msk [vmem:[%s224 + $0x8] sm:$0xff] %vm8134, %v8103
      %8137 = vst.msk [vmem:[%s224 + $0x10] sm:$0xff] %vm8134, %v8104
      %8138 = vst.msk [vmem:[%s224 + $0x18] sm:$0xff] %vm8134, %v8105
      %8139 = vst.msk [vmem:[%s224 + $0x20] sm:$0xff] %vm8134, %v8106
      %8140 = vst.msk [vmem:[%s224 + $0x28] sm:$0xff] %vm8134, %v8107
      %8141 = vst.msk [vmem:[%s224 + $0x30] sm:$0xff] %vm8134, %v8108
      %8142 = vst.msk [vmem:[%s224 + $0x38] sm:$0xff] %vm8134, %v8109
      %8143 = vst.msk [vmem:[%s224 + $0x40] sm:$0xff] %vm8134, %v8110
      %8144 = vst.msk [vmem:[%s224 + $0x48] sm:$0xff] %vm8134, %v8111
      %8145 = vst.msk [vmem:[%s224 + $0x50] sm:$0xff] %vm8134, %v8112
      %8146 = vst.msk [vmem:[%s224 + $0x58] sm:$0xff] %vm8134, %v8113
      %8147 = vst.msk [vmem:[%s224 + $0x60] sm:$0xff] %vm8134, %v8114
      %8148 = vst.msk [vmem:[%s224 + $0x68] sm:$0xff] %vm8134, %v8115
      %8149 = vst.msk [vmem:[%s224 + $0x70] sm:$0xff] %vm8134, %v8116
      %8150 = vst.msk [vmem:[%s224 + $0x78] sm:$0xff] %vm8134, %v8117
      %8151 = vst.msk [vmem:[%s224 + $0x80] sm:$0xff] %vm8134, %v8118
      %8152 = vst.msk [vmem:[%s224 + $0x88] sm:$0xff] %vm8134, %v8119
      %8153 = vst.msk [vmem:[%s224 + $0x90] sm:$0xff] %vm8134, %v8120
      %8154 = vst.msk [vmem:[%s224 + $0x98] sm:$0xff] %vm8134, %v8121
      %8155 = vst.msk [vmem:[%s224 + $0xa0] sm:$0xff] %vm8134, %v8122
      %8156 = vst.msk [vmem:[%s224 + $0xa8] sm:$0xff] %vm8134, %v8123
      %8157 = vst.msk [vmem:[%s224 + $0xb0] sm:$0xff] %vm8134, %v8124
      %8158 = vst.msk [vmem:[%s224 + $0xb8] sm:$0xff] %vm8134, %v8125
      %8159 = vst.msk [vmem:[%s224 + $0xc0] sm:$0xff] %vm8134, %v8126
      %8160 = vst.msk [vmem:[%s224 + $0xc8] sm:$0xff] %vm8134, %v8127
      %8161 = vst.msk [vmem:[%s224 + $0xd0] sm:$0xff] %vm8134, %v8128
      %8162 = vst.msk [vmem:[%s224 + $0xd8] sm:$0xff] %vm8134, %v8129
      %8163 = vst.msk [vmem:[%s224 + $0xe0] sm:$0xff] %vm8134, %v8130
      %8164 = vst.msk [vmem:[%s224 + $0xe8] sm:$0xff] %vm8134, %v8131
      %8165 = vst.msk [vmem:[%s224 + $0xf0] sm:$0xff] %vm8134, %v8132
      %8166 = vst.msk [vmem:[%s224 + $0xf8] sm:$0xff] %vm8134, %v8133
      %p8167 = scmp.lt.s32.totalorder %s16, 1
      %s8168 = scalar_select %p8167, %s16, 1
      %s8169 = smul.addr %s8168, 32
      %s8170 = smul.addr %s8169, 8
      %s8171 = scalar_lea.vmem %s5, %s8170
      // Predicated region
      $region41: #{tpu_custom_call.1} parent=39 // pred_check
        %p8172 = pneg %p144
      $region42: #{tpu_custom_call.1} parent=39 // pred_check_branch
        %8174 = sbr.rel (%p8172) target = $region44
      $region43: #{tpu_custom_call.1} parent=39 // pred_region
        _
      $region44: #{tpu_custom_call.1} parent=39 // pred_fallthru
        _
    $region40: #{tpu_custom_call.1} parent=5 // pred_fallthru
      _
    %p8175 = scmp.le.s32.totalorder 2, %s11
    // Predicated region
    $region45: #{tpu_custom_call.1} parent=5 // pred_check
      %p8176 = pneg %p8175
    $region46: #{tpu_custom_call.1} parent=5 // pred_check_branch
      %8178 = sbr.rel (%p8176) target = $region48
    $region47: #{tpu_custom_call.1} parent=5 // pred_region
      %s8179 = ssub.s32 %s11, 2
      // Predicated region
      $region49: #{tpu_custom_call.1} parent=47 // pred_check
        %p8180 = pneg %p150
      $region50: #{tpu_custom_call.1} parent=47 // pred_check_branch
        %8182 = sbr.rel (%p8180) target = $region52
      $region51: #{tpu_custom_call.1} parent=47 // pred_region
        %p8183 = scmp.lt.s32.totalorder %s17, 1
        %s8184 = scalar_select %p8183, %s17, 1
        %s8185 = smul.addr %s8184, 32
        %s8186 = smul.addr %s8185, 8
        %s8187 = scalar_lea.vmem %s5, %s8186
      $region52: #{tpu_custom_call.1} parent=47 // pred_fallthru
        _
    $region48: #{tpu_custom_call.1} parent=5 // pred_fallthru
      _
  $region6: #{tpu_custom_call.1} parent=0 // loop_footer
    %s15 = sadd.s32 1, %s11
  $region7: #{tpu_custom_call.1} parent=0 // loop_footer_branch
    %10 = sbr.rel target = $region3
  $region8: #{tpu_custom_call.1} parent=0 // loop_exit
    _

</llo_original>
